<compile_context>
chip_gen: v7x
topology: tpu7x:2x2x1
jax: 0.10.0
libtpu: 0.0.40
codegen_flags: <defaults>
</compile_context>

<pallas_src>
import functools

import numpy as np
import jax
import jax.numpy as jnp
from jax import lax
from jax.experimental import pallas as pl
from jax.experimental.pallas import tpu as pltpu


# ----------------------------- Pallas kernels ------------------------------

def _conv_relu_pool_kernel(p_ref, w_ref, b_ref, o_ref, *, pool):
    """Fused channel-major conv + bias + ReLU + k_pool x k_pool max-pool.

    p_ref: (1, F, R)  bf16 im2col patches; feature-major, conv columns (rows of the
                      image) ordered (ph, pw, hq, wq) so each pooling section is a
                      contiguous, lane-aligned chunk of q = R // pool**2 lanes.
    w_ref: (Co, F)    bf16 flattened conv weight (torch OIHW -> (Co, Ci*k*k), padded).
    b_ref: (Co, 1)    f32 bias.
    o_ref: (1, Co, q) f32 pooled output; lane dim q = Ho*Wo (NCHW-flatten order).
    """
    acc = jnp.dot(w_ref[...], p_ref[0], preferred_element_type=jnp.float32)  # (Co, R)
    acc = jnp.maximum(acc + b_ref[...], 0.0)
    q = acc.shape[1] // (pool * pool)
    pooled = acc[:, 0:q]
    for s in range(1, pool * pool):                      # p*p is small and static
        pooled = jnp.maximum(pooled, acc[:, s * q:(s + 1) * q])
    o_ref[0] = pooled


def _mlp_kernel(x_ref, w1_ref, b1_ref, w2_ref, b2_ref, w3_ref, b3_ref, o_ref):
    """Fused fc1(+ReLU) -> fc2(+ReLU) -> fc3; intermediates stay on-chip."""
    h = jnp.dot(x_ref[...], w1_ref[...], preferred_element_type=jnp.float32)
    h = jnp.maximum(h + b1_ref[...], 0.0)
    h = jnp.dot(h, w2_ref[...], preferred_element_type=jnp.float32)
    h = jnp.maximum(h + b2_ref[...], 0.0)
    h = jnp.dot(h, w3_ref[...], preferred_element_type=jnp.float32)
    o_ref[...] = h + b3_ref[...]


# ------------------------------ layer wrappers ------------------------------

def conv_relu_pool(x_nchw, w_oihw, b, pool):
    """x: (N, Cin, H, W) f32 -> (N, Cout, H//pool, W//pool) f32."""
    n, cin, h, w = x_nchw.shape
    cout, _, kh, kw = w_oihw.shape
    assert kh == kw and kh % 2 == 1, "odd square kernels (symmetric 'same' padding)"
    k = kh
    pad = (k - 1) // 2
    ho, wo = h // pool, w // pool
    feat = cin * k * k
    feat_p = ((feat + 15) // 16) * 16          # bf16 sublane-tile friendly K
    r = h * w
    q = ho * wo

    # --- glue: 'same' zero padding + feature-major im2col (data movement only).
    x_p = jnp.pad(x_nchw, ((0, 0), (0, 0), (pad, pad), (pad, pad)))
    patches = jnp.stack(
        [x_p[:, :, i:i + h, j:j + w] for i in range(k) for j in range(k)],
        axis=2)                                            # (n, cin, k*k, h, w)
    # feature order (ci, kh, kw); column order (ph, pw, hq, wq)
    p_t = patches.reshape(n, feat, ho, pool, wo, pool)     # (n, f, hq, ph, wq, pw)
    p_t = p_t.transpose(0, 1, 3, 5, 2, 4).reshape(n, feat, r)
    p_t = jnp.pad(p_t, ((0, 0), (0, feat_p - feat), (0, 0))).astype(jnp.bfloat16)

    w_t = jnp.pad(w_oihw.reshape(cout, feat),
                  ((0, 0), (0, feat_p - feat))).astype(jnp.bfloat16)
    b_t = b.reshape(cout, 1).astype(jnp.float32)

    kernel = functools.partial(_conv_relu_pool_kernel, pool=pool)
    out = pl.pallas_call(
        kernel,
        out_shape=jax.ShapeDtypeStruct((n, cout, q), jnp.float32),
        grid_spec=pltpu.PrefetchScalarGridSpec(
            num_scalar_prefetch=0,
            grid=(n,),                                     # one full image per step
            in_specs=[
                pl.BlockSpec((1, feat_p, r), lambda bi: (bi, 0, 0)),
                pl.BlockSpec((cout, feat_p), lambda bi: (0, 0)),
                pl.BlockSpec((cout, 1), lambda bi: (0, 0)),
            ],
            out_specs=pl.BlockSpec((1, cout, q), lambda bi: (bi, 0, 0)),
        ),
        compiler_params=pltpu.CompilerParams(
            dimension_semantics=("parallel",),             # v7x: shard batch over TCs
            vmem_limit_bytes=32 * 1024 * 1024),
    )(p_t, w_t, b_t)
    return out.reshape(n, cout, ho, wo)


def mlp(x_flat, p_fc1, p_fc2, p_fc3):
    """x_flat: (N, Din) f32 (already NCHW-flattened); torch-layout fc weights."""
    n, din = x_flat.shape
    (w1, b1), (w2, b2), (w3, b3) = p_fc1, p_fc2, p_fc3
    d1, d2, d3 = w1.shape[0], w2.shape[0], w3.shape[0]

    x_b = x_flat.astype(jnp.bfloat16)
    w1_t = jnp.transpose(w1).astype(jnp.bfloat16)          # (Din, 120) -- the big one
    w2_t = jnp.transpose(w2).astype(jnp.float32)           # (120, 84)
    w3_t = jnp.transpose(w3).astype(jnp.float32)           # (84, 13)
    b1_t = b1.reshape(1, d1).astype(jnp.float32)
    b2_t = b2.reshape(1, d2).astype(jnp.float32)
    b3_t = b3.reshape(1, d3).astype(jnp.float32)

    return pl.pallas_call(
        _mlp_kernel,
        out_shape=jax.ShapeDtypeStruct((n, d3), jnp.float32),
        grid_spec=pltpu.PrefetchScalarGridSpec(
            num_scalar_prefetch=0,
            grid=(1,),
            in_specs=[
                pl.BlockSpec((n, din), lambda i: (0, 0)),
                pl.BlockSpec((din, d1), lambda i: (0, 0)),
                pl.BlockSpec((1, d1), lambda i: (0, 0)),
                pl.BlockSpec((d1, d2), lambda i: (0, 0)),
                pl.BlockSpec((1, d2), lambda i: (0, 0)),
                pl.BlockSpec((d2, d3), lambda i: (0, 0)),
                pl.BlockSpec((1, d3), lambda i: (0, 0)),
            ],
            out_specs=pl.BlockSpec((n, d3), lambda i: (0, 0)),
        ),
        compiler_params=pltpu.CompilerParams(
            vmem_limit_bytes=32 * 1024 * 1024),
    )(x_b, w1_t, b1_t, w2_t, b2_t, w3_t, b3_t)


# ------------------------------- model ------------------------------------

def init_params(key, k1, k2, k3, k_pool, out_ch, h=128, w=128):
    def conv_p(kk, cout, cin, k):
        kw_, kb_ = jax.random.split(kk)
        bound = 1.0 / np.sqrt(cin * k * k)
        return (jax.random.uniform(kw_, (cout, cin, k, k), jnp.float32, -bound, bound),
                jax.random.uniform(kb_, (cout,), jnp.float32, -bound, bound))

    def fc_p(kk, dout, din):
        kw_, kb_ = jax.random.split(kk)
        bound = 1.0 / np.sqrt(din)
        return (jax.random.uniform(kw_, (dout, din), jnp.float32, -bound, bound),
                jax.random.uniform(kb_, (dout,), jnp.float32, -bound, bound))

    keys = jax.random.split(key, 6)
    out_size = out_ch * (h // k_pool ** 3) * (w // k_pool ** 3)  # conv_output_size([128,128], ...)
    return {
        "conv1": conv_p(keys[0], 6, 3, k1),
        "conv2": conv_p(keys[1], 12, 6, k2),
        "conv3": conv_p(keys[2], out_ch, 12, k3),
        "fc1": fc_p(keys[3], 120, out_size),
        "fc2": fc_p(keys[4], 84, 120),
        "fc3": fc_p(keys[5], 13, 84),
    }


def forward(params, x_nchw, k_pool):
    x = conv_relu_pool(x_nchw, *params["conv1"], k_pool)
    x = conv_relu_pool(x, *params["conv2"], k_pool)
    x = conv_relu_pool(x, *params["conv3"], k_pool)
    # activations are already channel-major (N, C, Ho, Wo): this IS torch.flatten(x, 1)
    x = x.reshape(x.shape[0], -1)
    return mlp(x, params["fc1"], params["fc2"], params["fc3"])


# Pure-JAX f32 reference (mirrors the PyTorch forward) for a numerical sanity check.
def reference_forward(params, x_nchw, k_pool):
    x = x_nchw
    for name in ("conv1", "conv2", "conv3"):
        w_, b_ = params[name]
        x = lax.conv_general_dilated(
            x, w_, (1, 1), "SAME",
            dimension_numbers=("NCHW", "OIHW", "NCHW"),
            precision=lax.Precision.HIGHEST)
        x = jnp.maximum(x + b_[None, :, None, None], 0.0)
        x = lax.reduce_window(x, -jnp.inf, lax.max,
                              (1, 1, k_pool, k_pool), (1, 1, k_pool, k_pool), "VALID")
    x = x.reshape(x.shape[0], -1)
    for name, act in (("fc1", True), ("fc2", True), ("fc3", False)):
        w_, b_ = params[name]
        x = jnp.dot(x, w_.T, precision=lax.Precision.HIGHEST) + b_
        if act:
            x = jnp.maximum(x, 0.0)
    return x


if __name__ == "__main__":
    k_conv1, k_conv2, k_conv3, k_pool, out_ch = 5, 3, 3, 2, 16
    key = jax.random.PRNGKey(0)
    pkey, xkey = jax.random.split(key)
    params = init_params(pkey, k_conv1, k_conv2, k_conv3, k_pool, out_ch)

    # batch=2, channels=3; spatial must be 128x128 because fc1 is sized from [128,128]
    x = jax.random.normal(xkey, (2, 3, 128, 128), dtype=jnp.float32)

    fwd = jax.jit(functools.partial(forward, k_pool=k_pool))
    out = jax.block_until_ready(fwd(params, x))
    assert out.shape == (2, 13) and out.dtype == jnp.float32

    ref = jax.block_until_ready(reference_forward(params, x, k_pool))
    np.testing.assert_allclose(np.asarray(out), np.asarray(ref), rtol=2e-2, atol=2e-2)

    print("KERNEL_OK")
</pallas_src>

<mosaic_0001>
module attributes {stable_mosaic.version = 11 : i64} {
  func.func @_conv_relu_pool_kernel(%arg0: i32, %arg1: memref<1x80x16384xbf16, #tpu.memory_space<vmem>>, %arg2: memref<6x80xbf16, #tpu.memory_space<vmem>>, %arg3: memref<6x1xf32, #tpu.memory_space<vmem>>, %arg4: memref<1x6x4096xf32, #tpu.memory_space<vmem>>) attributes {dimension_semantics = [#tpu.dimension_semantics<parallel>], iteration_bounds = array<i64: 2>, scalar_prefetch = 0 : i64, scratch_operands = 0 : i64, tpu.core_type = #tpu.core_type<tc>, window_params = [{transform_indices = @transform_0, window_bounds = array<i64: 1, 80, 16384>}, {pipeline_mode = #tpu.pipeline_mode<synchronous>, transform_indices = @transform_1, window_bounds = array<i64: 6, 80>}, {pipeline_mode = #tpu.pipeline_mode<synchronous>, transform_indices = @transform_2, window_bounds = array<i64: 6, 1>}, {transform_indices = @transform_3, window_bounds = array<i64: 1, 6, 4096>}]} {
    %c0 = arith.constant 0 : index
    %c0_0 = arith.constant 0 : index
    %0 = vector.load %arg2[%c0, %c0_0] : memref<6x80xbf16, #tpu.memory_space<vmem>>, vector<6x80xbf16>
    %c0_1 = arith.constant 0 : index
    %c0_2 = arith.constant 0 : index
    %c0_3 = arith.constant 0 : index
    %1 = vector.load %arg1[%c0_1, %c0_2, %c0_3] : memref<1x80x16384xbf16, #tpu.memory_space<vmem>>, vector<1x80x16384xbf16>
    %2 = vector.shape_cast %1 : vector<1x80x16384xbf16> to vector<80x16384xbf16>
    %cst = arith.constant dense<0.000000e+00> : vector<6x16384xf32>
    %3 = tpu.matmul %0, %2, %cst {dimension_numbers = #tpu.dot_dimension_numbers<[1], [0], [0], [1], [0, 0, 1, 1], [], []>} : vector<6x80xbf16>, vector<80x16384xbf16>, vector<6x16384xf32> -> vector<6x16384xf32>
    %c0_4 = arith.constant 0 : index
    %c0_5 = arith.constant 0 : index
    %4 = vector.load %arg3[%c0_4, %c0_5] : memref<6x1xf32, #tpu.memory_space<vmem>>, vector<6x1xf32>
    %5 = vector.broadcast %4 : vector<6x1xf32> to vector<6x16384xf32>
    %6 = arith.addf %3, %5 : vector<6x16384xf32>
    %cst_6 = arith.constant 0.000000e+00 : f32
    %7 = vector.broadcast %cst_6 : f32 to vector<6x16384xf32>
    %8 = arith.maximumf %6, %7 : vector<6x16384xf32>
    %9 = vector.extract_strided_slice %8 {offsets = [0, 0], sizes = [6, 4096], strides = [1, 1]} : vector<6x16384xf32> to vector<6x4096xf32>
    %10 = vector.extract_strided_slice %8 {offsets = [0, 4096], sizes = [6, 4096], strides = [1, 1]} : vector<6x16384xf32> to vector<6x4096xf32>
    %11 = arith.maximumf %9, %10 : vector<6x4096xf32>
    %12 = vector.extract_strided_slice %8 {offsets = [0, 8192], sizes = [6, 4096], strides = [1, 1]} : vector<6x16384xf32> to vector<6x4096xf32>
    %13 = arith.maximumf %11, %12 : vector<6x4096xf32>
    %14 = vector.extract_strided_slice %8 {offsets = [0, 12288], sizes = [6, 4096], strides = [1, 1]} : vector<6x16384xf32> to vector<6x4096xf32>
    %15 = arith.maximumf %13, %14 : vector<6x4096xf32>
    %c0_7 = arith.constant 0 : index
    %c0_8 = arith.constant 0 : index
    %c0_9 = arith.constant 0 : index
    %16 = vector.load %arg4[%c0_7, %c0_8, %c0_9] : memref<1x6x4096xf32, #tpu.memory_space<vmem>>, vector<1x6x4096xf32>
    %17 = vector.shape_cast %16 : vector<1x6x4096xf32> to vector<6x4096xf32>
    %18 = vector.shape_cast %15 : vector<6x4096xf32> to vector<1x6x4096xf32>
    tpu.vector_store %arg4[%c0_7, %c0_8, %c0_9], %18 {strides = array<i32>} : memref<1x6x4096xf32, #tpu.memory_space<vmem>>, vector<1x6x4096xf32>,
    return
  }
  func.func @transform_0(%arg0: i32) -> (i32, i32, i32) {
    %c0_i32 = arith.constant 0 : i32
    %c0_i32_0 = arith.constant 0 : i32
    %c0_i32_1 = arith.constant 0 : i32
    return %arg0, %c0_i32, %c0_i32_0 : i32, i32, i32
  }
  func.func @transform_1(%arg0: i32) -> (i32, i32) {
    %c0_i32 = arith.constant 0 : i32
    %c0_i32_0 = arith.constant 0 : i32
    %c0_i32_1 = arith.constant 0 : i32
    return %c0_i32, %c0_i32_0 : i32, i32
  }
  func.func @transform_2(%arg0: i32) -> (i32, i32) {
    %c0_i32 = arith.constant 0 : i32
    %c0_i32_0 = arith.constant 0 : i32
    %c0_i32_1 = arith.constant 0 : i32
    return %c0_i32, %c0_i32_0 : i32, i32
  }
  func.func @transform_3(%arg0: i32) -> (i32, i32, i32) {
    %c0_i32 = arith.constant 0 : i32
    %c0_i32_0 = arith.constant 0 : i32
    %c0_i32_1 = arith.constant 0 : i32
    return %arg0, %c0_i32, %c0_i32_0 : i32, i32, i32
  }
}

module attributes {stable_mosaic.version = 11 : i64} {
  func.func @_conv_relu_pool_kernel(%arg0: i32, %arg1: memref<1x64x4096xbf16, #tpu.memory_space<vmem>>, %arg2: memref<12x64xbf16, #tpu.memory_space<vmem>>, %arg3: memref<12x1xf32, #tpu.memory_space<vmem>>, %arg4: memref<1x12x1024xf32, #tpu.memory_space<vmem>>) attributes {dimension_semantics = [#tpu.dimension_semantics<parallel>], iteration_bounds = array<i64: 2>, scalar_prefetch = 0 : i64, scratch_operands = 0 : i64, tpu.core_type = #tpu.core_type<tc>, window_params = [{transform_indices = @transform_0, window_bounds = array<i64: 1, 64, 4096>}, {pipeline_mode = #tpu.pipeline_mode<synchronous>, transform_indices = @transform_1, window_bounds = array<i64: 12, 64>}, {pipeline_mode = #tpu.pipeline_mode<synchronous>, transform_indices = @transform_2, window_bounds = array<i64: 12, 1>}, {transform_indices = @transform_3, window_bounds = array<i64: 1, 12, 1024>}]} {
    %c0 = arith.constant 0 : index
    %c0_0 = arith.constant 0 : index
    %0 = vector.load %arg2[%c0, %c0_0] : memref<12x64xbf16, #tpu.memory_space<vmem>>, vector<12x64xbf16>
    %c0_1 = arith.constant 0 : index
    %c0_2 = arith.constant 0 : index
    %c0_3 = arith.constant 0 : index
    %1 = vector.load %arg1[%c0_1, %c0_2, %c0_3] : memref<1x64x4096xbf16, #tpu.memory_space<vmem>>, vector<1x64x4096xbf16>
    %2 = vector.shape_cast %1 : vector<1x64x4096xbf16> to vector<64x4096xbf16>
    %cst = arith.constant dense<0.000000e+00> : vector<12x4096xf32>
    %3 = tpu.matmul %0, %2, %cst {dimension_numbers = #tpu.dot_dimension_numbers<[1], [0], [0], [1], [0, 0, 1, 1], [], []>} : vector<12x64xbf16>, vector<64x4096xbf16>, vector<12x4096xf32> -> vector<12x4096xf32>
    %c0_4 = arith.constant 0 : index
    %c0_5 = arith.constant 0 : index
    %4 = vector.load %arg3[%c0_4, %c0_5] : memref<12x1xf32, #tpu.memory_space<vmem>>, vector<12x1xf32>
    %5 = vector.broadcast %4 : vector<12x1xf32> to vector<12x4096xf32>
    %6 = arith.addf %3, %5 : vector<12x4096xf32>
    %cst_6 = arith.constant 0.000000e+00 : f32
    %7 = vector.broadcast %cst_6 : f32 to vector<12x4096xf32>
    %8 = arith.maximumf %6, %7 : vector<12x4096xf32>
    %9 = vector.extract_strided_slice %8 {offsets = [0, 0], sizes = [12, 1024], strides = [1, 1]} : vector<12x4096xf32> to vector<12x1024xf32>
    %10 = vector.extract_strided_slice %8 {offsets = [0, 1024], sizes = [12, 1024], strides = [1, 1]} : vector<12x4096xf32> to vector<12x1024xf32>
    %11 = arith.maximumf %9, %10 : vector<12x1024xf32>
    %12 = vector.extract_strided_slice %8 {offsets = [0, 2048], sizes = [12, 1024], strides = [1, 1]} : vector<12x4096xf32> to vector<12x1024xf32>
    %13 = arith.maximumf %11, %12 : vector<12x1024xf32>
    %14 = vector.extract_strided_slice %8 {offsets = [0, 3072], sizes = [12, 1024], strides = [1, 1]} : vector<12x4096xf32> to vector<12x1024xf32>
    %15 = arith.maximumf %13, %14 : vector<12x1024xf32>
    %c0_7 = arith.constant 0 : index
    %c0_8 = arith.constant 0 : index
    %c0_9 = arith.constant 0 : index
    %16 = vector.load %arg4[%c0_7, %c0_8, %c0_9] : memref<1x12x1024xf32, #tpu.memory_space<vmem>>, vector<1x12x1024xf32>
    %17 = vector.shape_cast %16 : vector<1x12x1024xf32> to vector<12x1024xf32>
    %18 = vector.shape_cast %15 : vector<12x1024xf32> to vector<1x12x1024xf32>
    tpu.vector_store %arg4[%c0_7, %c0_8, %c0_9], %18 {strides = array<i32>} : memref<1x12x1024xf32, #tpu.memory_space<vmem>>, vector<1x12x1024xf32>,
    return
  }
  func.func @transform_0(%arg0: i32) -> (i32, i32, i32) {
    %c0_i32 = arith.constant 0 : i32
    %c0_i32_0 = arith.constant 0 : i32
    %c0_i32_1 = arith.constant 0 : i32
    return %arg0, %c0_i32, %c0_i32_0 : i32, i32, i32
  }
  func.func @transform_1(%arg0: i32) -> (i32, i32) {
    %c0_i32 = arith.constant 0 : i32
    %c0_i32_0 = arith.constant 0 : i32
    %c0_i32_1 = arith.constant 0 : i32
    return %c0_i32, %c0_i32_0 : i32, i32
  }
  func.func @transform_2(%arg0: i32) -> (i32, i32) {
    %c0_i32 = arith.constant 0 : i32
    %c0_i32_0 = arith.constant 0 : i32
    %c0_i32_1 = arith.constant 0 : i32
    return %c0_i32, %c0_i32_0 : i32, i32
  }
  func.func @transform_3(%arg0: i32) -> (i32, i32, i32) {
    %c0_i32 = arith.constant 0 : i32
    %c0_i32_0 = arith.constant 0 : i32
    %c0_i32_1 = arith.constant 0 : i32
    return %arg0, %c0_i32, %c0_i32_0 : i32, i32, i32
  }
}

module attributes {stable_mosaic.version = 11 : i64} {
  func.func @_conv_relu_pool_kernel(%arg0: i32, %arg1: memref<1x112x1024xbf16, #tpu.memory_space<vmem>>, %arg2: memref<16x112xbf16, #tpu.memory_space<vmem>>, %arg3: memref<16x1xf32, #tpu.memory_space<vmem>>, %arg4: memref<1x16x256xf32, #tpu.memory_space<vmem>>) attributes {dimension_semantics = [#tpu.dimension_semantics<parallel>], iteration_bounds = array<i64: 2>, scalar_prefetch = 0 : i64, scratch_operands = 0 : i64, tpu.core_type = #tpu.core_type<tc>, window_params = [{transform_indices = @transform_0, window_bounds = array<i64: 1, 112, 1024>}, {pipeline_mode = #tpu.pipeline_mode<synchronous>, transform_indices = @transform_1, window_bounds = array<i64: 16, 112>}, {pipeline_mode = #tpu.pipeline_mode<synchronous>, transform_indices = @transform_2, window_bounds = array<i64: 16, 1>}, {transform_indices = @transform_3, window_bounds = array<i64: 1, 16, 256>}]} {
    %c0 = arith.constant 0 : index
    %c0_0 = arith.constant 0 : index
    %0 = vector.load %arg2[%c0, %c0_0] : memref<16x112xbf16, #tpu.memory_space<vmem>>, vector<16x112xbf16>
    %c0_1 = arith.constant 0 : index
    %c0_2 = arith.constant 0 : index
    %c0_3 = arith.constant 0 : index
    %1 = vector.load %arg1[%c0_1, %c0_2, %c0_3] : memref<1x112x1024xbf16, #tpu.memory_space<vmem>>, vector<1x112x1024xbf16>
    %2 = vector.shape_cast %1 : vector<1x112x1024xbf16> to vector<112x1024xbf16>
    %cst = arith.constant dense<0.000000e+00> : vector<16x1024xf32>
    %3 = tpu.matmul %0, %2, %cst {dimension_numbers = #tpu.dot_dimension_numbers<[1], [0], [0], [1], [0, 0, 1, 1], [], []>} : vector<16x112xbf16>, vector<112x1024xbf16>, vector<16x1024xf32> -> vector<16x1024xf32>
    %c0_4 = arith.constant 0 : index
    %c0_5 = arith.constant 0 : index
    %4 = vector.load %arg3[%c0_4, %c0_5] : memref<16x1xf32, #tpu.memory_space<vmem>>, vector<16x1xf32>
    %5 = vector.broadcast %4 : vector<16x1xf32> to vector<16x1024xf32>
    %6 = arith.addf %3, %5 : vector<16x1024xf32>
    %cst_6 = arith.constant 0.000000e+00 : f32
    %7 = vector.broadcast %cst_6 : f32 to vector<16x1024xf32>
    %8 = arith.maximumf %6, %7 : vector<16x1024xf32>
    %9 = vector.extract_strided_slice %8 {offsets = [0, 0], sizes = [16, 256], strides = [1, 1]} : vector<16x1024xf32> to vector<16x256xf32>
    %10 = vector.extract_strided_slice %8 {offsets = [0, 256], sizes = [16, 256], strides = [1, 1]} : vector<16x1024xf32> to vector<16x256xf32>
    %11 = arith.maximumf %9, %10 : vector<16x256xf32>
    %12 = vector.extract_strided_slice %8 {offsets = [0, 512], sizes = [16, 256], strides = [1, 1]} : vector<16x1024xf32> to vector<16x256xf32>
    %13 = arith.maximumf %11, %12 : vector<16x256xf32>
    %14 = vector.extract_strided_slice %8 {offsets = [0, 768], sizes = [16, 256], strides = [1, 1]} : vector<16x1024xf32> to vector<16x256xf32>
    %15 = arith.maximumf %13, %14 : vector<16x256xf32>
    %c0_7 = arith.constant 0 : index
    %c0_8 = arith.constant 0 : index
    %c0_9 = arith.constant 0 : index
    %16 = vector.load %arg4[%c0_7, %c0_8, %c0_9] : memref<1x16x256xf32, #tpu.memory_space<vmem>>, vector<1x16x256xf32>
    %17 = vector.shape_cast %16 : vector<1x16x256xf32> to vector<16x256xf32>
    %18 = vector.shape_cast %15 : vector<16x256xf32> to vector<1x16x256xf32>
    tpu.vector_store %arg4[%c0_7, %c0_8, %c0_9], %18 {strides = array<i32>} : memref<1x16x256xf32, #tpu.memory_space<vmem>>, vector<1x16x256xf32>,
    return
  }
  func.func @transform_0(%arg0: i32) -> (i32, i32, i32) {
    %c0_i32 = arith.constant 0 : i32
    %c0_i32_0 = arith.constant 0 : i32
    %c0_i32_1 = arith.constant 0 : i32
    return %arg0, %c0_i32, %c0_i32_0 : i32, i32, i32
  }
  func.func @transform_1(%arg0: i32) -> (i32, i32) {
    %c0_i32 = arith.constant 0 : i32
    %c0_i32_0 = arith.constant 0 : i32
    %c0_i32_1 = arith.constant 0 : i32
    return %c0_i32, %c0_i32_0 : i32, i32
  }
  func.func @transform_2(%arg0: i32) -> (i32, i32) {
    %c0_i32 = arith.constant 0 : i32
    %c0_i32_0 = arith.constant 0 : i32
    %c0_i32_1 = arith.constant 0 : i32
    return %c0_i32, %c0_i32_0 : i32, i32
  }
  func.func @transform_3(%arg0: i32) -> (i32, i32, i32) {
    %c0_i32 = arith.constant 0 : i32
    %c0_i32_0 = arith.constant 0 : i32
    %c0_i32_1 = arith.constant 0 : i32
    return %arg0, %c0_i32, %c0_i32_0 : i32, i32, i32
  }
}

module attributes {stable_mosaic.version = 11 : i64} {
  func.func @_mlp_kernel(%arg0: i32, %arg1: memref<2x4096xbf16, #tpu.memory_space<vmem>>, %arg2: memref<4096x120xbf16, #tpu.memory_space<vmem>>, %arg3: memref<1x120xf32, #tpu.memory_space<vmem>>, %arg4: memref<120x84xf32, #tpu.memory_space<vmem>>, %arg5: memref<1x84xf32, #tpu.memory_space<vmem>>, %arg6: memref<84x13xf32, #tpu.memory_space<vmem>>, %arg7: memref<1x13xf32, #tpu.memory_space<vmem>>, %arg8: memref<2x13xf32, #tpu.memory_space<vmem>>) attributes {dimension_semantics = [#tpu.dimension_semantics<arbitrary>], iteration_bounds = array<i64: 1>, scalar_prefetch = 0 : i64, scratch_operands = 0 : i64, tpu.core_type = #tpu.core_type<tc>, window_params = [{pipeline_mode = #tpu.pipeline_mode<synchronous>, transform_indices = @transform_0, window_bounds = array<i64: 2, 4096>}, {pipeline_mode = #tpu.pipeline_mode<synchronous>, transform_indices = @transform_1, window_bounds = array<i64: 4096, 120>}, {pipeline_mode = #tpu.pipeline_mode<synchronous>, transform_indices = @transform_2, window_bounds = array<i64: 1, 120>}, {pipeline_mode = #tpu.pipeline_mode<synchronous>, transform_indices = @transform_3, window_bounds = array<i64: 120, 84>}, {pipeline_mode = #tpu.pipeline_mode<synchronous>, transform_indices = @transform_4, window_bounds = array<i64: 1, 84>}, {pipeline_mode = #tpu.pipeline_mode<synchronous>, transform_indices = @transform_5, window_bounds = array<i64: 84, 13>}, {pipeline_mode = #tpu.pipeline_mode<synchronous>, transform_indices = @transform_6, window_bounds = array<i64: 1, 13>}, {pipeline_mode = #tpu.pipeline_mode<synchronous>, transform_indices = @transform_7, window_bounds = array<i64: 2, 13>}]} {
    %c0 = arith.constant 0 : index
    %c0_0 = arith.constant 0 : index
    %0 = vector.load %arg1[%c0, %c0_0] : memref<2x4096xbf16, #tpu.memory_space<vmem>>, vector<2x4096xbf16>
    %c0_1 = arith.constant 0 : index
    %c0_2 = arith.constant 0 : index
    %1 = vector.load %arg2[%c0_1, %c0_2] : memref<4096x120xbf16, #tpu.memory_space<vmem>>, vector<4096x120xbf16>
    %cst = arith.constant dense<0.000000e+00> : vector<2x120xf32>
    %2 = tpu.matmul %0, %1, %cst {dimension_numbers = #tpu.dot_dimension_numbers<[1], [0], [0], [1], [0, 0, 1, 1], [], []>} : vector<2x4096xbf16>, vector<4096x120xbf16>, vector<2x120xf32> -> vector<2x120xf32>
    %c0_3 = arith.constant 0 : index
    %c0_4 = arith.constant 0 : index
    %3 = vector.load %arg3[%c0_3, %c0_4] : memref<1x120xf32, #tpu.memory_space<vmem>>, vector<1x120xf32>
    %4 = vector.broadcast %3 : vector<1x120xf32> to vector<2x120xf32>
    %5 = arith.addf %2, %4 : vector<2x120xf32>
    %cst_5 = arith.constant 0.000000e+00 : f32
    %6 = vector.broadcast %cst_5 : f32 to vector<2x120xf32>
    %7 = arith.maximumf %5, %6 : vector<2x120xf32>
    %c0_6 = arith.constant 0 : index
    %c0_7 = arith.constant 0 : index
    %8 = vector.load %arg4[%c0_6, %c0_7] : memref<120x84xf32, #tpu.memory_space<vmem>>, vector<120x84xf32>
    %cst_8 = arith.constant dense<0.000000e+00> : vector<2x84xf32>
    %9 = tpu.matmul %7, %8, %cst_8 {dimension_numbers = #tpu.dot_dimension_numbers<[1], [0], [0], [1], [0, 0, 1, 1], [], []>} : vector<2x120xf32>, vector<120x84xf32>, vector<2x84xf32> -> vector<2x84xf32>
    %c0_9 = arith.constant 0 : index
    %c0_10 = arith.constant 0 : index
    %10 = vector.load %arg5[%c0_9, %c0_10] : memref<1x84xf32, #tpu.memory_space<vmem>>, vector<1x84xf32>
    %11 = vector.broadcast %10 : vector<1x84xf32> to vector<2x84xf32>
    %12 = arith.addf %9, %11 : vector<2x84xf32>
    %cst_11 = arith.constant 0.000000e+00 : f32
    %13 = vector.broadcast %cst_11 : f32 to vector<2x84xf32>
    %14 = arith.maximumf %12, %13 : vector<2x84xf32>
    %c0_12 = arith.constant 0 : index
    %c0_13 = arith.constant 0 : index
    %15 = vector.load %arg6[%c0_12, %c0_13] : memref<84x13xf32, #tpu.memory_space<vmem>>, vector<84x13xf32>
    %cst_14 = arith.constant dense<0.000000e+00> : vector<2x13xf32>
    %16 = tpu.matmul %14, %15, %cst_14 {dimension_numbers = #tpu.dot_dimension_numbers<[1], [0], [0], [1], [0, 0, 1, 1], [], []>} : vector<2x84xf32>, vector<84x13xf32>, vector<2x13xf32> -> vector<2x13xf32>
    %c0_15 = arith.constant 0 : index
    %c0_16 = arith.constant 0 : index
    %17 = vector.load %arg7[%c0_15, %c0_16] : memref<1x13xf32, #tpu.memory_space<vmem>>, vector<1x13xf32>
    %18 = vector.broadcast %17 : vector<1x13xf32> to vector<2x13xf32>
    %19 = arith.addf %16, %18 : vector<2x13xf32>
    %c0_17 = arith.constant 0 : index
    %c0_18 = arith.constant 0 : index
    %20 = vector.load %arg8[%c0_17, %c0_18] : memref<2x13xf32, #tpu.memory_space<vmem>>, vector<2x13xf32>
    tpu.vector_store %arg8[%c0_17, %c0_18], %19 {strides = array<i32>} : memref<2x13xf32, #tpu.memory_space<vmem>>, vector<2x13xf32>,
    return
  }
  func.func @transform_0(%arg0: i32) -> (i32, i32) {
    %c0_i32 = arith.constant 0 : i32
    %c0_i32_0 = arith.constant 0 : i32
    %c0_i32_1 = arith.constant 0 : i32
    return %c0_i32, %c0_i32_0 : i32, i32
  }
  func.func @transform_1(%arg0: i32) -> (i32, i32) {
    %c0_i32 = arith.constant 0 : i32
    %c0_i32_0 = arith.constant 0 : i32
    %c0_i32_1 = arith.constant 0 : i32
    return %c0_i32, %c0_i32_0 : i32, i32
  }
  func.func @transform_2(%arg0: i32) -> (i32, i32) {
    %c0_i32 = arith.constant 0 : i32
    %c0_i32_0 = arith.constant 0 : i32
    %c0_i32_1 = arith.constant 0 : i32
    return %c0_i32, %c0_i32_0 : i32, i32
  }
  func.func @transform_3(%arg0: i32) -> (i32, i32) {
    %c0_i32 = arith.constant 0 : i32
    %c0_i32_0 = arith.constant 0 : i32
    %c0_i32_1 = arith.constant 0 : i32
    return %c0_i32, %c0_i32_0 : i32, i32
  }
  func.func @transform_4(%arg0: i32) -> (i32, i32) {
    %c0_i32 = arith.constant 0 : i32
    %c0_i32_0 = arith.constant 0 : i32
    %c0_i32_1 = arith.constant 0 : i32
    return %c0_i32, %c0_i32_0 : i32, i32
  }
  func.func @transform_5(%arg0: i32) -> (i32, i32) {
    %c0_i32 = arith.constant 0 : i32
    %c0_i32_0 = arith.constant 0 : i32
    %c0_i32_1 = arith.constant 0 : i32
    return %c0_i32, %c0_i32_0 : i32, i32
  }
  func.func @transform_6(%arg0: i32) -> (i32, i32) {
    %c0_i32 = arith.constant 0 : i32
    %c0_i32_0 = arith.constant 0 : i32
    %c0_i32_1 = arith.constant 0 : i32
    return %c0_i32, %c0_i32_0 : i32, i32
  }
  func.func @transform_7(%arg0: i32) -> (i32, i32) {
    %c0_i32 = arith.constant 0 : i32
    %c0_i32_0 = arith.constant 0 : i32
    %c0_i32_1 = arith.constant 0 : i32
    return %c0_i32, %c0_i32_0 : i32, i32
  }
}

</mosaic_0001>

<llo_original>
// kernel: forward.4
$region0: #{forward.4}
  #allocation0 [shape = 'u32[]', space=smem, size = 0x4, offset = 0x4, fixed_abs, tag = 'smem constant byte address 0x4 - core index']
  #allocation1 [shape = 'u32[144,128]{1,0:T(1,128)}', space=vmem, size = 0x12000, scoped, tag = 'internal scratch']
  %s0 = inlined_call_operand.vmem [shape: bf16[2,80,16384], index: 0, kind: input, shape index: {}]
  %s1 = inlined_call_operand.vmem [shape: bf16[6,80], index: 1, kind: input, shape index: {}]
  %s2 = inlined_call_operand.vmem [shape: f32[6,1], index: 2, kind: input, shape index: {}]
  %s3 = inlined_call_operand.vmem [shape: f32[2,6,4096], index: 3, kind: output, shape index: {}]
  %s4 = sld [smem:[#allocation0]]
  $region45: #{forward.4} parent=0
    _
  %s6 = ssub.s32 1, %s4
  %s7 = scalar_select 0, %s6, %s4
  loop: start=0, step=1, limit=4
  $region2: #{forward.4} parent=0 // loop_pre_header
    _
  $region3: #{forward.4} parent=0 // loop_header
    %s9 = sphi 0, %s13
    %p10 = scmp.ge.s32.totalorder %s9, 4
    %s19 = sphi 0, %s21
    %s22 = sphi 0, %s19
    %s23 = sphi 0, %s22
    %s39 = sphi 0, %s23
    %s43 = sphi 0, %s43
    %s45 = sphi 0, %s43
    %s46 = sphi 0, %s45
    %s60 = sphi 0, %s46
    %s64 = sphi 0, %s64
    %s66 = sphi 0, %s64
    %s67 = sphi 0, %s66
    %s81 = sphi 0, %s67
    %s87 = sphi 0, %s89
    %s90 = sphi 0, %s87
    %s91 = sphi 0, %s90
    %s107 = sphi 0, %s91
  $region4: #{forward.4} parent=0 // loop_header_branch
    %12 = sbr.rel (%p10) target = $region8
  $region5: #{forward.4} parent=0 // loop_body
    %s14 = ssub.s32 %s9, 1
    %s15 = ssub.s32 %s9, 2
    %s16 = sadd.s32 %s9, 1
    %s17 = ssub.s32 %s9, %s16
    %p18 = scmp.eq.s32.totalorder %s17, 0
    %s20 = sadd.s32 %s19, 1
    %s21 = scalar_select %p18, %s19, %s20
    %p24 = pneg %p18
    %p25 = scmp.eq.s32.totalorder %s9, 1
    %p26 = por %p24, %p25
    %p27 = scmp.ne.s32.totalorder %s19, %s22
    %p28 = scmp.eq.s32.totalorder %s9, 0
    %p29 = por %p27, %p28
    %p30 = scmp.ne.s32.totalorder %s19, %s22
    %p31 = scmp.eq.s32.totalorder %s14, 1
    %p32 = por %p30, %p31
    %p33 = scmp.ne.s32.totalorder %s22, %s23
    %p34 = scmp.eq.s32.totalorder %s14, 0
    %p35 = por %p33, %p34
    %p36 = scmp.ne.s32.totalorder %s22, %s23
    %p37 = scmp.eq.s32.totalorder %s15, 1
    %p38 = por %p36, %p37
    %p40 = scmp.ne.s32.totalorder %s23, %s39
    %p41 = scmp.eq.s32.totalorder %s15, 0
    %p42 = por %p40, %p41
    %s44 = sadd.s32 %s43, 1
    %p47 = scmp.eq.s32.totalorder %s9, 1
    %p48 = scmp.ne.s32.totalorder %s43, %s45
    %p49 = scmp.eq.s32.totalorder %s9, 0
    %p50 = por %p48, %p49
    %p51 = scmp.ne.s32.totalorder %s43, %s45
    %p52 = scmp.eq.s32.totalorder %s14, 1
    %p53 = por %p51, %p52
    %p54 = scmp.ne.s32.totalorder %s45, %s46
    %p55 = scmp.eq.s32.totalorder %s14, 0
    %p56 = por %p54, %p55
    %p57 = scmp.ne.s32.totalorder %s45, %s46
    %p58 = scmp.eq.s32.totalorder %s15, 1
    %p59 = por %p57, %p58
    %p61 = scmp.ne.s32.totalorder %s46, %s60
    %p62 = scmp.eq.s32.totalorder %s15, 0
    %p63 = por %p61, %p62
    %s65 = sadd.s32 %s64, 1
    %p68 = scmp.eq.s32.totalorder %s9, 1
    %p69 = scmp.ne.s32.totalorder %s64, %s66
    %p70 = scmp.eq.s32.totalorder %s9, 0
    %p71 = por %p69, %p70
    %p72 = scmp.ne.s32.totalorder %s64, %s66
    %p73 = scmp.eq.s32.totalorder %s14, 1
    %p74 = por %p72, %p73
    %p75 = scmp.ne.s32.totalorder %s66, %s67
    %p76 = scmp.eq.s32.totalorder %s14, 0
    %p77 = por %p75, %p76
    %p78 = scmp.ne.s32.totalorder %s66, %s67
    %p79 = scmp.eq.s32.totalorder %s15, 1
    %p80 = por %p78, %p79
    %p82 = scmp.ne.s32.totalorder %s67, %s81
    %p83 = scmp.eq.s32.totalorder %s15, 0
    %p84 = por %p82, %p83
    %s85 = ssub.s32 %s9, %s16
    %p86 = scmp.eq.s32.totalorder %s85, 0
    %s88 = sadd.s32 %s87, 1
    %s89 = scalar_select %p86, %s87, %s88
    %p92 = pneg %p86
    %p93 = scmp.eq.s32.totalorder %s9, 1
    %p94 = por %p92, %p93
    %p95 = scmp.ne.s32.totalorder %s87, %s90
    %p96 = scmp.eq.s32.totalorder %s9, 0
    %p97 = por %p95, %p96
    %p98 = scmp.ne.s32.totalorder %s87, %s90
    %p99 = scmp.eq.s32.totalorder %s14, 1
    %p100 = por %p98, %p99
    %p101 = scmp.ne.s32.totalorder %s90, %s91
    %p102 = scmp.eq.s32.totalorder %s14, 0
    %p103 = por %p101, %p102
    %p104 = scmp.ne.s32.totalorder %s90, %s91
    %p105 = scmp.eq.s32.totalorder %s15, 1
    %p106 = por %p104, %p105
    %p108 = scmp.ne.s32.totalorder %s91, %s107
    %p109 = scmp.eq.s32.totalorder %s15, 0
    %p110 = por %p108, %p109
    %p111 = scmp.le.s32.totalorder 1, %s9
    %p112 = scmp.lt.s32.totalorder %s9, 3
    %p113 = pnand %p111, %p112
    %p114 = pneg %p113
    // Predicated region
    $region9: #{forward.4} parent=5 // pred_check
      _
    $region10: #{forward.4} parent=5 // pred_check_branch
      %116 = sbr.rel (%p113) target = $region12
    $region11: #{forward.4} parent=5 // pred_region
      %s117 = ssub.s32 %s9, 1
      // Predicated region
      $region13: #{forward.4} parent=11 // pred_check
        %p118 = pneg %p56
      $region14: #{forward.4} parent=11 // pred_check_branch
        %120 = sbr.rel (%p118) target = $region16
      $region15: #{forward.4} parent=11 // pred_region
        _
      $region16: #{forward.4} parent=11 // pred_fallthru
        _
      // Predicated region
      $region17: #{forward.4} parent=11 // pred_check
        %p121 = pneg %p77
      $region18: #{forward.4} parent=11 // pred_check_branch
        %123 = sbr.rel (%p121) target = $region20
      $region19: #{forward.4} parent=11 // pred_region
        _
      $region20: #{forward.4} parent=11 // pred_fallthru
        _
    $region12: #{forward.4} parent=5 // pred_fallthru
      _
    %p124 = scmp.lt.s32.totalorder %s9, 2
    // Predicated region
    $region21: #{forward.4} parent=5 // pred_check
      %p125 = pneg %p124
    $region22: #{forward.4} parent=5 // pred_check_branch
      %127 = sbr.rel (%p125) target = $region24
    $region23: #{forward.4} parent=5 // pred_region
      // Predicated region
      $region25: #{forward.4} parent=23 // pred_check
        %p128 = pneg %p29
      $region26: #{forward.4} parent=23 // pred_check_branch
        %130 = sbr.rel (%p128) target = $region28
      $region27: #{forward.4} parent=23 // pred_region
        %p131 = scmp.lt.s32.totalorder %s9, 1
        %s132 = scalar_select %p131, %s9, 1
        %s133 = smul.addr %s132, 1280
        %s134 = smul.addr %s133, 4
        %s135 = scalar_lea.vmem %s0, %s134
      $region28: #{forward.4} parent=23 // pred_fallthru
        _
    $region24: #{forward.4} parent=5 // pred_fallthru
      _
    %p136 = scmp.le.s32.totalorder 1, %s9
    %p137 = scmp.lt.s32.totalorder %s9, 3
    %p138 = pnand %p136, %p137
    %p139 = pneg %p138
    // Predicated region
    $region29: #{forward.4} parent=5 // pred_check
      _
    $region30: #{forward.4} parent=5 // pred_check_branch
      %141 = sbr.rel (%p138) target = $region32
    $region31: #{forward.4} parent=5 // pred_region
      %s142 = ssub.s32 %s9, 1
      %p143 = scmp.lt.s32.totalorder %s14, 1
      %s144 = scalar_select %p143, %s14, 1
      %s145 = smul.addr %s144, 1280
      %s146 = smul.addr %s145, 4
      %s147 = scalar_lea.vmem %s0, %s146
      %p148 = pneg %p35
      %p149 = pneg %p32
      %p150 = pneg %p56
      %p151 = pneg %p53
      %p152 = pneg %p77
      %p153 = pneg %p74
      %p154 = pneg %p103
      %p155 = pneg %p100
      %p156 = scmp.lt.s32.totalorder %s14, 1
      %s157 = scalar_select %p156, %s14, 1
      %s158 = smul.addr %s157, 32
      %s159 = smul.addr %s158, 8
      %s160 = scalar_lea.vmem %s3, %s159
      %p161 = scmp.lt.s32.totalorder %s14, 1
      %s162 = scalar_select %p161, %s14, 1
      %s163 = smul.addr %s162, 1280
      %s164 = smul.addr %s163, 4
      %s165 = scalar_lea.vmem %s0, %s164
      %p166 = scmp.lt.s32.totalorder %s14, 1
      %s167 = scalar_select %p166, %s14, 1
      %s168 = smul.addr %s167, 32
      %s169 = smul.addr %s168, 8
      %s170 = scalar_lea.vmem %s3, %s169
      %v172 = vld [vmem:[%s1] sm:$0x7]
      %v173 = vld [vmem:[%s165] sm:$0xff]
      %v174 = vld [vmem:[%s165 + $0x8] sm:$0xff]
      %v175 = vld [vmem:[%s165 + $0x10] sm:$0xff]
      %v176 = vld [vmem:[%s165 + $0x18] sm:$0xff]
      %v177 = vld [vmem:[%s165 + $0x20] sm:$0xff]
      %v178 = vld [vmem:[%s165 + $0x28] sm:$0xff]
      %v179 = vld [vmem:[%s165 + $0x30] sm:$0xff]
      %v180 = vld [vmem:[%s165 + $0x38] sm:$0xff]
      %v181 = vld [vmem:[%s165 + $0x40] sm:$0xff]
      %v182 = vld [vmem:[%s165 + $0x48] sm:$0xff]
      %v183 = vld [vmem:[%s165 + $0x50] sm:$0xff]
      %v184 = vld [vmem:[%s165 + $0x58] sm:$0xff]
      %v185 = vld [vmem:[%s165 + $0x60] sm:$0xff]
      %v186 = vld [vmem:[%s165 + $0x68] sm:$0xff]
      %v187 = vld [vmem:[%s165 + $0x70] sm:$0xff]
      %v188 = vld [vmem:[%s165 + $0x78] sm:$0xff]
      %v189 = vld [vmem:[%s165 + $0x80] sm:$0xff]
      %v190 = vld [vmem:[%s165 + $0x88] sm:$0xff]
      %v191 = vld [vmem:[%s165 + $0x90] sm:$0xff]
      %v192 = vld [vmem:[%s165 + $0x98] sm:$0xff]
      %v193 = vld [vmem:[%s165 + $0xa0] sm:$0xff]
      %v194 = vld [vmem:[%s165 + $0xa8] sm:$0xff]
      %v195 = vld [vmem:[%s165 + $0xb0] sm:$0xff]
      %v196 = vld [vmem:[%s165 + $0xb8] sm:$0xff]
      %v197 = vld [vmem:[%s165 + $0xc0] sm:$0xff]
      %v198 = vld [vmem:[%s165 + $0xc8] sm:$0xff]
      %v199 = vld [vmem:[%s165 + $0xd0] sm:$0xff]
      %v200 = vld [vmem:[%s165 + $0xd8] sm:$0xff]
      %v201 = vld [vmem:[%s165 + $0xe0] sm:$0xff]
      %v202 = vld [vmem:[%s165 + $0xe8] sm:$0xff]
      %v203 = vld [vmem:[%s165 + $0xf0] sm:$0xff]
      %v204 = vld [vmem:[%s165 + $0xf8] sm:$0xff]
      %v205 = vld [vmem:[%s165 + $0x100] sm:$0xff]
      %v206 = vld [vmem:[%s165 + $0x108] sm:$0xff]
      %v207 = vld [vmem:[%s165 + $0x110] sm:$0xff]
      %v208 = vld [vmem:[%s165 + $0x118] sm:$0xff]
      %v209 = vld [vmem:[%s165 + $0x120] sm:$0xff]
      %v210 = vld [vmem:[%s165 + $0x128] sm:$0xff]
      %v211 = vld [vmem:[%s165 + $0x130] sm:$0xff]
      %v212 = vld [vmem:[%s165 + $0x138] sm:$0xff]
      %v213 = vld [vmem:[%s165 + $0x140] sm:$0xff]
      %v214 = vld [vmem:[%s165 + $0x148] sm:$0xff]
      %v215 = vld [vmem:[%s165 + $0x150] sm:$0xff]
      %v216 = vld [vmem:[%s165 + $0x158] sm:$0xff]
      %v217 = vld [vmem:[%s165 + $0x160] sm:$0xff]
      %v218 = vld [vmem:[%s165 + $0x168] sm:$0xff]
      %v219 = vld [vmem:[%s165 + $0x170] sm:$0xff]
      %v220 = vld [vmem:[%s165 + $0x178] sm:$0xff]
      %v221 = vld [vmem:[%s165 + $0x180] sm:$0xff]
      %v222 = vld [vmem:[%s165 + $0x188] sm:$0xff]
      %v223 = vld [vmem:[%s165 + $0x190] sm:$0xff]
      %v224 = vld [vmem:[%s165 + $0x198] sm:$0xff]
      %v225 = vld [vmem:[%s165 + $0x1a0] sm:$0xff]
      %v226 = vld [vmem:[%s165 + $0x1a8] sm:$0xff]
      %v227 = vld [vmem:[%s165 + $0x1b0] sm:$0xff]
      %v228 = vld [vmem:[%s165 + $0x1b8] sm:$0xff]
      %v229 = vld [vmem:[%s165 + $0x1c0] sm:$0xff]
      %v230 = vld [vmem:[%s165 + $0x1c8] sm:$0xff]
      %v231 = vld [vmem:[%s165 + $0x1d0] sm:$0xff]
      %v232 = vld [vmem:[%s165 + $0x1d8] sm:$0xff]
      %v233 = vld [vmem:[%s165 + $0x1e0] sm:$0xff]
      %v234 = vld [vmem:[%s165 + $0x1e8] sm:$0xff]
      %v235 = vld [vmem:[%s165 + $0x1f0] sm:$0xff]
      %v236 = vld [vmem:[%s165 + $0x1f8] sm:$0xff]
      %v237 = vld [vmem:[%s165 + $0x200] sm:$0xff]
      %v238 = vld [vmem:[%s165 + $0x208] sm:$0xff]
      %v239 = vld [vmem:[%s165 + $0x210] sm:$0xff]
      %v240 = vld [vmem:[%s165 + $0x218] sm:$0xff]
      %v241 = vld [vmem:[%s165 + $0x220] sm:$0xff]
      %v242 = vld [vmem:[%s165 + $0x228] sm:$0xff]
      %v243 = vld [vmem:[%s165 + $0x230] sm:$0xff]
      %v244 = vld [vmem:[%s165 + $0x238] sm:$0xff]
      %v245 = vld [vmem:[%s165 + $0x240] sm:$0xff]
      %v246 = vld [vmem:[%s165 + $0x248] sm:$0xff]
      %v247 = vld [vmem:[%s165 + $0x250] sm:$0xff]
      %v248 = vld [vmem:[%s165 + $0x258] sm:$0xff]
      %v249 = vld [vmem:[%s165 + $0x260] sm:$0xff]
      %v250 = vld [vmem:[%s165 + $0x268] sm:$0xff]
      %v251 = vld [vmem:[%s165 + $0x270] sm:$0xff]
      %v252 = vld [vmem:[%s165 + $0x278] sm:$0xff]
      %v253 = vld [vmem:[%s165 + $0x280] sm:$0xff]
      %v254 = vld [vmem:[%s165 + $0x288] sm:$0xff]
      %v255 = vld [vmem:[%s165 + $0x290] sm:$0xff]
      %v256 = vld [vmem:[%s165 + $0x298] sm:$0xff]
      %v257 = vld [vmem:[%s165 + $0x2a0] sm:$0xff]
      %v258 = vld [vmem:[%s165 + $0x2a8] sm:$0xff]
      %v259 = vld [vmem:[%s165 + $0x2b0] sm:$0xff]
      %v260 = vld [vmem:[%s165 + $0x2b8] sm:$0xff]
      %v261 = vld [vmem:[%s165 + $0x2c0] sm:$0xff]
      %v262 = vld [vmem:[%s165 + $0x2c8] sm:$0xff]
      %v263 = vld [vmem:[%s165 + $0x2d0] sm:$0xff]
      %v264 = vld [vmem:[%s165 + $0x2d8] sm:$0xff]
      %v265 = vld [vmem:[%s165 + $0x2e0] sm:$0xff]
      %v266 = vld [vmem:[%s165 + $0x2e8] sm:$0xff]
      %v267 = vld [vmem:[%s165 + $0x2f0] sm:$0xff]
      %v268 = vld [vmem:[%s165 + $0x2f8] sm:$0xff]
      %v269 = vld [vmem:[%s165 + $0x300] sm:$0xff]
      %v270 = vld [vmem:[%s165 + $0x308] sm:$0xff]
      %v271 = vld [vmem:[%s165 + $0x310] sm:$0xff]
      %v272 = vld [vmem:[%s165 + $0x318] sm:$0xff]
      %v273 = vld [vmem:[%s165 + $0x320] sm:$0xff]
      %v274 = vld [vmem:[%s165 + $0x328] sm:$0xff]
      %v275 = vld [vmem:[%s165 + $0x330] sm:$0xff]
      %v276 = vld [vmem:[%s165 + $0x338] sm:$0xff]
      %v277 = vld [vmem:[%s165 + $0x340] sm:$0xff]
      %v278 = vld [vmem:[%s165 + $0x348] sm:$0xff]
      %v279 = vld [vmem:[%s165 + $0x350] sm:$0xff]
      %v280 = vld [vmem:[%s165 + $0x358] sm:$0xff]
      %v281 = vld [vmem:[%s165 + $0x360] sm:$0xff]
      %v282 = vld [vmem:[%s165 + $0x368] sm:$0xff]
      %v283 = vld [vmem:[%s165 + $0x370] sm:$0xff]
      %v284 = vld [vmem:[%s165 + $0x378] sm:$0xff]
      %v285 = vld [vmem:[%s165 + $0x380] sm:$0xff]
      %v286 = vld [vmem:[%s165 + $0x388] sm:$0xff]
      %v287 = vld [vmem:[%s165 + $0x390] sm:$0xff]
      %v288 = vld [vmem:[%s165 + $0x398] sm:$0xff]
      %v289 = vld [vmem:[%s165 + $0x3a0] sm:$0xff]
      %v290 = vld [vmem:[%s165 + $0x3a8] sm:$0xff]
      %v291 = vld [vmem:[%s165 + $0x3b0] sm:$0xff]
      %v292 = vld [vmem:[%s165 + $0x3b8] sm:$0xff]
      %v293 = vld [vmem:[%s165 + $0x3c0] sm:$0xff]
      %v294 = vld [vmem:[%s165 + $0x3c8] sm:$0xff]
      %v295 = vld [vmem:[%s165 + $0x3d0] sm:$0xff]
      %v296 = vld [vmem:[%s165 + $0x3d8] sm:$0xff]
      %v297 = vld [vmem:[%s165 + $0x3e0] sm:$0xff]
      %v298 = vld [vmem:[%s165 + $0x3e8] sm:$0xff]
      %v299 = vld [vmem:[%s165 + $0x3f0] sm:$0xff]
      %v300 = vld [vmem:[%s165 + $0x3f8] sm:$0xff]
      %v301 = vld [vmem:[%s165 + $0x400] sm:$0xff]
      %v302 = vld [vmem:[%s165 + $0x408] sm:$0xff]
      %v303 = vld [vmem:[%s165 + $0x410] sm:$0xff]
      %v304 = vld [vmem:[%s165 + $0x418] sm:$0xff]
      %v305 = vld [vmem:[%s165 + $0x420] sm:$0xff]
      %v306 = vld [vmem:[%s165 + $0x428] sm:$0xff]
      %v307 = vld [vmem:[%s165 + $0x430] sm:$0xff]
      %v308 = vld [vmem:[%s165 + $0x438] sm:$0xff]
      %v309 = vld [vmem:[%s165 + $0x440] sm:$0xff]
      %v310 = vld [vmem:[%s165 + $0x448] sm:$0xff]
      %v311 = vld [vmem:[%s165 + $0x450] sm:$0xff]
      %v312 = vld [vmem:[%s165 + $0x458] sm:$0xff]
      %v313 = vld [vmem:[%s165 + $0x460] sm:$0xff]
      %v314 = vld [vmem:[%s165 + $0x468] sm:$0xff]
      %v315 = vld [vmem:[%s165 + $0x470] sm:$0xff]
      %v316 = vld [vmem:[%s165 + $0x478] sm:$0xff]
      %v317 = vld [vmem:[%s165 + $0x480] sm:$0xff]
      %v318 = vld [vmem:[%s165 + $0x488] sm:$0xff]
      %v319 = vld [vmem:[%s165 + $0x490] sm:$0xff]
      %v320 = vld [vmem:[%s165 + $0x498] sm:$0xff]
      %v321 = vld [vmem:[%s165 + $0x4a0] sm:$0xff]
      %v322 = vld [vmem:[%s165 + $0x4a8] sm:$0xff]
      %v323 = vld [vmem:[%s165 + $0x4b0] sm:$0xff]
      %v324 = vld [vmem:[%s165 + $0x4b8] sm:$0xff]
      %v325 = vld [vmem:[%s165 + $0x4c0] sm:$0xff]
      %v326 = vld [vmem:[%s165 + $0x4c8] sm:$0xff]
      %v327 = vld [vmem:[%s165 + $0x4d0] sm:$0xff]
      %v328 = vld [vmem:[%s165 + $0x4d8] sm:$0xff]
      %v329 = vld [vmem:[%s165 + $0x4e0] sm:$0xff]
      %v330 = vld [vmem:[%s165 + $0x4e8] sm:$0xff]
      %v331 = vld [vmem:[%s165 + $0x4f0] sm:$0xff]
      %v332 = vld [vmem:[%s165 + $0x4f8] sm:$0xff]
      %v333 = vld [vmem:[%s165 + $0x500] sm:$0xff]
      %v334 = vld [vmem:[%s165 + $0x508] sm:$0xff]
      %v335 = vld [vmem:[%s165 + $0x510] sm:$0xff]
      %v336 = vld [vmem:[%s165 + $0x518] sm:$0xff]
      %v337 = vld [vmem:[%s165 + $0x520] sm:$0xff]
      %v338 = vld [vmem:[%s165 + $0x528] sm:$0xff]
      %v339 = vld [vmem:[%s165 + $0x530] sm:$0xff]
      %v340 = vld [vmem:[%s165 + $0x538] sm:$0xff]
      %v341 = vld [vmem:[%s165 + $0x540] sm:$0xff]
      %v342 = vld [vmem:[%s165 + $0x548] sm:$0xff]
      %v343 = vld [vmem:[%s165 + $0x550] sm:$0xff]
      %v344 = vld [vmem:[%s165 + $0x558] sm:$0xff]
      %v345 = vld [vmem:[%s165 + $0x560] sm:$0xff]
      %v346 = vld [vmem:[%s165 + $0x568] sm:$0xff]
      %v347 = vld [vmem:[%s165 + $0x570] sm:$0xff]
      %v348 = vld [vmem:[%s165 + $0x578] sm:$0xff]
      %v349 = vld [vmem:[%s165 + $0x580] sm:$0xff]
      %v350 = vld [vmem:[%s165 + $0x588] sm:$0xff]
      %v351 = vld [vmem:[%s165 + $0x590] sm:$0xff]
      %v352 = vld [vmem:[%s165 + $0x598] sm:$0xff]
      %v353 = vld [vmem:[%s165 + $0x5a0] sm:$0xff]
      %v354 = vld [vmem:[%s165 + $0x5a8] sm:$0xff]
      %v355 = vld [vmem:[%s165 + $0x5b0] sm:$0xff]
      %v356 = vld [vmem:[%s165 + $0x5b8] sm:$0xff]
      %v357 = vld [vmem:[%s165 + $0x5c0] sm:$0xff]
      %v358 = vld [vmem:[%s165 + $0x5c8] sm:$0xff]
      %v359 = vld [vmem:[%s165 + $0x5d0] sm:$0xff]
      %v360 = vld [vmem:[%s165 + $0x5d8] sm:$0xff]
      %v361 = vld [vmem:[%s165 + $0x5e0] sm:$0xff]
      %v362 = vld [vmem:[%s165 + $0x5e8] sm:$0xff]
      %v363 = vld [vmem:[%s165 + $0x5f0] sm:$0xff]
      %v364 = vld [vmem:[%s165 + $0x5f8] sm:$0xff]
      %v365 = vld [vmem:[%s165 + $0x600] sm:$0xff]
      %v366 = vld [vmem:[%s165 + $0x608] sm:$0xff]
      %v367 = vld [vmem:[%s165 + $0x610] sm:$0xff]
      %v368 = vld [vmem:[%s165 + $0x618] sm:$0xff]
      %v369 = vld [vmem:[%s165 + $0x620] sm:$0xff]
      %v370 = vld [vmem:[%s165 + $0x628] sm:$0xff]
      %v371 = vld [vmem:[%s165 + $0x630] sm:$0xff]
      %v372 = vld [vmem:[%s165 + $0x638] sm:$0xff]
      %v373 = vld [vmem:[%s165 + $0x640] sm:$0xff]
      %v374 = vld [vmem:[%s165 + $0x648] sm:$0xff]
      %v375 = vld [vmem:[%s165 + $0x650] sm:$0xff]
      %v376 = vld [vmem:[%s165 + $0x658] sm:$0xff]
      %v377 = vld [vmem:[%s165 + $0x660] sm:$0xff]
      %v378 = vld [vmem:[%s165 + $0x668] sm:$0xff]
      %v379 = vld [vmem:[%s165 + $0x670] sm:$0xff]
      %v380 = vld [vmem:[%s165 + $0x678] sm:$0xff]
      %v381 = vld [vmem:[%s165 + $0x680] sm:$0xff]
      %v382 = vld [vmem:[%s165 + $0x688] sm:$0xff]
      %v383 = vld [vmem:[%s165 + $0x690] sm:$0xff]
      %v384 = vld [vmem:[%s165 + $0x698] sm:$0xff]
      %v385 = vld [vmem:[%s165 + $0x6a0] sm:$0xff]
      %v386 = vld [vmem:[%s165 + $0x6a8] sm:$0xff]
      %v387 = vld [vmem:[%s165 + $0x6b0] sm:$0xff]
      %v388 = vld [vmem:[%s165 + $0x6b8] sm:$0xff]
      %v389 = vld [vmem:[%s165 + $0x6c0] sm:$0xff]
      %v390 = vld [vmem:[%s165 + $0x6c8] sm:$0xff]
      %v391 = vld [vmem:[%s165 + $0x6d0] sm:$0xff]
      %v392 = vld [vmem:[%s165 + $0x6d8] sm:$0xff]
      %v393 = vld [vmem:[%s165 + $0x6e0] sm:$0xff]
      %v394 = vld [vmem:[%s165 + $0x6e8] sm:$0xff]
      %v395 = vld [vmem:[%s165 + $0x6f0] sm:$0xff]
      %v396 = vld [vmem:[%s165 + $0x6f8] sm:$0xff]
      %v397 = vld [vmem:[%s165 + $0x700] sm:$0xff]
      %v398 = vld [vmem:[%s165 + $0x708] sm:$0xff]
      %v399 = vld [vmem:[%s165 + $0x710] sm:$0xff]
      %v400 = vld [vmem:[%s165 + $0x718] sm:$0xff]
      %v401 = vld [vmem:[%s165 + $0x720] sm:$0xff]
      %v402 = vld [vmem:[%s165 + $0x728] sm:$0xff]
      %v403 = vld [vmem:[%s165 + $0x730] sm:$0xff]
      %v404 = vld [vmem:[%s165 + $0x738] sm:$0xff]
      %v405 = vld [vmem:[%s165 + $0x740] sm:$0xff]
      %v406 = vld [vmem:[%s165 + $0x748] sm:$0xff]
      %v407 = vld [vmem:[%s165 + $0x750] sm:$0xff]
      %v408 = vld [vmem:[%s165 + $0x758] sm:$0xff]
      %v409 = vld [vmem:[%s165 + $0x760] sm:$0xff]
      %v410 = vld [vmem:[%s165 + $0x768] sm:$0xff]
      %v411 = vld [vmem:[%s165 + $0x770] sm:$0xff]
      %v412 = vld [vmem:[%s165 + $0x778] sm:$0xff]
      %v413 = vld [vmem:[%s165 + $0x780] sm:$0xff]
      %v414 = vld [vmem:[%s165 + $0x788] sm:$0xff]
      %v415 = vld [vmem:[%s165 + $0x790] sm:$0xff]
      %v416 = vld [vmem:[%s165 + $0x798] sm:$0xff]
      %v417 = vld [vmem:[%s165 + $0x7a0] sm:$0xff]
      %v418 = vld [vmem:[%s165 + $0x7a8] sm:$0xff]
      %v419 = vld [vmem:[%s165 + $0x7b0] sm:$0xff]
      %v420 = vld [vmem:[%s165 + $0x7b8] sm:$0xff]
      %v421 = vld [vmem:[%s165 + $0x7c0] sm:$0xff]
      %v422 = vld [vmem:[%s165 + $0x7c8] sm:$0xff]
      %v423 = vld [vmem:[%s165 + $0x7d0] sm:$0xff]
      %v424 = vld [vmem:[%s165 + $0x7d8] sm:$0xff]
      %v425 = vld [vmem:[%s165 + $0x7e0] sm:$0xff]
      %v426 = vld [vmem:[%s165 + $0x7e8] sm:$0xff]
      %v427 = vld [vmem:[%s165 + $0x7f0] sm:$0xff]
      %v428 = vld [vmem:[%s165 + $0x7f8] sm:$0xff]
      %v429 = vld [vmem:[%s165 + $0x800] sm:$0xff]
      %v430 = vld [vmem:[%s165 + $0x808] sm:$0xff]
      %v431 = vld [vmem:[%s165 + $0x810] sm:$0xff]
      %v432 = vld [vmem:[%s165 + $0x818] sm:$0xff]
      %v433 = vld [vmem:[%s165 + $0x820] sm:$0xff]
      %v434 = vld [vmem:[%s165 + $0x828] sm:$0xff]
      %v435 = vld [vmem:[%s165 + $0x830] sm:$0xff]
      %v436 = vld [vmem:[%s165 + $0x838] sm:$0xff]
      %v437 = vld [vmem:[%s165 + $0x840] sm:$0xff]
      %v438 = vld [vmem:[%s165 + $0x848] sm:$0xff]
      %v439 = vld [vmem:[%s165 + $0x850] sm:$0xff]
      %v440 = vld [vmem:[%s165 + $0x858] sm:$0xff]
      %v441 = vld [vmem:[%s165 + $0x860] sm:$0xff]
      %v442 = vld [vmem:[%s165 + $0x868] sm:$0xff]
      %v443 = vld [vmem:[%s165 + $0x870] sm:$0xff]
      %v444 = vld [vmem:[%s165 + $0x878] sm:$0xff]
      %v445 = vld [vmem:[%s165 + $0x880] sm:$0xff]
      %v446 = vld [vmem:[%s165 + $0x888] sm:$0xff]
      %v447 = vld [vmem:[%s165 + $0x890] sm:$0xff]
      %v448 = vld [vmem:[%s165 + $0x898] sm:$0xff]
      %v449 = vld [vmem:[%s165 + $0x8a0] sm:$0xff]
      %v450 = vld [vmem:[%s165 + $0x8a8] sm:$0xff]
      %v451 = vld [vmem:[%s165 + $0x8b0] sm:$0xff]
      %v452 = vld [vmem:[%s165 + $0x8b8] sm:$0xff]
      %v453 = vld [vmem:[%s165 + $0x8c0] sm:$0xff]
      %v454 = vld [vmem:[%s165 + $0x8c8] sm:$0xff]
      %v455 = vld [vmem:[%s165 + $0x8d0] sm:$0xff]
      %v456 = vld [vmem:[%s165 + $0x8d8] sm:$0xff]
      %v457 = vld [vmem:[%s165 + $0x8e0] sm:$0xff]
      %v458 = vld [vmem:[%s165 + $0x8e8] sm:$0xff]
      %v459 = vld [vmem:[%s165 + $0x8f0] sm:$0xff]
      %v460 = vld [vmem:[%s165 + $0x8f8] sm:$0xff]
      %v461 = vld [vmem:[%s165 + $0x900] sm:$0xff]
      %v462 = vld [vmem:[%s165 + $0x908] sm:$0xff]
      %v463 = vld [vmem:[%s165 + $0x910] sm:$0xff]
      %v464 = vld [vmem:[%s165 + $0x918] sm:$0xff]
      %v465 = vld [vmem:[%s165 + $0x920] sm:$0xff]
      %v466 = vld [vmem:[%s165 + $0x928] sm:$0xff]
      %v467 = vld [vmem:[%s165 + $0x930] sm:$0xff]
      %v468 = vld [vmem:[%s165 + $0x938] sm:$0xff]
      %v469 = vld [vmem:[%s165 + $0x940] sm:$0xff]
      %v470 = vld [vmem:[%s165 + $0x948] sm:$0xff]
      %v471 = vld [vmem:[%s165 + $0x950] sm:$0xff]
      %v472 = vld [vmem:[%s165 + $0x958] sm:$0xff]
      %v473 = vld [vmem:[%s165 + $0x960] sm:$0xff]
      %v474 = vld [vmem:[%s165 + $0x968] sm:$0xff]
      %v475 = vld [vmem:[%s165 + $0x970] sm:$0xff]
      %v476 = vld [vmem:[%s165 + $0x978] sm:$0xff]
      %v477 = vld [vmem:[%s165 + $0x980] sm:$0xff]
      %v478 = vld [vmem:[%s165 + $0x988] sm:$0xff]
      %v479 = vld [vmem:[%s165 + $0x990] sm:$0xff]
      %v480 = vld [vmem:[%s165 + $0x998] sm:$0xff]
      %v481 = vld [vmem:[%s165 + $0x9a0] sm:$0xff]
      %v482 = vld [vmem:[%s165 + $0x9a8] sm:$0xff]
      %v483 = vld [vmem:[%s165 + $0x9b0] sm:$0xff]
      %v484 = vld [vmem:[%s165 + $0x9b8] sm:$0xff]
      %v485 = vld [vmem:[%s165 + $0x9c0] sm:$0xff]
      %v486 = vld [vmem:[%s165 + $0x9c8] sm:$0xff]
      %v487 = vld [vmem:[%s165 + $0x9d0] sm:$0xff]
      %v488 = vld [vmem:[%s165 + $0x9d8] sm:$0xff]
      %v489 = vld [vmem:[%s165 + $0x9e0] sm:$0xff]
      %v490 = vld [vmem:[%s165 + $0x9e8] sm:$0xff]
      %v491 = vld [vmem:[%s165 + $0x9f0] sm:$0xff]
      %v492 = vld [vmem:[%s165 + $0x9f8] sm:$0xff]
      %v493 = vld [vmem:[%s165 + $0xa00] sm:$0xff]
      %v494 = vld [vmem:[%s165 + $0xa08] sm:$0xff]
      %v495 = vld [vmem:[%s165 + $0xa10] sm:$0xff]
      %v496 = vld [vmem:[%s165 + $0xa18] sm:$0xff]
      %v497 = vld [vmem:[%s165 + $0xa20] sm:$0xff]
      %v498 = vld [vmem:[%s165 + $0xa28] sm:$0xff]
      %v499 = vld [vmem:[%s165 + $0xa30] sm:$0xff]
      %v500 = vld [vmem:[%s165 + $0xa38] sm:$0xff]
      %v501 = vld [vmem:[%s165 + $0xa40] sm:$0xff]
      %v502 = vld [vmem:[%s165 + $0xa48] sm:$0xff]
      %v503 = vld [vmem:[%s165 + $0xa50] sm:$0xff]
      %v504 = vld [vmem:[%s165 + $0xa58] sm:$0xff]
      %v505 = vld [vmem:[%s165 + $0xa60] sm:$0xff]
      %v506 = vld [vmem:[%s165 + $0xa68] sm:$0xff]
      %v507 = vld [vmem:[%s165 + $0xa70] sm:$0xff]
      %v508 = vld [vmem:[%s165 + $0xa78] sm:$0xff]
      %v509 = vld [vmem:[%s165 + $0xa80] sm:$0xff]
      %v510 = vld [vmem:[%s165 + $0xa88] sm:$0xff]
      %v511 = vld [vmem:[%s165 + $0xa90] sm:$0xff]
      %v512 = vld [vmem:[%s165 + $0xa98] sm:$0xff]
      %v513 = vld [vmem:[%s165 + $0xaa0] sm:$0xff]
      %v514 = vld [vmem:[%s165 + $0xaa8] sm:$0xff]
      %v515 = vld [vmem:[%s165 + $0xab0] sm:$0xff]
      %v516 = vld [vmem:[%s165 + $0xab8] sm:$0xff]
      %v517 = vld [vmem:[%s165 + $0xac0] sm:$0xff]
      %v518 = vld [vmem:[%s165 + $0xac8] sm:$0xff]
      %v519 = vld [vmem:[%s165 + $0xad0] sm:$0xff]
      %v520 = vld [vmem:[%s165 + $0xad8] sm:$0xff]
      %v521 = vld [vmem:[%s165 + $0xae0] sm:$0xff]
      %v522 = vld [vmem:[%s165 + $0xae8] sm:$0xff]
      %v523 = vld [vmem:[%s165 + $0xaf0] sm:$0xff]
      %v524 = vld [vmem:[%s165 + $0xaf8] sm:$0xff]
      %v525 = vld [vmem:[%s165 + $0xb00] sm:$0xff]
      %v526 = vld [vmem:[%s165 + $0xb08] sm:$0xff]
      %v527 = vld [vmem:[%s165 + $0xb10] sm:$0xff]
      %v528 = vld [vmem:[%s165 + $0xb18] sm:$0xff]
      %v529 = vld [vmem:[%s165 + $0xb20] sm:$0xff]
      %v530 = vld [vmem:[%s165 + $0xb28] sm:$0xff]
      %v531 = vld [vmem:[%s165 + $0xb30] sm:$0xff]
      %v532 = vld [vmem:[%s165 + $0xb38] sm:$0xff]
      %v533 = vld [vmem:[%s165 + $0xb40] sm:$0xff]
      %v534 = vld [vmem:[%s165 + $0xb48] sm:$0xff]
      %v535 = vld [vmem:[%s165 + $0xb50] sm:$0xff]
      %v536 = vld [vmem:[%s165 + $0xb58] sm:$0xff]
      %v537 = vld [vmem:[%s165 + $0xb60] sm:$0xff]
      %v538 = vld [vmem:[%s165 + $0xb68] sm:$0xff]
      %v539 = vld [vmem:[%s165 + $0xb70] sm:$0xff]
      %v540 = vld [vmem:[%s165 + $0xb78] sm:$0xff]
      %v541 = vld [vmem:[%s165 + $0xb80] sm:$0xff]
      %v542 = vld [vmem:[%s165 + $0xb88] sm:$0xff]
      %v543 = vld [vmem:[%s165 + $0xb90] sm:$0xff]
      %v544 = vld [vmem:[%s165 + $0xb98] sm:$0xff]
      %v545 = vld [vmem:[%s165 + $0xba0] sm:$0xff]
      %v546 = vld [vmem:[%s165 + $0xba8] sm:$0xff]
      %v547 = vld [vmem:[%s165 + $0xbb0] sm:$0xff]
      %v548 = vld [vmem:[%s165 + $0xbb8] sm:$0xff]
      %v549 = vld [vmem:[%s165 + $0xbc0] sm:$0xff]
      %v550 = vld [vmem:[%s165 + $0xbc8] sm:$0xff]
      %v551 = vld [vmem:[%s165 + $0xbd0] sm:$0xff]
      %v552 = vld [vmem:[%s165 + $0xbd8] sm:$0xff]
      %v553 = vld [vmem:[%s165 + $0xbe0] sm:$0xff]
      %v554 = vld [vmem:[%s165 + $0xbe8] sm:$0xff]
      %v555 = vld [vmem:[%s165 + $0xbf0] sm:$0xff]
      %v556 = vld [vmem:[%s165 + $0xbf8] sm:$0xff]
      %v557 = vld [vmem:[%s165 + $0xc00] sm:$0xff]
      %v558 = vld [vmem:[%s165 + $0xc08] sm:$0xff]
      %v559 = vld [vmem:[%s165 + $0xc10] sm:$0xff]
      %v560 = vld [vmem:[%s165 + $0xc18] sm:$0xff]
      %v561 = vld [vmem:[%s165 + $0xc20] sm:$0xff]
      %v562 = vld [vmem:[%s165 + $0xc28] sm:$0xff]
      %v563 = vld [vmem:[%s165 + $0xc30] sm:$0xff]
      %v564 = vld [vmem:[%s165 + $0xc38] sm:$0xff]
      %v565 = vld [vmem:[%s165 + $0xc40] sm:$0xff]
      %v566 = vld [vmem:[%s165 + $0xc48] sm:$0xff]
      %v567 = vld [vmem:[%s165 + $0xc50] sm:$0xff]
      %v568 = vld [vmem:[%s165 + $0xc58] sm:$0xff]
      %v569 = vld [vmem:[%s165 + $0xc60] sm:$0xff]
      %v570 = vld [vmem:[%s165 + $0xc68] sm:$0xff]
      %v571 = vld [vmem:[%s165 + $0xc70] sm:$0xff]
      %v572 = vld [vmem:[%s165 + $0xc78] sm:$0xff]
      %v573 = vld [vmem:[%s165 + $0xc80] sm:$0xff]
      %v574 = vld [vmem:[%s165 + $0xc88] sm:$0xff]
      %v575 = vld [vmem:[%s165 + $0xc90] sm:$0xff]
      %v576 = vld [vmem:[%s165 + $0xc98] sm:$0xff]
      %v577 = vld [vmem:[%s165 + $0xca0] sm:$0xff]
      %v578 = vld [vmem:[%s165 + $0xca8] sm:$0xff]
      %v579 = vld [vmem:[%s165 + $0xcb0] sm:$0xff]
      %v580 = vld [vmem:[%s165 + $0xcb8] sm:$0xff]
      %v581 = vld [vmem:[%s165 + $0xcc0] sm:$0xff]
      %v582 = vld [vmem:[%s165 + $0xcc8] sm:$0xff]
      %v583 = vld [vmem:[%s165 + $0xcd0] sm:$0xff]
      %v584 = vld [vmem:[%s165 + $0xcd8] sm:$0xff]
      %v585 = vld [vmem:[%s165 + $0xce0] sm:$0xff]
      %v586 = vld [vmem:[%s165 + $0xce8] sm:$0xff]
      %v587 = vld [vmem:[%s165 + $0xcf0] sm:$0xff]
      %v588 = vld [vmem:[%s165 + $0xcf8] sm:$0xff]
      %v589 = vld [vmem:[%s165 + $0xd00] sm:$0xff]
      %v590 = vld [vmem:[%s165 + $0xd08] sm:$0xff]
      %v591 = vld [vmem:[%s165 + $0xd10] sm:$0xff]
      %v592 = vld [vmem:[%s165 + $0xd18] sm:$0xff]
      %v593 = vld [vmem:[%s165 + $0xd20] sm:$0xff]
      %v594 = vld [vmem:[%s165 + $0xd28] sm:$0xff]
      %v595 = vld [vmem:[%s165 + $0xd30] sm:$0xff]
      %v596 = vld [vmem:[%s165 + $0xd38] sm:$0xff]
      %v597 = vld [vmem:[%s165 + $0xd40] sm:$0xff]
      %v598 = vld [vmem:[%s165 + $0xd48] sm:$0xff]
      %v599 = vld [vmem:[%s165 + $0xd50] sm:$0xff]
      %v600 = vld [vmem:[%s165 + $0xd58] sm:$0xff]
      %v601 = vld [vmem:[%s165 + $0xd60] sm:$0xff]
      %v602 = vld [vmem:[%s165 + $0xd68] sm:$0xff]
      %v603 = vld [vmem:[%s165 + $0xd70] sm:$0xff]
      %v604 = vld [vmem:[%s165 + $0xd78] sm:$0xff]
      %v605 = vld [vmem:[%s165 + $0xd80] sm:$0xff]
      %v606 = vld [vmem:[%s165 + $0xd88] sm:$0xff]
      %v607 = vld [vmem:[%s165 + $0xd90] sm:$0xff]
      %v608 = vld [vmem:[%s165 + $0xd98] sm:$0xff]
      %v609 = vld [vmem:[%s165 + $0xda0] sm:$0xff]
      %v610 = vld [vmem:[%s165 + $0xda8] sm:$0xff]
      %v611 = vld [vmem:[%s165 + $0xdb0] sm:$0xff]
      %v612 = vld [vmem:[%s165 + $0xdb8] sm:$0xff]
      %v613 = vld [vmem:[%s165 + $0xdc0] sm:$0xff]
      %v614 = vld [vmem:[%s165 + $0xdc8] sm:$0xff]
      %v615 = vld [vmem:[%s165 + $0xdd0] sm:$0xff]
      %v616 = vld [vmem:[%s165 + $0xdd8] sm:$0xff]
      %v617 = vld [vmem:[%s165 + $0xde0] sm:$0xff]
      %v618 = vld [vmem:[%s165 + $0xde8] sm:$0xff]
      %v619 = vld [vmem:[%s165 + $0xdf0] sm:$0xff]
      %v620 = vld [vmem:[%s165 + $0xdf8] sm:$0xff]
      %v621 = vld [vmem:[%s165 + $0xe00] sm:$0xff]
      %v622 = vld [vmem:[%s165 + $0xe08] sm:$0xff]
      %v623 = vld [vmem:[%s165 + $0xe10] sm:$0xff]
      %v624 = vld [vmem:[%s165 + $0xe18] sm:$0xff]
      %v625 = vld [vmem:[%s165 + $0xe20] sm:$0xff]
      %v626 = vld [vmem:[%s165 + $0xe28] sm:$0xff]
      %v627 = vld [vmem:[%s165 + $0xe30] sm:$0xff]
      %v628 = vld [vmem:[%s165 + $0xe38] sm:$0xff]
      %v629 = vld [vmem:[%s165 + $0xe40] sm:$0xff]
      %v630 = vld [vmem:[%s165 + $0xe48] sm:$0xff]
      %v631 = vld [vmem:[%s165 + $0xe50] sm:$0xff]
      %v632 = vld [vmem:[%s165 + $0xe58] sm:$0xff]
      %v633 = vld [vmem:[%s165 + $0xe60] sm:$0xff]
      %v634 = vld [vmem:[%s165 + $0xe68] sm:$0xff]
      %v635 = vld [vmem:[%s165 + $0xe70] sm:$0xff]
      %v636 = vld [vmem:[%s165 + $0xe78] sm:$0xff]
      %v637 = vld [vmem:[%s165 + $0xe80] sm:$0xff]
      %v638 = vld [vmem:[%s165 + $0xe88] sm:$0xff]
      %v639 = vld [vmem:[%s165 + $0xe90] sm:$0xff]
      %v640 = vld [vmem:[%s165 + $0xe98] sm:$0xff]
      %v641 = vld [vmem:[%s165 + $0xea0] sm:$0xff]
      %v642 = vld [vmem:[%s165 + $0xea8] sm:$0xff]
      %v643 = vld [vmem:[%s165 + $0xeb0] sm:$0xff]
      %v644 = vld [vmem:[%s165 + $0xeb8] sm:$0xff]
      %v645 = vld [vmem:[%s165 + $0xec0] sm:$0xff]
      %v646 = vld [vmem:[%s165 + $0xec8] sm:$0xff]
      %v647 = vld [vmem:[%s165 + $0xed0] sm:$0xff]
      %v648 = vld [vmem:[%s165 + $0xed8] sm:$0xff]
      %v649 = vld [vmem:[%s165 + $0xee0] sm:$0xff]
      %v650 = vld [vmem:[%s165 + $0xee8] sm:$0xff]
      %v651 = vld [vmem:[%s165 + $0xef0] sm:$0xff]
      %v652 = vld [vmem:[%s165 + $0xef8] sm:$0xff]
      %v653 = vld [vmem:[%s165 + $0xf00] sm:$0xff]
      %v654 = vld [vmem:[%s165 + $0xf08] sm:$0xff]
      %v655 = vld [vmem:[%s165 + $0xf10] sm:$0xff]
      %v656 = vld [vmem:[%s165 + $0xf18] sm:$0xff]
      %v657 = vld [vmem:[%s165 + $0xf20] sm:$0xff]
      %v658 = vld [vmem:[%s165 + $0xf28] sm:$0xff]
      %v659 = vld [vmem:[%s165 + $0xf30] sm:$0xff]
      %v660 = vld [vmem:[%s165 + $0xf38] sm:$0xff]
      %v661 = vld [vmem:[%s165 + $0xf40] sm:$0xff]
      %v662 = vld [vmem:[%s165 + $0xf48] sm:$0xff]
      %v663 = vld [vmem:[%s165 + $0xf50] sm:$0xff]
      %v664 = vld [vmem:[%s165 + $0xf58] sm:$0xff]
      %v665 = vld [vmem:[%s165 + $0xf60] sm:$0xff]
      %v666 = vld [vmem:[%s165 + $0xf68] sm:$0xff]
      %v667 = vld [vmem:[%s165 + $0xf70] sm:$0xff]
      %v668 = vld [vmem:[%s165 + $0xf78] sm:$0xff]
      %v669 = vld [vmem:[%s165 + $0xf80] sm:$0xff]
      %v670 = vld [vmem:[%s165 + $0xf88] sm:$0xff]
      %v671 = vld [vmem:[%s165 + $0xf90] sm:$0xff]
      %v672 = vld [vmem:[%s165 + $0xf98] sm:$0xff]
      %v673 = vld [vmem:[%s165 + $0xfa0] sm:$0xff]
      %v674 = vld [vmem:[%s165 + $0xfa8] sm:$0xff]
      %v675 = vld [vmem:[%s165 + $0xfb0] sm:$0xff]
      %v676 = vld [vmem:[%s165 + $0xfb8] sm:$0xff]
      %v677 = vld [vmem:[%s165 + $0xfc0] sm:$0xff]
      %v678 = vld [vmem:[%s165 + $0xfc8] sm:$0xff]
      %v679 = vld [vmem:[%s165 + $0xfd0] sm:$0xff]
      %v680 = vld [vmem:[%s165 + $0xfd8] sm:$0xff]
      %v681 = vld [vmem:[%s165 + $0xfe0] sm:$0xff]
      %v682 = vld [vmem:[%s165 + $0xfe8] sm:$0xff]
      %v683 = vld [vmem:[%s165 + $0xff0] sm:$0xff]
      %v684 = vld [vmem:[%s165 + $0xff8] sm:$0xff]
      %v685 = vld [vmem:[%s165 + $0x1000] sm:$0xff]
      %v686 = vld [vmem:[%s165 + $0x1008] sm:$0xff]
      %v687 = vld [vmem:[%s165 + $0x1010] sm:$0xff]
      %v688 = vld [vmem:[%s165 + $0x1018] sm:$0xff]
      %v689 = vld [vmem:[%s165 + $0x1020] sm:$0xff]
      %v690 = vld [vmem:[%s165 + $0x1028] sm:$0xff]
      %v691 = vld [vmem:[%s165 + $0x1030] sm:$0xff]
      %v692 = vld [vmem:[%s165 + $0x1038] sm:$0xff]
      %v693 = vld [vmem:[%s165 + $0x1040] sm:$0xff]
      %v694 = vld [vmem:[%s165 + $0x1048] sm:$0xff]
      %v695 = vld [vmem:[%s165 + $0x1050] sm:$0xff]
      %v696 = vld [vmem:[%s165 + $0x1058] sm:$0xff]
      %v697 = vld [vmem:[%s165 + $0x1060] sm:$0xff]
      %v698 = vld [vmem:[%s165 + $0x1068] sm:$0xff]
      %v699 = vld [vmem:[%s165 + $0x1070] sm:$0xff]
      %v700 = vld [vmem:[%s165 + $0x1078] sm:$0xff]
      %v701 = vld [vmem:[%s165 + $0x1080] sm:$0xff]
      %v702 = vld [vmem:[%s165 + $0x1088] sm:$0xff]
      %v703 = vld [vmem:[%s165 + $0x1090] sm:$0xff]
      %v704 = vld [vmem:[%s165 + $0x1098] sm:$0xff]
      %v705 = vld [vmem:[%s165 + $0x10a0] sm:$0xff]
      %v706 = vld [vmem:[%s165 + $0x10a8] sm:$0xff]
      %v707 = vld [vmem:[%s165 + $0x10b0] sm:$0xff]
      %v708 = vld [vmem:[%s165 + $0x10b8] sm:$0xff]
      %v709 = vld [vmem:[%s165 + $0x10c0] sm:$0xff]
      %v710 = vld [vmem:[%s165 + $0x10c8] sm:$0xff]
      %v711 = vld [vmem:[%s165 + $0x10d0] sm:$0xff]
      %v712 = vld [vmem:[%s165 + $0x10d8] sm:$0xff]
      %v713 = vld [vmem:[%s165 + $0x10e0] sm:$0xff]
      %v714 = vld [vmem:[%s165 + $0x10e8] sm:$0xff]
      %v715 = vld [vmem:[%s165 + $0x10f0] sm:$0xff]
      %v716 = vld [vmem:[%s165 + $0x10f8] sm:$0xff]
      %v717 = vld [vmem:[%s165 + $0x1100] sm:$0xff]
      %v718 = vld [vmem:[%s165 + $0x1108] sm:$0xff]
      %v719 = vld [vmem:[%s165 + $0x1110] sm:$0xff]
      %v720 = vld [vmem:[%s165 + $0x1118] sm:$0xff]
      %v721 = vld [vmem:[%s165 + $0x1120] sm:$0xff]
      %v722 = vld [vmem:[%s165 + $0x1128] sm:$0xff]
      %v723 = vld [vmem:[%s165 + $0x1130] sm:$0xff]
      %v724 = vld [vmem:[%s165 + $0x1138] sm:$0xff]
      %v725 = vld [vmem:[%s165 + $0x1140] sm:$0xff]
      %v726 = vld [vmem:[%s165 + $0x1148] sm:$0xff]
      %v727 = vld [vmem:[%s165 + $0x1150] sm:$0xff]
      %v728 = vld [vmem:[%s165 + $0x1158] sm:$0xff]
      %v729 = vld [vmem:[%s165 + $0x1160] sm:$0xff]
      %v730 = vld [vmem:[%s165 + $0x1168] sm:$0xff]
      %v731 = vld [vmem:[%s165 + $0x1170] sm:$0xff]
      %v732 = vld [vmem:[%s165 + $0x1178] sm:$0xff]
      %v733 = vld [vmem:[%s165 + $0x1180] sm:$0xff]
      %v734 = vld [vmem:[%s165 + $0x1188] sm:$0xff]
      %v735 = vld [vmem:[%s165 + $0x1190] sm:$0xff]
      %v736 = vld [vmem:[%s165 + $0x1198] sm:$0xff]
      %v737 = vld [vmem:[%s165 + $0x11a0] sm:$0xff]
      %v738 = vld [vmem:[%s165 + $0x11a8] sm:$0xff]
      %v739 = vld [vmem:[%s165 + $0x11b0] sm:$0xff]
      %v740 = vld [vmem:[%s165 + $0x11b8] sm:$0xff]
      %v741 = vld [vmem:[%s165 + $0x11c0] sm:$0xff]
      %v742 = vld [vmem:[%s165 + $0x11c8] sm:$0xff]
      %v743 = vld [vmem:[%s165 + $0x11d0] sm:$0xff]
      %v744 = vld [vmem:[%s165 + $0x11d8] sm:$0xff]
      %v745 = vld [vmem:[%s165 + $0x11e0] sm:$0xff]
      %v746 = vld [vmem:[%s165 + $0x11e8] sm:$0xff]
      %v747 = vld [vmem:[%s165 + $0x11f0] sm:$0xff]
      %v748 = vld [vmem:[%s165 + $0x11f8] sm:$0xff]
      %v749 = vld [vmem:[%s165 + $0x1200] sm:$0xff]
      %v750 = vld [vmem:[%s165 + $0x1208] sm:$0xff]
      %v751 = vld [vmem:[%s165 + $0x1210] sm:$0xff]
      %v752 = vld [vmem:[%s165 + $0x1218] sm:$0xff]
      %v753 = vld [vmem:[%s165 + $0x1220] sm:$0xff]
      %v754 = vld [vmem:[%s165 + $0x1228] sm:$0xff]
      %v755 = vld [vmem:[%s165 + $0x1230] sm:$0xff]
      %v756 = vld [vmem:[%s165 + $0x1238] sm:$0xff]
      %v757 = vld [vmem:[%s165 + $0x1240] sm:$0xff]
      %v758 = vld [vmem:[%s165 + $0x1248] sm:$0xff]
      %v759 = vld [vmem:[%s165 + $0x1250] sm:$0xff]
      %v760 = vld [vmem:[%s165 + $0x1258] sm:$0xff]
      %v761 = vld [vmem:[%s165 + $0x1260] sm:$0xff]
      %v762 = vld [vmem:[%s165 + $0x1268] sm:$0xff]
      %v763 = vld [vmem:[%s165 + $0x1270] sm:$0xff]
      %v764 = vld [vmem:[%s165 + $0x1278] sm:$0xff]
      %v765 = vld [vmem:[%s165 + $0x1280] sm:$0xff]
      %v766 = vld [vmem:[%s165 + $0x1288] sm:$0xff]
      %v767 = vld [vmem:[%s165 + $0x1290] sm:$0xff]
      %v768 = vld [vmem:[%s165 + $0x1298] sm:$0xff]
      %v769 = vld [vmem:[%s165 + $0x12a0] sm:$0xff]
      %v770 = vld [vmem:[%s165 + $0x12a8] sm:$0xff]
      %v771 = vld [vmem:[%s165 + $0x12b0] sm:$0xff]
      %v772 = vld [vmem:[%s165 + $0x12b8] sm:$0xff]
      %v773 = vld [vmem:[%s165 + $0x12c0] sm:$0xff]
      %v774 = vld [vmem:[%s165 + $0x12c8] sm:$0xff]
      %v775 = vld [vmem:[%s165 + $0x12d0] sm:$0xff]
      %v776 = vld [vmem:[%s165 + $0x12d8] sm:$0xff]
      %v777 = vld [vmem:[%s165 + $0x12e0] sm:$0xff]
      %v778 = vld [vmem:[%s165 + $0x12e8] sm:$0xff]
      %v779 = vld [vmem:[%s165 + $0x12f0] sm:$0xff]
      %v780 = vld [vmem:[%s165 + $0x12f8] sm:$0xff]
      %v781 = vld [vmem:[%s165 + $0x1300] sm:$0xff]
      %v782 = vld [vmem:[%s165 + $0x1308] sm:$0xff]
      %v783 = vld [vmem:[%s165 + $0x1310] sm:$0xff]
      %v784 = vld [vmem:[%s165 + $0x1318] sm:$0xff]
      %v785 = vld [vmem:[%s165 + $0x1320] sm:$0xff]
      %v786 = vld [vmem:[%s165 + $0x1328] sm:$0xff]
      %v787 = vld [vmem:[%s165 + $0x1330] sm:$0xff]
      %v788 = vld [vmem:[%s165 + $0x1338] sm:$0xff]
      %v789 = vld [vmem:[%s165 + $0x1340] sm:$0xff]
      %v790 = vld [vmem:[%s165 + $0x1348] sm:$0xff]
      %v791 = vld [vmem:[%s165 + $0x1350] sm:$0xff]
      %v792 = vld [vmem:[%s165 + $0x1358] sm:$0xff]
      %v793 = vld [vmem:[%s165 + $0x1360] sm:$0xff]
      %v794 = vld [vmem:[%s165 + $0x1368] sm:$0xff]
      %v795 = vld [vmem:[%s165 + $0x1370] sm:$0xff]
      %v796 = vld [vmem:[%s165 + $0x1378] sm:$0xff]
      %v797 = vld [vmem:[%s165 + $0x1380] sm:$0xff]
      %v798 = vld [vmem:[%s165 + $0x1388] sm:$0xff]
      %v799 = vld [vmem:[%s165 + $0x1390] sm:$0xff]
      %v800 = vld [vmem:[%s165 + $0x1398] sm:$0xff]
      %v801 = vld [vmem:[%s165 + $0x13a0] sm:$0xff]
      %v802 = vld [vmem:[%s165 + $0x13a8] sm:$0xff]
      %v803 = vld [vmem:[%s165 + $0x13b0] sm:$0xff]
      %v804 = vld [vmem:[%s165 + $0x13b8] sm:$0xff]
      %v805 = vld [vmem:[%s165 + $0x13c0] sm:$0xff]
      %v806 = vld [vmem:[%s165 + $0x13c8] sm:$0xff]
      %v807 = vld [vmem:[%s165 + $0x13d0] sm:$0xff]
      %v808 = vld [vmem:[%s165 + $0x13d8] sm:$0xff]
      %v809 = vld [vmem:[%s165 + $0x13e0] sm:$0xff]
      %v810 = vld [vmem:[%s165 + $0x13e8] sm:$0xff]
      %v811 = vld [vmem:[%s165 + $0x13f0] sm:$0xff]
      %v812 = vld [vmem:[%s165 + $0x13f8] sm:$0xff]
      %v813 = vld [vmem:[%s2] sm:$0x3f]
      %815 = vset.pattern.permute.xlu0 0
      %816 = vperm.xlu0 %815, %v813
      %v817 = vpop.permute.xlu0 %816
      %v1459 = vunpack.c.l.b16 %v173
      %v1460 = vunpack.c.h.b16 %v173
      %v1461 = vunpack.c.l.b16 %v174
      %v1462 = vunpack.c.h.b16 %v174
      %v1463 = vunpack.c.l.b16 %v175
      %v1464 = vunpack.c.h.b16 %v175
      %v1465 = vunpack.c.l.b16 %v176
      %v1466 = vunpack.c.h.b16 %v176
      %v1467 = vunpack.c.l.b16 %v177
      %v1468 = vunpack.c.h.b16 %v177
      %v1469 = vunpack.c.l.b16 %v178
      %v1470 = vunpack.c.h.b16 %v178
      %v1471 = vunpack.c.l.b16 %v179
      %v1472 = vunpack.c.h.b16 %v179
      %v1473 = vunpack.c.l.b16 %v180
      %v1474 = vunpack.c.h.b16 %v180
      %v1475 = vunpack.c.l.b16 %v181
      %v1476 = vunpack.c.h.b16 %v181
      %v1477 = vunpack.c.l.b16 %v182
      %v1478 = vunpack.c.h.b16 %v182
      %v1479 = vunpack.c.l.b16 %v183
      %v1480 = vunpack.c.h.b16 %v183
      %v1481 = vunpack.c.l.b16 %v184
      %v1482 = vunpack.c.h.b16 %v184
      %v1483 = vunpack.c.l.b16 %v185
      %v1484 = vunpack.c.h.b16 %v185
      %v1485 = vunpack.c.l.b16 %v186
      %v1486 = vunpack.c.h.b16 %v186
      %v1487 = vunpack.c.l.b16 %v187
      %v1488 = vunpack.c.h.b16 %v187
      %v1489 = vunpack.c.l.b16 %v188
      %v1490 = vunpack.c.h.b16 %v188
      %v1491 = vunpack.c.l.b16 %v189
      %v1492 = vunpack.c.h.b16 %v189
      %v1493 = vunpack.c.l.b16 %v190
      %v1494 = vunpack.c.h.b16 %v190
      %v1495 = vunpack.c.l.b16 %v191
      %v1496 = vunpack.c.h.b16 %v191
      %v1497 = vunpack.c.l.b16 %v192
      %v1498 = vunpack.c.h.b16 %v192
      %v1499 = vunpack.c.l.b16 %v193
      %v1500 = vunpack.c.h.b16 %v193
      %v1501 = vunpack.c.l.b16 %v194
      %v1502 = vunpack.c.h.b16 %v194
      %v1503 = vunpack.c.l.b16 %v195
      %v1504 = vunpack.c.h.b16 %v195
      %v1505 = vunpack.c.l.b16 %v196
      %v1506 = vunpack.c.h.b16 %v196
      %v1507 = vunpack.c.l.b16 %v197
      %v1508 = vunpack.c.h.b16 %v197
      %v1509 = vunpack.c.l.b16 %v198
      %v1510 = vunpack.c.h.b16 %v198
      %v1511 = vunpack.c.l.b16 %v199
      %v1512 = vunpack.c.h.b16 %v199
      %v1513 = vunpack.c.l.b16 %v200
      %v1514 = vunpack.c.h.b16 %v200
      %v1515 = vunpack.c.l.b16 %v201
      %v1516 = vunpack.c.h.b16 %v201
      %v1517 = vunpack.c.l.b16 %v202
      %v1518 = vunpack.c.h.b16 %v202
      %v1519 = vunpack.c.l.b16 %v203
      %v1520 = vunpack.c.h.b16 %v203
      %v1521 = vunpack.c.l.b16 %v204
      %v1522 = vunpack.c.h.b16 %v204
      %v1523 = vunpack.c.l.b16 %v205
      %v1524 = vunpack.c.h.b16 %v205
      %v1525 = vunpack.c.l.b16 %v206
      %v1526 = vunpack.c.h.b16 %v206
      %v1527 = vunpack.c.l.b16 %v207
      %v1528 = vunpack.c.h.b16 %v207
      %v1529 = vunpack.c.l.b16 %v208
      %v1530 = vunpack.c.h.b16 %v208
      %v1531 = vunpack.c.l.b16 %v209
      %v1532 = vunpack.c.h.b16 %v209
      %v1533 = vunpack.c.l.b16 %v210
      %v1534 = vunpack.c.h.b16 %v210
      %v1535 = vunpack.c.l.b16 %v211
      %v1536 = vunpack.c.h.b16 %v211
      %v1537 = vunpack.c.l.b16 %v212
      %v1538 = vunpack.c.h.b16 %v212
      %v1539 = vunpack.c.l.b16 %v213
      %v1540 = vunpack.c.h.b16 %v213
      %v1541 = vunpack.c.l.b16 %v214
      %v1542 = vunpack.c.h.b16 %v214
      %v1543 = vunpack.c.l.b16 %v215
      %v1544 = vunpack.c.h.b16 %v215
      %v1545 = vunpack.c.l.b16 %v216
      %v1546 = vunpack.c.h.b16 %v216
      %v1547 = vunpack.c.l.b16 %v217
      %v1548 = vunpack.c.h.b16 %v217
      %v1549 = vunpack.c.l.b16 %v218
      %v1550 = vunpack.c.h.b16 %v218
      %v1551 = vunpack.c.l.b16 %v219
      %v1552 = vunpack.c.h.b16 %v219
      %v1553 = vunpack.c.l.b16 %v220
      %v1554 = vunpack.c.h.b16 %v220
      %v1555 = vunpack.c.l.b16 %v221
      %v1556 = vunpack.c.h.b16 %v221
      %v1557 = vunpack.c.l.b16 %v222
      %v1558 = vunpack.c.h.b16 %v222
      %v1559 = vunpack.c.l.b16 %v223
      %v1560 = vunpack.c.h.b16 %v223
      %v1561 = vunpack.c.l.b16 %v224
      %v1562 = vunpack.c.h.b16 %v224
      %v1563 = vunpack.c.l.b16 %v225
      %v1564 = vunpack.c.h.b16 %v225
      %v1565 = vunpack.c.l.b16 %v226
      %v1566 = vunpack.c.h.b16 %v226
      %v1567 = vunpack.c.l.b16 %v227
      %v1568 = vunpack.c.h.b16 %v227
      %v1569 = vunpack.c.l.b16 %v228
      %v1570 = vunpack.c.h.b16 %v228
      %v1571 = vunpack.c.l.b16 %v229
      %v1572 = vunpack.c.h.b16 %v229
      %v1573 = vunpack.c.l.b16 %v230
      %v1574 = vunpack.c.h.b16 %v230
      %v1575 = vunpack.c.l.b16 %v231
      %v1576 = vunpack.c.h.b16 %v231
      %v1577 = vunpack.c.l.b16 %v232
      %v1578 = vunpack.c.h.b16 %v232
      %v1579 = vunpack.c.l.b16 %v233
      %v1580 = vunpack.c.h.b16 %v233
      %v1581 = vunpack.c.l.b16 %v234
      %v1582 = vunpack.c.h.b16 %v234
      %v1583 = vunpack.c.l.b16 %v235
      %v1584 = vunpack.c.h.b16 %v235
      %v1585 = vunpack.c.l.b16 %v236
      %v1586 = vunpack.c.h.b16 %v236
      %v1587 = vunpack.c.l.b16 %v237
      %v1588 = vunpack.c.h.b16 %v237
      %v1589 = vunpack.c.l.b16 %v238
      %v1590 = vunpack.c.h.b16 %v238
      %v1591 = vunpack.c.l.b16 %v239
      %v1592 = vunpack.c.h.b16 %v239
      %v1593 = vunpack.c.l.b16 %v240
      %v1594 = vunpack.c.h.b16 %v240
      %v1595 = vunpack.c.l.b16 %v241
      %v1596 = vunpack.c.h.b16 %v241
      %v1597 = vunpack.c.l.b16 %v242
      %v1598 = vunpack.c.h.b16 %v242
      %v1599 = vunpack.c.l.b16 %v243
      %v1600 = vunpack.c.h.b16 %v243
      %v1601 = vunpack.c.l.b16 %v244
      %v1602 = vunpack.c.h.b16 %v244
      %v1603 = vunpack.c.l.b16 %v245
      %v1604 = vunpack.c.h.b16 %v245
      %v1605 = vunpack.c.l.b16 %v246
      %v1606 = vunpack.c.h.b16 %v246
      %v1607 = vunpack.c.l.b16 %v247
      %v1608 = vunpack.c.h.b16 %v247
      %v1609 = vunpack.c.l.b16 %v248
      %v1610 = vunpack.c.h.b16 %v248
      %v1611 = vunpack.c.l.b16 %v249
      %v1612 = vunpack.c.h.b16 %v249
      %v1613 = vunpack.c.l.b16 %v250
      %v1614 = vunpack.c.h.b16 %v250
      %v1615 = vunpack.c.l.b16 %v251
      %v1616 = vunpack.c.h.b16 %v251
      %v1617 = vunpack.c.l.b16 %v252
      %v1618 = vunpack.c.h.b16 %v252
      %v1619 = vunpack.c.l.b16 %v253
      %v1620 = vunpack.c.h.b16 %v253
      %v1621 = vunpack.c.l.b16 %v254
      %v1622 = vunpack.c.h.b16 %v254
      %v1623 = vunpack.c.l.b16 %v255
      %v1624 = vunpack.c.h.b16 %v255
      %v1625 = vunpack.c.l.b16 %v256
      %v1626 = vunpack.c.h.b16 %v256
      %v1627 = vunpack.c.l.b16 %v257
      %v1628 = vunpack.c.h.b16 %v257
      %v1629 = vunpack.c.l.b16 %v258
      %v1630 = vunpack.c.h.b16 %v258
      %v1631 = vunpack.c.l.b16 %v259
      %v1632 = vunpack.c.h.b16 %v259
      %v1633 = vunpack.c.l.b16 %v260
      %v1634 = vunpack.c.h.b16 %v260
      %v1635 = vunpack.c.l.b16 %v261
      %v1636 = vunpack.c.h.b16 %v261
      %v1637 = vunpack.c.l.b16 %v262
      %v1638 = vunpack.c.h.b16 %v262
      %v1639 = vunpack.c.l.b16 %v263
      %v1640 = vunpack.c.h.b16 %v263
      %v1641 = vunpack.c.l.b16 %v264
      %v1642 = vunpack.c.h.b16 %v264
      %v1643 = vunpack.c.l.b16 %v265
      %v1644 = vunpack.c.h.b16 %v265
      %v1645 = vunpack.c.l.b16 %v266
      %v1646 = vunpack.c.h.b16 %v266
      %v1647 = vunpack.c.l.b16 %v267
      %v1648 = vunpack.c.h.b16 %v267
      %v1649 = vunpack.c.l.b16 %v268
      %v1650 = vunpack.c.h.b16 %v268
      %v1651 = vunpack.c.l.b16 %v269
      %v1652 = vunpack.c.h.b16 %v269
      %v1653 = vunpack.c.l.b16 %v270
      %v1654 = vunpack.c.h.b16 %v270
      %v1655 = vunpack.c.l.b16 %v271
      %v1656 = vunpack.c.h.b16 %v271
      %v1657 = vunpack.c.l.b16 %v272
      %v1658 = vunpack.c.h.b16 %v272
      %v1659 = vunpack.c.l.b16 %v273
      %v1660 = vunpack.c.h.b16 %v273
      %v1661 = vunpack.c.l.b16 %v274
      %v1662 = vunpack.c.h.b16 %v274
      %v1663 = vunpack.c.l.b16 %v275
      %v1664 = vunpack.c.h.b16 %v275
      %v1665 = vunpack.c.l.b16 %v276
      %v1666 = vunpack.c.h.b16 %v276
      %v1667 = vunpack.c.l.b16 %v277
      %v1668 = vunpack.c.h.b16 %v277
      %v1669 = vunpack.c.l.b16 %v278
      %v1670 = vunpack.c.h.b16 %v278
      %v1671 = vunpack.c.l.b16 %v279
      %v1672 = vunpack.c.h.b16 %v279
      %v1673 = vunpack.c.l.b16 %v280
      %v1674 = vunpack.c.h.b16 %v280
      %v1675 = vunpack.c.l.b16 %v281
      %v1676 = vunpack.c.h.b16 %v281
      %v1677 = vunpack.c.l.b16 %v282
      %v1678 = vunpack.c.h.b16 %v282
      %v1679 = vunpack.c.l.b16 %v283
      %v1680 = vunpack.c.h.b16 %v283
      %v1681 = vunpack.c.l.b16 %v284
      %v1682 = vunpack.c.h.b16 %v284
      %v1683 = vunpack.c.l.b16 %v285
      %v1684 = vunpack.c.h.b16 %v285
      %v1685 = vunpack.c.l.b16 %v286
      %v1686 = vunpack.c.h.b16 %v286
      %v1687 = vunpack.c.l.b16 %v287
      %v1688 = vunpack.c.h.b16 %v287
      %v1689 = vunpack.c.l.b16 %v288
      %v1690 = vunpack.c.h.b16 %v288
      %v1691 = vunpack.c.l.b16 %v289
      %v1692 = vunpack.c.h.b16 %v289
      %v1693 = vunpack.c.l.b16 %v290
      %v1694 = vunpack.c.h.b16 %v290
      %v1695 = vunpack.c.l.b16 %v291
      %v1696 = vunpack.c.h.b16 %v291
      %v1697 = vunpack.c.l.b16 %v292
      %v1698 = vunpack.c.h.b16 %v292
      %v1699 = vunpack.c.l.b16 %v293
      %v1700 = vunpack.c.h.b16 %v293
      %v1701 = vunpack.c.l.b16 %v294
      %v1702 = vunpack.c.h.b16 %v294
      %v1703 = vunpack.c.l.b16 %v295
      %v1704 = vunpack.c.h.b16 %v295
      %v1705 = vunpack.c.l.b16 %v296
      %v1706 = vunpack.c.h.b16 %v296
      %v1707 = vunpack.c.l.b16 %v297
      %v1708 = vunpack.c.h.b16 %v297
      %v1709 = vunpack.c.l.b16 %v298
      %v1710 = vunpack.c.h.b16 %v298
      %v1711 = vunpack.c.l.b16 %v299
      %v1712 = vunpack.c.h.b16 %v299
      %v1713 = vunpack.c.l.b16 %v300
      %v1714 = vunpack.c.h.b16 %v300
      %v1715 = vunpack.c.l.b16 %v301
      %v1716 = vunpack.c.h.b16 %v301
      %v1717 = vunpack.c.l.b16 %v302
      %v1718 = vunpack.c.h.b16 %v302
      %v1719 = vunpack.c.l.b16 %v303
      %v1720 = vunpack.c.h.b16 %v303
      %v1721 = vunpack.c.l.b16 %v304
      %v1722 = vunpack.c.h.b16 %v304
      %v1723 = vunpack.c.l.b16 %v305
      %v1724 = vunpack.c.h.b16 %v305
      %v1725 = vunpack.c.l.b16 %v306
      %v1726 = vunpack.c.h.b16 %v306
      %v1727 = vunpack.c.l.b16 %v307
      %v1728 = vunpack.c.h.b16 %v307
      %v1729 = vunpack.c.l.b16 %v308
      %v1730 = vunpack.c.h.b16 %v308
      %v1731 = vunpack.c.l.b16 %v309
      %v1732 = vunpack.c.h.b16 %v309
      %v1733 = vunpack.c.l.b16 %v310
      %v1734 = vunpack.c.h.b16 %v310
      %v1735 = vunpack.c.l.b16 %v311
      %v1736 = vunpack.c.h.b16 %v311
      %v1737 = vunpack.c.l.b16 %v312
      %v1738 = vunpack.c.h.b16 %v312
      %v1739 = vunpack.c.l.b16 %v313
      %v1740 = vunpack.c.h.b16 %v313
      %v1741 = vunpack.c.l.b16 %v314
      %v1742 = vunpack.c.h.b16 %v314
      %v1743 = vunpack.c.l.b16 %v315
      %v1744 = vunpack.c.h.b16 %v315
      %v1745 = vunpack.c.l.b16 %v316
      %v1746 = vunpack.c.h.b16 %v316
      %v1747 = vunpack.c.l.b16 %v317
      %v1748 = vunpack.c.h.b16 %v317
      %v1749 = vunpack.c.l.b16 %v318
      %v1750 = vunpack.c.h.b16 %v318
      %v1751 = vunpack.c.l.b16 %v319
      %v1752 = vunpack.c.h.b16 %v319
      %v1753 = vunpack.c.l.b16 %v320
      %v1754 = vunpack.c.h.b16 %v320
      %v1755 = vunpack.c.l.b16 %v321
      %v1756 = vunpack.c.h.b16 %v321
      %v1757 = vunpack.c.l.b16 %v322
      %v1758 = vunpack.c.h.b16 %v322
      %v1759 = vunpack.c.l.b16 %v323
      %v1760 = vunpack.c.h.b16 %v323
      %v1761 = vunpack.c.l.b16 %v324
      %v1762 = vunpack.c.h.b16 %v324
      %v1763 = vunpack.c.l.b16 %v325
      %v1764 = vunpack.c.h.b16 %v325
      %v1765 = vunpack.c.l.b16 %v326
      %v1766 = vunpack.c.h.b16 %v326
      %v1767 = vunpack.c.l.b16 %v327
      %v1768 = vunpack.c.h.b16 %v327
      %v1769 = vunpack.c.l.b16 %v328
      %v1770 = vunpack.c.h.b16 %v328
      %v1771 = vunpack.c.l.b16 %v329
      %v1772 = vunpack.c.h.b16 %v329
      %v1773 = vunpack.c.l.b16 %v330
      %v1774 = vunpack.c.h.b16 %v330
      %v1775 = vunpack.c.l.b16 %v331
      %v1776 = vunpack.c.h.b16 %v331
      %v1777 = vunpack.c.l.b16 %v332
      %v1778 = vunpack.c.h.b16 %v332
      %v1779 = vunpack.c.l.b16 %v333
      %v1780 = vunpack.c.h.b16 %v333
      %v1781 = vunpack.c.l.b16 %v334
      %v1782 = vunpack.c.h.b16 %v334
      %v1783 = vunpack.c.l.b16 %v335
      %v1784 = vunpack.c.h.b16 %v335
      %v1785 = vunpack.c.l.b16 %v336
      %v1786 = vunpack.c.h.b16 %v336
      %v1787 = vunpack.c.l.b16 %v337
      %v1788 = vunpack.c.h.b16 %v337
      %v1789 = vunpack.c.l.b16 %v338
      %v1790 = vunpack.c.h.b16 %v338
      %v1791 = vunpack.c.l.b16 %v339
      %v1792 = vunpack.c.h.b16 %v339
      %v1793 = vunpack.c.l.b16 %v340
      %v1794 = vunpack.c.h.b16 %v340
      %v1795 = vunpack.c.l.b16 %v341
      %v1796 = vunpack.c.h.b16 %v341
      %v1797 = vunpack.c.l.b16 %v342
      %v1798 = vunpack.c.h.b16 %v342
      %v1799 = vunpack.c.l.b16 %v343
      %v1800 = vunpack.c.h.b16 %v343
      %v1801 = vunpack.c.l.b16 %v344
      %v1802 = vunpack.c.h.b16 %v344
      %v1803 = vunpack.c.l.b16 %v345
      %v1804 = vunpack.c.h.b16 %v345
      %v1805 = vunpack.c.l.b16 %v346
      %v1806 = vunpack.c.h.b16 %v346
      %v1807 = vunpack.c.l.b16 %v347
      %v1808 = vunpack.c.h.b16 %v347
      %v1809 = vunpack.c.l.b16 %v348
      %v1810 = vunpack.c.h.b16 %v348
      %v1811 = vunpack.c.l.b16 %v349
      %v1812 = vunpack.c.h.b16 %v349
      %v1813 = vunpack.c.l.b16 %v350
      %v1814 = vunpack.c.h.b16 %v350
      %v1815 = vunpack.c.l.b16 %v351
      %v1816 = vunpack.c.h.b16 %v351
      %v1817 = vunpack.c.l.b16 %v352
      %v1818 = vunpack.c.h.b16 %v352
      %v1819 = vunpack.c.l.b16 %v353
      %v1820 = vunpack.c.h.b16 %v353
      %v1821 = vunpack.c.l.b16 %v354
      %v1822 = vunpack.c.h.b16 %v354
      %v1823 = vunpack.c.l.b16 %v355
      %v1824 = vunpack.c.h.b16 %v355
      %v1825 = vunpack.c.l.b16 %v356
      %v1826 = vunpack.c.h.b16 %v356
      %v1827 = vunpack.c.l.b16 %v357
      %v1828 = vunpack.c.h.b16 %v357
      %v1829 = vunpack.c.l.b16 %v358
      %v1830 = vunpack.c.h.b16 %v358
      %v1831 = vunpack.c.l.b16 %v359
      %v1832 = vunpack.c.h.b16 %v359
      %v1833 = vunpack.c.l.b16 %v360
      %v1834 = vunpack.c.h.b16 %v360
      %v1835 = vunpack.c.l.b16 %v361
      %v1836 = vunpack.c.h.b16 %v361
      %v1837 = vunpack.c.l.b16 %v362
      %v1838 = vunpack.c.h.b16 %v362
      %v1839 = vunpack.c.l.b16 %v363
      %v1840 = vunpack.c.h.b16 %v363
      %v1841 = vunpack.c.l.b16 %v364
      %v1842 = vunpack.c.h.b16 %v364
      %v1843 = vunpack.c.l.b16 %v365
      %v1844 = vunpack.c.h.b16 %v365
      %v1845 = vunpack.c.l.b16 %v366
      %v1846 = vunpack.c.h.b16 %v366
      %v1847 = vunpack.c.l.b16 %v367
      %v1848 = vunpack.c.h.b16 %v367
      %v1849 = vunpack.c.l.b16 %v368
      %v1850 = vunpack.c.h.b16 %v368
      %v1851 = vunpack.c.l.b16 %v369
      %v1852 = vunpack.c.h.b16 %v369
      %v1853 = vunpack.c.l.b16 %v370
      %v1854 = vunpack.c.h.b16 %v370
      %v1855 = vunpack.c.l.b16 %v371
      %v1856 = vunpack.c.h.b16 %v371
      %v1857 = vunpack.c.l.b16 %v372
      %v1858 = vunpack.c.h.b16 %v372
      %v1859 = vunpack.c.l.b16 %v373
      %v1860 = vunpack.c.h.b16 %v373
      %v1861 = vunpack.c.l.b16 %v374
      %v1862 = vunpack.c.h.b16 %v374
      %v1863 = vunpack.c.l.b16 %v375
      %v1864 = vunpack.c.h.b16 %v375
      %v1865 = vunpack.c.l.b16 %v376
      %v1866 = vunpack.c.h.b16 %v376
      %v1867 = vunpack.c.l.b16 %v377
      %v1868 = vunpack.c.h.b16 %v377
      %v1869 = vunpack.c.l.b16 %v378
      %v1870 = vunpack.c.h.b16 %v378
      %v1871 = vunpack.c.l.b16 %v379
      %v1872 = vunpack.c.h.b16 %v379
      %v1873 = vunpack.c.l.b16 %v380
      %v1874 = vunpack.c.h.b16 %v380
      %v1875 = vunpack.c.l.b16 %v381
      %v1876 = vunpack.c.h.b16 %v381
      %v1877 = vunpack.c.l.b16 %v382
      %v1878 = vunpack.c.h.b16 %v382
      %v1879 = vunpack.c.l.b16 %v383
      %v1880 = vunpack.c.h.b16 %v383
      %v1881 = vunpack.c.l.b16 %v384
      %v1882 = vunpack.c.h.b16 %v384
      %v1883 = vunpack.c.l.b16 %v385
      %v1884 = vunpack.c.h.b16 %v385
      %v1885 = vunpack.c.l.b16 %v386
      %v1886 = vunpack.c.h.b16 %v386
      %v1887 = vunpack.c.l.b16 %v387
      %v1888 = vunpack.c.h.b16 %v387
      %v1889 = vunpack.c.l.b16 %v388
      %v1890 = vunpack.c.h.b16 %v388
      %v1891 = vunpack.c.l.b16 %v389
      %v1892 = vunpack.c.h.b16 %v389
      %v1893 = vunpack.c.l.b16 %v390
      %v1894 = vunpack.c.h.b16 %v390
      %v1895 = vunpack.c.l.b16 %v391
      %v1896 = vunpack.c.h.b16 %v391
      %v1897 = vunpack.c.l.b16 %v392
      %v1898 = vunpack.c.h.b16 %v392
      %v1899 = vunpack.c.l.b16 %v393
      %v1900 = vunpack.c.h.b16 %v393
      %v1901 = vunpack.c.l.b16 %v394
      %v1902 = vunpack.c.h.b16 %v394
      %v1903 = vunpack.c.l.b16 %v395
      %v1904 = vunpack.c.h.b16 %v395
      %v1905 = vunpack.c.l.b16 %v396
      %v1906 = vunpack.c.h.b16 %v396
      %v1907 = vunpack.c.l.b16 %v397
      %v1908 = vunpack.c.h.b16 %v397
      %v1909 = vunpack.c.l.b16 %v398
      %v1910 = vunpack.c.h.b16 %v398
      %v1911 = vunpack.c.l.b16 %v399
      %v1912 = vunpack.c.h.b16 %v399
      %v1913 = vunpack.c.l.b16 %v400
      %v1914 = vunpack.c.h.b16 %v400
      %v1915 = vunpack.c.l.b16 %v401
      %v1916 = vunpack.c.h.b16 %v401
      %v1917 = vunpack.c.l.b16 %v402
      %v1918 = vunpack.c.h.b16 %v402
      %v1919 = vunpack.c.l.b16 %v403
      %v1920 = vunpack.c.h.b16 %v403
      %v1921 = vunpack.c.l.b16 %v404
      %v1922 = vunpack.c.h.b16 %v404
      %v1923 = vunpack.c.l.b16 %v405
      %v1924 = vunpack.c.h.b16 %v405
      %v1925 = vunpack.c.l.b16 %v406
      %v1926 = vunpack.c.h.b16 %v406
      %v1927 = vunpack.c.l.b16 %v407
      %v1928 = vunpack.c.h.b16 %v407
      %v1929 = vunpack.c.l.b16 %v408
      %v1930 = vunpack.c.h.b16 %v408
      %v1931 = vunpack.c.l.b16 %v409
      %v1932 = vunpack.c.h.b16 %v409
      %v1933 = vunpack.c.l.b16 %v410
      %v1934 = vunpack.c.h.b16 %v410
      %v1935 = vunpack.c.l.b16 %v411
      %v1936 = vunpack.c.h.b16 %v411
      %v1937 = vunpack.c.l.b16 %v412
      %v1938 = vunpack.c.h.b16 %v412
      %v1939 = vunpack.c.l.b16 %v413
      %v1940 = vunpack.c.h.b16 %v413
      %v1941 = vunpack.c.l.b16 %v414
      %v1942 = vunpack.c.h.b16 %v414
      %v1943 = vunpack.c.l.b16 %v415
      %v1944 = vunpack.c.h.b16 %v415
      %v1945 = vunpack.c.l.b16 %v416
      %v1946 = vunpack.c.h.b16 %v416
      %v1947 = vunpack.c.l.b16 %v417
      %v1948 = vunpack.c.h.b16 %v417
      %v1949 = vunpack.c.l.b16 %v418
      %v1950 = vunpack.c.h.b16 %v418
      %v1951 = vunpack.c.l.b16 %v419
      %v1952 = vunpack.c.h.b16 %v419
      %v1953 = vunpack.c.l.b16 %v420
      %v1954 = vunpack.c.h.b16 %v420
      %v1955 = vunpack.c.l.b16 %v421
      %v1956 = vunpack.c.h.b16 %v421
      %v1957 = vunpack.c.l.b16 %v422
      %v1958 = vunpack.c.h.b16 %v422
      %v1959 = vunpack.c.l.b16 %v423
      %v1960 = vunpack.c.h.b16 %v423
      %v1961 = vunpack.c.l.b16 %v424
      %v1962 = vunpack.c.h.b16 %v424
      %v1963 = vunpack.c.l.b16 %v425
      %v1964 = vunpack.c.h.b16 %v425
      %v1965 = vunpack.c.l.b16 %v426
      %v1966 = vunpack.c.h.b16 %v426
      %v1967 = vunpack.c.l.b16 %v427
      %v1968 = vunpack.c.h.b16 %v427
      %v1969 = vunpack.c.l.b16 %v428
      %v1970 = vunpack.c.h.b16 %v428
      %v1971 = vunpack.c.l.b16 %v429
      %v1972 = vunpack.c.h.b16 %v429
      %v1973 = vunpack.c.l.b16 %v430
      %v1974 = vunpack.c.h.b16 %v430
      %v1975 = vunpack.c.l.b16 %v431
      %v1976 = vunpack.c.h.b16 %v431
      %v1977 = vunpack.c.l.b16 %v432
      %v1978 = vunpack.c.h.b16 %v432
      %v1979 = vunpack.c.l.b16 %v433
      %v1980 = vunpack.c.h.b16 %v433
      %v1981 = vunpack.c.l.b16 %v434
      %v1982 = vunpack.c.h.b16 %v434
      %v1983 = vunpack.c.l.b16 %v435
      %v1984 = vunpack.c.h.b16 %v435
      %v1985 = vunpack.c.l.b16 %v436
      %v1986 = vunpack.c.h.b16 %v436
      %v1987 = vunpack.c.l.b16 %v437
      %v1988 = vunpack.c.h.b16 %v437
      %v1989 = vunpack.c.l.b16 %v438
      %v1990 = vunpack.c.h.b16 %v438
      %v1991 = vunpack.c.l.b16 %v439
      %v1992 = vunpack.c.h.b16 %v439
      %v1993 = vunpack.c.l.b16 %v440
      %v1994 = vunpack.c.h.b16 %v440
      %v1995 = vunpack.c.l.b16 %v441
      %v1996 = vunpack.c.h.b16 %v441
      %v1997 = vunpack.c.l.b16 %v442
      %v1998 = vunpack.c.h.b16 %v442
      %v1999 = vunpack.c.l.b16 %v443
      %v2000 = vunpack.c.h.b16 %v443
      %v2001 = vunpack.c.l.b16 %v444
      %v2002 = vunpack.c.h.b16 %v444
      %v2003 = vunpack.c.l.b16 %v445
      %v2004 = vunpack.c.h.b16 %v445
      %v2005 = vunpack.c.l.b16 %v446
      %v2006 = vunpack.c.h.b16 %v446
      %v2007 = vunpack.c.l.b16 %v447
      %v2008 = vunpack.c.h.b16 %v447
      %v2009 = vunpack.c.l.b16 %v448
      %v2010 = vunpack.c.h.b16 %v448
      %v2011 = vunpack.c.l.b16 %v449
      %v2012 = vunpack.c.h.b16 %v449
      %v2013 = vunpack.c.l.b16 %v450
      %v2014 = vunpack.c.h.b16 %v450
      %v2015 = vunpack.c.l.b16 %v451
      %v2016 = vunpack.c.h.b16 %v451
      %v2017 = vunpack.c.l.b16 %v452
      %v2018 = vunpack.c.h.b16 %v452
      %v2019 = vunpack.c.l.b16 %v453
      %v2020 = vunpack.c.h.b16 %v453
      %v2021 = vunpack.c.l.b16 %v454
      %v2022 = vunpack.c.h.b16 %v454
      %v2023 = vunpack.c.l.b16 %v455
      %v2024 = vunpack.c.h.b16 %v455
      %v2025 = vunpack.c.l.b16 %v456
      %v2026 = vunpack.c.h.b16 %v456
      %v2027 = vunpack.c.l.b16 %v457
      %v2028 = vunpack.c.h.b16 %v457
      %v2029 = vunpack.c.l.b16 %v458
      %v2030 = vunpack.c.h.b16 %v458
      %v2031 = vunpack.c.l.b16 %v459
      %v2032 = vunpack.c.h.b16 %v459
      %v2033 = vunpack.c.l.b16 %v460
      %v2034 = vunpack.c.h.b16 %v460
      %v2035 = vunpack.c.l.b16 %v461
      %v2036 = vunpack.c.h.b16 %v461
      %v2037 = vunpack.c.l.b16 %v462
      %v2038 = vunpack.c.h.b16 %v462
      %v2039 = vunpack.c.l.b16 %v463
      %v2040 = vunpack.c.h.b16 %v463
      %v2041 = vunpack.c.l.b16 %v464
      %v2042 = vunpack.c.h.b16 %v464
      %v2043 = vunpack.c.l.b16 %v465
      %v2044 = vunpack.c.h.b16 %v465
      %v2045 = vunpack.c.l.b16 %v466
      %v2046 = vunpack.c.h.b16 %v466
      %v2047 = vunpack.c.l.b16 %v467
      %v2048 = vunpack.c.h.b16 %v467
      %v2049 = vunpack.c.l.b16 %v468
      %v2050 = vunpack.c.h.b16 %v468
      %v2051 = vunpack.c.l.b16 %v469
      %v2052 = vunpack.c.h.b16 %v469
      %v2053 = vunpack.c.l.b16 %v470
      %v2054 = vunpack.c.h.b16 %v470
      %v2055 = vunpack.c.l.b16 %v471
      %v2056 = vunpack.c.h.b16 %v471
      %v2057 = vunpack.c.l.b16 %v472
      %v2058 = vunpack.c.h.b16 %v472
      %v2059 = vunpack.c.l.b16 %v473
      %v2060 = vunpack.c.h.b16 %v473
      %v2061 = vunpack.c.l.b16 %v474
      %v2062 = vunpack.c.h.b16 %v474
      %v2063 = vunpack.c.l.b16 %v475
      %v2064 = vunpack.c.h.b16 %v475
      %v2065 = vunpack.c.l.b16 %v476
      %v2066 = vunpack.c.h.b16 %v476
      %v2067 = vunpack.c.l.b16 %v477
      %v2068 = vunpack.c.h.b16 %v477
      %v2069 = vunpack.c.l.b16 %v478
      %v2070 = vunpack.c.h.b16 %v478
      %v2071 = vunpack.c.l.b16 %v479
      %v2072 = vunpack.c.h.b16 %v479
      %v2073 = vunpack.c.l.b16 %v480
      %v2074 = vunpack.c.h.b16 %v480
      %v2075 = vunpack.c.l.b16 %v481
      %v2076 = vunpack.c.h.b16 %v481
      %v2077 = vunpack.c.l.b16 %v482
      %v2078 = vunpack.c.h.b16 %v482
      %v2079 = vunpack.c.l.b16 %v483
      %v2080 = vunpack.c.h.b16 %v483
      %v2081 = vunpack.c.l.b16 %v484
      %v2082 = vunpack.c.h.b16 %v484
      %v2083 = vunpack.c.l.b16 %v485
      %v2084 = vunpack.c.h.b16 %v485
      %v2085 = vunpack.c.l.b16 %v486
      %v2086 = vunpack.c.h.b16 %v486
      %v2087 = vunpack.c.l.b16 %v487
      %v2088 = vunpack.c.h.b16 %v487
      %v2089 = vunpack.c.l.b16 %v488
      %v2090 = vunpack.c.h.b16 %v488
      %v2091 = vunpack.c.l.b16 %v489
      %v2092 = vunpack.c.h.b16 %v489
      %v2093 = vunpack.c.l.b16 %v490
      %v2094 = vunpack.c.h.b16 %v490
      %v2095 = vunpack.c.l.b16 %v491
      %v2096 = vunpack.c.h.b16 %v491
      %v2097 = vunpack.c.l.b16 %v492
      %v2098 = vunpack.c.h.b16 %v492
      %v2099 = vunpack.c.l.b16 %v493
      %v2100 = vunpack.c.h.b16 %v493
      %v2101 = vunpack.c.l.b16 %v494
      %v2102 = vunpack.c.h.b16 %v494
      %v2103 = vunpack.c.l.b16 %v495
      %v2104 = vunpack.c.h.b16 %v495
      %v2105 = vunpack.c.l.b16 %v496
      %v2106 = vunpack.c.h.b16 %v496
      %v2107 = vunpack.c.l.b16 %v497
      %v2108 = vunpack.c.h.b16 %v497
      %v2109 = vunpack.c.l.b16 %v498
      %v2110 = vunpack.c.h.b16 %v498
      %v2111 = vunpack.c.l.b16 %v499
      %v2112 = vunpack.c.h.b16 %v499
      %v2113 = vunpack.c.l.b16 %v500
      %v2114 = vunpack.c.h.b16 %v500
      %v2115 = vunpack.c.l.b16 %v501
      %v2116 = vunpack.c.h.b16 %v501
      %v2117 = vunpack.c.l.b16 %v502
      %v2118 = vunpack.c.h.b16 %v502
      %v2119 = vunpack.c.l.b16 %v503
      %v2120 = vunpack.c.h.b16 %v503
      %v2121 = vunpack.c.l.b16 %v504
      %v2122 = vunpack.c.h.b16 %v504
      %v2123 = vunpack.c.l.b16 %v505
      %v2124 = vunpack.c.h.b16 %v505
      %v2125 = vunpack.c.l.b16 %v506
      %v2126 = vunpack.c.h.b16 %v506
      %v2127 = vunpack.c.l.b16 %v507
      %v2128 = vunpack.c.h.b16 %v507
      %v2129 = vunpack.c.l.b16 %v508
      %v2130 = vunpack.c.h.b16 %v508
      %v2131 = vunpack.c.l.b16 %v509
      %v2132 = vunpack.c.h.b16 %v509
      %v2133 = vunpack.c.l.b16 %v510
      %v2134 = vunpack.c.h.b16 %v510
      %v2135 = vunpack.c.l.b16 %v511
      %v2136 = vunpack.c.h.b16 %v511
      %v2137 = vunpack.c.l.b16 %v512
      %v2138 = vunpack.c.h.b16 %v512
      %v2139 = vunpack.c.l.b16 %v513
      %v2140 = vunpack.c.h.b16 %v513
      %v2141 = vunpack.c.l.b16 %v514
      %v2142 = vunpack.c.h.b16 %v514
      %v2143 = vunpack.c.l.b16 %v515
      %v2144 = vunpack.c.h.b16 %v515
      %v2145 = vunpack.c.l.b16 %v516
      %v2146 = vunpack.c.h.b16 %v516
      %v2147 = vunpack.c.l.b16 %v517
      %v2148 = vunpack.c.h.b16 %v517
      %v2149 = vunpack.c.l.b16 %v518
      %v2150 = vunpack.c.h.b16 %v518
      %v2151 = vunpack.c.l.b16 %v519
      %v2152 = vunpack.c.h.b16 %v519
      %v2153 = vunpack.c.l.b16 %v520
      %v2154 = vunpack.c.h.b16 %v520
      %v2155 = vunpack.c.l.b16 %v521
      %v2156 = vunpack.c.h.b16 %v521
      %v2157 = vunpack.c.l.b16 %v522
      %v2158 = vunpack.c.h.b16 %v522
      %v2159 = vunpack.c.l.b16 %v523
      %v2160 = vunpack.c.h.b16 %v523
      %v2161 = vunpack.c.l.b16 %v524
      %v2162 = vunpack.c.h.b16 %v524
      %v2163 = vunpack.c.l.b16 %v525
      %v2164 = vunpack.c.h.b16 %v525
      %v2165 = vunpack.c.l.b16 %v526
      %v2166 = vunpack.c.h.b16 %v526
      %v2167 = vunpack.c.l.b16 %v527
      %v2168 = vunpack.c.h.b16 %v527
      %v2169 = vunpack.c.l.b16 %v528
      %v2170 = vunpack.c.h.b16 %v528
      %v2171 = vunpack.c.l.b16 %v529
      %v2172 = vunpack.c.h.b16 %v529
      %v2173 = vunpack.c.l.b16 %v530
      %v2174 = vunpack.c.h.b16 %v530
      %v2175 = vunpack.c.l.b16 %v531
      %v2176 = vunpack.c.h.b16 %v531
      %v2177 = vunpack.c.l.b16 %v532
      %v2178 = vunpack.c.h.b16 %v532
      %v2179 = vunpack.c.l.b16 %v533
      %v2180 = vunpack.c.h.b16 %v533
      %v2181 = vunpack.c.l.b16 %v534
      %v2182 = vunpack.c.h.b16 %v534
      %v2183 = vunpack.c.l.b16 %v535
      %v2184 = vunpack.c.h.b16 %v535
      %v2185 = vunpack.c.l.b16 %v536
      %v2186 = vunpack.c.h.b16 %v536
      %v2187 = vunpack.c.l.b16 %v537
      %v2188 = vunpack.c.h.b16 %v537
      %v2189 = vunpack.c.l.b16 %v538
      %v2190 = vunpack.c.h.b16 %v538
      %v2191 = vunpack.c.l.b16 %v539
      %v2192 = vunpack.c.h.b16 %v539
      %v2193 = vunpack.c.l.b16 %v540
      %v2194 = vunpack.c.h.b16 %v540
      %v2195 = vunpack.c.l.b16 %v541
      %v2196 = vunpack.c.h.b16 %v541
      %v2197 = vunpack.c.l.b16 %v542
      %v2198 = vunpack.c.h.b16 %v542
      %v2199 = vunpack.c.l.b16 %v543
      %v2200 = vunpack.c.h.b16 %v543
      %v2201 = vunpack.c.l.b16 %v544
      %v2202 = vunpack.c.h.b16 %v544
      %v2203 = vunpack.c.l.b16 %v545
      %v2204 = vunpack.c.h.b16 %v545
      %v2205 = vunpack.c.l.b16 %v546
      %v2206 = vunpack.c.h.b16 %v546
      %v2207 = vunpack.c.l.b16 %v547
      %v2208 = vunpack.c.h.b16 %v547
      %v2209 = vunpack.c.l.b16 %v548
      %v2210 = vunpack.c.h.b16 %v548
      %v2211 = vunpack.c.l.b16 %v549
      %v2212 = vunpack.c.h.b16 %v549
      %v2213 = vunpack.c.l.b16 %v550
      %v2214 = vunpack.c.h.b16 %v550
      %v2215 = vunpack.c.l.b16 %v551
      %v2216 = vunpack.c.h.b16 %v551
      %v2217 = vunpack.c.l.b16 %v552
      %v2218 = vunpack.c.h.b16 %v552
      %v2219 = vunpack.c.l.b16 %v553
      %v2220 = vunpack.c.h.b16 %v553
      %v2221 = vunpack.c.l.b16 %v554
      %v2222 = vunpack.c.h.b16 %v554
      %v2223 = vunpack.c.l.b16 %v555
      %v2224 = vunpack.c.h.b16 %v555
      %v2225 = vunpack.c.l.b16 %v556
      %v2226 = vunpack.c.h.b16 %v556
      %v2227 = vunpack.c.l.b16 %v557
      %v2228 = vunpack.c.h.b16 %v557
      %v2229 = vunpack.c.l.b16 %v558
      %v2230 = vunpack.c.h.b16 %v558
      %v2231 = vunpack.c.l.b16 %v559
      %v2232 = vunpack.c.h.b16 %v559
      %v2233 = vunpack.c.l.b16 %v560
      %v2234 = vunpack.c.h.b16 %v560
      %v2235 = vunpack.c.l.b16 %v561
      %v2236 = vunpack.c.h.b16 %v561
      %v2237 = vunpack.c.l.b16 %v562
      %v2238 = vunpack.c.h.b16 %v562
      %v2239 = vunpack.c.l.b16 %v563
      %v2240 = vunpack.c.h.b16 %v563
      %v2241 = vunpack.c.l.b16 %v564
      %v2242 = vunpack.c.h.b16 %v564
      %v2243 = vunpack.c.l.b16 %v565
      %v2244 = vunpack.c.h.b16 %v565
      %v2245 = vunpack.c.l.b16 %v566
      %v2246 = vunpack.c.h.b16 %v566
      %v2247 = vunpack.c.l.b16 %v567
      %v2248 = vunpack.c.h.b16 %v567
      %v2249 = vunpack.c.l.b16 %v568
      %v2250 = vunpack.c.h.b16 %v568
      %v2251 = vunpack.c.l.b16 %v569
      %v2252 = vunpack.c.h.b16 %v569
      %v2253 = vunpack.c.l.b16 %v570
      %v2254 = vunpack.c.h.b16 %v570
      %v2255 = vunpack.c.l.b16 %v571
      %v2256 = vunpack.c.h.b16 %v571
      %v2257 = vunpack.c.l.b16 %v572
      %v2258 = vunpack.c.h.b16 %v572
      %v2259 = vunpack.c.l.b16 %v573
      %v2260 = vunpack.c.h.b16 %v573
      %v2261 = vunpack.c.l.b16 %v574
      %v2262 = vunpack.c.h.b16 %v574
      %v2263 = vunpack.c.l.b16 %v575
      %v2264 = vunpack.c.h.b16 %v575
      %v2265 = vunpack.c.l.b16 %v576
      %v2266 = vunpack.c.h.b16 %v576
      %v2267 = vunpack.c.l.b16 %v577
      %v2268 = vunpack.c.h.b16 %v577
      %v2269 = vunpack.c.l.b16 %v578
      %v2270 = vunpack.c.h.b16 %v578
      %v2271 = vunpack.c.l.b16 %v579
      %v2272 = vunpack.c.h.b16 %v579
      %v2273 = vunpack.c.l.b16 %v580
      %v2274 = vunpack.c.h.b16 %v580
      %v2275 = vunpack.c.l.b16 %v581
      %v2276 = vunpack.c.h.b16 %v581
      %v2277 = vunpack.c.l.b16 %v582
      %v2278 = vunpack.c.h.b16 %v582
      %v2279 = vunpack.c.l.b16 %v583
      %v2280 = vunpack.c.h.b16 %v583
      %v2281 = vunpack.c.l.b16 %v584
      %v2282 = vunpack.c.h.b16 %v584
      %v2283 = vunpack.c.l.b16 %v585
      %v2284 = vunpack.c.h.b16 %v585
      %v2285 = vunpack.c.l.b16 %v586
      %v2286 = vunpack.c.h.b16 %v586
      %v2287 = vunpack.c.l.b16 %v587
      %v2288 = vunpack.c.h.b16 %v587
      %v2289 = vunpack.c.l.b16 %v588
      %v2290 = vunpack.c.h.b16 %v588
      %v2291 = vunpack.c.l.b16 %v589
      %v2292 = vunpack.c.h.b16 %v589
      %v2293 = vunpack.c.l.b16 %v590
      %v2294 = vunpack.c.h.b16 %v590
      %v2295 = vunpack.c.l.b16 %v591
      %v2296 = vunpack.c.h.b16 %v591
      %v2297 = vunpack.c.l.b16 %v592
      %v2298 = vunpack.c.h.b16 %v592
      %v2299 = vunpack.c.l.b16 %v593
      %v2300 = vunpack.c.h.b16 %v593
      %v2301 = vunpack.c.l.b16 %v594
      %v2302 = vunpack.c.h.b16 %v594
      %v2303 = vunpack.c.l.b16 %v595
      %v2304 = vunpack.c.h.b16 %v595
      %v2305 = vunpack.c.l.b16 %v596
      %v2306 = vunpack.c.h.b16 %v596
      %v2307 = vunpack.c.l.b16 %v597
      %v2308 = vunpack.c.h.b16 %v597
      %v2309 = vunpack.c.l.b16 %v598
      %v2310 = vunpack.c.h.b16 %v598
      %v2311 = vunpack.c.l.b16 %v599
      %v2312 = vunpack.c.h.b16 %v599
      %v2313 = vunpack.c.l.b16 %v600
      %v2314 = vunpack.c.h.b16 %v600
      %v2315 = vunpack.c.l.b16 %v601
      %v2316 = vunpack.c.h.b16 %v601
      %v2317 = vunpack.c.l.b16 %v602
      %v2318 = vunpack.c.h.b16 %v602
      %v2319 = vunpack.c.l.b16 %v603
      %v2320 = vunpack.c.h.b16 %v603
      %v2321 = vunpack.c.l.b16 %v604
      %v2322 = vunpack.c.h.b16 %v604
      %v2323 = vunpack.c.l.b16 %v605
      %v2324 = vunpack.c.h.b16 %v605
      %v2325 = vunpack.c.l.b16 %v606
      %v2326 = vunpack.c.h.b16 %v606
      %v2327 = vunpack.c.l.b16 %v607
      %v2328 = vunpack.c.h.b16 %v607
      %v2329 = vunpack.c.l.b16 %v608
      %v2330 = vunpack.c.h.b16 %v608
      %v2331 = vunpack.c.l.b16 %v609
      %v2332 = vunpack.c.h.b16 %v609
      %v2333 = vunpack.c.l.b16 %v610
      %v2334 = vunpack.c.h.b16 %v610
      %v2335 = vunpack.c.l.b16 %v611
      %v2336 = vunpack.c.h.b16 %v611
      %v2337 = vunpack.c.l.b16 %v612
      %v2338 = vunpack.c.h.b16 %v612
      %v2339 = vunpack.c.l.b16 %v613
      %v2340 = vunpack.c.h.b16 %v613
      %v2341 = vunpack.c.l.b16 %v614
      %v2342 = vunpack.c.h.b16 %v614
      %v2343 = vunpack.c.l.b16 %v615
      %v2344 = vunpack.c.h.b16 %v615
      %v2345 = vunpack.c.l.b16 %v616
      %v2346 = vunpack.c.h.b16 %v616
      %v2347 = vunpack.c.l.b16 %v617
      %v2348 = vunpack.c.h.b16 %v617
      %v2349 = vunpack.c.l.b16 %v618
      %v2350 = vunpack.c.h.b16 %v618
      %v2351 = vunpack.c.l.b16 %v619
      %v2352 = vunpack.c.h.b16 %v619
      %v2353 = vunpack.c.l.b16 %v620
      %v2354 = vunpack.c.h.b16 %v620
      %v2355 = vunpack.c.l.b16 %v621
      %v2356 = vunpack.c.h.b16 %v621
      %v2357 = vunpack.c.l.b16 %v622
      %v2358 = vunpack.c.h.b16 %v622
      %v2359 = vunpack.c.l.b16 %v623
      %v2360 = vunpack.c.h.b16 %v623
      %v2361 = vunpack.c.l.b16 %v624
      %v2362 = vunpack.c.h.b16 %v624
      %v2363 = vunpack.c.l.b16 %v625
      %v2364 = vunpack.c.h.b16 %v625
      %v2365 = vunpack.c.l.b16 %v626
      %v2366 = vunpack.c.h.b16 %v626
      %v2367 = vunpack.c.l.b16 %v627
      %v2368 = vunpack.c.h.b16 %v627
      %v2369 = vunpack.c.l.b16 %v628
      %v2370 = vunpack.c.h.b16 %v628
      %v2371 = vunpack.c.l.b16 %v629
      %v2372 = vunpack.c.h.b16 %v629
      %v2373 = vunpack.c.l.b16 %v630
      %v2374 = vunpack.c.h.b16 %v630
      %v2375 = vunpack.c.l.b16 %v631
      %v2376 = vunpack.c.h.b16 %v631
      %v2377 = vunpack.c.l.b16 %v632
      %v2378 = vunpack.c.h.b16 %v632
      %v2379 = vunpack.c.l.b16 %v633
      %v2380 = vunpack.c.h.b16 %v633
      %v2381 = vunpack.c.l.b16 %v634
      %v2382 = vunpack.c.h.b16 %v634
      %v2383 = vunpack.c.l.b16 %v635
      %v2384 = vunpack.c.h.b16 %v635
      %v2385 = vunpack.c.l.b16 %v636
      %v2386 = vunpack.c.h.b16 %v636
      %v2387 = vunpack.c.l.b16 %v637
      %v2388 = vunpack.c.h.b16 %v637
      %v2389 = vunpack.c.l.b16 %v638
      %v2390 = vunpack.c.h.b16 %v638
      %v2391 = vunpack.c.l.b16 %v639
      %v2392 = vunpack.c.h.b16 %v639
      %v2393 = vunpack.c.l.b16 %v640
      %v2394 = vunpack.c.h.b16 %v640
      %v2395 = vunpack.c.l.b16 %v641
      %v2396 = vunpack.c.h.b16 %v641
      %v2397 = vunpack.c.l.b16 %v642
      %v2398 = vunpack.c.h.b16 %v642
      %v2399 = vunpack.c.l.b16 %v643
      %v2400 = vunpack.c.h.b16 %v643
      %v2401 = vunpack.c.l.b16 %v644
      %v2402 = vunpack.c.h.b16 %v644
      %v2403 = vunpack.c.l.b16 %v645
      %v2404 = vunpack.c.h.b16 %v645
      %v2405 = vunpack.c.l.b16 %v646
      %v2406 = vunpack.c.h.b16 %v646
      %v2407 = vunpack.c.l.b16 %v647
      %v2408 = vunpack.c.h.b16 %v647
      %v2409 = vunpack.c.l.b16 %v648
      %v2410 = vunpack.c.h.b16 %v648
      %v2411 = vunpack.c.l.b16 %v649
      %v2412 = vunpack.c.h.b16 %v649
      %v2413 = vunpack.c.l.b16 %v650
      %v2414 = vunpack.c.h.b16 %v650
      %v2415 = vunpack.c.l.b16 %v651
      %v2416 = vunpack.c.h.b16 %v651
      %v2417 = vunpack.c.l.b16 %v652
      %v2418 = vunpack.c.h.b16 %v652
      %v2419 = vunpack.c.l.b16 %v653
      %v2420 = vunpack.c.h.b16 %v653
      %v2421 = vunpack.c.l.b16 %v654
      %v2422 = vunpack.c.h.b16 %v654
      %v2423 = vunpack.c.l.b16 %v655
      %v2424 = vunpack.c.h.b16 %v655
      %v2425 = vunpack.c.l.b16 %v656
      %v2426 = vunpack.c.h.b16 %v656
      %v2427 = vunpack.c.l.b16 %v657
      %v2428 = vunpack.c.h.b16 %v657
      %v2429 = vunpack.c.l.b16 %v658
      %v2430 = vunpack.c.h.b16 %v658
      %v2431 = vunpack.c.l.b16 %v659
      %v2432 = vunpack.c.h.b16 %v659
      %v2433 = vunpack.c.l.b16 %v660
      %v2434 = vunpack.c.h.b16 %v660
      %v2435 = vunpack.c.l.b16 %v661
      %v2436 = vunpack.c.h.b16 %v661
      %v2437 = vunpack.c.l.b16 %v662
      %v2438 = vunpack.c.h.b16 %v662
      %v2439 = vunpack.c.l.b16 %v663
      %v2440 = vunpack.c.h.b16 %v663
      %v2441 = vunpack.c.l.b16 %v664
      %v2442 = vunpack.c.h.b16 %v664
      %v2443 = vunpack.c.l.b16 %v665
      %v2444 = vunpack.c.h.b16 %v665
      %v2445 = vunpack.c.l.b16 %v666
      %v2446 = vunpack.c.h.b16 %v666
      %v2447 = vunpack.c.l.b16 %v667
      %v2448 = vunpack.c.h.b16 %v667
      %v2449 = vunpack.c.l.b16 %v668
      %v2450 = vunpack.c.h.b16 %v668
      %v2451 = vunpack.c.l.b16 %v669
      %v2452 = vunpack.c.h.b16 %v669
      %v2453 = vunpack.c.l.b16 %v670
      %v2454 = vunpack.c.h.b16 %v670
      %v2455 = vunpack.c.l.b16 %v671
      %v2456 = vunpack.c.h.b16 %v671
      %v2457 = vunpack.c.l.b16 %v672
      %v2458 = vunpack.c.h.b16 %v672
      %v2459 = vunpack.c.l.b16 %v673
      %v2460 = vunpack.c.h.b16 %v673
      %v2461 = vunpack.c.l.b16 %v674
      %v2462 = vunpack.c.h.b16 %v674
      %v2463 = vunpack.c.l.b16 %v675
      %v2464 = vunpack.c.h.b16 %v675
      %v2465 = vunpack.c.l.b16 %v676
      %v2466 = vunpack.c.h.b16 %v676
      %v2467 = vunpack.c.l.b16 %v677
      %v2468 = vunpack.c.h.b16 %v677
      %v2469 = vunpack.c.l.b16 %v678
      %v2470 = vunpack.c.h.b16 %v678
      %v2471 = vunpack.c.l.b16 %v679
      %v2472 = vunpack.c.h.b16 %v679
      %v2473 = vunpack.c.l.b16 %v680
      %v2474 = vunpack.c.h.b16 %v680
      %v2475 = vunpack.c.l.b16 %v681
      %v2476 = vunpack.c.h.b16 %v681
      %v2477 = vunpack.c.l.b16 %v682
      %v2478 = vunpack.c.h.b16 %v682
      %v2479 = vunpack.c.l.b16 %v683
      %v2480 = vunpack.c.h.b16 %v683
      %v2481 = vunpack.c.l.b16 %v684
      %v2482 = vunpack.c.h.b16 %v684
      %v2483 = vunpack.c.l.b16 %v685
      %v2484 = vunpack.c.h.b16 %v685
      %v2485 = vunpack.c.l.b16 %v686
      %v2486 = vunpack.c.h.b16 %v686
      %v2487 = vunpack.c.l.b16 %v687
      %v2488 = vunpack.c.h.b16 %v687
      %v2489 = vunpack.c.l.b16 %v688
      %v2490 = vunpack.c.h.b16 %v688
      %v2491 = vunpack.c.l.b16 %v689
      %v2492 = vunpack.c.h.b16 %v689
      %v2493 = vunpack.c.l.b16 %v690
      %v2494 = vunpack.c.h.b16 %v690
      %v2495 = vunpack.c.l.b16 %v691
      %v2496 = vunpack.c.h.b16 %v691
      %v2497 = vunpack.c.l.b16 %v692
      %v2498 = vunpack.c.h.b16 %v692
      %v2499 = vunpack.c.l.b16 %v693
      %v2500 = vunpack.c.h.b16 %v693
      %v2501 = vunpack.c.l.b16 %v694
      %v2502 = vunpack.c.h.b16 %v694
      %v2503 = vunpack.c.l.b16 %v695
      %v2504 = vunpack.c.h.b16 %v695
      %v2505 = vunpack.c.l.b16 %v696
      %v2506 = vunpack.c.h.b16 %v696
      %v2507 = vunpack.c.l.b16 %v697
      %v2508 = vunpack.c.h.b16 %v697
      %v2509 = vunpack.c.l.b16 %v698
      %v2510 = vunpack.c.h.b16 %v698
      %v2511 = vunpack.c.l.b16 %v699
      %v2512 = vunpack.c.h.b16 %v699
      %v2513 = vunpack.c.l.b16 %v700
      %v2514 = vunpack.c.h.b16 %v700
      %v2515 = vunpack.c.l.b16 %v701
      %v2516 = vunpack.c.h.b16 %v701
      %v2517 = vunpack.c.l.b16 %v702
      %v2518 = vunpack.c.h.b16 %v702
      %v2519 = vunpack.c.l.b16 %v703
      %v2520 = vunpack.c.h.b16 %v703
      %v2521 = vunpack.c.l.b16 %v704
      %v2522 = vunpack.c.h.b16 %v704
      %v2523 = vunpack.c.l.b16 %v705
      %v2524 = vunpack.c.h.b16 %v705
      %v2525 = vunpack.c.l.b16 %v706
      %v2526 = vunpack.c.h.b16 %v706
      %v2527 = vunpack.c.l.b16 %v707
      %v2528 = vunpack.c.h.b16 %v707
      %v2529 = vunpack.c.l.b16 %v708
      %v2530 = vunpack.c.h.b16 %v708
      %v2531 = vunpack.c.l.b16 %v709
      %v2532 = vunpack.c.h.b16 %v709
      %v2533 = vunpack.c.l.b16 %v710
      %v2534 = vunpack.c.h.b16 %v710
      %v2535 = vunpack.c.l.b16 %v711
      %v2536 = vunpack.c.h.b16 %v711
      %v2537 = vunpack.c.l.b16 %v712
      %v2538 = vunpack.c.h.b16 %v712
      %v2539 = vunpack.c.l.b16 %v713
      %v2540 = vunpack.c.h.b16 %v713
      %v2541 = vunpack.c.l.b16 %v714
      %v2542 = vunpack.c.h.b16 %v714
      %v2543 = vunpack.c.l.b16 %v715
      %v2544 = vunpack.c.h.b16 %v715
      %v2545 = vunpack.c.l.b16 %v716
      %v2546 = vunpack.c.h.b16 %v716
      %v2547 = vunpack.c.l.b16 %v717
      %v2548 = vunpack.c.h.b16 %v717
      %v2549 = vunpack.c.l.b16 %v718
      %v2550 = vunpack.c.h.b16 %v718
      %v2551 = vunpack.c.l.b16 %v719
      %v2552 = vunpack.c.h.b16 %v719
      %v2553 = vunpack.c.l.b16 %v720
      %v2554 = vunpack.c.h.b16 %v720
      %v2555 = vunpack.c.l.b16 %v721
      %v2556 = vunpack.c.h.b16 %v721
      %v2557 = vunpack.c.l.b16 %v722
      %v2558 = vunpack.c.h.b16 %v722
      %v2559 = vunpack.c.l.b16 %v723
      %v2560 = vunpack.c.h.b16 %v723
      %v2561 = vunpack.c.l.b16 %v724
      %v2562 = vunpack.c.h.b16 %v724
      %v2563 = vunpack.c.l.b16 %v725
      %v2564 = vunpack.c.h.b16 %v725
      %v2565 = vunpack.c.l.b16 %v726
      %v2566 = vunpack.c.h.b16 %v726
      %v2567 = vunpack.c.l.b16 %v727
      %v2568 = vunpack.c.h.b16 %v727
      %v2569 = vunpack.c.l.b16 %v728
      %v2570 = vunpack.c.h.b16 %v728
      %v2571 = vunpack.c.l.b16 %v729
      %v2572 = vunpack.c.h.b16 %v729
      %v2573 = vunpack.c.l.b16 %v730
      %v2574 = vunpack.c.h.b16 %v730
      %v2575 = vunpack.c.l.b16 %v731
      %v2576 = vunpack.c.h.b16 %v731
      %v2577 = vunpack.c.l.b16 %v732
      %v2578 = vunpack.c.h.b16 %v732
      %v2579 = vunpack.c.l.b16 %v733
      %v2580 = vunpack.c.h.b16 %v733
      %v2581 = vunpack.c.l.b16 %v734
      %v2582 = vunpack.c.h.b16 %v734
      %v2583 = vunpack.c.l.b16 %v735
      %v2584 = vunpack.c.h.b16 %v735
      %v2585 = vunpack.c.l.b16 %v736
      %v2586 = vunpack.c.h.b16 %v736
      %v2587 = vunpack.c.l.b16 %v737
      %v2588 = vunpack.c.h.b16 %v737
      %v2589 = vunpack.c.l.b16 %v738
      %v2590 = vunpack.c.h.b16 %v738
      %v2591 = vunpack.c.l.b16 %v739
      %v2592 = vunpack.c.h.b16 %v739
      %v2593 = vunpack.c.l.b16 %v740
      %v2594 = vunpack.c.h.b16 %v740
      %v2595 = vunpack.c.l.b16 %v741
      %v2596 = vunpack.c.h.b16 %v741
      %v2597 = vunpack.c.l.b16 %v742
      %v2598 = vunpack.c.h.b16 %v742
      %v2599 = vunpack.c.l.b16 %v743
      %v2600 = vunpack.c.h.b16 %v743
      %v2601 = vunpack.c.l.b16 %v744
      %v2602 = vunpack.c.h.b16 %v744
      %v2603 = vunpack.c.l.b16 %v745
      %v2604 = vunpack.c.h.b16 %v745
      %v2605 = vunpack.c.l.b16 %v746
      %v2606 = vunpack.c.h.b16 %v746
      %v2607 = vunpack.c.l.b16 %v747
      %v2608 = vunpack.c.h.b16 %v747
      %v2609 = vunpack.c.l.b16 %v748
      %v2610 = vunpack.c.h.b16 %v748
      %v2611 = vunpack.c.l.b16 %v749
      %v2612 = vunpack.c.h.b16 %v749
      %v2613 = vunpack.c.l.b16 %v750
      %v2614 = vunpack.c.h.b16 %v750
      %v2615 = vunpack.c.l.b16 %v751
      %v2616 = vunpack.c.h.b16 %v751
      %v2617 = vunpack.c.l.b16 %v752
      %v2618 = vunpack.c.h.b16 %v752
      %v2619 = vunpack.c.l.b16 %v753
      %v2620 = vunpack.c.h.b16 %v753
      %v2621 = vunpack.c.l.b16 %v754
      %v2622 = vunpack.c.h.b16 %v754
      %v2623 = vunpack.c.l.b16 %v755
      %v2624 = vunpack.c.h.b16 %v755
      %v2625 = vunpack.c.l.b16 %v756
      %v2626 = vunpack.c.h.b16 %v756
      %v2627 = vunpack.c.l.b16 %v757
      %v2628 = vunpack.c.h.b16 %v757
      %v2629 = vunpack.c.l.b16 %v758
      %v2630 = vunpack.c.h.b16 %v758
      %v2631 = vunpack.c.l.b16 %v759
      %v2632 = vunpack.c.h.b16 %v759
      %v2633 = vunpack.c.l.b16 %v760
      %v2634 = vunpack.c.h.b16 %v760
      %v2635 = vunpack.c.l.b16 %v761
      %v2636 = vunpack.c.h.b16 %v761
      %v2637 = vunpack.c.l.b16 %v762
      %v2638 = vunpack.c.h.b16 %v762
      %v2639 = vunpack.c.l.b16 %v763
      %v2640 = vunpack.c.h.b16 %v763
      %v2641 = vunpack.c.l.b16 %v764
      %v2642 = vunpack.c.h.b16 %v764
      %v2643 = vunpack.c.l.b16 %v765
      %v2644 = vunpack.c.h.b16 %v765
      %v2645 = vunpack.c.l.b16 %v766
      %v2646 = vunpack.c.h.b16 %v766
      %v2647 = vunpack.c.l.b16 %v767
      %v2648 = vunpack.c.h.b16 %v767
      %v2649 = vunpack.c.l.b16 %v768
      %v2650 = vunpack.c.h.b16 %v768
      %v2651 = vunpack.c.l.b16 %v769
      %v2652 = vunpack.c.h.b16 %v769
      %v2653 = vunpack.c.l.b16 %v770
      %v2654 = vunpack.c.h.b16 %v770
      %v2655 = vunpack.c.l.b16 %v771
      %v2656 = vunpack.c.h.b16 %v771
      %v2657 = vunpack.c.l.b16 %v772
      %v2658 = vunpack.c.h.b16 %v772
      %v2659 = vunpack.c.l.b16 %v773
      %v2660 = vunpack.c.h.b16 %v773
      %v2661 = vunpack.c.l.b16 %v774
      %v2662 = vunpack.c.h.b16 %v774
      %v2663 = vunpack.c.l.b16 %v775
      %v2664 = vunpack.c.h.b16 %v775
      %v2665 = vunpack.c.l.b16 %v776
      %v2666 = vunpack.c.h.b16 %v776
      %v2667 = vunpack.c.l.b16 %v777
      %v2668 = vunpack.c.h.b16 %v777
      %v2669 = vunpack.c.l.b16 %v778
      %v2670 = vunpack.c.h.b16 %v778
      %v2671 = vunpack.c.l.b16 %v779
      %v2672 = vunpack.c.h.b16 %v779
      %v2673 = vunpack.c.l.b16 %v780
      %v2674 = vunpack.c.h.b16 %v780
      %v2675 = vunpack.c.l.b16 %v781
      %v2676 = vunpack.c.h.b16 %v781
      %v2677 = vunpack.c.l.b16 %v782
      %v2678 = vunpack.c.h.b16 %v782
      %v2679 = vunpack.c.l.b16 %v783
      %v2680 = vunpack.c.h.b16 %v783
      %v2681 = vunpack.c.l.b16 %v784
      %v2682 = vunpack.c.h.b16 %v784
      %v2683 = vunpack.c.l.b16 %v785
      %v2684 = vunpack.c.h.b16 %v785
      %v2685 = vunpack.c.l.b16 %v786
      %v2686 = vunpack.c.h.b16 %v786
      %v2687 = vunpack.c.l.b16 %v787
      %v2688 = vunpack.c.h.b16 %v787
      %v2689 = vunpack.c.l.b16 %v788
      %v2690 = vunpack.c.h.b16 %v788
      %v2691 = vunpack.c.l.b16 %v789
      %v2692 = vunpack.c.h.b16 %v789
      %v2693 = vunpack.c.l.b16 %v790
      %v2694 = vunpack.c.h.b16 %v790
      %v2695 = vunpack.c.l.b16 %v791
      %v2696 = vunpack.c.h.b16 %v791
      %v2697 = vunpack.c.l.b16 %v792
      %v2698 = vunpack.c.h.b16 %v792
      %v2699 = vunpack.c.l.b16 %v793
      %v2700 = vunpack.c.h.b16 %v793
      %v2701 = vunpack.c.l.b16 %v794
      %v2702 = vunpack.c.h.b16 %v794
      %v2703 = vunpack.c.l.b16 %v795
      %v2704 = vunpack.c.h.b16 %v795
      %v2705 = vunpack.c.l.b16 %v796
      %v2706 = vunpack.c.h.b16 %v796
      %v2707 = vunpack.c.l.b16 %v797
      %v2708 = vunpack.c.h.b16 %v797
      %v2709 = vunpack.c.l.b16 %v798
      %v2710 = vunpack.c.h.b16 %v798
      %v2711 = vunpack.c.l.b16 %v799
      %v2712 = vunpack.c.h.b16 %v799
      %v2713 = vunpack.c.l.b16 %v800
      %v2714 = vunpack.c.h.b16 %v800
      %v2715 = vunpack.c.l.b16 %v801
      %v2716 = vunpack.c.h.b16 %v801
      %v2717 = vunpack.c.l.b16 %v802
      %v2718 = vunpack.c.h.b16 %v802
      %v2719 = vunpack.c.l.b16 %v803
      %v2720 = vunpack.c.h.b16 %v803
      %v2721 = vunpack.c.l.b16 %v804
      %v2722 = vunpack.c.h.b16 %v804
      %v2723 = vunpack.c.l.b16 %v805
      %v2724 = vunpack.c.h.b16 %v805
      %v2725 = vunpack.c.l.b16 %v806
      %v2726 = vunpack.c.h.b16 %v806
      %v2727 = vunpack.c.l.b16 %v807
      %v2728 = vunpack.c.h.b16 %v807
      %v2729 = vunpack.c.l.b16 %v808
      %v2730 = vunpack.c.h.b16 %v808
      %v2731 = vunpack.c.l.b16 %v809
      %v2732 = vunpack.c.h.b16 %v809
      %v2733 = vunpack.c.l.b16 %v810
      %v2734 = vunpack.c.h.b16 %v810
      %v2735 = vunpack.c.l.b16 %v811
      %v2736 = vunpack.c.h.b16 %v811
      %v2737 = vunpack.c.l.b16 %v812
      %v2738 = vunpack.c.h.b16 %v812
      %v2739 = vpack.c.b16 %v1587, %v1459
      %v2740 = vpack.c.b16 %v1588, %v1460
      %v2741 = vpack.c.b16 %v1589, %v1461
      %v2742 = vpack.c.b16 %v1590, %v1462
      %v2743 = vpack.c.b16 %v1591, %v1463
      %v2744 = vpack.c.b16 %v1592, %v1464
      %v2745 = vpack.c.b16 %v1593, %v1465
      %v2746 = vpack.c.b16 %v1594, %v1466
      %v2747 = vpack.c.b16 %v1595, %v1467
      %v2748 = vpack.c.b16 %v1596, %v1468
      %v2749 = vpack.c.b16 %v1597, %v1469
      %v2750 = vpack.c.b16 %v1598, %v1470
      %v2751 = vpack.c.b16 %v1599, %v1471
      %v2752 = vpack.c.b16 %v1600, %v1472
      %v2753 = vpack.c.b16 %v1601, %v1473
      %v2754 = vpack.c.b16 %v1602, %v1474
      %v2755 = vpack.c.b16 %v1603, %v1475
      %v2756 = vpack.c.b16 %v1604, %v1476
      %v2757 = vpack.c.b16 %v1605, %v1477
      %v2758 = vpack.c.b16 %v1606, %v1478
      %v2759 = vpack.c.b16 %v1607, %v1479
      %v2760 = vpack.c.b16 %v1608, %v1480
      %v2761 = vpack.c.b16 %v1609, %v1481
      %v2762 = vpack.c.b16 %v1610, %v1482
      %v2763 = vpack.c.b16 %v1611, %v1483
      %v2764 = vpack.c.b16 %v1612, %v1484
      %v2765 = vpack.c.b16 %v1613, %v1485
      %v2766 = vpack.c.b16 %v1614, %v1486
      %v2767 = vpack.c.b16 %v1615, %v1487
      %v2768 = vpack.c.b16 %v1616, %v1488
      %v2769 = vpack.c.b16 %v1617, %v1489
      %v2770 = vpack.c.b16 %v1618, %v1490
      %v2771 = vpack.c.b16 %v1619, %v1491
      %v2772 = vpack.c.b16 %v1620, %v1492
      %v2773 = vpack.c.b16 %v1621, %v1493
      %v2774 = vpack.c.b16 %v1622, %v1494
      %v2775 = vpack.c.b16 %v1623, %v1495
      %v2776 = vpack.c.b16 %v1624, %v1496
      %v2777 = vpack.c.b16 %v1625, %v1497
      %v2778 = vpack.c.b16 %v1626, %v1498
      %v2779 = vpack.c.b16 %v1627, %v1499
      %v2780 = vpack.c.b16 %v1628, %v1500
      %v2781 = vpack.c.b16 %v1629, %v1501
      %v2782 = vpack.c.b16 %v1630, %v1502
      %v2783 = vpack.c.b16 %v1631, %v1503
      %v2784 = vpack.c.b16 %v1632, %v1504
      %v2785 = vpack.c.b16 %v1633, %v1505
      %v2786 = vpack.c.b16 %v1634, %v1506
      %v2787 = vpack.c.b16 %v1635, %v1507
      %v2788 = vpack.c.b16 %v1636, %v1508
      %v2789 = vpack.c.b16 %v1637, %v1509
      %v2790 = vpack.c.b16 %v1638, %v1510
      %v2791 = vpack.c.b16 %v1639, %v1511
      %v2792 = vpack.c.b16 %v1640, %v1512
      %v2793 = vpack.c.b16 %v1641, %v1513
      %v2794 = vpack.c.b16 %v1642, %v1514
      %v2795 = vpack.c.b16 %v1643, %v1515
      %v2796 = vpack.c.b16 %v1644, %v1516
      %v2797 = vpack.c.b16 %v1645, %v1517
      %v2798 = vpack.c.b16 %v1646, %v1518
      %v2799 = vpack.c.b16 %v1647, %v1519
      %v2800 = vpack.c.b16 %v1648, %v1520
      %v2801 = vpack.c.b16 %v1649, %v1521
      %v2802 = vpack.c.b16 %v1650, %v1522
      %v2803 = vpack.c.b16 %v1651, %v1523
      %v2804 = vpack.c.b16 %v1652, %v1524
      %v2805 = vpack.c.b16 %v1653, %v1525
      %v2806 = vpack.c.b16 %v1654, %v1526
      %v2807 = vpack.c.b16 %v1655, %v1527
      %v2808 = vpack.c.b16 %v1656, %v1528
      %v2809 = vpack.c.b16 %v1657, %v1529
      %v2810 = vpack.c.b16 %v1658, %v1530
      %v2811 = vpack.c.b16 %v1659, %v1531
      %v2812 = vpack.c.b16 %v1660, %v1532
      %v2813 = vpack.c.b16 %v1661, %v1533
      %v2814 = vpack.c.b16 %v1662, %v1534
      %v2815 = vpack.c.b16 %v1663, %v1535
      %v2816 = vpack.c.b16 %v1664, %v1536
      %v2817 = vpack.c.b16 %v1665, %v1537
      %v2818 = vpack.c.b16 %v1666, %v1538
      %v2819 = vpack.c.b16 %v1667, %v1539
      %v2820 = vpack.c.b16 %v1668, %v1540
      %v2821 = vpack.c.b16 %v1669, %v1541
      %v2822 = vpack.c.b16 %v1670, %v1542
      %v2823 = vpack.c.b16 %v1671, %v1543
      %v2824 = vpack.c.b16 %v1672, %v1544
      %v2825 = vpack.c.b16 %v1673, %v1545
      %v2826 = vpack.c.b16 %v1674, %v1546
      %v2827 = vpack.c.b16 %v1675, %v1547
      %v2828 = vpack.c.b16 %v1676, %v1548
      %v2829 = vpack.c.b16 %v1677, %v1549
      %v2830 = vpack.c.b16 %v1678, %v1550
      %v2831 = vpack.c.b16 %v1679, %v1551
      %v2832 = vpack.c.b16 %v1680, %v1552
      %v2833 = vpack.c.b16 %v1681, %v1553
      %v2834 = vpack.c.b16 %v1682, %v1554
      %v2835 = vpack.c.b16 %v1683, %v1555
      %v2836 = vpack.c.b16 %v1684, %v1556
      %v2837 = vpack.c.b16 %v1685, %v1557
      %v2838 = vpack.c.b16 %v1686, %v1558
      %v2839 = vpack.c.b16 %v1687, %v1559
      %v2840 = vpack.c.b16 %v1688, %v1560
      %v2841 = vpack.c.b16 %v1689, %v1561
      %v2842 = vpack.c.b16 %v1690, %v1562
      %v2843 = vpack.c.b16 %v1691, %v1563
      %v2844 = vpack.c.b16 %v1692, %v1564
      %v2845 = vpack.c.b16 %v1693, %v1565
      %v2846 = vpack.c.b16 %v1694, %v1566
      %v2847 = vpack.c.b16 %v1695, %v1567
      %v2848 = vpack.c.b16 %v1696, %v1568
      %v2849 = vpack.c.b16 %v1697, %v1569
      %v2850 = vpack.c.b16 %v1698, %v1570
      %v2851 = vpack.c.b16 %v1699, %v1571
      %v2852 = vpack.c.b16 %v1700, %v1572
      %v2853 = vpack.c.b16 %v1701, %v1573
      %v2854 = vpack.c.b16 %v1702, %v1574
      %v2855 = vpack.c.b16 %v1703, %v1575
      %v2856 = vpack.c.b16 %v1704, %v1576
      %v2857 = vpack.c.b16 %v1705, %v1577
      %v2858 = vpack.c.b16 %v1706, %v1578
      %v2859 = vpack.c.b16 %v1707, %v1579
      %v2860 = vpack.c.b16 %v1708, %v1580
      %v2861 = vpack.c.b16 %v1709, %v1581
      %v2862 = vpack.c.b16 %v1710, %v1582
      %v2863 = vpack.c.b16 %v1711, %v1583
      %v2864 = vpack.c.b16 %v1712, %v1584
      %v2865 = vpack.c.b16 %v1713, %v1585
      %v2866 = vpack.c.b16 %v1714, %v1586
      %v2867 = vpack.c.b16 %v1843, %v1715
      %v2868 = vpack.c.b16 %v1844, %v1716
      %v2869 = vpack.c.b16 %v1845, %v1717
      %v2870 = vpack.c.b16 %v1846, %v1718
      %v2871 = vpack.c.b16 %v1847, %v1719
      %v2872 = vpack.c.b16 %v1848, %v1720
      %v2873 = vpack.c.b16 %v1849, %v1721
      %v2874 = vpack.c.b16 %v1850, %v1722
      %v2875 = vpack.c.b16 %v1851, %v1723
      %v2876 = vpack.c.b16 %v1852, %v1724
      %v2877 = vpack.c.b16 %v1853, %v1725
      %v2878 = vpack.c.b16 %v1854, %v1726
      %v2879 = vpack.c.b16 %v1855, %v1727
      %v2880 = vpack.c.b16 %v1856, %v1728
      %v2881 = vpack.c.b16 %v1857, %v1729
      %v2882 = vpack.c.b16 %v1858, %v1730
      %v2883 = vpack.c.b16 %v1859, %v1731
      %v2884 = vpack.c.b16 %v1860, %v1732
      %v2885 = vpack.c.b16 %v1861, %v1733
      %v2886 = vpack.c.b16 %v1862, %v1734
      %v2887 = vpack.c.b16 %v1863, %v1735
      %v2888 = vpack.c.b16 %v1864, %v1736
      %v2889 = vpack.c.b16 %v1865, %v1737
      %v2890 = vpack.c.b16 %v1866, %v1738
      %v2891 = vpack.c.b16 %v1867, %v1739
      %v2892 = vpack.c.b16 %v1868, %v1740
      %v2893 = vpack.c.b16 %v1869, %v1741
      %v2894 = vpack.c.b16 %v1870, %v1742
      %v2895 = vpack.c.b16 %v1871, %v1743
      %v2896 = vpack.c.b16 %v1872, %v1744
      %v2897 = vpack.c.b16 %v1873, %v1745
      %v2898 = vpack.c.b16 %v1874, %v1746
      %v2899 = vpack.c.b16 %v1875, %v1747
      %v2900 = vpack.c.b16 %v1876, %v1748
      %v2901 = vpack.c.b16 %v1877, %v1749
      %v2902 = vpack.c.b16 %v1878, %v1750
      %v2903 = vpack.c.b16 %v1879, %v1751
      %v2904 = vpack.c.b16 %v1880, %v1752
      %v2905 = vpack.c.b16 %v1881, %v1753
      %v2906 = vpack.c.b16 %v1882, %v1754
      %v2907 = vpack.c.b16 %v1883, %v1755
      %v2908 = vpack.c.b16 %v1884, %v1756
      %v2909 = vpack.c.b16 %v1885, %v1757
      %v2910 = vpack.c.b16 %v1886, %v1758
      %v2911 = vpack.c.b16 %v1887, %v1759
      %v2912 = vpack.c.b16 %v1888, %v1760
      %v2913 = vpack.c.b16 %v1889, %v1761
      %v2914 = vpack.c.b16 %v1890, %v1762
      %v2915 = vpack.c.b16 %v1891, %v1763
      %v2916 = vpack.c.b16 %v1892, %v1764
      %v2917 = vpack.c.b16 %v1893, %v1765
      %v2918 = vpack.c.b16 %v1894, %v1766
      %v2919 = vpack.c.b16 %v1895, %v1767
      %v2920 = vpack.c.b16 %v1896, %v1768
      %v2921 = vpack.c.b16 %v1897, %v1769
      %v2922 = vpack.c.b16 %v1898, %v1770
      %v2923 = vpack.c.b16 %v1899, %v1771
      %v2924 = vpack.c.b16 %v1900, %v1772
      %v2925 = vpack.c.b16 %v1901, %v1773
      %v2926 = vpack.c.b16 %v1902, %v1774
      %v2927 = vpack.c.b16 %v1903, %v1775
      %v2928 = vpack.c.b16 %v1904, %v1776
      %v2929 = vpack.c.b16 %v1905, %v1777
      %v2930 = vpack.c.b16 %v1906, %v1778
      %v2931 = vpack.c.b16 %v1907, %v1779
      %v2932 = vpack.c.b16 %v1908, %v1780
      %v2933 = vpack.c.b16 %v1909, %v1781
      %v2934 = vpack.c.b16 %v1910, %v1782
      %v2935 = vpack.c.b16 %v1911, %v1783
      %v2936 = vpack.c.b16 %v1912, %v1784
      %v2937 = vpack.c.b16 %v1913, %v1785
      %v2938 = vpack.c.b16 %v1914, %v1786
      %v2939 = vpack.c.b16 %v1915, %v1787
      %v2940 = vpack.c.b16 %v1916, %v1788
      %v2941 = vpack.c.b16 %v1917, %v1789
      %v2942 = vpack.c.b16 %v1918, %v1790
      %v2943 = vpack.c.b16 %v1919, %v1791
      %v2944 = vpack.c.b16 %v1920, %v1792
      %v2945 = vpack.c.b16 %v1921, %v1793
      %v2946 = vpack.c.b16 %v1922, %v1794
      %v2947 = vpack.c.b16 %v1923, %v1795
      %v2948 = vpack.c.b16 %v1924, %v1796
      %v2949 = vpack.c.b16 %v1925, %v1797
      %v2950 = vpack.c.b16 %v1926, %v1798
      %v2951 = vpack.c.b16 %v1927, %v1799
      %v2952 = vpack.c.b16 %v1928, %v1800
      %v2953 = vpack.c.b16 %v1929, %v1801
      %v2954 = vpack.c.b16 %v1930, %v1802
      %v2955 = vpack.c.b16 %v1931, %v1803
      %v2956 = vpack.c.b16 %v1932, %v1804
      %v2957 = vpack.c.b16 %v1933, %v1805
      %v2958 = vpack.c.b16 %v1934, %v1806
      %v2959 = vpack.c.b16 %v1935, %v1807
      %v2960 = vpack.c.b16 %v1936, %v1808
      %v2961 = vpack.c.b16 %v1937, %v1809
      %v2962 = vpack.c.b16 %v1938, %v1810
      %v2963 = vpack.c.b16 %v1939, %v1811
      %v2964 = vpack.c.b16 %v1940, %v1812
      %v2965 = vpack.c.b16 %v1941, %v1813
      %v2966 = vpack.c.b16 %v1942, %v1814
      %v2967 = vpack.c.b16 %v1943, %v1815
      %v2968 = vpack.c.b16 %v1944, %v1816
      %v2969 = vpack.c.b16 %v1945, %v1817
      %v2970 = vpack.c.b16 %v1946, %v1818
      %v2971 = vpack.c.b16 %v1947, %v1819
      %v2972 = vpack.c.b16 %v1948, %v1820
      %v2973 = vpack.c.b16 %v1949, %v1821
      %v2974 = vpack.c.b16 %v1950, %v1822
      %v2975 = vpack.c.b16 %v1951, %v1823
      %v2976 = vpack.c.b16 %v1952, %v1824
      %v2977 = vpack.c.b16 %v1953, %v1825
      %v2978 = vpack.c.b16 %v1954, %v1826
      %v2979 = vpack.c.b16 %v1955, %v1827
      %v2980 = vpack.c.b16 %v1956, %v1828
      %v2981 = vpack.c.b16 %v1957, %v1829
      %v2982 = vpack.c.b16 %v1958, %v1830
      %v2983 = vpack.c.b16 %v1959, %v1831
      %v2984 = vpack.c.b16 %v1960, %v1832
      %v2985 = vpack.c.b16 %v1961, %v1833
      %v2986 = vpack.c.b16 %v1962, %v1834
      %v2987 = vpack.c.b16 %v1963, %v1835
      %v2988 = vpack.c.b16 %v1964, %v1836
      %v2989 = vpack.c.b16 %v1965, %v1837
      %v2990 = vpack.c.b16 %v1966, %v1838
      %v2991 = vpack.c.b16 %v1967, %v1839
      %v2992 = vpack.c.b16 %v1968, %v1840
      %v2993 = vpack.c.b16 %v1969, %v1841
      %v2994 = vpack.c.b16 %v1970, %v1842
      %v2995 = vpack.c.b16 %v2099, %v1971
      %v2996 = vpack.c.b16 %v2100, %v1972
      %v2997 = vpack.c.b16 %v2101, %v1973
      %v2998 = vpack.c.b16 %v2102, %v1974
      %v2999 = vpack.c.b16 %v2103, %v1975
      %v3000 = vpack.c.b16 %v2104, %v1976
      %v3001 = vpack.c.b16 %v2105, %v1977
      %v3002 = vpack.c.b16 %v2106, %v1978
      %v3003 = vpack.c.b16 %v2107, %v1979
      %v3004 = vpack.c.b16 %v2108, %v1980
      %v3005 = vpack.c.b16 %v2109, %v1981
      %v3006 = vpack.c.b16 %v2110, %v1982
      %v3007 = vpack.c.b16 %v2111, %v1983
      %v3008 = vpack.c.b16 %v2112, %v1984
      %v3009 = vpack.c.b16 %v2113, %v1985
      %v3010 = vpack.c.b16 %v2114, %v1986
      %v3011 = vpack.c.b16 %v2115, %v1987
      %v3012 = vpack.c.b16 %v2116, %v1988
      %v3013 = vpack.c.b16 %v2117, %v1989
      %v3014 = vpack.c.b16 %v2118, %v1990
      %v3015 = vpack.c.b16 %v2119, %v1991
      %v3016 = vpack.c.b16 %v2120, %v1992
      %v3017 = vpack.c.b16 %v2121, %v1993
      %v3018 = vpack.c.b16 %v2122, %v1994
      %v3019 = vpack.c.b16 %v2123, %v1995
      %v3020 = vpack.c.b16 %v2124, %v1996
      %v3021 = vpack.c.b16 %v2125, %v1997
      %v3022 = vpack.c.b16 %v2126, %v1998
      %v3023 = vpack.c.b16 %v2127, %v1999
      %v3024 = vpack.c.b16 %v2128, %v2000
      %v3025 = vpack.c.b16 %v2129, %v2001
      %v3026 = vpack.c.b16 %v2130, %v2002
      %v3027 = vpack.c.b16 %v2131, %v2003
      %v3028 = vpack.c.b16 %v2132, %v2004
      %v3029 = vpack.c.b16 %v2133, %v2005
      %v3030 = vpack.c.b16 %v2134, %v2006
      %v3031 = vpack.c.b16 %v2135, %v2007
      %v3032 = vpack.c.b16 %v2136, %v2008
      %v3033 = vpack.c.b16 %v2137, %v2009
      %v3034 = vpack.c.b16 %v2138, %v2010
      %v3035 = vpack.c.b16 %v2139, %v2011
      %v3036 = vpack.c.b16 %v2140, %v2012
      %v3037 = vpack.c.b16 %v2141, %v2013
      %v3038 = vpack.c.b16 %v2142, %v2014
      %v3039 = vpack.c.b16 %v2143, %v2015
      %v3040 = vpack.c.b16 %v2144, %v2016
      %v3041 = vpack.c.b16 %v2145, %v2017
      %v3042 = vpack.c.b16 %v2146, %v2018
      %v3043 = vpack.c.b16 %v2147, %v2019
      %v3044 = vpack.c.b16 %v2148, %v2020
      %v3045 = vpack.c.b16 %v2149, %v2021
      %v3046 = vpack.c.b16 %v2150, %v2022
      %v3047 = vpack.c.b16 %v2151, %v2023
      %v3048 = vpack.c.b16 %v2152, %v2024
      %v3049 = vpack.c.b16 %v2153, %v2025
      %v3050 = vpack.c.b16 %v2154, %v2026
      %v3051 = vpack.c.b16 %v2155, %v2027
      %v3052 = vpack.c.b16 %v2156, %v2028
      %v3053 = vpack.c.b16 %v2157, %v2029
      %v3054 = vpack.c.b16 %v2158, %v2030
      %v3055 = vpack.c.b16 %v2159, %v2031
      %v3056 = vpack.c.b16 %v2160, %v2032
      %v3057 = vpack.c.b16 %v2161, %v2033
      %v3058 = vpack.c.b16 %v2162, %v2034
      %v3059 = vpack.c.b16 %v2163, %v2035
      %v3060 = vpack.c.b16 %v2164, %v2036
      %v3061 = vpack.c.b16 %v2165, %v2037
      %v3062 = vpack.c.b16 %v2166, %v2038
      %v3063 = vpack.c.b16 %v2167, %v2039
      %v3064 = vpack.c.b16 %v2168, %v2040
      %v3065 = vpack.c.b16 %v2169, %v2041
      %v3066 = vpack.c.b16 %v2170, %v2042
      %v3067 = vpack.c.b16 %v2171, %v2043
      %v3068 = vpack.c.b16 %v2172, %v2044
      %v3069 = vpack.c.b16 %v2173, %v2045
      %v3070 = vpack.c.b16 %v2174, %v2046
      %v3071 = vpack.c.b16 %v2175, %v2047
      %v3072 = vpack.c.b16 %v2176, %v2048
      %v3073 = vpack.c.b16 %v2177, %v2049
      %v3074 = vpack.c.b16 %v2178, %v2050
      %v3075 = vpack.c.b16 %v2179, %v2051
      %v3076 = vpack.c.b16 %v2180, %v2052
      %v3077 = vpack.c.b16 %v2181, %v2053
      %v3078 = vpack.c.b16 %v2182, %v2054
      %v3079 = vpack.c.b16 %v2183, %v2055
      %v3080 = vpack.c.b16 %v2184, %v2056
      %v3081 = vpack.c.b16 %v2185, %v2057
      %v3082 = vpack.c.b16 %v2186, %v2058
      %v3083 = vpack.c.b16 %v2187, %v2059
      %v3084 = vpack.c.b16 %v2188, %v2060
      %v3085 = vpack.c.b16 %v2189, %v2061
      %v3086 = vpack.c.b16 %v2190, %v2062
      %v3087 = vpack.c.b16 %v2191, %v2063
      %v3088 = vpack.c.b16 %v2192, %v2064
      %v3089 = vpack.c.b16 %v2193, %v2065
      %v3090 = vpack.c.b16 %v2194, %v2066
      %v3091 = vpack.c.b16 %v2195, %v2067
      %v3092 = vpack.c.b16 %v2196, %v2068
      %v3093 = vpack.c.b16 %v2197, %v2069
      %v3094 = vpack.c.b16 %v2198, %v2070
      %v3095 = vpack.c.b16 %v2199, %v2071
      %v3096 = vpack.c.b16 %v2200, %v2072
      %v3097 = vpack.c.b16 %v2201, %v2073
      %v3098 = vpack.c.b16 %v2202, %v2074
      %v3099 = vpack.c.b16 %v2203, %v2075
      %v3100 = vpack.c.b16 %v2204, %v2076
      %v3101 = vpack.c.b16 %v2205, %v2077
      %v3102 = vpack.c.b16 %v2206, %v2078
      %v3103 = vpack.c.b16 %v2207, %v2079
      %v3104 = vpack.c.b16 %v2208, %v2080
      %v3105 = vpack.c.b16 %v2209, %v2081
      %v3106 = vpack.c.b16 %v2210, %v2082
      %v3107 = vpack.c.b16 %v2211, %v2083
      %v3108 = vpack.c.b16 %v2212, %v2084
      %v3109 = vpack.c.b16 %v2213, %v2085
      %v3110 = vpack.c.b16 %v2214, %v2086
      %v3111 = vpack.c.b16 %v2215, %v2087
      %v3112 = vpack.c.b16 %v2216, %v2088
      %v3113 = vpack.c.b16 %v2217, %v2089
      %v3114 = vpack.c.b16 %v2218, %v2090
      %v3115 = vpack.c.b16 %v2219, %v2091
      %v3116 = vpack.c.b16 %v2220, %v2092
      %v3117 = vpack.c.b16 %v2221, %v2093
      %v3118 = vpack.c.b16 %v2222, %v2094
      %v3119 = vpack.c.b16 %v2223, %v2095
      %v3120 = vpack.c.b16 %v2224, %v2096
      %v3121 = vpack.c.b16 %v2225, %v2097
      %v3122 = vpack.c.b16 %v2226, %v2098
      %v3123 = vpack.c.b16 %v2355, %v2227
      %v3124 = vpack.c.b16 %v2356, %v2228
      %v3125 = vpack.c.b16 %v2357, %v2229
      %v3126 = vpack.c.b16 %v2358, %v2230
      %v3127 = vpack.c.b16 %v2359, %v2231
      %v3128 = vpack.c.b16 %v2360, %v2232
      %v3129 = vpack.c.b16 %v2361, %v2233
      %v3130 = vpack.c.b16 %v2362, %v2234
      %v3131 = vpack.c.b16 %v2363, %v2235
      %v3132 = vpack.c.b16 %v2364, %v2236
      %v3133 = vpack.c.b16 %v2365, %v2237
      %v3134 = vpack.c.b16 %v2366, %v2238
      %v3135 = vpack.c.b16 %v2367, %v2239
      %v3136 = vpack.c.b16 %v2368, %v2240
      %v3137 = vpack.c.b16 %v2369, %v2241
      %v3138 = vpack.c.b16 %v2370, %v2242
      %v3139 = vpack.c.b16 %v2371, %v2243
      %v3140 = vpack.c.b16 %v2372, %v2244
      %v3141 = vpack.c.b16 %v2373, %v2245
      %v3142 = vpack.c.b16 %v2374, %v2246
      %v3143 = vpack.c.b16 %v2375, %v2247
      %v3144 = vpack.c.b16 %v2376, %v2248
      %v3145 = vpack.c.b16 %v2377, %v2249
      %v3146 = vpack.c.b16 %v2378, %v2250
      %v3147 = vpack.c.b16 %v2379, %v2251
      %v3148 = vpack.c.b16 %v2380, %v2252
      %v3149 = vpack.c.b16 %v2381, %v2253
      %v3150 = vpack.c.b16 %v2382, %v2254
      %v3151 = vpack.c.b16 %v2383, %v2255
      %v3152 = vpack.c.b16 %v2384, %v2256
      %v3153 = vpack.c.b16 %v2385, %v2257
      %v3154 = vpack.c.b16 %v2386, %v2258
      %v3155 = vpack.c.b16 %v2387, %v2259
      %v3156 = vpack.c.b16 %v2388, %v2260
      %v3157 = vpack.c.b16 %v2389, %v2261
      %v3158 = vpack.c.b16 %v2390, %v2262
      %v3159 = vpack.c.b16 %v2391, %v2263
      %v3160 = vpack.c.b16 %v2392, %v2264
      %v3161 = vpack.c.b16 %v2393, %v2265
      %v3162 = vpack.c.b16 %v2394, %v2266
      %v3163 = vpack.c.b16 %v2395, %v2267
      %v3164 = vpack.c.b16 %v2396, %v2268
      %v3165 = vpack.c.b16 %v2397, %v2269
      %v3166 = vpack.c.b16 %v2398, %v2270
      %v3167 = vpack.c.b16 %v2399, %v2271
      %v3168 = vpack.c.b16 %v2400, %v2272
      %v3169 = vpack.c.b16 %v2401, %v2273
      %v3170 = vpack.c.b16 %v2402, %v2274
      %v3171 = vpack.c.b16 %v2403, %v2275
      %v3172 = vpack.c.b16 %v2404, %v2276
      %v3173 = vpack.c.b16 %v2405, %v2277
      %v3174 = vpack.c.b16 %v2406, %v2278
      %v3175 = vpack.c.b16 %v2407, %v2279
      %v3176 = vpack.c.b16 %v2408, %v2280
      %v3177 = vpack.c.b16 %v2409, %v2281
      %v3178 = vpack.c.b16 %v2410, %v2282
      %v3179 = vpack.c.b16 %v2411, %v2283
      %v3180 = vpack.c.b16 %v2412, %v2284
      %v3181 = vpack.c.b16 %v2413, %v2285
      %v3182 = vpack.c.b16 %v2414, %v2286
      %v3183 = vpack.c.b16 %v2415, %v2287
      %v3184 = vpack.c.b16 %v2416, %v2288
      %v3185 = vpack.c.b16 %v2417, %v2289
      %v3186 = vpack.c.b16 %v2418, %v2290
      %v3187 = vpack.c.b16 %v2419, %v2291
      %v3188 = vpack.c.b16 %v2420, %v2292
      %v3189 = vpack.c.b16 %v2421, %v2293
      %v3190 = vpack.c.b16 %v2422, %v2294
      %v3191 = vpack.c.b16 %v2423, %v2295
      %v3192 = vpack.c.b16 %v2424, %v2296
      %v3193 = vpack.c.b16 %v2425, %v2297
      %v3194 = vpack.c.b16 %v2426, %v2298
      %v3195 = vpack.c.b16 %v2427, %v2299
      %v3196 = vpack.c.b16 %v2428, %v2300
      %v3197 = vpack.c.b16 %v2429, %v2301
      %v3198 = vpack.c.b16 %v2430, %v2302
      %v3199 = vpack.c.b16 %v2431, %v2303
      %v3200 = vpack.c.b16 %v2432, %v2304
      %v3201 = vpack.c.b16 %v2433, %v2305
      %v3202 = vpack.c.b16 %v2434, %v2306
      %v3203 = vpack.c.b16 %v2435, %v2307
      %v3204 = vpack.c.b16 %v2436, %v2308
      %v3205 = vpack.c.b16 %v2437, %v2309
      %v3206 = vpack.c.b16 %v2438, %v2310
      %v3207 = vpack.c.b16 %v2439, %v2311
      %v3208 = vpack.c.b16 %v2440, %v2312
      %v3209 = vpack.c.b16 %v2441, %v2313
      %v3210 = vpack.c.b16 %v2442, %v2314
      %v3211 = vpack.c.b16 %v2443, %v2315
      %v3212 = vpack.c.b16 %v2444, %v2316
      %v3213 = vpack.c.b16 %v2445, %v2317
      %v3214 = vpack.c.b16 %v2446, %v2318
      %v3215 = vpack.c.b16 %v2447, %v2319
      %v3216 = vpack.c.b16 %v2448, %v2320
      %v3217 = vpack.c.b16 %v2449, %v2321
      %v3218 = vpack.c.b16 %v2450, %v2322
      %v3219 = vpack.c.b16 %v2451, %v2323
      %v3220 = vpack.c.b16 %v2452, %v2324
      %v3221 = vpack.c.b16 %v2453, %v2325
      %v3222 = vpack.c.b16 %v2454, %v2326
      %v3223 = vpack.c.b16 %v2455, %v2327
      %v3224 = vpack.c.b16 %v2456, %v2328
      %v3225 = vpack.c.b16 %v2457, %v2329
      %v3226 = vpack.c.b16 %v2458, %v2330
      %v3227 = vpack.c.b16 %v2459, %v2331
      %v3228 = vpack.c.b16 %v2460, %v2332
      %v3229 = vpack.c.b16 %v2461, %v2333
      %v3230 = vpack.c.b16 %v2462, %v2334
      %v3231 = vpack.c.b16 %v2463, %v2335
      %v3232 = vpack.c.b16 %v2464, %v2336
      %v3233 = vpack.c.b16 %v2465, %v2337
      %v3234 = vpack.c.b16 %v2466, %v2338
      %v3235 = vpack.c.b16 %v2467, %v2339
      %v3236 = vpack.c.b16 %v2468, %v2340
      %v3237 = vpack.c.b16 %v2469, %v2341
      %v3238 = vpack.c.b16 %v2470, %v2342
      %v3239 = vpack.c.b16 %v2471, %v2343
      %v3240 = vpack.c.b16 %v2472, %v2344
      %v3241 = vpack.c.b16 %v2473, %v2345
      %v3242 = vpack.c.b16 %v2474, %v2346
      %v3243 = vpack.c.b16 %v2475, %v2347
      %v3244 = vpack.c.b16 %v2476, %v2348
      %v3245 = vpack.c.b16 %v2477, %v2349
      %v3246 = vpack.c.b16 %v2478, %v2350
      %v3247 = vpack.c.b16 %v2479, %v2351
      %v3248 = vpack.c.b16 %v2480, %v2352
      %v3249 = vpack.c.b16 %v2481, %v2353
      %v3250 = vpack.c.b16 %v2482, %v2354
      %v3251 = vpack.c.b16 %v2611, %v2483
      %v3252 = vpack.c.b16 %v2612, %v2484
      %v3253 = vpack.c.b16 %v2613, %v2485
      %v3254 = vpack.c.b16 %v2614, %v2486
      %v3255 = vpack.c.b16 %v2615, %v2487
      %v3256 = vpack.c.b16 %v2616, %v2488
      %v3257 = vpack.c.b16 %v2617, %v2489
      %v3258 = vpack.c.b16 %v2618, %v2490
      %v3259 = vpack.c.b16 %v2619, %v2491
      %v3260 = vpack.c.b16 %v2620, %v2492
      %v3261 = vpack.c.b16 %v2621, %v2493
      %v3262 = vpack.c.b16 %v2622, %v2494
      %v3263 = vpack.c.b16 %v2623, %v2495
      %v3264 = vpack.c.b16 %v2624, %v2496
      %v3265 = vpack.c.b16 %v2625, %v2497
      %v3266 = vpack.c.b16 %v2626, %v2498
      %v3267 = vpack.c.b16 %v2627, %v2499
      %v3268 = vpack.c.b16 %v2628, %v2500
      %v3269 = vpack.c.b16 %v2629, %v2501
      %v3270 = vpack.c.b16 %v2630, %v2502
      %v3271 = vpack.c.b16 %v2631, %v2503
      %v3272 = vpack.c.b16 %v2632, %v2504
      %v3273 = vpack.c.b16 %v2633, %v2505
      %v3274 = vpack.c.b16 %v2634, %v2506
      %v3275 = vpack.c.b16 %v2635, %v2507
      %v3276 = vpack.c.b16 %v2636, %v2508
      %v3277 = vpack.c.b16 %v2637, %v2509
      %v3278 = vpack.c.b16 %v2638, %v2510
      %v3279 = vpack.c.b16 %v2639, %v2511
      %v3280 = vpack.c.b16 %v2640, %v2512
      %v3281 = vpack.c.b16 %v2641, %v2513
      %v3282 = vpack.c.b16 %v2642, %v2514
      %v3283 = vpack.c.b16 %v2643, %v2515
      %v3284 = vpack.c.b16 %v2644, %v2516
      %v3285 = vpack.c.b16 %v2645, %v2517
      %v3286 = vpack.c.b16 %v2646, %v2518
      %v3287 = vpack.c.b16 %v2647, %v2519
      %v3288 = vpack.c.b16 %v2648, %v2520
      %v3289 = vpack.c.b16 %v2649, %v2521
      %v3290 = vpack.c.b16 %v2650, %v2522
      %v3291 = vpack.c.b16 %v2651, %v2523
      %v3292 = vpack.c.b16 %v2652, %v2524
      %v3293 = vpack.c.b16 %v2653, %v2525
      %v3294 = vpack.c.b16 %v2654, %v2526
      %v3295 = vpack.c.b16 %v2655, %v2527
      %v3296 = vpack.c.b16 %v2656, %v2528
      %v3297 = vpack.c.b16 %v2657, %v2529
      %v3298 = vpack.c.b16 %v2658, %v2530
      %v3299 = vpack.c.b16 %v2659, %v2531
      %v3300 = vpack.c.b16 %v2660, %v2532
      %v3301 = vpack.c.b16 %v2661, %v2533
      %v3302 = vpack.c.b16 %v2662, %v2534
      %v3303 = vpack.c.b16 %v2663, %v2535
      %v3304 = vpack.c.b16 %v2664, %v2536
      %v3305 = vpack.c.b16 %v2665, %v2537
      %v3306 = vpack.c.b16 %v2666, %v2538
      %v3307 = vpack.c.b16 %v2667, %v2539
      %v3308 = vpack.c.b16 %v2668, %v2540
      %v3309 = vpack.c.b16 %v2669, %v2541
      %v3310 = vpack.c.b16 %v2670, %v2542
      %v3311 = vpack.c.b16 %v2671, %v2543
      %v3312 = vpack.c.b16 %v2672, %v2544
      %v3313 = vpack.c.b16 %v2673, %v2545
      %v3314 = vpack.c.b16 %v2674, %v2546
      %v3315 = vpack.c.b16 %v2675, %v2547
      %v3316 = vpack.c.b16 %v2676, %v2548
      %v3317 = vpack.c.b16 %v2677, %v2549
      %v3318 = vpack.c.b16 %v2678, %v2550
      %v3319 = vpack.c.b16 %v2679, %v2551
      %v3320 = vpack.c.b16 %v2680, %v2552
      %v3321 = vpack.c.b16 %v2681, %v2553
      %v3322 = vpack.c.b16 %v2682, %v2554
      %v3323 = vpack.c.b16 %v2683, %v2555
      %v3324 = vpack.c.b16 %v2684, %v2556
      %v3325 = vpack.c.b16 %v2685, %v2557
      %v3326 = vpack.c.b16 %v2686, %v2558
      %v3327 = vpack.c.b16 %v2687, %v2559
      %v3328 = vpack.c.b16 %v2688, %v2560
      %v3329 = vpack.c.b16 %v2689, %v2561
      %v3330 = vpack.c.b16 %v2690, %v2562
      %v3331 = vpack.c.b16 %v2691, %v2563
      %v3332 = vpack.c.b16 %v2692, %v2564
      %v3333 = vpack.c.b16 %v2693, %v2565
      %v3334 = vpack.c.b16 %v2694, %v2566
      %v3335 = vpack.c.b16 %v2695, %v2567
      %v3336 = vpack.c.b16 %v2696, %v2568
      %v3337 = vpack.c.b16 %v2697, %v2569
      %v3338 = vpack.c.b16 %v2698, %v2570
      %v3339 = vpack.c.b16 %v2699, %v2571
      %v3340 = vpack.c.b16 %v2700, %v2572
      %v3341 = vpack.c.b16 %v2701, %v2573
      %v3342 = vpack.c.b16 %v2702, %v2574
      %v3343 = vpack.c.b16 %v2703, %v2575
      %v3344 = vpack.c.b16 %v2704, %v2576
      %v3345 = vpack.c.b16 %v2705, %v2577
      %v3346 = vpack.c.b16 %v2706, %v2578
      %v3347 = vpack.c.b16 %v2707, %v2579
      %v3348 = vpack.c.b16 %v2708, %v2580
      %v3349 = vpack.c.b16 %v2709, %v2581
      %v3350 = vpack.c.b16 %v2710, %v2582
      %v3351 = vpack.c.b16 %v2711, %v2583
      %v3352 = vpack.c.b16 %v2712, %v2584
      %v3353 = vpack.c.b16 %v2713, %v2585
      %v3354 = vpack.c.b16 %v2714, %v2586
      %v3355 = vpack.c.b16 %v2715, %v2587
      %v3356 = vpack.c.b16 %v2716, %v2588
      %v3357 = vpack.c.b16 %v2717, %v2589
      %v3358 = vpack.c.b16 %v2718, %v2590
      %v3359 = vpack.c.b16 %v2719, %v2591
      %v3360 = vpack.c.b16 %v2720, %v2592
      %v3361 = vpack.c.b16 %v2721, %v2593
      %v3362 = vpack.c.b16 %v2722, %v2594
      %v3363 = vpack.c.b16 %v2723, %v2595
      %v3364 = vpack.c.b16 %v2724, %v2596
      %v3365 = vpack.c.b16 %v2725, %v2597
      %v3366 = vpack.c.b16 %v2726, %v2598
      %v3367 = vpack.c.b16 %v2727, %v2599
      %v3368 = vpack.c.b16 %v2728, %v2600
      %v3369 = vpack.c.b16 %v2729, %v2601
      %v3370 = vpack.c.b16 %v2730, %v2602
      %v3371 = vpack.c.b16 %v2731, %v2603
      %v3372 = vpack.c.b16 %v2732, %v2604
      %v3373 = vpack.c.b16 %v2733, %v2605
      %v3374 = vpack.c.b16 %v2734, %v2606
      %v3375 = vpack.c.b16 %v2735, %v2607
      %v3376 = vpack.c.b16 %v2736, %v2608
      %v3377 = vpack.c.b16 %v2737, %v2609
      %v3378 = vpack.c.b16 %v2738, %v2610
      %vm4019 = vcmask 654336
      %v4021 = vsel %vm4019, %v172, 0
      %4023 = vmatprep.subr.bf16.mxu0 %v2740
      %4024 = vmatpush1.bf16.msra.mxu0 %v2739
      %4025 = vmatprep.subr.bf16.mxu0 %v2868
      %4026 = vmatpush1.bf16.msra.mxu0 %v2867
      %4027 = vmatprep.subr.bf16.mxu0 %v2996
      %4028 = vmatpush1.bf16.msra.mxu0 %v2995
      %4029 = vmatprep.subr.bf16.mxu0 %v3124
      %4030 = vmatpush1.bf16.msra.mxu0 %v3123
      %4031 = vmatprep.subr.bf16.mxu0 %v3252
      %4032 = vmatpush1.bf16.msra.mxu0 %v3251
      %4033 = vmatprep.subr.bf16.mxu0 0
      %4034 = vmatpush1.bf16.msra.mxu0 0
      %4035 = vmatprep.subr.bf16.mxu0 0
      %4036 = vmatpush1.bf16.msra.mxu0 0
      %4037 = vmatprep.subr.bf16.mxu0 0
      %4038 = vmatpush1.bf16.msra.mxu0 0
      %4039 = vmatprep.subr.bf16.mxu0 0
      %4040 = vmatpush1.bf16.msra.mxu0 0
      %4041 = vmatprep.subr.bf16.mxu0 0
      %4042 = vmatpush1.bf16.msra.mxu0 0
      %4043 = vmatprep.subr.bf16.mxu0 0
      %4044 = vmatpush1.bf16.msra.mxu0 0
      %4045 = vmatprep.subr.bf16.mxu0 0
      %4046 = vmatpush1.bf16.msra.mxu0 0
      %4047 = vmatprep.subr.bf16.mxu0 0
      %4048 = vmatpush1.bf16.msra.mxu0 0
      %4049 = vmatprep.subr.bf16.mxu0 0
      %4050 = vmatpush1.bf16.msra.mxu0 0
      %4051 = vmatprep.subr.bf16.mxu0 0
      %4052 = vmatpush1.bf16.msra.mxu0 0
      %4053 = vmatprep.subr.bf16.mxu0 0
      %4054 = vmatpush1.bf16.msra.mxu0 0
      %4055 = vmatprep.mubr.bf16.mxu0 0
      %4056 = vmatmul.mubr.bf16.gmra.mrb[0].mxu0 %v4021
      %v4057 = vpop.f32.mrb[0].mxu0
      %v4058 = vadd.f32 %v817, %v4057
      %v4059 = vpop.f32.mrb[0].mxu0
      %v4060 = vadd.f32 %v817, %v4059
      %v4061 = vpop.f32.mrb[0].mxu0
      %v4062 = vpop.f32.mrb[0].mxu0
      %4063 = vdwg.mxu0
      %4064 = vmatprep.subr.bf16.mxu0 %v2742
      %4065 = vmatpush1.bf16.msra.mxu0 %v2741
      %4066 = vmatprep.subr.bf16.mxu0 %v2870
      %4067 = vmatpush1.bf16.msra.mxu0 %v2869
      %4068 = vmatprep.subr.bf16.mxu0 %v2998
      %4069 = vmatpush1.bf16.msra.mxu0 %v2997
      %4070 = vmatprep.subr.bf16.mxu0 %v3126
      %4071 = vmatpush1.bf16.msra.mxu0 %v3125
      %4072 = vmatprep.subr.bf16.mxu0 %v3254
      %4073 = vmatpush1.bf16.msra.mxu0 %v3253
      %4074 = vmatprep.subr.bf16.mxu0 0
      %4075 = vmatpush1.bf16.msra.mxu0 0
      %4076 = vmatprep.subr.bf16.mxu0 0
      %4077 = vmatpush1.bf16.msra.mxu0 0
      %4078 = vmatprep.subr.bf16.mxu0 0
      %4079 = vmatpush1.bf16.msra.mxu0 0
      %4080 = vmatprep.subr.bf16.mxu0 0
      %4081 = vmatpush1.bf16.msra.mxu0 0
      %4082 = vmatprep.subr.bf16.mxu0 0
      %4083 = vmatpush1.bf16.msra.mxu0 0
      %4084 = vmatprep.subr.bf16.mxu0 0
      %4085 = vmatpush1.bf16.msra.mxu0 0
      %4086 = vmatprep.subr.bf16.mxu0 0
      %4087 = vmatpush1.bf16.msra.mxu0 0
      %4088 = vmatprep.subr.bf16.mxu0 0
      %4089 = vmatpush1.bf16.msra.mxu0 0
      %4090 = vmatprep.subr.bf16.mxu0 0
      %4091 = vmatpush1.bf16.msra.mxu0 0
      %4092 = vmatprep.subr.bf16.mxu0 0
      %4093 = vmatpush1.bf16.msra.mxu0 0
      %4094 = vmatprep.subr.bf16.mxu0 0
      %4095 = vmatpush1.bf16.msra.mxu0 0
      %4096 = vmatprep.mubr.bf16.mxu0 0
      %4097 = vmatmul.mubr.bf16.gmra.mrb[0].mxu0 %v4021
      %v4098 = vpop.f32.mrb[0].mxu0
      %v4099 = vadd.f32 %v817, %v4098
      %v4100 = vpop.f32.mrb[0].mxu0
      %v4101 = vadd.f32 %v817, %v4100
      %v4102 = vpop.f32.mrb[0].mxu0
      %v4103 = vpop.f32.mrb[0].mxu0
      %4104 = vdwg.mxu0
      %4105 = vmatprep.subr.bf16.mxu0 %v2744
      %4106 = vmatpush1.bf16.msra.mxu0 %v2743
      %4107 = vmatprep.subr.bf16.mxu0 %v2872
      %4108 = vmatpush1.bf16.msra.mxu0 %v2871
      %4109 = vmatprep.subr.bf16.mxu0 %v3000
      %4110 = vmatpush1.bf16.msra.mxu0 %v2999
      %4111 = vmatprep.subr.bf16.mxu0 %v3128
      %4112 = vmatpush1.bf16.msra.mxu0 %v3127
      %4113 = vmatprep.subr.bf16.mxu0 %v3256
      %4114 = vmatpush1.bf16.msra.mxu0 %v3255
      %4115 = vmatprep.subr.bf16.mxu0 0
      %4116 = vmatpush1.bf16.msra.mxu0 0
      %4117 = vmatprep.subr.bf16.mxu0 0
      %4118 = vmatpush1.bf16.msra.mxu0 0
      %4119 = vmatprep.subr.bf16.mxu0 0
      %4120 = vmatpush1.bf16.msra.mxu0 0
      %4121 = vmatprep.subr.bf16.mxu0 0
      %4122 = vmatpush1.bf16.msra.mxu0 0
      %4123 = vmatprep.subr.bf16.mxu0 0
      %4124 = vmatpush1.bf16.msra.mxu0 0
      %4125 = vmatprep.subr.bf16.mxu0 0
      %4126 = vmatpush1.bf16.msra.mxu0 0
      %4127 = vmatprep.subr.bf16.mxu0 0
      %4128 = vmatpush1.bf16.msra.mxu0 0
      %4129 = vmatprep.subr.bf16.mxu0 0
      %4130 = vmatpush1.bf16.msra.mxu0 0
      %4131 = vmatprep.subr.bf16.mxu0 0
      %4132 = vmatpush1.bf16.msra.mxu0 0
      %4133 = vmatprep.subr.bf16.mxu0 0
      %4134 = vmatpush1.bf16.msra.mxu0 0
      %4135 = vmatprep.subr.bf16.mxu0 0
      %4136 = vmatpush1.bf16.msra.mxu0 0
      %4137 = vmatprep.mubr.bf16.mxu0 0
      %4138 = vmatmul.mubr.bf16.gmra.mrb[0].mxu0 %v4021
      %v4139 = vpop.f32.mrb[0].mxu0
      %v4140 = vadd.f32 %v817, %v4139
      %v4141 = vpop.f32.mrb[0].mxu0
      %v4142 = vadd.f32 %v817, %v4141
      %v4143 = vpop.f32.mrb[0].mxu0
      %v4144 = vpop.f32.mrb[0].mxu0
      %4145 = vdwg.mxu0
      %4146 = vmatprep.subr.bf16.mxu0 %v2746
      %4147 = vmatpush1.bf16.msra.mxu0 %v2745
      %4148 = vmatprep.subr.bf16.mxu0 %v2874
      %4149 = vmatpush1.bf16.msra.mxu0 %v2873
      %4150 = vmatprep.subr.bf16.mxu0 %v3002
      %4151 = vmatpush1.bf16.msra.mxu0 %v3001
      %4152 = vmatprep.subr.bf16.mxu0 %v3130
      %4153 = vmatpush1.bf16.msra.mxu0 %v3129
      %4154 = vmatprep.subr.bf16.mxu0 %v3258
      %4155 = vmatpush1.bf16.msra.mxu0 %v3257
      %4156 = vmatprep.subr.bf16.mxu0 0
      %4157 = vmatpush1.bf16.msra.mxu0 0
      %4158 = vmatprep.subr.bf16.mxu0 0
      %4159 = vmatpush1.bf16.msra.mxu0 0
      %4160 = vmatprep.subr.bf16.mxu0 0
      %4161 = vmatpush1.bf16.msra.mxu0 0
      %4162 = vmatprep.subr.bf16.mxu0 0
      %4163 = vmatpush1.bf16.msra.mxu0 0
      %4164 = vmatprep.subr.bf16.mxu0 0
      %4165 = vmatpush1.bf16.msra.mxu0 0
      %4166 = vmatprep.subr.bf16.mxu0 0
      %4167 = vmatpush1.bf16.msra.mxu0 0
      %4168 = vmatprep.subr.bf16.mxu0 0
      %4169 = vmatpush1.bf16.msra.mxu0 0
      %4170 = vmatprep.subr.bf16.mxu0 0
      %4171 = vmatpush1.bf16.msra.mxu0 0
      %4172 = vmatprep.subr.bf16.mxu0 0
      %4173 = vmatpush1.bf16.msra.mxu0 0
      %4174 = vmatprep.subr.bf16.mxu0 0
      %4175 = vmatpush1.bf16.msra.mxu0 0
      %4176 = vmatprep.subr.bf16.mxu0 0
      %4177 = vmatpush1.bf16.msra.mxu0 0
      %4178 = vmatprep.mubr.bf16.mxu0 0
      %4179 = vmatmul.mubr.bf16.gmra.mrb[0].mxu0 %v4021
      %v4180 = vpop.f32.mrb[0].mxu0
      %v4181 = vadd.f32 %v817, %v4180
      %v4182 = vpop.f32.mrb[0].mxu0
      %v4183 = vadd.f32 %v817, %v4182
      %v4184 = vpop.f32.mrb[0].mxu0
      %v4185 = vpop.f32.mrb[0].mxu0
      %4186 = vdwg.mxu0
      %4187 = vmatprep.subr.bf16.mxu0 %v2748
      %4188 = vmatpush1.bf16.msra.mxu0 %v2747
      %4189 = vmatprep.subr.bf16.mxu0 %v2876
      %4190 = vmatpush1.bf16.msra.mxu0 %v2875
      %4191 = vmatprep.subr.bf16.mxu0 %v3004
      %4192 = vmatpush1.bf16.msra.mxu0 %v3003
      %4193 = vmatprep.subr.bf16.mxu0 %v3132
      %4194 = vmatpush1.bf16.msra.mxu0 %v3131
      %4195 = vmatprep.subr.bf16.mxu0 %v3260
      %4196 = vmatpush1.bf16.msra.mxu0 %v3259
      %4197 = vmatprep.subr.bf16.mxu0 0
      %4198 = vmatpush1.bf16.msra.mxu0 0
      %4199 = vmatprep.subr.bf16.mxu0 0
      %4200 = vmatpush1.bf16.msra.mxu0 0
      %4201 = vmatprep.subr.bf16.mxu0 0
      %4202 = vmatpush1.bf16.msra.mxu0 0
      %4203 = vmatprep.subr.bf16.mxu0 0
      %4204 = vmatpush1.bf16.msra.mxu0 0
      %4205 = vmatprep.subr.bf16.mxu0 0
      %4206 = vmatpush1.bf16.msra.mxu0 0
      %4207 = vmatprep.subr.bf16.mxu0 0
      %4208 = vmatpush1.bf16.msra.mxu0 0
      %4209 = vmatprep.subr.bf16.mxu0 0
      %4210 = vmatpush1.bf16.msra.mxu0 0
      %4211 = vmatprep.subr.bf16.mxu0 0
      %4212 = vmatpush1.bf16.msra.mxu0 0
      %4213 = vmatprep.subr.bf16.mxu0 0
      %4214 = vmatpush1.bf16.msra.mxu0 0
      %4215 = vmatprep.subr.bf16.mxu0 0
      %4216 = vmatpush1.bf16.msra.mxu0 0
      %4217 = vmatprep.subr.bf16.mxu0 0
      %4218 = vmatpush1.bf16.msra.mxu0 0
      %4219 = vmatprep.mubr.bf16.mxu0 0
      %4220 = vmatmul.mubr.bf16.gmra.mrb[0].mxu0 %v4021
      %v4221 = vpop.f32.mrb[0].mxu0
      %v4222 = vadd.f32 %v817, %v4221
      %v4223 = vpop.f32.mrb[0].mxu0
      %v4224 = vadd.f32 %v817, %v4223
      %v4225 = vpop.f32.mrb[0].mxu0
      %v4226 = vpop.f32.mrb[0].mxu0
      %4227 = vdwg.mxu0
      %4228 = vmatprep.subr.bf16.mxu0 %v2750
      %4229 = vmatpush1.bf16.msra.mxu0 %v2749
      %4230 = vmatprep.subr.bf16.mxu0 %v2878
      %4231 = vmatpush1.bf16.msra.mxu0 %v2877
      %4232 = vmatprep.subr.bf16.mxu0 %v3006
      %4233 = vmatpush1.bf16.msra.mxu0 %v3005
      %4234 = vmatprep.subr.bf16.mxu0 %v3134
      %4235 = vmatpush1.bf16.msra.mxu0 %v3133
      %4236 = vmatprep.subr.bf16.mxu0 %v3262
      %4237 = vmatpush1.bf16.msra.mxu0 %v3261
      %4238 = vmatprep.subr.bf16.mxu0 0
      %4239 = vmatpush1.bf16.msra.mxu0 0
      %4240 = vmatprep.subr.bf16.mxu0 0
      %4241 = vmatpush1.bf16.msra.mxu0 0
      %4242 = vmatprep.subr.bf16.mxu0 0
      %4243 = vmatpush1.bf16.msra.mxu0 0
      %4244 = vmatprep.subr.bf16.mxu0 0
      %4245 = vmatpush1.bf16.msra.mxu0 0
      %4246 = vmatprep.subr.bf16.mxu0 0
      %4247 = vmatpush1.bf16.msra.mxu0 0
      %4248 = vmatprep.subr.bf16.mxu0 0
      %4249 = vmatpush1.bf16.msra.mxu0 0
      %4250 = vmatprep.subr.bf16.mxu0 0
      %4251 = vmatpush1.bf16.msra.mxu0 0
      %4252 = vmatprep.subr.bf16.mxu0 0
      %4253 = vmatpush1.bf16.msra.mxu0 0
      %4254 = vmatprep.subr.bf16.mxu0 0
      %4255 = vmatpush1.bf16.msra.mxu0 0
      %4256 = vmatprep.subr.bf16.mxu0 0
      %4257 = vmatpush1.bf16.msra.mxu0 0
      %4258 = vmatprep.subr.bf16.mxu0 0
      %4259 = vmatpush1.bf16.msra.mxu0 0
      %4260 = vmatprep.mubr.bf16.mxu0 0
      %4261 = vmatmul.mubr.bf16.gmra.mrb[0].mxu0 %v4021
      %v4262 = vpop.f32.mrb[0].mxu0
      %v4263 = vadd.f32 %v817, %v4262
      %v4264 = vpop.f32.mrb[0].mxu0
      %v4265 = vadd.f32 %v817, %v4264
      %v4266 = vpop.f32.mrb[0].mxu0
      %v4267 = vpop.f32.mrb[0].mxu0
      %4268 = vdwg.mxu0
      %4269 = vmatprep.subr.bf16.mxu0 %v2752
      %4270 = vmatpush1.bf16.msra.mxu0 %v2751
      %4271 = vmatprep.subr.bf16.mxu0 %v2880
      %4272 = vmatpush1.bf16.msra.mxu0 %v2879
      %4273 = vmatprep.subr.bf16.mxu0 %v3008
      %4274 = vmatpush1.bf16.msra.mxu0 %v3007
      %4275 = vmatprep.subr.bf16.mxu0 %v3136
      %4276 = vmatpush1.bf16.msra.mxu0 %v3135
      %4277 = vmatprep.subr.bf16.mxu0 %v3264
      %4278 = vmatpush1.bf16.msra.mxu0 %v3263
      %4279 = vmatprep.subr.bf16.mxu0 0
      %4280 = vmatpush1.bf16.msra.mxu0 0
      %4281 = vmatprep.subr.bf16.mxu0 0
      %4282 = vmatpush1.bf16.msra.mxu0 0
      %4283 = vmatprep.subr.bf16.mxu0 0
      %4284 = vmatpush1.bf16.msra.mxu0 0
      %4285 = vmatprep.subr.bf16.mxu0 0
      %4286 = vmatpush1.bf16.msra.mxu0 0
      %4287 = vmatprep.subr.bf16.mxu0 0
      %4288 = vmatpush1.bf16.msra.mxu0 0
      %4289 = vmatprep.subr.bf16.mxu0 0
      %4290 = vmatpush1.bf16.msra.mxu0 0
      %4291 = vmatprep.subr.bf16.mxu0 0
      %4292 = vmatpush1.bf16.msra.mxu0 0
      %4293 = vmatprep.subr.bf16.mxu0 0
      %4294 = vmatpush1.bf16.msra.mxu0 0
      %4295 = vmatprep.subr.bf16.mxu0 0
      %4296 = vmatpush1.bf16.msra.mxu0 0
      %4297 = vmatprep.subr.bf16.mxu0 0
      %4298 = vmatpush1.bf16.msra.mxu0 0
      %4299 = vmatprep.subr.bf16.mxu0 0
      %4300 = vmatpush1.bf16.msra.mxu0 0
      %4301 = vmatprep.mubr.bf16.mxu0 0
      %4302 = vmatmul.mubr.bf16.gmra.mrb[0].mxu0 %v4021
      %v4303 = vpop.f32.mrb[0].mxu0
      %v4304 = vadd.f32 %v817, %v4303
      %v4305 = vpop.f32.mrb[0].mxu0
      %v4306 = vadd.f32 %v817, %v4305
      %v4307 = vpop.f32.mrb[0].mxu0
      %v4308 = vpop.f32.mrb[0].mxu0
      %4309 = vdwg.mxu0
      %4310 = vmatprep.subr.bf16.mxu0 %v2754
      %4311 = vmatpush1.bf16.msra.mxu0 %v2753
      %4312 = vmatprep.subr.bf16.mxu0 %v2882
      %4313 = vmatpush1.bf16.msra.mxu0 %v2881
      %4314 = vmatprep.subr.bf16.mxu0 %v3010
      %4315 = vmatpush1.bf16.msra.mxu0 %v3009
      %4316 = vmatprep.subr.bf16.mxu0 %v3138
      %4317 = vmatpush1.bf16.msra.mxu0 %v3137
      %4318 = vmatprep.subr.bf16.mxu0 %v3266
      %4319 = vmatpush1.bf16.msra.mxu0 %v3265
      %4320 = vmatprep.subr.bf16.mxu0 0
      %4321 = vmatpush1.bf16.msra.mxu0 0
      %4322 = vmatprep.subr.bf16.mxu0 0
      %4323 = vmatpush1.bf16.msra.mxu0 0
      %4324 = vmatprep.subr.bf16.mxu0 0
      %4325 = vmatpush1.bf16.msra.mxu0 0
      %4326 = vmatprep.subr.bf16.mxu0 0
      %4327 = vmatpush1.bf16.msra.mxu0 0
      %4328 = vmatprep.subr.bf16.mxu0 0
      %4329 = vmatpush1.bf16.msra.mxu0 0
      %4330 = vmatprep.subr.bf16.mxu0 0
      %4331 = vmatpush1.bf16.msra.mxu0 0
      %4332 = vmatprep.subr.bf16.mxu0 0
      %4333 = vmatpush1.bf16.msra.mxu0 0
      %4334 = vmatprep.subr.bf16.mxu0 0
      %4335 = vmatpush1.bf16.msra.mxu0 0
      %4336 = vmatprep.subr.bf16.mxu0 0
      %4337 = vmatpush1.bf16.msra.mxu0 0
      %4338 = vmatprep.subr.bf16.mxu0 0
      %4339 = vmatpush1.bf16.msra.mxu0 0
      %4340 = vmatprep.subr.bf16.mxu0 0
      %4341 = vmatpush1.bf16.msra.mxu0 0
      %4342 = vmatprep.mubr.bf16.mxu0 0
      %4343 = vmatmul.mubr.bf16.gmra.mrb[0].mxu0 %v4021
      %v4344 = vpop.f32.mrb[0].mxu0
      %v4345 = vadd.f32 %v817, %v4344
      %v4346 = vpop.f32.mrb[0].mxu0
      %v4347 = vadd.f32 %v817, %v4346
      %v4348 = vpop.f32.mrb[0].mxu0
      %v4349 = vpop.f32.mrb[0].mxu0
      %4350 = vdwg.mxu0
      %4351 = vmatprep.subr.bf16.mxu0 %v2756
      %4352 = vmatpush1.bf16.msra.mxu0 %v2755
      %4353 = vmatprep.subr.bf16.mxu0 %v2884
      %4354 = vmatpush1.bf16.msra.mxu0 %v2883
      %4355 = vmatprep.subr.bf16.mxu0 %v3012
      %4356 = vmatpush1.bf16.msra.mxu0 %v3011
      %4357 = vmatprep.subr.bf16.mxu0 %v3140
      %4358 = vmatpush1.bf16.msra.mxu0 %v3139
      %4359 = vmatprep.subr.bf16.mxu0 %v3268
      %4360 = vmatpush1.bf16.msra.mxu0 %v3267
      %4361 = vmatprep.subr.bf16.mxu0 0
      %4362 = vmatpush1.bf16.msra.mxu0 0
      %4363 = vmatprep.subr.bf16.mxu0 0
      %4364 = vmatpush1.bf16.msra.mxu0 0
      %4365 = vmatprep.subr.bf16.mxu0 0
      %4366 = vmatpush1.bf16.msra.mxu0 0
      %4367 = vmatprep.subr.bf16.mxu0 0
      %4368 = vmatpush1.bf16.msra.mxu0 0
      %4369 = vmatprep.subr.bf16.mxu0 0
      %4370 = vmatpush1.bf16.msra.mxu0 0
      %4371 = vmatprep.subr.bf16.mxu0 0
      %4372 = vmatpush1.bf16.msra.mxu0 0
      %4373 = vmatprep.subr.bf16.mxu0 0
      %4374 = vmatpush1.bf16.msra.mxu0 0
      %4375 = vmatprep.subr.bf16.mxu0 0
      %4376 = vmatpush1.bf16.msra.mxu0 0
      %4377 = vmatprep.subr.bf16.mxu0 0
      %4378 = vmatpush1.bf16.msra.mxu0 0
      %4379 = vmatprep.subr.bf16.mxu0 0
      %4380 = vmatpush1.bf16.msra.mxu0 0
      %4381 = vmatprep.subr.bf16.mxu0 0
      %4382 = vmatpush1.bf16.msra.mxu0 0
      %4383 = vmatprep.mubr.bf16.mxu0 0
      %4384 = vmatmul.mubr.bf16.gmra.mrb[0].mxu0 %v4021
      %v4385 = vpop.f32.mrb[0].mxu0
      %v4386 = vadd.f32 %v817, %v4385
      %v4387 = vpop.f32.mrb[0].mxu0
      %v4388 = vadd.f32 %v817, %v4387
      %v4389 = vpop.f32.mrb[0].mxu0
      %v4390 = vpop.f32.mrb[0].mxu0
      %4391 = vdwg.mxu0
      %4392 = vmatprep.subr.bf16.mxu0 %v2758
      %4393 = vmatpush1.bf16.msra.mxu0 %v2757
      %4394 = vmatprep.subr.bf16.mxu0 %v2886
      %4395 = vmatpush1.bf16.msra.mxu0 %v2885
      %4396 = vmatprep.subr.bf16.mxu0 %v3014
      %4397 = vmatpush1.bf16.msra.mxu0 %v3013
      %4398 = vmatprep.subr.bf16.mxu0 %v3142
      %4399 = vmatpush1.bf16.msra.mxu0 %v3141
      %4400 = vmatprep.subr.bf16.mxu0 %v3270
      %4401 = vmatpush1.bf16.msra.mxu0 %v3269
      %4402 = vmatprep.subr.bf16.mxu0 0
      %4403 = vmatpush1.bf16.msra.mxu0 0
      %4404 = vmatprep.subr.bf16.mxu0 0
      %4405 = vmatpush1.bf16.msra.mxu0 0
      %4406 = vmatprep.subr.bf16.mxu0 0
      %4407 = vmatpush1.bf16.msra.mxu0 0
      %4408 = vmatprep.subr.bf16.mxu0 0
      %4409 = vmatpush1.bf16.msra.mxu0 0
      %4410 = vmatprep.subr.bf16.mxu0 0
      %4411 = vmatpush1.bf16.msra.mxu0 0
      %4412 = vmatprep.subr.bf16.mxu0 0
      %4413 = vmatpush1.bf16.msra.mxu0 0
      %4414 = vmatprep.subr.bf16.mxu0 0
      %4415 = vmatpush1.bf16.msra.mxu0 0
      %4416 = vmatprep.subr.bf16.mxu0 0
      %4417 = vmatpush1.bf16.msra.mxu0 0
      %4418 = vmatprep.subr.bf16.mxu0 0
      %4419 = vmatpush1.bf16.msra.mxu0 0
      %4420 = vmatprep.subr.bf16.mxu0 0
      %4421 = vmatpush1.bf16.msra.mxu0 0
      %4422 = vmatprep.subr.bf16.mxu0 0
      %4423 = vmatpush1.bf16.msra.mxu0 0
      %4424 = vmatprep.mubr.bf16.mxu0 0
      %4425 = vmatmul.mubr.bf16.gmra.mrb[0].mxu0 %v4021
      %v4426 = vpop.f32.mrb[0].mxu0
      %v4427 = vadd.f32 %v817, %v4426
      %v4428 = vpop.f32.mrb[0].mxu0
      %v4429 = vadd.f32 %v817, %v4428
      %v4430 = vpop.f32.mrb[0].mxu0
      %v4431 = vpop.f32.mrb[0].mxu0
      %4432 = vdwg.mxu0
      %4433 = vmatprep.subr.bf16.mxu0 %v2760
      %4434 = vmatpush1.bf16.msra.mxu0 %v2759
      %4435 = vmatprep.subr.bf16.mxu0 %v2888
      %4436 = vmatpush1.bf16.msra.mxu0 %v2887
      %4437 = vmatprep.subr.bf16.mxu0 %v3016
      %4438 = vmatpush1.bf16.msra.mxu0 %v3015
      %4439 = vmatprep.subr.bf16.mxu0 %v3144
      %4440 = vmatpush1.bf16.msra.mxu0 %v3143
      %4441 = vmatprep.subr.bf16.mxu0 %v3272
      %4442 = vmatpush1.bf16.msra.mxu0 %v3271
      %4443 = vmatprep.subr.bf16.mxu0 0
      %4444 = vmatpush1.bf16.msra.mxu0 0
      %4445 = vmatprep.subr.bf16.mxu0 0
      %4446 = vmatpush1.bf16.msra.mxu0 0
      %4447 = vmatprep.subr.bf16.mxu0 0
      %4448 = vmatpush1.bf16.msra.mxu0 0
      %4449 = vmatprep.subr.bf16.mxu0 0
      %4450 = vmatpush1.bf16.msra.mxu0 0
      %4451 = vmatprep.subr.bf16.mxu0 0
      %4452 = vmatpush1.bf16.msra.mxu0 0
      %4453 = vmatprep.subr.bf16.mxu0 0
      %4454 = vmatpush1.bf16.msra.mxu0 0
      %4455 = vmatprep.subr.bf16.mxu0 0
      %4456 = vmatpush1.bf16.msra.mxu0 0
      %4457 = vmatprep.subr.bf16.mxu0 0
      %4458 = vmatpush1.bf16.msra.mxu0 0
      %4459 = vmatprep.subr.bf16.mxu0 0
      %4460 = vmatpush1.bf16.msra.mxu0 0
      %4461 = vmatprep.subr.bf16.mxu0 0
      %4462 = vmatpush1.bf16.msra.mxu0 0
      %4463 = vmatprep.subr.bf16.mxu0 0
      %4464 = vmatpush1.bf16.msra.mxu0 0
      %4465 = vmatprep.mubr.bf16.mxu0 0
      %4466 = vmatmul.mubr.bf16.gmra.mrb[0].mxu0 %v4021
      %v4467 = vpop.f32.mrb[0].mxu0
      %v4468 = vadd.f32 %v817, %v4467
      %v4469 = vpop.f32.mrb[0].mxu0
      %v4470 = vadd.f32 %v817, %v4469
      %v4471 = vpop.f32.mrb[0].mxu0
      %v4472 = vpop.f32.mrb[0].mxu0
      %4473 = vdwg.mxu0
      %4474 = vmatprep.subr.bf16.mxu0 %v2762
      %4475 = vmatpush1.bf16.msra.mxu0 %v2761
      %4476 = vmatprep.subr.bf16.mxu0 %v2890
      %4477 = vmatpush1.bf16.msra.mxu0 %v2889
      %4478 = vmatprep.subr.bf16.mxu0 %v3018
      %4479 = vmatpush1.bf16.msra.mxu0 %v3017
      %4480 = vmatprep.subr.bf16.mxu0 %v3146
      %4481 = vmatpush1.bf16.msra.mxu0 %v3145
      %4482 = vmatprep.subr.bf16.mxu0 %v3274
      %4483 = vmatpush1.bf16.msra.mxu0 %v3273
      %4484 = vmatprep.subr.bf16.mxu0 0
      %4485 = vmatpush1.bf16.msra.mxu0 0
      %4486 = vmatprep.subr.bf16.mxu0 0
      %4487 = vmatpush1.bf16.msra.mxu0 0
      %4488 = vmatprep.subr.bf16.mxu0 0
      %4489 = vmatpush1.bf16.msra.mxu0 0
      %4490 = vmatprep.subr.bf16.mxu0 0
      %4491 = vmatpush1.bf16.msra.mxu0 0
      %4492 = vmatprep.subr.bf16.mxu0 0
      %4493 = vmatpush1.bf16.msra.mxu0 0
      %4494 = vmatprep.subr.bf16.mxu0 0
      %4495 = vmatpush1.bf16.msra.mxu0 0
      %4496 = vmatprep.subr.bf16.mxu0 0
      %4497 = vmatpush1.bf16.msra.mxu0 0
      %4498 = vmatprep.subr.bf16.mxu0 0
      %4499 = vmatpush1.bf16.msra.mxu0 0
      %4500 = vmatprep.subr.bf16.mxu0 0
      %4501 = vmatpush1.bf16.msra.mxu0 0
      %4502 = vmatprep.subr.bf16.mxu0 0
      %4503 = vmatpush1.bf16.msra.mxu0 0
      %4504 = vmatprep.subr.bf16.mxu0 0
      %4505 = vmatpush1.bf16.msra.mxu0 0
      %4506 = vmatprep.mubr.bf16.mxu0 0
      %4507 = vmatmul.mubr.bf16.gmra.mrb[0].mxu0 %v4021
      %v4508 = vpop.f32.mrb[0].mxu0
      %v4509 = vadd.f32 %v817, %v4508
      %v4510 = vpop.f32.mrb[0].mxu0
      %v4511 = vadd.f32 %v817, %v4510
      %v4512 = vpop.f32.mrb[0].mxu0
      %v4513 = vpop.f32.mrb[0].mxu0
      %4514 = vdwg.mxu0
      %4515 = vmatprep.subr.bf16.mxu0 %v2764
      %4516 = vmatpush1.bf16.msra.mxu0 %v2763
      %4517 = vmatprep.subr.bf16.mxu0 %v2892
      %4518 = vmatpush1.bf16.msra.mxu0 %v2891
      %4519 = vmatprep.subr.bf16.mxu0 %v3020
      %4520 = vmatpush1.bf16.msra.mxu0 %v3019
      %4521 = vmatprep.subr.bf16.mxu0 %v3148
      %4522 = vmatpush1.bf16.msra.mxu0 %v3147
      %4523 = vmatprep.subr.bf16.mxu0 %v3276
      %4524 = vmatpush1.bf16.msra.mxu0 %v3275
      %4525 = vmatprep.subr.bf16.mxu0 0
      %4526 = vmatpush1.bf16.msra.mxu0 0
      %4527 = vmatprep.subr.bf16.mxu0 0
      %4528 = vmatpush1.bf16.msra.mxu0 0
      %4529 = vmatprep.subr.bf16.mxu0 0
      %4530 = vmatpush1.bf16.msra.mxu0 0
      %4531 = vmatprep.subr.bf16.mxu0 0
      %4532 = vmatpush1.bf16.msra.mxu0 0
      %4533 = vmatprep.subr.bf16.mxu0 0
      %4534 = vmatpush1.bf16.msra.mxu0 0
      %4535 = vmatprep.subr.bf16.mxu0 0
      %4536 = vmatpush1.bf16.msra.mxu0 0
      %4537 = vmatprep.subr.bf16.mxu0 0
      %4538 = vmatpush1.bf16.msra.mxu0 0
      %4539 = vmatprep.subr.bf16.mxu0 0
      %4540 = vmatpush1.bf16.msra.mxu0 0
      %4541 = vmatprep.subr.bf16.mxu0 0
      %4542 = vmatpush1.bf16.msra.mxu0 0
      %4543 = vmatprep.subr.bf16.mxu0 0
      %4544 = vmatpush1.bf16.msra.mxu0 0
      %4545 = vmatprep.subr.bf16.mxu0 0
      %4546 = vmatpush1.bf16.msra.mxu0 0
      %4547 = vmatprep.mubr.bf16.mxu0 0
      %4548 = vmatmul.mubr.bf16.gmra.mrb[0].mxu0 %v4021
      %v4549 = vpop.f32.mrb[0].mxu0
      %v4550 = vadd.f32 %v817, %v4549
      %v4551 = vpop.f32.mrb[0].mxu0
      %v4552 = vadd.f32 %v817, %v4551
      %v4553 = vpop.f32.mrb[0].mxu0
      %v4554 = vpop.f32.mrb[0].mxu0
      %4555 = vdwg.mxu0
      %4556 = vmatprep.subr.bf16.mxu0 %v2766
      %4557 = vmatpush1.bf16.msra.mxu0 %v2765
      %4558 = vmatprep.subr.bf16.mxu0 %v2894
      %4559 = vmatpush1.bf16.msra.mxu0 %v2893
      %4560 = vmatprep.subr.bf16.mxu0 %v3022
      %4561 = vmatpush1.bf16.msra.mxu0 %v3021
      %4562 = vmatprep.subr.bf16.mxu0 %v3150
      %4563 = vmatpush1.bf16.msra.mxu0 %v3149
      %4564 = vmatprep.subr.bf16.mxu0 %v3278
      %4565 = vmatpush1.bf16.msra.mxu0 %v3277
      %4566 = vmatprep.subr.bf16.mxu0 0
      %4567 = vmatpush1.bf16.msra.mxu0 0
      %4568 = vmatprep.subr.bf16.mxu0 0
      %4569 = vmatpush1.bf16.msra.mxu0 0
      %4570 = vmatprep.subr.bf16.mxu0 0
      %4571 = vmatpush1.bf16.msra.mxu0 0
      %4572 = vmatprep.subr.bf16.mxu0 0
      %4573 = vmatpush1.bf16.msra.mxu0 0
      %4574 = vmatprep.subr.bf16.mxu0 0
      %4575 = vmatpush1.bf16.msra.mxu0 0
      %4576 = vmatprep.subr.bf16.mxu0 0
      %4577 = vmatpush1.bf16.msra.mxu0 0
      %4578 = vmatprep.subr.bf16.mxu0 0
      %4579 = vmatpush1.bf16.msra.mxu0 0
      %4580 = vmatprep.subr.bf16.mxu0 0
      %4581 = vmatpush1.bf16.msra.mxu0 0
      %4582 = vmatprep.subr.bf16.mxu0 0
      %4583 = vmatpush1.bf16.msra.mxu0 0
      %4584 = vmatprep.subr.bf16.mxu0 0
      %4585 = vmatpush1.bf16.msra.mxu0 0
      %4586 = vmatprep.subr.bf16.mxu0 0
      %4587 = vmatpush1.bf16.msra.mxu0 0
      %4588 = vmatprep.mubr.bf16.mxu0 0
      %4589 = vmatmul.mubr.bf16.gmra.mrb[0].mxu0 %v4021
      %v4590 = vpop.f32.mrb[0].mxu0
      %v4591 = vadd.f32 %v817, %v4590
      %v4592 = vpop.f32.mrb[0].mxu0
      %v4593 = vadd.f32 %v817, %v4592
      %v4594 = vpop.f32.mrb[0].mxu0
      %v4595 = vpop.f32.mrb[0].mxu0
      %4596 = vdwg.mxu0
      %4597 = vmatprep.subr.bf16.mxu0 %v2768
      %4598 = vmatpush1.bf16.msra.mxu0 %v2767
      %4599 = vmatprep.subr.bf16.mxu0 %v2896
      %4600 = vmatpush1.bf16.msra.mxu0 %v2895
      %4601 = vmatprep.subr.bf16.mxu0 %v3024
      %4602 = vmatpush1.bf16.msra.mxu0 %v3023
      %4603 = vmatprep.subr.bf16.mxu0 %v3152
      %4604 = vmatpush1.bf16.msra.mxu0 %v3151
      %4605 = vmatprep.subr.bf16.mxu0 %v3280
      %4606 = vmatpush1.bf16.msra.mxu0 %v3279
      %4607 = vmatprep.subr.bf16.mxu0 0
      %4608 = vmatpush1.bf16.msra.mxu0 0
      %4609 = vmatprep.subr.bf16.mxu0 0
      %4610 = vmatpush1.bf16.msra.mxu0 0
      %4611 = vmatprep.subr.bf16.mxu0 0
      %4612 = vmatpush1.bf16.msra.mxu0 0
      %4613 = vmatprep.subr.bf16.mxu0 0
      %4614 = vmatpush1.bf16.msra.mxu0 0
      %4615 = vmatprep.subr.bf16.mxu0 0
      %4616 = vmatpush1.bf16.msra.mxu0 0
      %4617 = vmatprep.subr.bf16.mxu0 0
      %4618 = vmatpush1.bf16.msra.mxu0 0
      %4619 = vmatprep.subr.bf16.mxu0 0
      %4620 = vmatpush1.bf16.msra.mxu0 0
      %4621 = vmatprep.subr.bf16.mxu0 0
      %4622 = vmatpush1.bf16.msra.mxu0 0
      %4623 = vmatprep.subr.bf16.mxu0 0
      %4624 = vmatpush1.bf16.msra.mxu0 0
      %4625 = vmatprep.subr.bf16.mxu0 0
      %4626 = vmatpush1.bf16.msra.mxu0 0
      %4627 = vmatprep.subr.bf16.mxu0 0
      %4628 = vmatpush1.bf16.msra.mxu0 0
      %4629 = vmatprep.mubr.bf16.mxu0 0
      %4630 = vmatmul.mubr.bf16.gmra.mrb[0].mxu0 %v4021
      %v4631 = vpop.f32.mrb[0].mxu0
      %v4632 = vadd.f32 %v817, %v4631
      %v4633 = vpop.f32.mrb[0].mxu0
      %v4634 = vadd.f32 %v817, %v4633
      %v4635 = vpop.f32.mrb[0].mxu0
      %v4636 = vpop.f32.mrb[0].mxu0
      %4637 = vdwg.mxu0
      %4638 = vmatprep.subr.bf16.mxu0 %v2770
      %4639 = vmatpush1.bf16.msra.mxu0 %v2769
      %4640 = vmatprep.subr.bf16.mxu0 %v2898
      %4641 = vmatpush1.bf16.msra.mxu0 %v2897
      %4642 = vmatprep.subr.bf16.mxu0 %v3026
      %4643 = vmatpush1.bf16.msra.mxu0 %v3025
      %4644 = vmatprep.subr.bf16.mxu0 %v3154
      %4645 = vmatpush1.bf16.msra.mxu0 %v3153
      %4646 = vmatprep.subr.bf16.mxu0 %v3282
      %4647 = vmatpush1.bf16.msra.mxu0 %v3281
      %4648 = vmatprep.subr.bf16.mxu0 0
      %4649 = vmatpush1.bf16.msra.mxu0 0
      %4650 = vmatprep.subr.bf16.mxu0 0
      %4651 = vmatpush1.bf16.msra.mxu0 0
      %4652 = vmatprep.subr.bf16.mxu0 0
      %4653 = vmatpush1.bf16.msra.mxu0 0
      %4654 = vmatprep.subr.bf16.mxu0 0
      %4655 = vmatpush1.bf16.msra.mxu0 0
      %4656 = vmatprep.subr.bf16.mxu0 0
      %4657 = vmatpush1.bf16.msra.mxu0 0
      %4658 = vmatprep.subr.bf16.mxu0 0
      %4659 = vmatpush1.bf16.msra.mxu0 0
      %4660 = vmatprep.subr.bf16.mxu0 0
      %4661 = vmatpush1.bf16.msra.mxu0 0
      %4662 = vmatprep.subr.bf16.mxu0 0
      %4663 = vmatpush1.bf16.msra.mxu0 0
      %4664 = vmatprep.subr.bf16.mxu0 0
      %4665 = vmatpush1.bf16.msra.mxu0 0
      %4666 = vmatprep.subr.bf16.mxu0 0
      %4667 = vmatpush1.bf16.msra.mxu0 0
      %4668 = vmatprep.subr.bf16.mxu0 0
      %4669 = vmatpush1.bf16.msra.mxu0 0
      %4670 = vmatprep.mubr.bf16.mxu0 0
      %4671 = vmatmul.mubr.bf16.gmra.mrb[0].mxu0 %v4021
      %v4672 = vpop.f32.mrb[0].mxu0
      %v4673 = vadd.f32 %v817, %v4672
      %v4674 = vpop.f32.mrb[0].mxu0
      %v4675 = vadd.f32 %v817, %v4674
      %v4676 = vpop.f32.mrb[0].mxu0
      %v4677 = vpop.f32.mrb[0].mxu0
      %4678 = vdwg.mxu0
      %4679 = vmatprep.subr.bf16.mxu0 %v2772
      %4680 = vmatpush1.bf16.msra.mxu0 %v2771
      %4681 = vmatprep.subr.bf16.mxu0 %v2900
      %4682 = vmatpush1.bf16.msra.mxu0 %v2899
      %4683 = vmatprep.subr.bf16.mxu0 %v3028
      %4684 = vmatpush1.bf16.msra.mxu0 %v3027
      %4685 = vmatprep.subr.bf16.mxu0 %v3156
      %4686 = vmatpush1.bf16.msra.mxu0 %v3155
      %4687 = vmatprep.subr.bf16.mxu0 %v3284
      %4688 = vmatpush1.bf16.msra.mxu0 %v3283
      %4689 = vmatprep.subr.bf16.mxu0 0
      %4690 = vmatpush1.bf16.msra.mxu0 0
      %4691 = vmatprep.subr.bf16.mxu0 0
      %4692 = vmatpush1.bf16.msra.mxu0 0
      %4693 = vmatprep.subr.bf16.mxu0 0
      %4694 = vmatpush1.bf16.msra.mxu0 0
      %4695 = vmatprep.subr.bf16.mxu0 0
      %4696 = vmatpush1.bf16.msra.mxu0 0
      %4697 = vmatprep.subr.bf16.mxu0 0
      %4698 = vmatpush1.bf16.msra.mxu0 0
      %4699 = vmatprep.subr.bf16.mxu0 0
      %4700 = vmatpush1.bf16.msra.mxu0 0
      %4701 = vmatprep.subr.bf16.mxu0 0
      %4702 = vmatpush1.bf16.msra.mxu0 0
      %4703 = vmatprep.subr.bf16.mxu0 0
      %4704 = vmatpush1.bf16.msra.mxu0 0
      %4705 = vmatprep.subr.bf16.mxu0 0
      %4706 = vmatpush1.bf16.msra.mxu0 0
      %4707 = vmatprep.subr.bf16.mxu0 0
      %4708 = vmatpush1.bf16.msra.mxu0 0
      %4709 = vmatprep.subr.bf16.mxu0 0
      %4710 = vmatpush1.bf16.msra.mxu0 0
      %4711 = vmatprep.mubr.bf16.mxu0 0
      %4712 = vmatmul.mubr.bf16.gmra.mrb[0].mxu0 %v4021
      %v4713 = vpop.f32.mrb[0].mxu0
      %v4714 = vadd.f32 %v817, %v4713
      %v4715 = vpop.f32.mrb[0].mxu0
      %v4716 = vadd.f32 %v817, %v4715
      %v4717 = vpop.f32.mrb[0].mxu0
      %v4718 = vpop.f32.mrb[0].mxu0
      %4719 = vdwg.mxu0
      %4720 = vmatprep.subr.bf16.mxu0 %v2774
      %4721 = vmatpush1.bf16.msra.mxu0 %v2773
      %4722 = vmatprep.subr.bf16.mxu0 %v2902
      %4723 = vmatpush1.bf16.msra.mxu0 %v2901
      %4724 = vmatprep.subr.bf16.mxu0 %v3030
      %4725 = vmatpush1.bf16.msra.mxu0 %v3029
      %4726 = vmatprep.subr.bf16.mxu0 %v3158
      %4727 = vmatpush1.bf16.msra.mxu0 %v3157
      %4728 = vmatprep.subr.bf16.mxu0 %v3286
      %4729 = vmatpush1.bf16.msra.mxu0 %v3285
      %4730 = vmatprep.subr.bf16.mxu0 0
      %4731 = vmatpush1.bf16.msra.mxu0 0
      %4732 = vmatprep.subr.bf16.mxu0 0
      %4733 = vmatpush1.bf16.msra.mxu0 0
      %4734 = vmatprep.subr.bf16.mxu0 0
      %4735 = vmatpush1.bf16.msra.mxu0 0
      %4736 = vmatprep.subr.bf16.mxu0 0
      %4737 = vmatpush1.bf16.msra.mxu0 0
      %4738 = vmatprep.subr.bf16.mxu0 0
      %4739 = vmatpush1.bf16.msra.mxu0 0
      %4740 = vmatprep.subr.bf16.mxu0 0
      %4741 = vmatpush1.bf16.msra.mxu0 0
      %4742 = vmatprep.subr.bf16.mxu0 0
      %4743 = vmatpush1.bf16.msra.mxu0 0
      %4744 = vmatprep.subr.bf16.mxu0 0
      %4745 = vmatpush1.bf16.msra.mxu0 0
      %4746 = vmatprep.subr.bf16.mxu0 0
      %4747 = vmatpush1.bf16.msra.mxu0 0
      %4748 = vmatprep.subr.bf16.mxu0 0
      %4749 = vmatpush1.bf16.msra.mxu0 0
      %4750 = vmatprep.subr.bf16.mxu0 0
      %4751 = vmatpush1.bf16.msra.mxu0 0
      %4752 = vmatprep.mubr.bf16.mxu0 0
      %4753 = vmatmul.mubr.bf16.gmra.mrb[0].mxu0 %v4021
      %v4754 = vpop.f32.mrb[0].mxu0
      %v4755 = vadd.f32 %v817, %v4754
      %v4756 = vpop.f32.mrb[0].mxu0
      %v4757 = vadd.f32 %v817, %v4756
      %v4758 = vpop.f32.mrb[0].mxu0
      %v4759 = vpop.f32.mrb[0].mxu0
      %4760 = vdwg.mxu0
      %4761 = vmatprep.subr.bf16.mxu0 %v2776
      %4762 = vmatpush1.bf16.msra.mxu0 %v2775
      %4763 = vmatprep.subr.bf16.mxu0 %v2904
      %4764 = vmatpush1.bf16.msra.mxu0 %v2903
      %4765 = vmatprep.subr.bf16.mxu0 %v3032
      %4766 = vmatpush1.bf16.msra.mxu0 %v3031
      %4767 = vmatprep.subr.bf16.mxu0 %v3160
      %4768 = vmatpush1.bf16.msra.mxu0 %v3159
      %4769 = vmatprep.subr.bf16.mxu0 %v3288
      %4770 = vmatpush1.bf16.msra.mxu0 %v3287
      %4771 = vmatprep.subr.bf16.mxu0 0
      %4772 = vmatpush1.bf16.msra.mxu0 0
      %4773 = vmatprep.subr.bf16.mxu0 0
      %4774 = vmatpush1.bf16.msra.mxu0 0
      %4775 = vmatprep.subr.bf16.mxu0 0
      %4776 = vmatpush1.bf16.msra.mxu0 0
      %4777 = vmatprep.subr.bf16.mxu0 0
      %4778 = vmatpush1.bf16.msra.mxu0 0
      %4779 = vmatprep.subr.bf16.mxu0 0
      %4780 = vmatpush1.bf16.msra.mxu0 0
      %4781 = vmatprep.subr.bf16.mxu0 0
      %4782 = vmatpush1.bf16.msra.mxu0 0
      %4783 = vmatprep.subr.bf16.mxu0 0
      %4784 = vmatpush1.bf16.msra.mxu0 0
      %4785 = vmatprep.subr.bf16.mxu0 0
      %4786 = vmatpush1.bf16.msra.mxu0 0
      %4787 = vmatprep.subr.bf16.mxu0 0
      %4788 = vmatpush1.bf16.msra.mxu0 0
      %4789 = vmatprep.subr.bf16.mxu0 0
      %4790 = vmatpush1.bf16.msra.mxu0 0
      %4791 = vmatprep.subr.bf16.mxu0 0
      %4792 = vmatpush1.bf16.msra.mxu0 0
      %4793 = vmatprep.mubr.bf16.mxu0 0
      %4794 = vmatmul.mubr.bf16.gmra.mrb[0].mxu0 %v4021
      %v4795 = vpop.f32.mrb[0].mxu0
      %v4796 = vadd.f32 %v817, %v4795
      %v4797 = vpop.f32.mrb[0].mxu0
      %v4798 = vadd.f32 %v817, %v4797
      %v4799 = vpop.f32.mrb[0].mxu0
      %v4800 = vpop.f32.mrb[0].mxu0
      %4801 = vdwg.mxu0
      %4802 = vmatprep.subr.bf16.mxu0 %v2778
      %4803 = vmatpush1.bf16.msra.mxu0 %v2777
      %4804 = vmatprep.subr.bf16.mxu0 %v2906
      %4805 = vmatpush1.bf16.msra.mxu0 %v2905
      %4806 = vmatprep.subr.bf16.mxu0 %v3034
      %4807 = vmatpush1.bf16.msra.mxu0 %v3033
      %4808 = vmatprep.subr.bf16.mxu0 %v3162
      %4809 = vmatpush1.bf16.msra.mxu0 %v3161
      %4810 = vmatprep.subr.bf16.mxu0 %v3290
      %4811 = vmatpush1.bf16.msra.mxu0 %v3289
      %4812 = vmatprep.subr.bf16.mxu0 0
      %4813 = vmatpush1.bf16.msra.mxu0 0
      %4814 = vmatprep.subr.bf16.mxu0 0
      %4815 = vmatpush1.bf16.msra.mxu0 0
      %4816 = vmatprep.subr.bf16.mxu0 0
      %4817 = vmatpush1.bf16.msra.mxu0 0
      %4818 = vmatprep.subr.bf16.mxu0 0
      %4819 = vmatpush1.bf16.msra.mxu0 0
      %4820 = vmatprep.subr.bf16.mxu0 0
      %4821 = vmatpush1.bf16.msra.mxu0 0
      %4822 = vmatprep.subr.bf16.mxu0 0
      %4823 = vmatpush1.bf16.msra.mxu0 0
      %4824 = vmatprep.subr.bf16.mxu0 0
      %4825 = vmatpush1.bf16.msra.mxu0 0
      %4826 = vmatprep.subr.bf16.mxu0 0
      %4827 = vmatpush1.bf16.msra.mxu0 0
      %4828 = vmatprep.subr.bf16.mxu0 0
      %4829 = vmatpush1.bf16.msra.mxu0 0
      %4830 = vmatprep.subr.bf16.mxu0 0
      %4831 = vmatpush1.bf16.msra.mxu0 0
      %4832 = vmatprep.subr.bf16.mxu0 0
      %4833 = vmatpush1.bf16.msra.mxu0 0
      %4834 = vmatprep.mubr.bf16.mxu0 0
      %4835 = vmatmul.mubr.bf16.gmra.mrb[0].mxu0 %v4021
      %v4836 = vpop.f32.mrb[0].mxu0
      %v4837 = vadd.f32 %v817, %v4836
      %v4838 = vpop.f32.mrb[0].mxu0
      %v4839 = vadd.f32 %v817, %v4838
      %v4840 = vpop.f32.mrb[0].mxu0
      %v4841 = vpop.f32.mrb[0].mxu0
      %4842 = vdwg.mxu0
      %4843 = vmatprep.subr.bf16.mxu0 %v2780
      %4844 = vmatpush1.bf16.msra.mxu0 %v2779
      %4845 = vmatprep.subr.bf16.mxu0 %v2908
      %4846 = vmatpush1.bf16.msra.mxu0 %v2907
      %4847 = vmatprep.subr.bf16.mxu0 %v3036
      %4848 = vmatpush1.bf16.msra.mxu0 %v3035
      %4849 = vmatprep.subr.bf16.mxu0 %v3164
      %4850 = vmatpush1.bf16.msra.mxu0 %v3163
      %4851 = vmatprep.subr.bf16.mxu0 %v3292
      %4852 = vmatpush1.bf16.msra.mxu0 %v3291
      %4853 = vmatprep.subr.bf16.mxu0 0
      %4854 = vmatpush1.bf16.msra.mxu0 0
      %4855 = vmatprep.subr.bf16.mxu0 0
      %4856 = vmatpush1.bf16.msra.mxu0 0
      %4857 = vmatprep.subr.bf16.mxu0 0
      %4858 = vmatpush1.bf16.msra.mxu0 0
      %4859 = vmatprep.subr.bf16.mxu0 0
      %4860 = vmatpush1.bf16.msra.mxu0 0
      %4861 = vmatprep.subr.bf16.mxu0 0
      %4862 = vmatpush1.bf16.msra.mxu0 0
      %4863 = vmatprep.subr.bf16.mxu0 0
      %4864 = vmatpush1.bf16.msra.mxu0 0
      %4865 = vmatprep.subr.bf16.mxu0 0
      %4866 = vmatpush1.bf16.msra.mxu0 0
      %4867 = vmatprep.subr.bf16.mxu0 0
      %4868 = vmatpush1.bf16.msra.mxu0 0
      %4869 = vmatprep.subr.bf16.mxu0 0
      %4870 = vmatpush1.bf16.msra.mxu0 0
      %4871 = vmatprep.subr.bf16.mxu0 0
      %4872 = vmatpush1.bf16.msra.mxu0 0
      %4873 = vmatprep.subr.bf16.mxu0 0
      %4874 = vmatpush1.bf16.msra.mxu0 0
      %4875 = vmatprep.mubr.bf16.mxu0 0
      %4876 = vmatmul.mubr.bf16.gmra.mrb[0].mxu0 %v4021
      %v4877 = vpop.f32.mrb[0].mxu0
      %v4878 = vadd.f32 %v817, %v4877
      %v4879 = vpop.f32.mrb[0].mxu0
      %v4880 = vadd.f32 %v817, %v4879
      %v4881 = vpop.f32.mrb[0].mxu0
      %v4882 = vpop.f32.mrb[0].mxu0
      %4883 = vdwg.mxu0
      %4884 = vmatprep.subr.bf16.mxu0 %v2782
      %4885 = vmatpush1.bf16.msra.mxu0 %v2781
      %4886 = vmatprep.subr.bf16.mxu0 %v2910
      %4887 = vmatpush1.bf16.msra.mxu0 %v2909
      %4888 = vmatprep.subr.bf16.mxu0 %v3038
      %4889 = vmatpush1.bf16.msra.mxu0 %v3037
      %4890 = vmatprep.subr.bf16.mxu0 %v3166
      %4891 = vmatpush1.bf16.msra.mxu0 %v3165
      %4892 = vmatprep.subr.bf16.mxu0 %v3294
      %4893 = vmatpush1.bf16.msra.mxu0 %v3293
      %4894 = vmatprep.subr.bf16.mxu0 0
      %4895 = vmatpush1.bf16.msra.mxu0 0
      %4896 = vmatprep.subr.bf16.mxu0 0
      %4897 = vmatpush1.bf16.msra.mxu0 0
      %4898 = vmatprep.subr.bf16.mxu0 0
      %4899 = vmatpush1.bf16.msra.mxu0 0
      %4900 = vmatprep.subr.bf16.mxu0 0
      %4901 = vmatpush1.bf16.msra.mxu0 0
      %4902 = vmatprep.subr.bf16.mxu0 0
      %4903 = vmatpush1.bf16.msra.mxu0 0
      %4904 = vmatprep.subr.bf16.mxu0 0
      %4905 = vmatpush1.bf16.msra.mxu0 0
      %4906 = vmatprep.subr.bf16.mxu0 0
      %4907 = vmatpush1.bf16.msra.mxu0 0
      %4908 = vmatprep.subr.bf16.mxu0 0
      %4909 = vmatpush1.bf16.msra.mxu0 0
      %4910 = vmatprep.subr.bf16.mxu0 0
      %4911 = vmatpush1.bf16.msra.mxu0 0
      %4912 = vmatprep.subr.bf16.mxu0 0
      %4913 = vmatpush1.bf16.msra.mxu0 0
      %4914 = vmatprep.subr.bf16.mxu0 0
      %4915 = vmatpush1.bf16.msra.mxu0 0
      %4916 = vmatprep.mubr.bf16.mxu0 0
      %4917 = vmatmul.mubr.bf16.gmra.mrb[0].mxu0 %v4021
      %v4918 = vpop.f32.mrb[0].mxu0
      %v4919 = vadd.f32 %v817, %v4918
      %v4920 = vpop.f32.mrb[0].mxu0
      %v4921 = vadd.f32 %v817, %v4920
      %v4922 = vpop.f32.mrb[0].mxu0
      %v4923 = vpop.f32.mrb[0].mxu0
      %4924 = vdwg.mxu0
      %4925 = vmatprep.subr.bf16.mxu0 %v2784
      %4926 = vmatpush1.bf16.msra.mxu0 %v2783
      %4927 = vmatprep.subr.bf16.mxu0 %v2912
      %4928 = vmatpush1.bf16.msra.mxu0 %v2911
      %4929 = vmatprep.subr.bf16.mxu0 %v3040
      %4930 = vmatpush1.bf16.msra.mxu0 %v3039
      %4931 = vmatprep.subr.bf16.mxu0 %v3168
      %4932 = vmatpush1.bf16.msra.mxu0 %v3167
      %4933 = vmatprep.subr.bf16.mxu0 %v3296
      %4934 = vmatpush1.bf16.msra.mxu0 %v3295
      %4935 = vmatprep.subr.bf16.mxu0 0
      %4936 = vmatpush1.bf16.msra.mxu0 0
      %4937 = vmatprep.subr.bf16.mxu0 0
      %4938 = vmatpush1.bf16.msra.mxu0 0
      %4939 = vmatprep.subr.bf16.mxu0 0
      %4940 = vmatpush1.bf16.msra.mxu0 0
      %4941 = vmatprep.subr.bf16.mxu0 0
      %4942 = vmatpush1.bf16.msra.mxu0 0
      %4943 = vmatprep.subr.bf16.mxu0 0
      %4944 = vmatpush1.bf16.msra.mxu0 0
      %4945 = vmatprep.subr.bf16.mxu0 0
      %4946 = vmatpush1.bf16.msra.mxu0 0
      %4947 = vmatprep.subr.bf16.mxu0 0
      %4948 = vmatpush1.bf16.msra.mxu0 0
      %4949 = vmatprep.subr.bf16.mxu0 0
      %4950 = vmatpush1.bf16.msra.mxu0 0
      %4951 = vmatprep.subr.bf16.mxu0 0
      %4952 = vmatpush1.bf16.msra.mxu0 0
      %4953 = vmatprep.subr.bf16.mxu0 0
      %4954 = vmatpush1.bf16.msra.mxu0 0
      %4955 = vmatprep.subr.bf16.mxu0 0
      %4956 = vmatpush1.bf16.msra.mxu0 0
      %4957 = vmatprep.mubr.bf16.mxu0 0
      %4958 = vmatmul.mubr.bf16.gmra.mrb[0].mxu0 %v4021
      %v4959 = vpop.f32.mrb[0].mxu0
      %v4960 = vadd.f32 %v817, %v4959
      %v4961 = vpop.f32.mrb[0].mxu0
      %v4962 = vadd.f32 %v817, %v4961
      %v4963 = vpop.f32.mrb[0].mxu0
      %v4964 = vpop.f32.mrb[0].mxu0
      %4965 = vdwg.mxu0
      %4966 = vmatprep.subr.bf16.mxu0 %v2786
      %4967 = vmatpush1.bf16.msra.mxu0 %v2785
      %4968 = vmatprep.subr.bf16.mxu0 %v2914
      %4969 = vmatpush1.bf16.msra.mxu0 %v2913
      %4970 = vmatprep.subr.bf16.mxu0 %v3042
      %4971 = vmatpush1.bf16.msra.mxu0 %v3041
      %4972 = vmatprep.subr.bf16.mxu0 %v3170
      %4973 = vmatpush1.bf16.msra.mxu0 %v3169
      %4974 = vmatprep.subr.bf16.mxu0 %v3298
      %4975 = vmatpush1.bf16.msra.mxu0 %v3297
      %4976 = vmatprep.subr.bf16.mxu0 0
      %4977 = vmatpush1.bf16.msra.mxu0 0
      %4978 = vmatprep.subr.bf16.mxu0 0
      %4979 = vmatpush1.bf16.msra.mxu0 0
      %4980 = vmatprep.subr.bf16.mxu0 0
      %4981 = vmatpush1.bf16.msra.mxu0 0
      %4982 = vmatprep.subr.bf16.mxu0 0
      %4983 = vmatpush1.bf16.msra.mxu0 0
      %4984 = vmatprep.subr.bf16.mxu0 0
      %4985 = vmatpush1.bf16.msra.mxu0 0
      %4986 = vmatprep.subr.bf16.mxu0 0
      %4987 = vmatpush1.bf16.msra.mxu0 0
      %4988 = vmatprep.subr.bf16.mxu0 0
      %4989 = vmatpush1.bf16.msra.mxu0 0
      %4990 = vmatprep.subr.bf16.mxu0 0
      %4991 = vmatpush1.bf16.msra.mxu0 0
      %4992 = vmatprep.subr.bf16.mxu0 0
      %4993 = vmatpush1.bf16.msra.mxu0 0
      %4994 = vmatprep.subr.bf16.mxu0 0
      %4995 = vmatpush1.bf16.msra.mxu0 0
      %4996 = vmatprep.subr.bf16.mxu0 0
      %4997 = vmatpush1.bf16.msra.mxu0 0
      %4998 = vmatprep.mubr.bf16.mxu0 0
      %4999 = vmatmul.mubr.bf16.gmra.mrb[0].mxu0 %v4021
      %v5000 = vpop.f32.mrb[0].mxu0
      %v5001 = vadd.f32 %v817, %v5000
      %v5002 = vpop.f32.mrb[0].mxu0
      %v5003 = vadd.f32 %v817, %v5002
      %v5004 = vpop.f32.mrb[0].mxu0
      %v5005 = vpop.f32.mrb[0].mxu0
      %5006 = vdwg.mxu0
      %5007 = vmatprep.subr.bf16.mxu0 %v2788
      %5008 = vmatpush1.bf16.msra.mxu0 %v2787
      %5009 = vmatprep.subr.bf16.mxu0 %v2916
      %5010 = vmatpush1.bf16.msra.mxu0 %v2915
      %5011 = vmatprep.subr.bf16.mxu0 %v3044
      %5012 = vmatpush1.bf16.msra.mxu0 %v3043
      %5013 = vmatprep.subr.bf16.mxu0 %v3172
      %5014 = vmatpush1.bf16.msra.mxu0 %v3171
      %5015 = vmatprep.subr.bf16.mxu0 %v3300
      %5016 = vmatpush1.bf16.msra.mxu0 %v3299
      %5017 = vmatprep.subr.bf16.mxu0 0
      %5018 = vmatpush1.bf16.msra.mxu0 0
      %5019 = vmatprep.subr.bf16.mxu0 0
      %5020 = vmatpush1.bf16.msra.mxu0 0
      %5021 = vmatprep.subr.bf16.mxu0 0
      %5022 = vmatpush1.bf16.msra.mxu0 0
      %5023 = vmatprep.subr.bf16.mxu0 0
      %5024 = vmatpush1.bf16.msra.mxu0 0
      %5025 = vmatprep.subr.bf16.mxu0 0
      %5026 = vmatpush1.bf16.msra.mxu0 0
      %5027 = vmatprep.subr.bf16.mxu0 0
      %5028 = vmatpush1.bf16.msra.mxu0 0
      %5029 = vmatprep.subr.bf16.mxu0 0
      %5030 = vmatpush1.bf16.msra.mxu0 0
      %5031 = vmatprep.subr.bf16.mxu0 0
      %5032 = vmatpush1.bf16.msra.mxu0 0
      %5033 = vmatprep.subr.bf16.mxu0 0
      %5034 = vmatpush1.bf16.msra.mxu0 0
      %5035 = vmatprep.subr.bf16.mxu0 0
      %5036 = vmatpush1.bf16.msra.mxu0 0
      %5037 = vmatprep.subr.bf16.mxu0 0
      %5038 = vmatpush1.bf16.msra.mxu0 0
      %5039 = vmatprep.mubr.bf16.mxu0 0
      %5040 = vmatmul.mubr.bf16.gmra.mrb[0].mxu0 %v4021
      %v5041 = vpop.f32.mrb[0].mxu0
      %v5042 = vadd.f32 %v817, %v5041
      %v5043 = vpop.f32.mrb[0].mxu0
      %v5044 = vadd.f32 %v817, %v5043
      %v5045 = vpop.f32.mrb[0].mxu0
      %v5046 = vpop.f32.mrb[0].mxu0
      %5047 = vdwg.mxu0
      %5048 = vmatprep.subr.bf16.mxu0 %v2790
      %5049 = vmatpush1.bf16.msra.mxu0 %v2789
      %5050 = vmatprep.subr.bf16.mxu0 %v2918
      %5051 = vmatpush1.bf16.msra.mxu0 %v2917
      %5052 = vmatprep.subr.bf16.mxu0 %v3046
      %5053 = vmatpush1.bf16.msra.mxu0 %v3045
      %5054 = vmatprep.subr.bf16.mxu0 %v3174
      %5055 = vmatpush1.bf16.msra.mxu0 %v3173
      %5056 = vmatprep.subr.bf16.mxu0 %v3302
      %5057 = vmatpush1.bf16.msra.mxu0 %v3301
      %5058 = vmatprep.subr.bf16.mxu0 0
      %5059 = vmatpush1.bf16.msra.mxu0 0
      %5060 = vmatprep.subr.bf16.mxu0 0
      %5061 = vmatpush1.bf16.msra.mxu0 0
      %5062 = vmatprep.subr.bf16.mxu0 0
      %5063 = vmatpush1.bf16.msra.mxu0 0
      %5064 = vmatprep.subr.bf16.mxu0 0
      %5065 = vmatpush1.bf16.msra.mxu0 0
      %5066 = vmatprep.subr.bf16.mxu0 0
      %5067 = vmatpush1.bf16.msra.mxu0 0
      %5068 = vmatprep.subr.bf16.mxu0 0
      %5069 = vmatpush1.bf16.msra.mxu0 0
      %5070 = vmatprep.subr.bf16.mxu0 0
      %5071 = vmatpush1.bf16.msra.mxu0 0
      %5072 = vmatprep.subr.bf16.mxu0 0
      %5073 = vmatpush1.bf16.msra.mxu0 0
      %5074 = vmatprep.subr.bf16.mxu0 0
      %5075 = vmatpush1.bf16.msra.mxu0 0
      %5076 = vmatprep.subr.bf16.mxu0 0
      %5077 = vmatpush1.bf16.msra.mxu0 0
      %5078 = vmatprep.subr.bf16.mxu0 0
      %5079 = vmatpush1.bf16.msra.mxu0 0
      %5080 = vmatprep.mubr.bf16.mxu0 0
      %5081 = vmatmul.mubr.bf16.gmra.mrb[0].mxu0 %v4021
      %v5082 = vpop.f32.mrb[0].mxu0
      %v5083 = vadd.f32 %v817, %v5082
      %v5084 = vpop.f32.mrb[0].mxu0
      %v5085 = vadd.f32 %v817, %v5084
      %v5086 = vpop.f32.mrb[0].mxu0
      %v5087 = vpop.f32.mrb[0].mxu0
      %5088 = vdwg.mxu0
      %5089 = vmatprep.subr.bf16.mxu0 %v2792
      %5090 = vmatpush1.bf16.msra.mxu0 %v2791
      %5091 = vmatprep.subr.bf16.mxu0 %v2920
      %5092 = vmatpush1.bf16.msra.mxu0 %v2919
      %5093 = vmatprep.subr.bf16.mxu0 %v3048
      %5094 = vmatpush1.bf16.msra.mxu0 %v3047
      %5095 = vmatprep.subr.bf16.mxu0 %v3176
      %5096 = vmatpush1.bf16.msra.mxu0 %v3175
      %5097 = vmatprep.subr.bf16.mxu0 %v3304
      %5098 = vmatpush1.bf16.msra.mxu0 %v3303
      %5099 = vmatprep.subr.bf16.mxu0 0
      %5100 = vmatpush1.bf16.msra.mxu0 0
      %5101 = vmatprep.subr.bf16.mxu0 0
      %5102 = vmatpush1.bf16.msra.mxu0 0
      %5103 = vmatprep.subr.bf16.mxu0 0
      %5104 = vmatpush1.bf16.msra.mxu0 0
      %5105 = vmatprep.subr.bf16.mxu0 0
      %5106 = vmatpush1.bf16.msra.mxu0 0
      %5107 = vmatprep.subr.bf16.mxu0 0
      %5108 = vmatpush1.bf16.msra.mxu0 0
      %5109 = vmatprep.subr.bf16.mxu0 0
      %5110 = vmatpush1.bf16.msra.mxu0 0
      %5111 = vmatprep.subr.bf16.mxu0 0
      %5112 = vmatpush1.bf16.msra.mxu0 0
      %5113 = vmatprep.subr.bf16.mxu0 0
      %5114 = vmatpush1.bf16.msra.mxu0 0
      %5115 = vmatprep.subr.bf16.mxu0 0
      %5116 = vmatpush1.bf16.msra.mxu0 0
      %5117 = vmatprep.subr.bf16.mxu0 0
      %5118 = vmatpush1.bf16.msra.mxu0 0
      %5119 = vmatprep.subr.bf16.mxu0 0
      %5120 = vmatpush1.bf16.msra.mxu0 0
      %5121 = vmatprep.mubr.bf16.mxu0 0
      %5122 = vmatmul.mubr.bf16.gmra.mrb[0].mxu0 %v4021
      %v5123 = vpop.f32.mrb[0].mxu0
      %v5124 = vadd.f32 %v817, %v5123
      %v5125 = vpop.f32.mrb[0].mxu0
      %v5126 = vadd.f32 %v817, %v5125
      %v5127 = vpop.f32.mrb[0].mxu0
      %v5128 = vpop.f32.mrb[0].mxu0
      %5129 = vdwg.mxu0
      %5130 = vmatprep.subr.bf16.mxu0 %v2794
      %5131 = vmatpush1.bf16.msra.mxu0 %v2793
      %5132 = vmatprep.subr.bf16.mxu0 %v2922
      %5133 = vmatpush1.bf16.msra.mxu0 %v2921
      %5134 = vmatprep.subr.bf16.mxu0 %v3050
      %5135 = vmatpush1.bf16.msra.mxu0 %v3049
      %5136 = vmatprep.subr.bf16.mxu0 %v3178
      %5137 = vmatpush1.bf16.msra.mxu0 %v3177
      %5138 = vmatprep.subr.bf16.mxu0 %v3306
      %5139 = vmatpush1.bf16.msra.mxu0 %v3305
      %5140 = vmatprep.subr.bf16.mxu0 0
      %5141 = vmatpush1.bf16.msra.mxu0 0
      %5142 = vmatprep.subr.bf16.mxu0 0
      %5143 = vmatpush1.bf16.msra.mxu0 0
      %5144 = vmatprep.subr.bf16.mxu0 0
      %5145 = vmatpush1.bf16.msra.mxu0 0
      %5146 = vmatprep.subr.bf16.mxu0 0
      %5147 = vmatpush1.bf16.msra.mxu0 0
      %5148 = vmatprep.subr.bf16.mxu0 0
      %5149 = vmatpush1.bf16.msra.mxu0 0
      %5150 = vmatprep.subr.bf16.mxu0 0
      %5151 = vmatpush1.bf16.msra.mxu0 0
      %5152 = vmatprep.subr.bf16.mxu0 0
      %5153 = vmatpush1.bf16.msra.mxu0 0
      %5154 = vmatprep.subr.bf16.mxu0 0
      %5155 = vmatpush1.bf16.msra.mxu0 0
      %5156 = vmatprep.subr.bf16.mxu0 0
      %5157 = vmatpush1.bf16.msra.mxu0 0
      %5158 = vmatprep.subr.bf16.mxu0 0
      %5159 = vmatpush1.bf16.msra.mxu0 0
      %5160 = vmatprep.subr.bf16.mxu0 0
      %5161 = vmatpush1.bf16.msra.mxu0 0
      %5162 = vmatprep.mubr.bf16.mxu0 0
      %5163 = vmatmul.mubr.bf16.gmra.mrb[0].mxu0 %v4021
      %v5164 = vpop.f32.mrb[0].mxu0
      %v5165 = vadd.f32 %v817, %v5164
      %v5166 = vpop.f32.mrb[0].mxu0
      %v5167 = vadd.f32 %v817, %v5166
      %v5168 = vpop.f32.mrb[0].mxu0
      %v5169 = vpop.f32.mrb[0].mxu0
      %5170 = vdwg.mxu0
      %5171 = vmatprep.subr.bf16.mxu0 %v2796
      %5172 = vmatpush1.bf16.msra.mxu0 %v2795
      %5173 = vmatprep.subr.bf16.mxu0 %v2924
      %5174 = vmatpush1.bf16.msra.mxu0 %v2923
      %5175 = vmatprep.subr.bf16.mxu0 %v3052
      %5176 = vmatpush1.bf16.msra.mxu0 %v3051
      %5177 = vmatprep.subr.bf16.mxu0 %v3180
      %5178 = vmatpush1.bf16.msra.mxu0 %v3179
      %5179 = vmatprep.subr.bf16.mxu0 %v3308
      %5180 = vmatpush1.bf16.msra.mxu0 %v3307
      %5181 = vmatprep.subr.bf16.mxu0 0
      %5182 = vmatpush1.bf16.msra.mxu0 0
      %5183 = vmatprep.subr.bf16.mxu0 0
      %5184 = vmatpush1.bf16.msra.mxu0 0
      %5185 = vmatprep.subr.bf16.mxu0 0
      %5186 = vmatpush1.bf16.msra.mxu0 0
      %5187 = vmatprep.subr.bf16.mxu0 0
      %5188 = vmatpush1.bf16.msra.mxu0 0
      %5189 = vmatprep.subr.bf16.mxu0 0
      %5190 = vmatpush1.bf16.msra.mxu0 0
      %5191 = vmatprep.subr.bf16.mxu0 0
      %5192 = vmatpush1.bf16.msra.mxu0 0
      %5193 = vmatprep.subr.bf16.mxu0 0
      %5194 = vmatpush1.bf16.msra.mxu0 0
      %5195 = vmatprep.subr.bf16.mxu0 0
      %5196 = vmatpush1.bf16.msra.mxu0 0
      %5197 = vmatprep.subr.bf16.mxu0 0
      %5198 = vmatpush1.bf16.msra.mxu0 0
      %5199 = vmatprep.subr.bf16.mxu0 0
      %5200 = vmatpush1.bf16.msra.mxu0 0
      %5201 = vmatprep.subr.bf16.mxu0 0
      %5202 = vmatpush1.bf16.msra.mxu0 0
      %5203 = vmatprep.mubr.bf16.mxu0 0
      %5204 = vmatmul.mubr.bf16.gmra.mrb[0].mxu0 %v4021
      %v5205 = vpop.f32.mrb[0].mxu0
      %v5206 = vadd.f32 %v817, %v5205
      %v5207 = vpop.f32.mrb[0].mxu0
      %v5208 = vadd.f32 %v817, %v5207
      %v5209 = vpop.f32.mrb[0].mxu0
      %v5210 = vpop.f32.mrb[0].mxu0
      %5211 = vdwg.mxu0
      %5212 = vmatprep.subr.bf16.mxu0 %v2798
      %5213 = vmatpush1.bf16.msra.mxu0 %v2797
      %5214 = vmatprep.subr.bf16.mxu0 %v2926
      %5215 = vmatpush1.bf16.msra.mxu0 %v2925
      %5216 = vmatprep.subr.bf16.mxu0 %v3054
      %5217 = vmatpush1.bf16.msra.mxu0 %v3053
      %5218 = vmatprep.subr.bf16.mxu0 %v3182
      %5219 = vmatpush1.bf16.msra.mxu0 %v3181
      %5220 = vmatprep.subr.bf16.mxu0 %v3310
      %5221 = vmatpush1.bf16.msra.mxu0 %v3309
      %5222 = vmatprep.subr.bf16.mxu0 0
      %5223 = vmatpush1.bf16.msra.mxu0 0
      %5224 = vmatprep.subr.bf16.mxu0 0
      %5225 = vmatpush1.bf16.msra.mxu0 0
      %5226 = vmatprep.subr.bf16.mxu0 0
      %5227 = vmatpush1.bf16.msra.mxu0 0
      %5228 = vmatprep.subr.bf16.mxu0 0
      %5229 = vmatpush1.bf16.msra.mxu0 0
      %5230 = vmatprep.subr.bf16.mxu0 0
      %5231 = vmatpush1.bf16.msra.mxu0 0
      %5232 = vmatprep.subr.bf16.mxu0 0
      %5233 = vmatpush1.bf16.msra.mxu0 0
      %5234 = vmatprep.subr.bf16.mxu0 0
      %5235 = vmatpush1.bf16.msra.mxu0 0
      %5236 = vmatprep.subr.bf16.mxu0 0
      %5237 = vmatpush1.bf16.msra.mxu0 0
      %5238 = vmatprep.subr.bf16.mxu0 0
      %5239 = vmatpush1.bf16.msra.mxu0 0
      %5240 = vmatprep.subr.bf16.mxu0 0
      %5241 = vmatpush1.bf16.msra.mxu0 0
      %5242 = vmatprep.subr.bf16.mxu0 0
      %5243 = vmatpush1.bf16.msra.mxu0 0
      %5244 = vmatprep.mubr.bf16.mxu0 0
      %5245 = vmatmul.mubr.bf16.gmra.mrb[0].mxu0 %v4021
      %v5246 = vpop.f32.mrb[0].mxu0
      %v5247 = vadd.f32 %v817, %v5246
      %v5248 = vpop.f32.mrb[0].mxu0
      %v5249 = vadd.f32 %v817, %v5248
      %v5250 = vpop.f32.mrb[0].mxu0
      %v5251 = vpop.f32.mrb[0].mxu0
      %5252 = vdwg.mxu0
      %5253 = vmatprep.subr.bf16.mxu0 %v2800
      %5254 = vmatpush1.bf16.msra.mxu0 %v2799
      %5255 = vmatprep.subr.bf16.mxu0 %v2928
      %5256 = vmatpush1.bf16.msra.mxu0 %v2927
      %5257 = vmatprep.subr.bf16.mxu0 %v3056
      %5258 = vmatpush1.bf16.msra.mxu0 %v3055
      %5259 = vmatprep.subr.bf16.mxu0 %v3184
      %5260 = vmatpush1.bf16.msra.mxu0 %v3183
      %5261 = vmatprep.subr.bf16.mxu0 %v3312
      %5262 = vmatpush1.bf16.msra.mxu0 %v3311
      %5263 = vmatprep.subr.bf16.mxu0 0
      %5264 = vmatpush1.bf16.msra.mxu0 0
      %5265 = vmatprep.subr.bf16.mxu0 0
      %5266 = vmatpush1.bf16.msra.mxu0 0
      %5267 = vmatprep.subr.bf16.mxu0 0
      %5268 = vmatpush1.bf16.msra.mxu0 0
      %5269 = vmatprep.subr.bf16.mxu0 0
      %5270 = vmatpush1.bf16.msra.mxu0 0
      %5271 = vmatprep.subr.bf16.mxu0 0
      %5272 = vmatpush1.bf16.msra.mxu0 0
      %5273 = vmatprep.subr.bf16.mxu0 0
      %5274 = vmatpush1.bf16.msra.mxu0 0
      %5275 = vmatprep.subr.bf16.mxu0 0
      %5276 = vmatpush1.bf16.msra.mxu0 0
      %5277 = vmatprep.subr.bf16.mxu0 0
      %5278 = vmatpush1.bf16.msra.mxu0 0
      %5279 = vmatprep.subr.bf16.mxu0 0
      %5280 = vmatpush1.bf16.msra.mxu0 0
      %5281 = vmatprep.subr.bf16.mxu0 0
      %5282 = vmatpush1.bf16.msra.mxu0 0
      %5283 = vmatprep.subr.bf16.mxu0 0
      %5284 = vmatpush1.bf16.msra.mxu0 0
      %5285 = vmatprep.mubr.bf16.mxu0 0
      %5286 = vmatmul.mubr.bf16.gmra.mrb[0].mxu0 %v4021
      %v5287 = vpop.f32.mrb[0].mxu0
      %v5288 = vadd.f32 %v817, %v5287
      %v5289 = vpop.f32.mrb[0].mxu0
      %v5290 = vadd.f32 %v817, %v5289
      %v5291 = vpop.f32.mrb[0].mxu0
      %v5292 = vpop.f32.mrb[0].mxu0
      %5293 = vdwg.mxu0
      %5294 = vmatprep.subr.bf16.mxu0 %v2802
      %5295 = vmatpush1.bf16.msra.mxu0 %v2801
      %5296 = vmatprep.subr.bf16.mxu0 %v2930
      %5297 = vmatpush1.bf16.msra.mxu0 %v2929
      %5298 = vmatprep.subr.bf16.mxu0 %v3058
      %5299 = vmatpush1.bf16.msra.mxu0 %v3057
      %5300 = vmatprep.subr.bf16.mxu0 %v3186
      %5301 = vmatpush1.bf16.msra.mxu0 %v3185
      %5302 = vmatprep.subr.bf16.mxu0 %v3314
      %5303 = vmatpush1.bf16.msra.mxu0 %v3313
      %5304 = vmatprep.subr.bf16.mxu0 0
      %5305 = vmatpush1.bf16.msra.mxu0 0
      %5306 = vmatprep.subr.bf16.mxu0 0
      %5307 = vmatpush1.bf16.msra.mxu0 0
      %5308 = vmatprep.subr.bf16.mxu0 0
      %5309 = vmatpush1.bf16.msra.mxu0 0
      %5310 = vmatprep.subr.bf16.mxu0 0
      %5311 = vmatpush1.bf16.msra.mxu0 0
      %5312 = vmatprep.subr.bf16.mxu0 0
      %5313 = vmatpush1.bf16.msra.mxu0 0
      %5314 = vmatprep.subr.bf16.mxu0 0
      %5315 = vmatpush1.bf16.msra.mxu0 0
      %5316 = vmatprep.subr.bf16.mxu0 0
      %5317 = vmatpush1.bf16.msra.mxu0 0
      %5318 = vmatprep.subr.bf16.mxu0 0
      %5319 = vmatpush1.bf16.msra.mxu0 0
      %5320 = vmatprep.subr.bf16.mxu0 0
      %5321 = vmatpush1.bf16.msra.mxu0 0
      %5322 = vmatprep.subr.bf16.mxu0 0
      %5323 = vmatpush1.bf16.msra.mxu0 0
      %5324 = vmatprep.subr.bf16.mxu0 0
      %5325 = vmatpush1.bf16.msra.mxu0 0
      %5326 = vmatprep.mubr.bf16.mxu0 0
      %5327 = vmatmul.mubr.bf16.gmra.mrb[0].mxu0 %v4021
      %v5328 = vpop.f32.mrb[0].mxu0
      %v5329 = vadd.f32 %v817, %v5328
      %v5330 = vpop.f32.mrb[0].mxu0
      %v5331 = vadd.f32 %v817, %v5330
      %v5332 = vpop.f32.mrb[0].mxu0
      %v5333 = vpop.f32.mrb[0].mxu0
      %5334 = vdwg.mxu0
      %5335 = vmatprep.subr.bf16.mxu0 %v2804
      %5336 = vmatpush1.bf16.msra.mxu0 %v2803
      %5337 = vmatprep.subr.bf16.mxu0 %v2932
      %5338 = vmatpush1.bf16.msra.mxu0 %v2931
      %5339 = vmatprep.subr.bf16.mxu0 %v3060
      %5340 = vmatpush1.bf16.msra.mxu0 %v3059
      %5341 = vmatprep.subr.bf16.mxu0 %v3188
      %5342 = vmatpush1.bf16.msra.mxu0 %v3187
      %5343 = vmatprep.subr.bf16.mxu0 %v3316
      %5344 = vmatpush1.bf16.msra.mxu0 %v3315
      %5345 = vmatprep.subr.bf16.mxu0 0
      %5346 = vmatpush1.bf16.msra.mxu0 0
      %5347 = vmatprep.subr.bf16.mxu0 0
      %5348 = vmatpush1.bf16.msra.mxu0 0
      %5349 = vmatprep.subr.bf16.mxu0 0
      %5350 = vmatpush1.bf16.msra.mxu0 0
      %5351 = vmatprep.subr.bf16.mxu0 0
      %5352 = vmatpush1.bf16.msra.mxu0 0
      %5353 = vmatprep.subr.bf16.mxu0 0
      %5354 = vmatpush1.bf16.msra.mxu0 0
      %5355 = vmatprep.subr.bf16.mxu0 0
      %5356 = vmatpush1.bf16.msra.mxu0 0
      %5357 = vmatprep.subr.bf16.mxu0 0
      %5358 = vmatpush1.bf16.msra.mxu0 0
      %5359 = vmatprep.subr.bf16.mxu0 0
      %5360 = vmatpush1.bf16.msra.mxu0 0
      %5361 = vmatprep.subr.bf16.mxu0 0
      %5362 = vmatpush1.bf16.msra.mxu0 0
      %5363 = vmatprep.subr.bf16.mxu0 0
      %5364 = vmatpush1.bf16.msra.mxu0 0
      %5365 = vmatprep.subr.bf16.mxu0 0
      %5366 = vmatpush1.bf16.msra.mxu0 0
      %5367 = vmatprep.mubr.bf16.mxu0 0
      %5368 = vmatmul.mubr.bf16.gmra.mrb[0].mxu0 %v4021
      %v5369 = vpop.f32.mrb[0].mxu0
      %v5370 = vadd.f32 %v817, %v5369
      %v5371 = vpop.f32.mrb[0].mxu0
      %v5372 = vadd.f32 %v817, %v5371
      %v5373 = vpop.f32.mrb[0].mxu0
      %v5374 = vpop.f32.mrb[0].mxu0
      %5375 = vdwg.mxu0
      %5376 = vmatprep.subr.bf16.mxu0 %v2806
      %5377 = vmatpush1.bf16.msra.mxu0 %v2805
      %5378 = vmatprep.subr.bf16.mxu0 %v2934
      %5379 = vmatpush1.bf16.msra.mxu0 %v2933
      %5380 = vmatprep.subr.bf16.mxu0 %v3062
      %5381 = vmatpush1.bf16.msra.mxu0 %v3061
      %5382 = vmatprep.subr.bf16.mxu0 %v3190
      %5383 = vmatpush1.bf16.msra.mxu0 %v3189
      %5384 = vmatprep.subr.bf16.mxu0 %v3318
      %5385 = vmatpush1.bf16.msra.mxu0 %v3317
      %5386 = vmatprep.subr.bf16.mxu0 0
      %5387 = vmatpush1.bf16.msra.mxu0 0
      %5388 = vmatprep.subr.bf16.mxu0 0
      %5389 = vmatpush1.bf16.msra.mxu0 0
      %5390 = vmatprep.subr.bf16.mxu0 0
      %5391 = vmatpush1.bf16.msra.mxu0 0
      %5392 = vmatprep.subr.bf16.mxu0 0
      %5393 = vmatpush1.bf16.msra.mxu0 0
      %5394 = vmatprep.subr.bf16.mxu0 0
      %5395 = vmatpush1.bf16.msra.mxu0 0
      %5396 = vmatprep.subr.bf16.mxu0 0
      %5397 = vmatpush1.bf16.msra.mxu0 0
      %5398 = vmatprep.subr.bf16.mxu0 0
      %5399 = vmatpush1.bf16.msra.mxu0 0
      %5400 = vmatprep.subr.bf16.mxu0 0
      %5401 = vmatpush1.bf16.msra.mxu0 0
      %5402 = vmatprep.subr.bf16.mxu0 0
      %5403 = vmatpush1.bf16.msra.mxu0 0
      %5404 = vmatprep.subr.bf16.mxu0 0
      %5405 = vmatpush1.bf16.msra.mxu0 0
      %5406 = vmatprep.subr.bf16.mxu0 0
      %5407 = vmatpush1.bf16.msra.mxu0 0
      %5408 = vmatprep.mubr.bf16.mxu0 0
      %5409 = vmatmul.mubr.bf16.gmra.mrb[0].mxu0 %v4021
      %v5410 = vpop.f32.mrb[0].mxu0
      %v5411 = vadd.f32 %v817, %v5410
      %v5412 = vpop.f32.mrb[0].mxu0
      %v5413 = vadd.f32 %v817, %v5412
      %v5414 = vpop.f32.mrb[0].mxu0
      %v5415 = vpop.f32.mrb[0].mxu0
      %5416 = vdwg.mxu0
      %5417 = vmatprep.subr.bf16.mxu0 %v2808
      %5418 = vmatpush1.bf16.msra.mxu0 %v2807
      %5419 = vmatprep.subr.bf16.mxu0 %v2936
      %5420 = vmatpush1.bf16.msra.mxu0 %v2935
      %5421 = vmatprep.subr.bf16.mxu0 %v3064
      %5422 = vmatpush1.bf16.msra.mxu0 %v3063
      %5423 = vmatprep.subr.bf16.mxu0 %v3192
      %5424 = vmatpush1.bf16.msra.mxu0 %v3191
      %5425 = vmatprep.subr.bf16.mxu0 %v3320
      %5426 = vmatpush1.bf16.msra.mxu0 %v3319
      %5427 = vmatprep.subr.bf16.mxu0 0
      %5428 = vmatpush1.bf16.msra.mxu0 0
      %5429 = vmatprep.subr.bf16.mxu0 0
      %5430 = vmatpush1.bf16.msra.mxu0 0
      %5431 = vmatprep.subr.bf16.mxu0 0
      %5432 = vmatpush1.bf16.msra.mxu0 0
      %5433 = vmatprep.subr.bf16.mxu0 0
      %5434 = vmatpush1.bf16.msra.mxu0 0
      %5435 = vmatprep.subr.bf16.mxu0 0
      %5436 = vmatpush1.bf16.msra.mxu0 0
      %5437 = vmatprep.subr.bf16.mxu0 0
      %5438 = vmatpush1.bf16.msra.mxu0 0
      %5439 = vmatprep.subr.bf16.mxu0 0
      %5440 = vmatpush1.bf16.msra.mxu0 0
      %5441 = vmatprep.subr.bf16.mxu0 0
      %5442 = vmatpush1.bf16.msra.mxu0 0
      %5443 = vmatprep.subr.bf16.mxu0 0
      %5444 = vmatpush1.bf16.msra.mxu0 0
      %5445 = vmatprep.subr.bf16.mxu0 0
      %5446 = vmatpush1.bf16.msra.mxu0 0
      %5447 = vmatprep.subr.bf16.mxu0 0
      %5448 = vmatpush1.bf16.msra.mxu0 0
      %5449 = vmatprep.mubr.bf16.mxu0 0
      %5450 = vmatmul.mubr.bf16.gmra.mrb[0].mxu0 %v4021
      %v5451 = vpop.f32.mrb[0].mxu0
      %v5452 = vadd.f32 %v817, %v5451
      %v5453 = vpop.f32.mrb[0].mxu0
      %v5454 = vadd.f32 %v817, %v5453
      %v5455 = vpop.f32.mrb[0].mxu0
      %v5456 = vpop.f32.mrb[0].mxu0
      %5457 = vdwg.mxu0
      %5458 = vmatprep.subr.bf16.mxu0 %v2810
      %5459 = vmatpush1.bf16.msra.mxu0 %v2809
      %5460 = vmatprep.subr.bf16.mxu0 %v2938
      %5461 = vmatpush1.bf16.msra.mxu0 %v2937
      %5462 = vmatprep.subr.bf16.mxu0 %v3066
      %5463 = vmatpush1.bf16.msra.mxu0 %v3065
      %5464 = vmatprep.subr.bf16.mxu0 %v3194
      %5465 = vmatpush1.bf16.msra.mxu0 %v3193
      %5466 = vmatprep.subr.bf16.mxu0 %v3322
      %5467 = vmatpush1.bf16.msra.mxu0 %v3321
      %5468 = vmatprep.subr.bf16.mxu0 0
      %5469 = vmatpush1.bf16.msra.mxu0 0
      %5470 = vmatprep.subr.bf16.mxu0 0
      %5471 = vmatpush1.bf16.msra.mxu0 0
      %5472 = vmatprep.subr.bf16.mxu0 0
      %5473 = vmatpush1.bf16.msra.mxu0 0
      %5474 = vmatprep.subr.bf16.mxu0 0
      %5475 = vmatpush1.bf16.msra.mxu0 0
      %5476 = vmatprep.subr.bf16.mxu0 0
      %5477 = vmatpush1.bf16.msra.mxu0 0
      %5478 = vmatprep.subr.bf16.mxu0 0
      %5479 = vmatpush1.bf16.msra.mxu0 0
      %5480 = vmatprep.subr.bf16.mxu0 0
      %5481 = vmatpush1.bf16.msra.mxu0 0
      %5482 = vmatprep.subr.bf16.mxu0 0
      %5483 = vmatpush1.bf16.msra.mxu0 0
      %5484 = vmatprep.subr.bf16.mxu0 0
      %5485 = vmatpush1.bf16.msra.mxu0 0
      %5486 = vmatprep.subr.bf16.mxu0 0
      %5487 = vmatpush1.bf16.msra.mxu0 0
      %5488 = vmatprep.subr.bf16.mxu0 0
      %5489 = vmatpush1.bf16.msra.mxu0 0
      %5490 = vmatprep.mubr.bf16.mxu0 0
      %5491 = vmatmul.mubr.bf16.gmra.mrb[0].mxu0 %v4021
      %v5492 = vpop.f32.mrb[0].mxu0
      %v5493 = vadd.f32 %v817, %v5492
      %v5494 = vpop.f32.mrb[0].mxu0
      %v5495 = vadd.f32 %v817, %v5494
      %v5496 = vpop.f32.mrb[0].mxu0
      %v5497 = vpop.f32.mrb[0].mxu0
      %5498 = vdwg.mxu0
      %5499 = vmatprep.subr.bf16.mxu0 %v2812
      %5500 = vmatpush1.bf16.msra.mxu0 %v2811
      %5501 = vmatprep.subr.bf16.mxu0 %v2940
      %5502 = vmatpush1.bf16.msra.mxu0 %v2939
      %5503 = vmatprep.subr.bf16.mxu0 %v3068
      %5504 = vmatpush1.bf16.msra.mxu0 %v3067
      %5505 = vmatprep.subr.bf16.mxu0 %v3196
      %5506 = vmatpush1.bf16.msra.mxu0 %v3195
      %5507 = vmatprep.subr.bf16.mxu0 %v3324
      %5508 = vmatpush1.bf16.msra.mxu0 %v3323
      %5509 = vmatprep.subr.bf16.mxu0 0
      %5510 = vmatpush1.bf16.msra.mxu0 0
      %5511 = vmatprep.subr.bf16.mxu0 0
      %5512 = vmatpush1.bf16.msra.mxu0 0
      %5513 = vmatprep.subr.bf16.mxu0 0
      %5514 = vmatpush1.bf16.msra.mxu0 0
      %5515 = vmatprep.subr.bf16.mxu0 0
      %5516 = vmatpush1.bf16.msra.mxu0 0
      %5517 = vmatprep.subr.bf16.mxu0 0
      %5518 = vmatpush1.bf16.msra.mxu0 0
      %5519 = vmatprep.subr.bf16.mxu0 0
      %5520 = vmatpush1.bf16.msra.mxu0 0
      %5521 = vmatprep.subr.bf16.mxu0 0
      %5522 = vmatpush1.bf16.msra.mxu0 0
      %5523 = vmatprep.subr.bf16.mxu0 0
      %5524 = vmatpush1.bf16.msra.mxu0 0
      %5525 = vmatprep.subr.bf16.mxu0 0
      %5526 = vmatpush1.bf16.msra.mxu0 0
      %5527 = vmatprep.subr.bf16.mxu0 0
      %5528 = vmatpush1.bf16.msra.mxu0 0
      %5529 = vmatprep.subr.bf16.mxu0 0
      %5530 = vmatpush1.bf16.msra.mxu0 0
      %5531 = vmatprep.mubr.bf16.mxu0 0
      %5532 = vmatmul.mubr.bf16.gmra.mrb[0].mxu0 %v4021
      %v5533 = vpop.f32.mrb[0].mxu0
      %v5534 = vadd.f32 %v817, %v5533
      %v5535 = vpop.f32.mrb[0].mxu0
      %v5536 = vadd.f32 %v817, %v5535
      %v5537 = vpop.f32.mrb[0].mxu0
      %v5538 = vpop.f32.mrb[0].mxu0
      %5539 = vdwg.mxu0
      %5540 = vmatprep.subr.bf16.mxu0 %v2814
      %5541 = vmatpush1.bf16.msra.mxu0 %v2813
      %5542 = vmatprep.subr.bf16.mxu0 %v2942
      %5543 = vmatpush1.bf16.msra.mxu0 %v2941
      %5544 = vmatprep.subr.bf16.mxu0 %v3070
      %5545 = vmatpush1.bf16.msra.mxu0 %v3069
      %5546 = vmatprep.subr.bf16.mxu0 %v3198
      %5547 = vmatpush1.bf16.msra.mxu0 %v3197
      %5548 = vmatprep.subr.bf16.mxu0 %v3326
      %5549 = vmatpush1.bf16.msra.mxu0 %v3325
      %5550 = vmatprep.subr.bf16.mxu0 0
      %5551 = vmatpush1.bf16.msra.mxu0 0
      %5552 = vmatprep.subr.bf16.mxu0 0
      %5553 = vmatpush1.bf16.msra.mxu0 0
      %5554 = vmatprep.subr.bf16.mxu0 0
      %5555 = vmatpush1.bf16.msra.mxu0 0
      %5556 = vmatprep.subr.bf16.mxu0 0
      %5557 = vmatpush1.bf16.msra.mxu0 0
      %5558 = vmatprep.subr.bf16.mxu0 0
      %5559 = vmatpush1.bf16.msra.mxu0 0
      %5560 = vmatprep.subr.bf16.mxu0 0
      %5561 = vmatpush1.bf16.msra.mxu0 0
      %5562 = vmatprep.subr.bf16.mxu0 0
      %5563 = vmatpush1.bf16.msra.mxu0 0
      %5564 = vmatprep.subr.bf16.mxu0 0
      %5565 = vmatpush1.bf16.msra.mxu0 0
      %5566 = vmatprep.subr.bf16.mxu0 0
      %5567 = vmatpush1.bf16.msra.mxu0 0
      %5568 = vmatprep.subr.bf16.mxu0 0
      %5569 = vmatpush1.bf16.msra.mxu0 0
      %5570 = vmatprep.subr.bf16.mxu0 0
      %5571 = vmatpush1.bf16.msra.mxu0 0
      %5572 = vmatprep.mubr.bf16.mxu0 0
      %5573 = vmatmul.mubr.bf16.gmra.mrb[0].mxu0 %v4021
      %v5574 = vpop.f32.mrb[0].mxu0
      %v5575 = vadd.f32 %v817, %v5574
      %v5576 = vpop.f32.mrb[0].mxu0
      %v5577 = vadd.f32 %v817, %v5576
      %v5578 = vpop.f32.mrb[0].mxu0
      %v5579 = vpop.f32.mrb[0].mxu0
      %5580 = vdwg.mxu0
      %5581 = vmatprep.subr.bf16.mxu0 %v2816
      %5582 = vmatpush1.bf16.msra.mxu0 %v2815
      %5583 = vmatprep.subr.bf16.mxu0 %v2944
      %5584 = vmatpush1.bf16.msra.mxu0 %v2943
      %5585 = vmatprep.subr.bf16.mxu0 %v3072
      %5586 = vmatpush1.bf16.msra.mxu0 %v3071
      %5587 = vmatprep.subr.bf16.mxu0 %v3200
      %5588 = vmatpush1.bf16.msra.mxu0 %v3199
      %5589 = vmatprep.subr.bf16.mxu0 %v3328
      %5590 = vmatpush1.bf16.msra.mxu0 %v3327
      %5591 = vmatprep.subr.bf16.mxu0 0
      %5592 = vmatpush1.bf16.msra.mxu0 0
      %5593 = vmatprep.subr.bf16.mxu0 0
      %5594 = vmatpush1.bf16.msra.mxu0 0
      %5595 = vmatprep.subr.bf16.mxu0 0
      %5596 = vmatpush1.bf16.msra.mxu0 0
      %5597 = vmatprep.subr.bf16.mxu0 0
      %5598 = vmatpush1.bf16.msra.mxu0 0
      %5599 = vmatprep.subr.bf16.mxu0 0
      %5600 = vmatpush1.bf16.msra.mxu0 0
      %5601 = vmatprep.subr.bf16.mxu0 0
      %5602 = vmatpush1.bf16.msra.mxu0 0
      %5603 = vmatprep.subr.bf16.mxu0 0
      %5604 = vmatpush1.bf16.msra.mxu0 0
      %5605 = vmatprep.subr.bf16.mxu0 0
      %5606 = vmatpush1.bf16.msra.mxu0 0
      %5607 = vmatprep.subr.bf16.mxu0 0
      %5608 = vmatpush1.bf16.msra.mxu0 0
      %5609 = vmatprep.subr.bf16.mxu0 0
      %5610 = vmatpush1.bf16.msra.mxu0 0
      %5611 = vmatprep.subr.bf16.mxu0 0
      %5612 = vmatpush1.bf16.msra.mxu0 0
      %5613 = vmatprep.mubr.bf16.mxu0 0
      %5614 = vmatmul.mubr.bf16.gmra.mrb[0].mxu0 %v4021
      %v5615 = vpop.f32.mrb[0].mxu0
      %v5616 = vadd.f32 %v817, %v5615
      %v5617 = vpop.f32.mrb[0].mxu0
      %v5618 = vadd.f32 %v817, %v5617
      %v5619 = vpop.f32.mrb[0].mxu0
      %v5620 = vpop.f32.mrb[0].mxu0
      %5621 = vdwg.mxu0
      %5622 = vmatprep.subr.bf16.mxu0 %v2818
      %5623 = vmatpush1.bf16.msra.mxu0 %v2817
      %5624 = vmatprep.subr.bf16.mxu0 %v2946
      %5625 = vmatpush1.bf16.msra.mxu0 %v2945
      %5626 = vmatprep.subr.bf16.mxu0 %v3074
      %5627 = vmatpush1.bf16.msra.mxu0 %v3073
      %5628 = vmatprep.subr.bf16.mxu0 %v3202
      %5629 = vmatpush1.bf16.msra.mxu0 %v3201
      %5630 = vmatprep.subr.bf16.mxu0 %v3330
      %5631 = vmatpush1.bf16.msra.mxu0 %v3329
      %5632 = vmatprep.subr.bf16.mxu0 0
      %5633 = vmatpush1.bf16.msra.mxu0 0
      %5634 = vmatprep.subr.bf16.mxu0 0
      %5635 = vmatpush1.bf16.msra.mxu0 0
      %5636 = vmatprep.subr.bf16.mxu0 0
      %5637 = vmatpush1.bf16.msra.mxu0 0
      %5638 = vmatprep.subr.bf16.mxu0 0
      %5639 = vmatpush1.bf16.msra.mxu0 0
      %5640 = vmatprep.subr.bf16.mxu0 0
      %5641 = vmatpush1.bf16.msra.mxu0 0
      %5642 = vmatprep.subr.bf16.mxu0 0
      %5643 = vmatpush1.bf16.msra.mxu0 0
      %5644 = vmatprep.subr.bf16.mxu0 0
      %5645 = vmatpush1.bf16.msra.mxu0 0
      %5646 = vmatprep.subr.bf16.mxu0 0
      %5647 = vmatpush1.bf16.msra.mxu0 0
      %5648 = vmatprep.subr.bf16.mxu0 0
      %5649 = vmatpush1.bf16.msra.mxu0 0
      %5650 = vmatprep.subr.bf16.mxu0 0
      %5651 = vmatpush1.bf16.msra.mxu0 0
      %5652 = vmatprep.subr.bf16.mxu0 0
      %5653 = vmatpush1.bf16.msra.mxu0 0
      %5654 = vmatprep.mubr.bf16.mxu0 0
      %5655 = vmatmul.mubr.bf16.gmra.mrb[0].mxu0 %v4021
      %v5656 = vpop.f32.mrb[0].mxu0
      %v5657 = vadd.f32 %v817, %v5656
      %v5658 = vpop.f32.mrb[0].mxu0
      %v5659 = vadd.f32 %v817, %v5658
      %v5660 = vpop.f32.mrb[0].mxu0
      %v5661 = vpop.f32.mrb[0].mxu0
      %5662 = vdwg.mxu0
      %5663 = vmatprep.subr.bf16.mxu0 %v2820
      %5664 = vmatpush1.bf16.msra.mxu0 %v2819
      %5665 = vmatprep.subr.bf16.mxu0 %v2948
      %5666 = vmatpush1.bf16.msra.mxu0 %v2947
      %5667 = vmatprep.subr.bf16.mxu0 %v3076
      %5668 = vmatpush1.bf16.msra.mxu0 %v3075
      %5669 = vmatprep.subr.bf16.mxu0 %v3204
      %5670 = vmatpush1.bf16.msra.mxu0 %v3203
      %5671 = vmatprep.subr.bf16.mxu0 %v3332
      %5672 = vmatpush1.bf16.msra.mxu0 %v3331
      %5673 = vmatprep.subr.bf16.mxu0 0
      %5674 = vmatpush1.bf16.msra.mxu0 0
      %5675 = vmatprep.subr.bf16.mxu0 0
      %5676 = vmatpush1.bf16.msra.mxu0 0
      %5677 = vmatprep.subr.bf16.mxu0 0
      %5678 = vmatpush1.bf16.msra.mxu0 0
      %5679 = vmatprep.subr.bf16.mxu0 0
      %5680 = vmatpush1.bf16.msra.mxu0 0
      %5681 = vmatprep.subr.bf16.mxu0 0
      %5682 = vmatpush1.bf16.msra.mxu0 0
      %5683 = vmatprep.subr.bf16.mxu0 0
      %5684 = vmatpush1.bf16.msra.mxu0 0
      %5685 = vmatprep.subr.bf16.mxu0 0
      %5686 = vmatpush1.bf16.msra.mxu0 0
      %5687 = vmatprep.subr.bf16.mxu0 0
      %5688 = vmatpush1.bf16.msra.mxu0 0
      %5689 = vmatprep.subr.bf16.mxu0 0
      %5690 = vmatpush1.bf16.msra.mxu0 0
      %5691 = vmatprep.subr.bf16.mxu0 0
      %5692 = vmatpush1.bf16.msra.mxu0 0
      %5693 = vmatprep.subr.bf16.mxu0 0
      %5694 = vmatpush1.bf16.msra.mxu0 0
      %5695 = vmatprep.mubr.bf16.mxu0 0
      %5696 = vmatmul.mubr.bf16.gmra.mrb[0].mxu0 %v4021
      %v5697 = vpop.f32.mrb[0].mxu0
      %v5698 = vadd.f32 %v817, %v5697
      %v5699 = vpop.f32.mrb[0].mxu0
      %v5700 = vadd.f32 %v817, %v5699
      %v5701 = vpop.f32.mrb[0].mxu0
      %v5702 = vpop.f32.mrb[0].mxu0
      %5703 = vdwg.mxu0
      %5704 = vmatprep.subr.bf16.mxu0 %v2822
      %5705 = vmatpush1.bf16.msra.mxu0 %v2821
      %5706 = vmatprep.subr.bf16.mxu0 %v2950
      %5707 = vmatpush1.bf16.msra.mxu0 %v2949
      %5708 = vmatprep.subr.bf16.mxu0 %v3078
      %5709 = vmatpush1.bf16.msra.mxu0 %v3077
      %5710 = vmatprep.subr.bf16.mxu0 %v3206
      %5711 = vmatpush1.bf16.msra.mxu0 %v3205
      %5712 = vmatprep.subr.bf16.mxu0 %v3334
      %5713 = vmatpush1.bf16.msra.mxu0 %v3333
      %5714 = vmatprep.subr.bf16.mxu0 0
      %5715 = vmatpush1.bf16.msra.mxu0 0
      %5716 = vmatprep.subr.bf16.mxu0 0
      %5717 = vmatpush1.bf16.msra.mxu0 0
      %5718 = vmatprep.subr.bf16.mxu0 0
      %5719 = vmatpush1.bf16.msra.mxu0 0
      %5720 = vmatprep.subr.bf16.mxu0 0
      %5721 = vmatpush1.bf16.msra.mxu0 0
      %5722 = vmatprep.subr.bf16.mxu0 0
      %5723 = vmatpush1.bf16.msra.mxu0 0
      %5724 = vmatprep.subr.bf16.mxu0 0
      %5725 = vmatpush1.bf16.msra.mxu0 0
      %5726 = vmatprep.subr.bf16.mxu0 0
      %5727 = vmatpush1.bf16.msra.mxu0 0
      %5728 = vmatprep.subr.bf16.mxu0 0
      %5729 = vmatpush1.bf16.msra.mxu0 0
      %5730 = vmatprep.subr.bf16.mxu0 0
      %5731 = vmatpush1.bf16.msra.mxu0 0
      %5732 = vmatprep.subr.bf16.mxu0 0
      %5733 = vmatpush1.bf16.msra.mxu0 0
      %5734 = vmatprep.subr.bf16.mxu0 0
      %5735 = vmatpush1.bf16.msra.mxu0 0
      %5736 = vmatprep.mubr.bf16.mxu0 0
      %5737 = vmatmul.mubr.bf16.gmra.mrb[0].mxu0 %v4021
      %v5738 = vpop.f32.mrb[0].mxu0
      %v5739 = vadd.f32 %v817, %v5738
      %v5740 = vpop.f32.mrb[0].mxu0
      %v5741 = vadd.f32 %v817, %v5740
      %v5742 = vpop.f32.mrb[0].mxu0
      %v5743 = vpop.f32.mrb[0].mxu0
      %5744 = vdwg.mxu0
      %5745 = vmatprep.subr.bf16.mxu0 %v2824
      %5746 = vmatpush1.bf16.msra.mxu0 %v2823
      %5747 = vmatprep.subr.bf16.mxu0 %v2952
      %5748 = vmatpush1.bf16.msra.mxu0 %v2951
      %5749 = vmatprep.subr.bf16.mxu0 %v3080
      %5750 = vmatpush1.bf16.msra.mxu0 %v3079
      %5751 = vmatprep.subr.bf16.mxu0 %v3208
      %5752 = vmatpush1.bf16.msra.mxu0 %v3207
      %5753 = vmatprep.subr.bf16.mxu0 %v3336
      %5754 = vmatpush1.bf16.msra.mxu0 %v3335
      %5755 = vmatprep.subr.bf16.mxu0 0
      %5756 = vmatpush1.bf16.msra.mxu0 0
      %5757 = vmatprep.subr.bf16.mxu0 0
      %5758 = vmatpush1.bf16.msra.mxu0 0
      %5759 = vmatprep.subr.bf16.mxu0 0
      %5760 = vmatpush1.bf16.msra.mxu0 0
      %5761 = vmatprep.subr.bf16.mxu0 0
      %5762 = vmatpush1.bf16.msra.mxu0 0
      %5763 = vmatprep.subr.bf16.mxu0 0
      %5764 = vmatpush1.bf16.msra.mxu0 0
      %5765 = vmatprep.subr.bf16.mxu0 0
      %5766 = vmatpush1.bf16.msra.mxu0 0
      %5767 = vmatprep.subr.bf16.mxu0 0
      %5768 = vmatpush1.bf16.msra.mxu0 0
      %5769 = vmatprep.subr.bf16.mxu0 0
      %5770 = vmatpush1.bf16.msra.mxu0 0
      %5771 = vmatprep.subr.bf16.mxu0 0
      %5772 = vmatpush1.bf16.msra.mxu0 0
      %5773 = vmatprep.subr.bf16.mxu0 0
      %5774 = vmatpush1.bf16.msra.mxu0 0
      %5775 = vmatprep.subr.bf16.mxu0 0
      %5776 = vmatpush1.bf16.msra.mxu0 0
      %5777 = vmatprep.mubr.bf16.mxu0 0
      %5778 = vmatmul.mubr.bf16.gmra.mrb[0].mxu0 %v4021
      %v5779 = vpop.f32.mrb[0].mxu0
      %v5780 = vadd.f32 %v817, %v5779
      %v5781 = vpop.f32.mrb[0].mxu0
      %v5782 = vadd.f32 %v817, %v5781
      %v5783 = vpop.f32.mrb[0].mxu0
      %v5784 = vpop.f32.mrb[0].mxu0
      %5785 = vdwg.mxu0
      %5786 = vmatprep.subr.bf16.mxu0 %v2826
      %5787 = vmatpush1.bf16.msra.mxu0 %v2825
      %5788 = vmatprep.subr.bf16.mxu0 %v2954
      %5789 = vmatpush1.bf16.msra.mxu0 %v2953
      %5790 = vmatprep.subr.bf16.mxu0 %v3082
      %5791 = vmatpush1.bf16.msra.mxu0 %v3081
      %5792 = vmatprep.subr.bf16.mxu0 %v3210
      %5793 = vmatpush1.bf16.msra.mxu0 %v3209
      %5794 = vmatprep.subr.bf16.mxu0 %v3338
      %5795 = vmatpush1.bf16.msra.mxu0 %v3337
      %5796 = vmatprep.subr.bf16.mxu0 0
      %5797 = vmatpush1.bf16.msra.mxu0 0
      %5798 = vmatprep.subr.bf16.mxu0 0
      %5799 = vmatpush1.bf16.msra.mxu0 0
      %5800 = vmatprep.subr.bf16.mxu0 0
      %5801 = vmatpush1.bf16.msra.mxu0 0
      %5802 = vmatprep.subr.bf16.mxu0 0
      %5803 = vmatpush1.bf16.msra.mxu0 0
      %5804 = vmatprep.subr.bf16.mxu0 0
      %5805 = vmatpush1.bf16.msra.mxu0 0
      %5806 = vmatprep.subr.bf16.mxu0 0
      %5807 = vmatpush1.bf16.msra.mxu0 0
      %5808 = vmatprep.subr.bf16.mxu0 0
      %5809 = vmatpush1.bf16.msra.mxu0 0
      %5810 = vmatprep.subr.bf16.mxu0 0
      %5811 = vmatpush1.bf16.msra.mxu0 0
      %5812 = vmatprep.subr.bf16.mxu0 0
      %5813 = vmatpush1.bf16.msra.mxu0 0
      %5814 = vmatprep.subr.bf16.mxu0 0
      %5815 = vmatpush1.bf16.msra.mxu0 0
      %5816 = vmatprep.subr.bf16.mxu0 0
      %5817 = vmatpush1.bf16.msra.mxu0 0
      %5818 = vmatprep.mubr.bf16.mxu0 0
      %5819 = vmatmul.mubr.bf16.gmra.mrb[0].mxu0 %v4021
      %v5820 = vpop.f32.mrb[0].mxu0
      %v5821 = vadd.f32 %v817, %v5820
      %v5822 = vpop.f32.mrb[0].mxu0
      %v5823 = vadd.f32 %v817, %v5822
      %v5824 = vpop.f32.mrb[0].mxu0
      %v5825 = vpop.f32.mrb[0].mxu0
      %5826 = vdwg.mxu0
      %5827 = vmatprep.subr.bf16.mxu0 %v2828
      %5828 = vmatpush1.bf16.msra.mxu0 %v2827
      %5829 = vmatprep.subr.bf16.mxu0 %v2956
      %5830 = vmatpush1.bf16.msra.mxu0 %v2955
      %5831 = vmatprep.subr.bf16.mxu0 %v3084
      %5832 = vmatpush1.bf16.msra.mxu0 %v3083
      %5833 = vmatprep.subr.bf16.mxu0 %v3212
      %5834 = vmatpush1.bf16.msra.mxu0 %v3211
      %5835 = vmatprep.subr.bf16.mxu0 %v3340
      %5836 = vmatpush1.bf16.msra.mxu0 %v3339
      %5837 = vmatprep.subr.bf16.mxu0 0
      %5838 = vmatpush1.bf16.msra.mxu0 0
      %5839 = vmatprep.subr.bf16.mxu0 0
      %5840 = vmatpush1.bf16.msra.mxu0 0
      %5841 = vmatprep.subr.bf16.mxu0 0
      %5842 = vmatpush1.bf16.msra.mxu0 0
      %5843 = vmatprep.subr.bf16.mxu0 0
      %5844 = vmatpush1.bf16.msra.mxu0 0
      %5845 = vmatprep.subr.bf16.mxu0 0
      %5846 = vmatpush1.bf16.msra.mxu0 0
      %5847 = vmatprep.subr.bf16.mxu0 0
      %5848 = vmatpush1.bf16.msra.mxu0 0
      %5849 = vmatprep.subr.bf16.mxu0 0
      %5850 = vmatpush1.bf16.msra.mxu0 0
      %5851 = vmatprep.subr.bf16.mxu0 0
      %5852 = vmatpush1.bf16.msra.mxu0 0
      %5853 = vmatprep.subr.bf16.mxu0 0
      %5854 = vmatpush1.bf16.msra.mxu0 0
      %5855 = vmatprep.subr.bf16.mxu0 0
      %5856 = vmatpush1.bf16.msra.mxu0 0
      %5857 = vmatprep.subr.bf16.mxu0 0
      %5858 = vmatpush1.bf16.msra.mxu0 0
      %5859 = vmatprep.mubr.bf16.mxu0 0
      %5860 = vmatmul.mubr.bf16.gmra.mrb[0].mxu0 %v4021
      %v5861 = vpop.f32.mrb[0].mxu0
      %v5862 = vadd.f32 %v817, %v5861
      %v5863 = vpop.f32.mrb[0].mxu0
      %v5864 = vadd.f32 %v817, %v5863
      %v5865 = vpop.f32.mrb[0].mxu0
      %v5866 = vpop.f32.mrb[0].mxu0
      %5867 = vdwg.mxu0
      %5868 = vmatprep.subr.bf16.mxu0 %v2830
      %5869 = vmatpush1.bf16.msra.mxu0 %v2829
      %5870 = vmatprep.subr.bf16.mxu0 %v2958
      %5871 = vmatpush1.bf16.msra.mxu0 %v2957
      %5872 = vmatprep.subr.bf16.mxu0 %v3086
      %5873 = vmatpush1.bf16.msra.mxu0 %v3085
      %5874 = vmatprep.subr.bf16.mxu0 %v3214
      %5875 = vmatpush1.bf16.msra.mxu0 %v3213
      %5876 = vmatprep.subr.bf16.mxu0 %v3342
      %5877 = vmatpush1.bf16.msra.mxu0 %v3341
      %5878 = vmatprep.subr.bf16.mxu0 0
      %5879 = vmatpush1.bf16.msra.mxu0 0
      %5880 = vmatprep.subr.bf16.mxu0 0
      %5881 = vmatpush1.bf16.msra.mxu0 0
      %5882 = vmatprep.subr.bf16.mxu0 0
      %5883 = vmatpush1.bf16.msra.mxu0 0
      %5884 = vmatprep.subr.bf16.mxu0 0
      %5885 = vmatpush1.bf16.msra.mxu0 0
      %5886 = vmatprep.subr.bf16.mxu0 0
      %5887 = vmatpush1.bf16.msra.mxu0 0
      %5888 = vmatprep.subr.bf16.mxu0 0
      %5889 = vmatpush1.bf16.msra.mxu0 0
      %5890 = vmatprep.subr.bf16.mxu0 0
      %5891 = vmatpush1.bf16.msra.mxu0 0
      %5892 = vmatprep.subr.bf16.mxu0 0
      %5893 = vmatpush1.bf16.msra.mxu0 0
      %5894 = vmatprep.subr.bf16.mxu0 0
      %5895 = vmatpush1.bf16.msra.mxu0 0
      %5896 = vmatprep.subr.bf16.mxu0 0
      %5897 = vmatpush1.bf16.msra.mxu0 0
      %5898 = vmatprep.subr.bf16.mxu0 0
      %5899 = vmatpush1.bf16.msra.mxu0 0
      %5900 = vmatprep.mubr.bf16.mxu0 0
      %5901 = vmatmul.mubr.bf16.gmra.mrb[0].mxu0 %v4021
      %v5902 = vpop.f32.mrb[0].mxu0
      %v5903 = vadd.f32 %v817, %v5902
      %v5904 = vpop.f32.mrb[0].mxu0
      %v5905 = vadd.f32 %v817, %v5904
      %v5906 = vpop.f32.mrb[0].mxu0
      %v5907 = vpop.f32.mrb[0].mxu0
      %5908 = vdwg.mxu0
      %5909 = vmatprep.subr.bf16.mxu0 %v2832
      %5910 = vmatpush1.bf16.msra.mxu0 %v2831
      %5911 = vmatprep.subr.bf16.mxu0 %v2960
      %5912 = vmatpush1.bf16.msra.mxu0 %v2959
      %5913 = vmatprep.subr.bf16.mxu0 %v3088
      %5914 = vmatpush1.bf16.msra.mxu0 %v3087
      %5915 = vmatprep.subr.bf16.mxu0 %v3216
      %5916 = vmatpush1.bf16.msra.mxu0 %v3215
      %5917 = vmatprep.subr.bf16.mxu0 %v3344
      %5918 = vmatpush1.bf16.msra.mxu0 %v3343
      %5919 = vmatprep.subr.bf16.mxu0 0
      %5920 = vmatpush1.bf16.msra.mxu0 0
      %5921 = vmatprep.subr.bf16.mxu0 0
      %5922 = vmatpush1.bf16.msra.mxu0 0
      %5923 = vmatprep.subr.bf16.mxu0 0
      %5924 = vmatpush1.bf16.msra.mxu0 0
      %5925 = vmatprep.subr.bf16.mxu0 0
      %5926 = vmatpush1.bf16.msra.mxu0 0
      %5927 = vmatprep.subr.bf16.mxu0 0
      %5928 = vmatpush1.bf16.msra.mxu0 0
      %5929 = vmatprep.subr.bf16.mxu0 0
      %5930 = vmatpush1.bf16.msra.mxu0 0
      %5931 = vmatprep.subr.bf16.mxu0 0
      %5932 = vmatpush1.bf16.msra.mxu0 0
      %5933 = vmatprep.subr.bf16.mxu0 0
      %5934 = vmatpush1.bf16.msra.mxu0 0
      %5935 = vmatprep.subr.bf16.mxu0 0
      %5936 = vmatpush1.bf16.msra.mxu0 0
      %5937 = vmatprep.subr.bf16.mxu0 0
      %5938 = vmatpush1.bf16.msra.mxu0 0
      %5939 = vmatprep.subr.bf16.mxu0 0
      %5940 = vmatpush1.bf16.msra.mxu0 0
      %5941 = vmatprep.mubr.bf16.mxu0 0
      %5942 = vmatmul.mubr.bf16.gmra.mrb[0].mxu0 %v4021
      %v5943 = vpop.f32.mrb[0].mxu0
      %v5944 = vadd.f32 %v817, %v5943
      %v5945 = vpop.f32.mrb[0].mxu0
      %v5946 = vadd.f32 %v817, %v5945
      %v5947 = vpop.f32.mrb[0].mxu0
      %v5948 = vpop.f32.mrb[0].mxu0
      %5949 = vdwg.mxu0
      %5950 = vmatprep.subr.bf16.mxu0 %v2834
      %5951 = vmatpush1.bf16.msra.mxu0 %v2833
      %5952 = vmatprep.subr.bf16.mxu0 %v2962
      %5953 = vmatpush1.bf16.msra.mxu0 %v2961
      %5954 = vmatprep.subr.bf16.mxu0 %v3090
      %5955 = vmatpush1.bf16.msra.mxu0 %v3089
      %5956 = vmatprep.subr.bf16.mxu0 %v3218
      %5957 = vmatpush1.bf16.msra.mxu0 %v3217
      %5958 = vmatprep.subr.bf16.mxu0 %v3346
      %5959 = vmatpush1.bf16.msra.mxu0 %v3345
      %5960 = vmatprep.subr.bf16.mxu0 0
      %5961 = vmatpush1.bf16.msra.mxu0 0
      %5962 = vmatprep.subr.bf16.mxu0 0
      %5963 = vmatpush1.bf16.msra.mxu0 0
      %5964 = vmatprep.subr.bf16.mxu0 0
      %5965 = vmatpush1.bf16.msra.mxu0 0
      %5966 = vmatprep.subr.bf16.mxu0 0
      %5967 = vmatpush1.bf16.msra.mxu0 0
      %5968 = vmatprep.subr.bf16.mxu0 0
      %5969 = vmatpush1.bf16.msra.mxu0 0
      %5970 = vmatprep.subr.bf16.mxu0 0
      %5971 = vmatpush1.bf16.msra.mxu0 0
      %5972 = vmatprep.subr.bf16.mxu0 0
      %5973 = vmatpush1.bf16.msra.mxu0 0
      %5974 = vmatprep.subr.bf16.mxu0 0
      %5975 = vmatpush1.bf16.msra.mxu0 0
      %5976 = vmatprep.subr.bf16.mxu0 0
      %5977 = vmatpush1.bf16.msra.mxu0 0
      %5978 = vmatprep.subr.bf16.mxu0 0
      %5979 = vmatpush1.bf16.msra.mxu0 0
      %5980 = vmatprep.subr.bf16.mxu0 0
      %5981 = vmatpush1.bf16.msra.mxu0 0
      %5982 = vmatprep.mubr.bf16.mxu0 0
      %5983 = vmatmul.mubr.bf16.gmra.mrb[0].mxu0 %v4021
      %v5984 = vpop.f32.mrb[0].mxu0
      %v5985 = vadd.f32 %v817, %v5984
      %v5986 = vpop.f32.mrb[0].mxu0
      %v5987 = vadd.f32 %v817, %v5986
      %v5988 = vpop.f32.mrb[0].mxu0
      %v5989 = vpop.f32.mrb[0].mxu0
      %5990 = vdwg.mxu0
      %5991 = vmatprep.subr.bf16.mxu0 %v2836
      %5992 = vmatpush1.bf16.msra.mxu0 %v2835
      %5993 = vmatprep.subr.bf16.mxu0 %v2964
      %5994 = vmatpush1.bf16.msra.mxu0 %v2963
      %5995 = vmatprep.subr.bf16.mxu0 %v3092
      %5996 = vmatpush1.bf16.msra.mxu0 %v3091
      %5997 = vmatprep.subr.bf16.mxu0 %v3220
      %5998 = vmatpush1.bf16.msra.mxu0 %v3219
      %5999 = vmatprep.subr.bf16.mxu0 %v3348
      %6000 = vmatpush1.bf16.msra.mxu0 %v3347
      %6001 = vmatprep.subr.bf16.mxu0 0
      %6002 = vmatpush1.bf16.msra.mxu0 0
      %6003 = vmatprep.subr.bf16.mxu0 0
      %6004 = vmatpush1.bf16.msra.mxu0 0
      %6005 = vmatprep.subr.bf16.mxu0 0
      %6006 = vmatpush1.bf16.msra.mxu0 0
      %6007 = vmatprep.subr.bf16.mxu0 0
      %6008 = vmatpush1.bf16.msra.mxu0 0
      %6009 = vmatprep.subr.bf16.mxu0 0
      %6010 = vmatpush1.bf16.msra.mxu0 0
      %6011 = vmatprep.subr.bf16.mxu0 0
      %6012 = vmatpush1.bf16.msra.mxu0 0
      %6013 = vmatprep.subr.bf16.mxu0 0
      %6014 = vmatpush1.bf16.msra.mxu0 0
      %6015 = vmatprep.subr.bf16.mxu0 0
      %6016 = vmatpush1.bf16.msra.mxu0 0
      %6017 = vmatprep.subr.bf16.mxu0 0
      %6018 = vmatpush1.bf16.msra.mxu0 0
      %6019 = vmatprep.subr.bf16.mxu0 0
      %6020 = vmatpush1.bf16.msra.mxu0 0
      %6021 = vmatprep.subr.bf16.mxu0 0
      %6022 = vmatpush1.bf16.msra.mxu0 0
      %6023 = vmatprep.mubr.bf16.mxu0 0
      %6024 = vmatmul.mubr.bf16.gmra.mrb[0].mxu0 %v4021
      %v6025 = vpop.f32.mrb[0].mxu0
      %v6026 = vadd.f32 %v817, %v6025
      %v6027 = vpop.f32.mrb[0].mxu0
      %v6028 = vadd.f32 %v817, %v6027
      %v6029 = vpop.f32.mrb[0].mxu0
      %v6030 = vpop.f32.mrb[0].mxu0
      %6031 = vdwg.mxu0
      %6032 = vmatprep.subr.bf16.mxu0 %v2838
      %6033 = vmatpush1.bf16.msra.mxu0 %v2837
      %6034 = vmatprep.subr.bf16.mxu0 %v2966
      %6035 = vmatpush1.bf16.msra.mxu0 %v2965
      %6036 = vmatprep.subr.bf16.mxu0 %v3094
      %6037 = vmatpush1.bf16.msra.mxu0 %v3093
      %6038 = vmatprep.subr.bf16.mxu0 %v3222
      %6039 = vmatpush1.bf16.msra.mxu0 %v3221
      %6040 = vmatprep.subr.bf16.mxu0 %v3350
      %6041 = vmatpush1.bf16.msra.mxu0 %v3349
      %6042 = vmatprep.subr.bf16.mxu0 0
      %6043 = vmatpush1.bf16.msra.mxu0 0
      %6044 = vmatprep.subr.bf16.mxu0 0
      %6045 = vmatpush1.bf16.msra.mxu0 0
      %6046 = vmatprep.subr.bf16.mxu0 0
      %6047 = vmatpush1.bf16.msra.mxu0 0
      %6048 = vmatprep.subr.bf16.mxu0 0
      %6049 = vmatpush1.bf16.msra.mxu0 0
      %6050 = vmatprep.subr.bf16.mxu0 0
      %6051 = vmatpush1.bf16.msra.mxu0 0
      %6052 = vmatprep.subr.bf16.mxu0 0
      %6053 = vmatpush1.bf16.msra.mxu0 0
      %6054 = vmatprep.subr.bf16.mxu0 0
      %6055 = vmatpush1.bf16.msra.mxu0 0
      %6056 = vmatprep.subr.bf16.mxu0 0
      %6057 = vmatpush1.bf16.msra.mxu0 0
      %6058 = vmatprep.subr.bf16.mxu0 0
      %6059 = vmatpush1.bf16.msra.mxu0 0
      %6060 = vmatprep.subr.bf16.mxu0 0
      %6061 = vmatpush1.bf16.msra.mxu0 0
      %6062 = vmatprep.subr.bf16.mxu0 0
      %6063 = vmatpush1.bf16.msra.mxu0 0
      %6064 = vmatprep.mubr.bf16.mxu0 0
      %6065 = vmatmul.mubr.bf16.gmra.mrb[0].mxu0 %v4021
      %v6066 = vpop.f32.mrb[0].mxu0
      %v6067 = vadd.f32 %v817, %v6066
      %v6068 = vpop.f32.mrb[0].mxu0
      %v6069 = vadd.f32 %v817, %v6068
      %v6070 = vpop.f32.mrb[0].mxu0
      %v6071 = vpop.f32.mrb[0].mxu0
      %6072 = vdwg.mxu0
      %6073 = vmatprep.subr.bf16.mxu0 %v2840
      %6074 = vmatpush1.bf16.msra.mxu0 %v2839
      %6075 = vmatprep.subr.bf16.mxu0 %v2968
      %6076 = vmatpush1.bf16.msra.mxu0 %v2967
      %6077 = vmatprep.subr.bf16.mxu0 %v3096
      %6078 = vmatpush1.bf16.msra.mxu0 %v3095
      %6079 = vmatprep.subr.bf16.mxu0 %v3224
      %6080 = vmatpush1.bf16.msra.mxu0 %v3223
      %6081 = vmatprep.subr.bf16.mxu0 %v3352
      %6082 = vmatpush1.bf16.msra.mxu0 %v3351
      %6083 = vmatprep.subr.bf16.mxu0 0
      %6084 = vmatpush1.bf16.msra.mxu0 0
      %6085 = vmatprep.subr.bf16.mxu0 0
      %6086 = vmatpush1.bf16.msra.mxu0 0
      %6087 = vmatprep.subr.bf16.mxu0 0
      %6088 = vmatpush1.bf16.msra.mxu0 0
      %6089 = vmatprep.subr.bf16.mxu0 0
      %6090 = vmatpush1.bf16.msra.mxu0 0
      %6091 = vmatprep.subr.bf16.mxu0 0
      %6092 = vmatpush1.bf16.msra.mxu0 0
      %6093 = vmatprep.subr.bf16.mxu0 0
      %6094 = vmatpush1.bf16.msra.mxu0 0
      %6095 = vmatprep.subr.bf16.mxu0 0
      %6096 = vmatpush1.bf16.msra.mxu0 0
      %6097 = vmatprep.subr.bf16.mxu0 0
      %6098 = vmatpush1.bf16.msra.mxu0 0
      %6099 = vmatprep.subr.bf16.mxu0 0
      %6100 = vmatpush1.bf16.msra.mxu0 0
      %6101 = vmatprep.subr.bf16.mxu0 0
      %6102 = vmatpush1.bf16.msra.mxu0 0
      %6103 = vmatprep.subr.bf16.mxu0 0
      %6104 = vmatpush1.bf16.msra.mxu0 0
      %6105 = vmatprep.mubr.bf16.mxu0 0
      %6106 = vmatmul.mubr.bf16.gmra.mrb[0].mxu0 %v4021
      %v6107 = vpop.f32.mrb[0].mxu0
      %v6108 = vadd.f32 %v817, %v6107
      %v6109 = vpop.f32.mrb[0].mxu0
      %v6110 = vadd.f32 %v817, %v6109
      %v6111 = vpop.f32.mrb[0].mxu0
      %v6112 = vpop.f32.mrb[0].mxu0
      %6113 = vdwg.mxu0
      %6114 = vmatprep.subr.bf16.mxu0 %v2842
      %6115 = vmatpush1.bf16.msra.mxu0 %v2841
      %6116 = vmatprep.subr.bf16.mxu0 %v2970
      %6117 = vmatpush1.bf16.msra.mxu0 %v2969
      %6118 = vmatprep.subr.bf16.mxu0 %v3098
      %6119 = vmatpush1.bf16.msra.mxu0 %v3097
      %6120 = vmatprep.subr.bf16.mxu0 %v3226
      %6121 = vmatpush1.bf16.msra.mxu0 %v3225
      %6122 = vmatprep.subr.bf16.mxu0 %v3354
      %6123 = vmatpush1.bf16.msra.mxu0 %v3353
      %6124 = vmatprep.subr.bf16.mxu0 0
      %6125 = vmatpush1.bf16.msra.mxu0 0
      %6126 = vmatprep.subr.bf16.mxu0 0
      %6127 = vmatpush1.bf16.msra.mxu0 0
      %6128 = vmatprep.subr.bf16.mxu0 0
      %6129 = vmatpush1.bf16.msra.mxu0 0
      %6130 = vmatprep.subr.bf16.mxu0 0
      %6131 = vmatpush1.bf16.msra.mxu0 0
      %6132 = vmatprep.subr.bf16.mxu0 0
      %6133 = vmatpush1.bf16.msra.mxu0 0
      %6134 = vmatprep.subr.bf16.mxu0 0
      %6135 = vmatpush1.bf16.msra.mxu0 0
      %6136 = vmatprep.subr.bf16.mxu0 0
      %6137 = vmatpush1.bf16.msra.mxu0 0
      %6138 = vmatprep.subr.bf16.mxu0 0
      %6139 = vmatpush1.bf16.msra.mxu0 0
      %6140 = vmatprep.subr.bf16.mxu0 0
      %6141 = vmatpush1.bf16.msra.mxu0 0
      %6142 = vmatprep.subr.bf16.mxu0 0
      %6143 = vmatpush1.bf16.msra.mxu0 0
      %6144 = vmatprep.subr.bf16.mxu0 0
      %6145 = vmatpush1.bf16.msra.mxu0 0
      %6146 = vmatprep.mubr.bf16.mxu0 0
      %6147 = vmatmul.mubr.bf16.gmra.mrb[0].mxu0 %v4021
      %v6148 = vpop.f32.mrb[0].mxu0
      %v6149 = vadd.f32 %v817, %v6148
      %v6150 = vpop.f32.mrb[0].mxu0
      %v6151 = vadd.f32 %v817, %v6150
      %v6152 = vpop.f32.mrb[0].mxu0
      %v6153 = vpop.f32.mrb[0].mxu0
      %6154 = vdwg.mxu0
      %6155 = vmatprep.subr.bf16.mxu0 %v2844
      %6156 = vmatpush1.bf16.msra.mxu0 %v2843
      %6157 = vmatprep.subr.bf16.mxu0 %v2972
      %6158 = vmatpush1.bf16.msra.mxu0 %v2971
      %6159 = vmatprep.subr.bf16.mxu0 %v3100
      %6160 = vmatpush1.bf16.msra.mxu0 %v3099
      %6161 = vmatprep.subr.bf16.mxu0 %v3228
      %6162 = vmatpush1.bf16.msra.mxu0 %v3227
      %6163 = vmatprep.subr.bf16.mxu0 %v3356
      %6164 = vmatpush1.bf16.msra.mxu0 %v3355
      %6165 = vmatprep.subr.bf16.mxu0 0
      %6166 = vmatpush1.bf16.msra.mxu0 0
      %6167 = vmatprep.subr.bf16.mxu0 0
      %6168 = vmatpush1.bf16.msra.mxu0 0
      %6169 = vmatprep.subr.bf16.mxu0 0
      %6170 = vmatpush1.bf16.msra.mxu0 0
      %6171 = vmatprep.subr.bf16.mxu0 0
      %6172 = vmatpush1.bf16.msra.mxu0 0
      %6173 = vmatprep.subr.bf16.mxu0 0
      %6174 = vmatpush1.bf16.msra.mxu0 0
      %6175 = vmatprep.subr.bf16.mxu0 0
      %6176 = vmatpush1.bf16.msra.mxu0 0
      %6177 = vmatprep.subr.bf16.mxu0 0
      %6178 = vmatpush1.bf16.msra.mxu0 0
      %6179 = vmatprep.subr.bf16.mxu0 0
      %6180 = vmatpush1.bf16.msra.mxu0 0
      %6181 = vmatprep.subr.bf16.mxu0 0
      %6182 = vmatpush1.bf16.msra.mxu0 0
      %6183 = vmatprep.subr.bf16.mxu0 0
      %6184 = vmatpush1.bf16.msra.mxu0 0
      %6185 = vmatprep.subr.bf16.mxu0 0
      %6186 = vmatpush1.bf16.msra.mxu0 0
      %6187 = vmatprep.mubr.bf16.mxu0 0
      %6188 = vmatmul.mubr.bf16.gmra.mrb[0].mxu0 %v4021
      %v6189 = vpop.f32.mrb[0].mxu0
      %v6190 = vadd.f32 %v817, %v6189
      %v6191 = vpop.f32.mrb[0].mxu0
      %v6192 = vadd.f32 %v817, %v6191
      %v6193 = vpop.f32.mrb[0].mxu0
      %v6194 = vpop.f32.mrb[0].mxu0
      %6195 = vdwg.mxu0
      %6196 = vmatprep.subr.bf16.mxu0 %v2846
      %6197 = vmatpush1.bf16.msra.mxu0 %v2845
      %6198 = vmatprep.subr.bf16.mxu0 %v2974
      %6199 = vmatpush1.bf16.msra.mxu0 %v2973
      %6200 = vmatprep.subr.bf16.mxu0 %v3102
      %6201 = vmatpush1.bf16.msra.mxu0 %v3101
      %6202 = vmatprep.subr.bf16.mxu0 %v3230
      %6203 = vmatpush1.bf16.msra.mxu0 %v3229
      %6204 = vmatprep.subr.bf16.mxu0 %v3358
      %6205 = vmatpush1.bf16.msra.mxu0 %v3357
      %6206 = vmatprep.subr.bf16.mxu0 0
      %6207 = vmatpush1.bf16.msra.mxu0 0
      %6208 = vmatprep.subr.bf16.mxu0 0
      %6209 = vmatpush1.bf16.msra.mxu0 0
      %6210 = vmatprep.subr.bf16.mxu0 0
      %6211 = vmatpush1.bf16.msra.mxu0 0
      %6212 = vmatprep.subr.bf16.mxu0 0
      %6213 = vmatpush1.bf16.msra.mxu0 0
      %6214 = vmatprep.subr.bf16.mxu0 0
      %6215 = vmatpush1.bf16.msra.mxu0 0
      %6216 = vmatprep.subr.bf16.mxu0 0
      %6217 = vmatpush1.bf16.msra.mxu0 0
      %6218 = vmatprep.subr.bf16.mxu0 0
      %6219 = vmatpush1.bf16.msra.mxu0 0
      %6220 = vmatprep.subr.bf16.mxu0 0
      %6221 = vmatpush1.bf16.msra.mxu0 0
      %6222 = vmatprep.subr.bf16.mxu0 0
      %6223 = vmatpush1.bf16.msra.mxu0 0
      %6224 = vmatprep.subr.bf16.mxu0 0
      %6225 = vmatpush1.bf16.msra.mxu0 0
      %6226 = vmatprep.subr.bf16.mxu0 0
      %6227 = vmatpush1.bf16.msra.mxu0 0
      %6228 = vmatprep.mubr.bf16.mxu0 0
      %6229 = vmatmul.mubr.bf16.gmra.mrb[0].mxu0 %v4021
      %v6230 = vpop.f32.mrb[0].mxu0
      %v6231 = vadd.f32 %v817, %v6230
      %v6232 = vpop.f32.mrb[0].mxu0
      %v6233 = vadd.f32 %v817, %v6232
      %v6234 = vpop.f32.mrb[0].mxu0
      %v6235 = vpop.f32.mrb[0].mxu0
      %6236 = vdwg.mxu0
      %6237 = vmatprep.subr.bf16.mxu0 %v2848
      %6238 = vmatpush1.bf16.msra.mxu0 %v2847
      %6239 = vmatprep.subr.bf16.mxu0 %v2976
      %6240 = vmatpush1.bf16.msra.mxu0 %v2975
      %6241 = vmatprep.subr.bf16.mxu0 %v3104
      %6242 = vmatpush1.bf16.msra.mxu0 %v3103
      %6243 = vmatprep.subr.bf16.mxu0 %v3232
      %6244 = vmatpush1.bf16.msra.mxu0 %v3231
      %6245 = vmatprep.subr.bf16.mxu0 %v3360
      %6246 = vmatpush1.bf16.msra.mxu0 %v3359
      %6247 = vmatprep.subr.bf16.mxu0 0
      %6248 = vmatpush1.bf16.msra.mxu0 0
      %6249 = vmatprep.subr.bf16.mxu0 0
      %6250 = vmatpush1.bf16.msra.mxu0 0
      %6251 = vmatprep.subr.bf16.mxu0 0
      %6252 = vmatpush1.bf16.msra.mxu0 0
      %6253 = vmatprep.subr.bf16.mxu0 0
      %6254 = vmatpush1.bf16.msra.mxu0 0
      %6255 = vmatprep.subr.bf16.mxu0 0
      %6256 = vmatpush1.bf16.msra.mxu0 0
      %6257 = vmatprep.subr.bf16.mxu0 0
      %6258 = vmatpush1.bf16.msra.mxu0 0
      %6259 = vmatprep.subr.bf16.mxu0 0
      %6260 = vmatpush1.bf16.msra.mxu0 0
      %6261 = vmatprep.subr.bf16.mxu0 0
      %6262 = vmatpush1.bf16.msra.mxu0 0
      %6263 = vmatprep.subr.bf16.mxu0 0
      %6264 = vmatpush1.bf16.msra.mxu0 0
      %6265 = vmatprep.subr.bf16.mxu0 0
      %6266 = vmatpush1.bf16.msra.mxu0 0
      %6267 = vmatprep.subr.bf16.mxu0 0
      %6268 = vmatpush1.bf16.msra.mxu0 0
      %6269 = vmatprep.mubr.bf16.mxu0 0
      %6270 = vmatmul.mubr.bf16.gmra.mrb[0].mxu0 %v4021
      %v6271 = vpop.f32.mrb[0].mxu0
      %v6272 = vadd.f32 %v817, %v6271
      %v6273 = vpop.f32.mrb[0].mxu0
      %v6274 = vadd.f32 %v817, %v6273
      %v6275 = vpop.f32.mrb[0].mxu0
      %v6276 = vpop.f32.mrb[0].mxu0
      %6277 = vdwg.mxu0
      %6278 = vmatprep.subr.bf16.mxu0 %v2850
      %6279 = vmatpush1.bf16.msra.mxu0 %v2849
      %6280 = vmatprep.subr.bf16.mxu0 %v2978
      %6281 = vmatpush1.bf16.msra.mxu0 %v2977
      %6282 = vmatprep.subr.bf16.mxu0 %v3106
      %6283 = vmatpush1.bf16.msra.mxu0 %v3105
      %6284 = vmatprep.subr.bf16.mxu0 %v3234
      %6285 = vmatpush1.bf16.msra.mxu0 %v3233
      %6286 = vmatprep.subr.bf16.mxu0 %v3362
      %6287 = vmatpush1.bf16.msra.mxu0 %v3361
      %6288 = vmatprep.subr.bf16.mxu0 0
      %6289 = vmatpush1.bf16.msra.mxu0 0
      %6290 = vmatprep.subr.bf16.mxu0 0
      %6291 = vmatpush1.bf16.msra.mxu0 0
      %6292 = vmatprep.subr.bf16.mxu0 0
      %6293 = vmatpush1.bf16.msra.mxu0 0
      %6294 = vmatprep.subr.bf16.mxu0 0
      %6295 = vmatpush1.bf16.msra.mxu0 0
      %6296 = vmatprep.subr.bf16.mxu0 0
      %6297 = vmatpush1.bf16.msra.mxu0 0
      %6298 = vmatprep.subr.bf16.mxu0 0
      %6299 = vmatpush1.bf16.msra.mxu0 0
      %6300 = vmatprep.subr.bf16.mxu0 0
      %6301 = vmatpush1.bf16.msra.mxu0 0
      %6302 = vmatprep.subr.bf16.mxu0 0
      %6303 = vmatpush1.bf16.msra.mxu0 0
      %6304 = vmatprep.subr.bf16.mxu0 0
      %6305 = vmatpush1.bf16.msra.mxu0 0
      %6306 = vmatprep.subr.bf16.mxu0 0
      %6307 = vmatpush1.bf16.msra.mxu0 0
      %6308 = vmatprep.subr.bf16.mxu0 0
      %6309 = vmatpush1.bf16.msra.mxu0 0
      %6310 = vmatprep.mubr.bf16.mxu0 0
      %6311 = vmatmul.mubr.bf16.gmra.mrb[0].mxu0 %v4021
      %v6312 = vpop.f32.mrb[0].mxu0
      %v6313 = vadd.f32 %v817, %v6312
      %v6314 = vpop.f32.mrb[0].mxu0
      %v6315 = vadd.f32 %v817, %v6314
      %v6316 = vpop.f32.mrb[0].mxu0
      %v6317 = vpop.f32.mrb[0].mxu0
      %6318 = vdwg.mxu0
      %6319 = vmatprep.subr.bf16.mxu0 %v2852
      %6320 = vmatpush1.bf16.msra.mxu0 %v2851
      %6321 = vmatprep.subr.bf16.mxu0 %v2980
      %6322 = vmatpush1.bf16.msra.mxu0 %v2979
      %6323 = vmatprep.subr.bf16.mxu0 %v3108
      %6324 = vmatpush1.bf16.msra.mxu0 %v3107
      %6325 = vmatprep.subr.bf16.mxu0 %v3236
      %6326 = vmatpush1.bf16.msra.mxu0 %v3235
      %6327 = vmatprep.subr.bf16.mxu0 %v3364
      %6328 = vmatpush1.bf16.msra.mxu0 %v3363
      %6329 = vmatprep.subr.bf16.mxu0 0
      %6330 = vmatpush1.bf16.msra.mxu0 0
      %6331 = vmatprep.subr.bf16.mxu0 0
      %6332 = vmatpush1.bf16.msra.mxu0 0
      %6333 = vmatprep.subr.bf16.mxu0 0
      %6334 = vmatpush1.bf16.msra.mxu0 0
      %6335 = vmatprep.subr.bf16.mxu0 0
      %6336 = vmatpush1.bf16.msra.mxu0 0
      %6337 = vmatprep.subr.bf16.mxu0 0
      %6338 = vmatpush1.bf16.msra.mxu0 0
      %6339 = vmatprep.subr.bf16.mxu0 0
      %6340 = vmatpush1.bf16.msra.mxu0 0
      %6341 = vmatprep.subr.bf16.mxu0 0
      %6342 = vmatpush1.bf16.msra.mxu0 0
      %6343 = vmatprep.subr.bf16.mxu0 0
      %6344 = vmatpush1.bf16.msra.mxu0 0
      %6345 = vmatprep.subr.bf16.mxu0 0
      %6346 = vmatpush1.bf16.msra.mxu0 0
      %6347 = vmatprep.subr.bf16.mxu0 0
      %6348 = vmatpush1.bf16.msra.mxu0 0
      %6349 = vmatprep.subr.bf16.mxu0 0
      %6350 = vmatpush1.bf16.msra.mxu0 0
      %6351 = vmatprep.mubr.bf16.mxu0 0
      %6352 = vmatmul.mubr.bf16.gmra.mrb[0].mxu0 %v4021
      %v6353 = vpop.f32.mrb[0].mxu0
      %v6354 = vadd.f32 %v817, %v6353
      %v6355 = vpop.f32.mrb[0].mxu0
      %v6356 = vadd.f32 %v817, %v6355
      %v6357 = vpop.f32.mrb[0].mxu0
      %v6358 = vpop.f32.mrb[0].mxu0
      %6359 = vdwg.mxu0
      %6360 = vmatprep.subr.bf16.mxu0 %v2854
      %6361 = vmatpush1.bf16.msra.mxu0 %v2853
      %6362 = vmatprep.subr.bf16.mxu0 %v2982
      %6363 = vmatpush1.bf16.msra.mxu0 %v2981
      %6364 = vmatprep.subr.bf16.mxu0 %v3110
      %6365 = vmatpush1.bf16.msra.mxu0 %v3109
      %6366 = vmatprep.subr.bf16.mxu0 %v3238
      %6367 = vmatpush1.bf16.msra.mxu0 %v3237
      %6368 = vmatprep.subr.bf16.mxu0 %v3366
      %6369 = vmatpush1.bf16.msra.mxu0 %v3365
      %6370 = vmatprep.subr.bf16.mxu0 0
      %6371 = vmatpush1.bf16.msra.mxu0 0
      %6372 = vmatprep.subr.bf16.mxu0 0
      %6373 = vmatpush1.bf16.msra.mxu0 0
      %6374 = vmatprep.subr.bf16.mxu0 0
      %6375 = vmatpush1.bf16.msra.mxu0 0
      %6376 = vmatprep.subr.bf16.mxu0 0
      %6377 = vmatpush1.bf16.msra.mxu0 0
      %6378 = vmatprep.subr.bf16.mxu0 0
      %6379 = vmatpush1.bf16.msra.mxu0 0
      %6380 = vmatprep.subr.bf16.mxu0 0
      %6381 = vmatpush1.bf16.msra.mxu0 0
      %6382 = vmatprep.subr.bf16.mxu0 0
      %6383 = vmatpush1.bf16.msra.mxu0 0
      %6384 = vmatprep.subr.bf16.mxu0 0
      %6385 = vmatpush1.bf16.msra.mxu0 0
      %6386 = vmatprep.subr.bf16.mxu0 0
      %6387 = vmatpush1.bf16.msra.mxu0 0
      %6388 = vmatprep.subr.bf16.mxu0 0
      %6389 = vmatpush1.bf16.msra.mxu0 0
      %6390 = vmatprep.subr.bf16.mxu0 0
      %6391 = vmatpush1.bf16.msra.mxu0 0
      %6392 = vmatprep.mubr.bf16.mxu0 0
      %6393 = vmatmul.mubr.bf16.gmra.mrb[0].mxu0 %v4021
      %v6394 = vpop.f32.mrb[0].mxu0
      %v6395 = vadd.f32 %v817, %v6394
      %v6396 = vpop.f32.mrb[0].mxu0
      %v6397 = vadd.f32 %v817, %v6396
      %v6398 = vpop.f32.mrb[0].mxu0
      %v6399 = vpop.f32.mrb[0].mxu0
      %6400 = vdwg.mxu0
      %6401 = vmatprep.subr.bf16.mxu0 %v2856
      %6402 = vmatpush1.bf16.msra.mxu0 %v2855
      %6403 = vmatprep.subr.bf16.mxu0 %v2984
      %6404 = vmatpush1.bf16.msra.mxu0 %v2983
      %6405 = vmatprep.subr.bf16.mxu0 %v3112
      %6406 = vmatpush1.bf16.msra.mxu0 %v3111
      %6407 = vmatprep.subr.bf16.mxu0 %v3240
      %6408 = vmatpush1.bf16.msra.mxu0 %v3239
      %6409 = vmatprep.subr.bf16.mxu0 %v3368
      %6410 = vmatpush1.bf16.msra.mxu0 %v3367
      %6411 = vmatprep.subr.bf16.mxu0 0
      %6412 = vmatpush1.bf16.msra.mxu0 0
      %6413 = vmatprep.subr.bf16.mxu0 0
      %6414 = vmatpush1.bf16.msra.mxu0 0
      %6415 = vmatprep.subr.bf16.mxu0 0
      %6416 = vmatpush1.bf16.msra.mxu0 0
      %6417 = vmatprep.subr.bf16.mxu0 0
      %6418 = vmatpush1.bf16.msra.mxu0 0
      %6419 = vmatprep.subr.bf16.mxu0 0
      %6420 = vmatpush1.bf16.msra.mxu0 0
      %6421 = vmatprep.subr.bf16.mxu0 0
      %6422 = vmatpush1.bf16.msra.mxu0 0
      %6423 = vmatprep.subr.bf16.mxu0 0
      %6424 = vmatpush1.bf16.msra.mxu0 0
      %6425 = vmatprep.subr.bf16.mxu0 0
      %6426 = vmatpush1.bf16.msra.mxu0 0
      %6427 = vmatprep.subr.bf16.mxu0 0
      %6428 = vmatpush1.bf16.msra.mxu0 0
      %6429 = vmatprep.subr.bf16.mxu0 0
      %6430 = vmatpush1.bf16.msra.mxu0 0
      %6431 = vmatprep.subr.bf16.mxu0 0
      %6432 = vmatpush1.bf16.msra.mxu0 0
      %6433 = vmatprep.mubr.bf16.mxu0 0
      %6434 = vmatmul.mubr.bf16.gmra.mrb[0].mxu0 %v4021
      %v6435 = vpop.f32.mrb[0].mxu0
      %v6436 = vadd.f32 %v817, %v6435
      %v6437 = vpop.f32.mrb[0].mxu0
      %v6438 = vadd.f32 %v817, %v6437
      %v6439 = vpop.f32.mrb[0].mxu0
      %v6440 = vpop.f32.mrb[0].mxu0
      %6441 = vdwg.mxu0
      %6442 = vmatprep.subr.bf16.mxu0 %v2858
      %6443 = vmatpush1.bf16.msra.mxu0 %v2857
      %6444 = vmatprep.subr.bf16.mxu0 %v2986
      %6445 = vmatpush1.bf16.msra.mxu0 %v2985
      %6446 = vmatprep.subr.bf16.mxu0 %v3114
      %6447 = vmatpush1.bf16.msra.mxu0 %v3113
      %6448 = vmatprep.subr.bf16.mxu0 %v3242
      %6449 = vmatpush1.bf16.msra.mxu0 %v3241
      %6450 = vmatprep.subr.bf16.mxu0 %v3370
      %6451 = vmatpush1.bf16.msra.mxu0 %v3369
      %6452 = vmatprep.subr.bf16.mxu0 0
      %6453 = vmatpush1.bf16.msra.mxu0 0
      %6454 = vmatprep.subr.bf16.mxu0 0
      %6455 = vmatpush1.bf16.msra.mxu0 0
      %6456 = vmatprep.subr.bf16.mxu0 0
      %6457 = vmatpush1.bf16.msra.mxu0 0
      %6458 = vmatprep.subr.bf16.mxu0 0
      %6459 = vmatpush1.bf16.msra.mxu0 0
      %6460 = vmatprep.subr.bf16.mxu0 0
      %6461 = vmatpush1.bf16.msra.mxu0 0
      %6462 = vmatprep.subr.bf16.mxu0 0
      %6463 = vmatpush1.bf16.msra.mxu0 0
      %6464 = vmatprep.subr.bf16.mxu0 0
      %6465 = vmatpush1.bf16.msra.mxu0 0
      %6466 = vmatprep.subr.bf16.mxu0 0
      %6467 = vmatpush1.bf16.msra.mxu0 0
      %6468 = vmatprep.subr.bf16.mxu0 0
      %6469 = vmatpush1.bf16.msra.mxu0 0
      %6470 = vmatprep.subr.bf16.mxu0 0
      %6471 = vmatpush1.bf16.msra.mxu0 0
      %6472 = vmatprep.subr.bf16.mxu0 0
      %6473 = vmatpush1.bf16.msra.mxu0 0
      %6474 = vmatprep.mubr.bf16.mxu0 0
      %6475 = vmatmul.mubr.bf16.gmra.mrb[0].mxu0 %v4021
      %v6476 = vpop.f32.mrb[0].mxu0
      %v6477 = vadd.f32 %v817, %v6476
      %v6478 = vpop.f32.mrb[0].mxu0
      %v6479 = vadd.f32 %v817, %v6478
      %v6480 = vpop.f32.mrb[0].mxu0
      %v6481 = vpop.f32.mrb[0].mxu0
      %6482 = vdwg.mxu0
      %6483 = vmatprep.subr.bf16.mxu0 %v2860
      %6484 = vmatpush1.bf16.msra.mxu0 %v2859
      %6485 = vmatprep.subr.bf16.mxu0 %v2988
      %6486 = vmatpush1.bf16.msra.mxu0 %v2987
      %6487 = vmatprep.subr.bf16.mxu0 %v3116
      %6488 = vmatpush1.bf16.msra.mxu0 %v3115
      %6489 = vmatprep.subr.bf16.mxu0 %v3244
      %6490 = vmatpush1.bf16.msra.mxu0 %v3243
      %6491 = vmatprep.subr.bf16.mxu0 %v3372
      %6492 = vmatpush1.bf16.msra.mxu0 %v3371
      %6493 = vmatprep.subr.bf16.mxu0 0
      %6494 = vmatpush1.bf16.msra.mxu0 0
      %6495 = vmatprep.subr.bf16.mxu0 0
      %6496 = vmatpush1.bf16.msra.mxu0 0
      %6497 = vmatprep.subr.bf16.mxu0 0
      %6498 = vmatpush1.bf16.msra.mxu0 0
      %6499 = vmatprep.subr.bf16.mxu0 0
      %6500 = vmatpush1.bf16.msra.mxu0 0
      %6501 = vmatprep.subr.bf16.mxu0 0
      %6502 = vmatpush1.bf16.msra.mxu0 0
      %6503 = vmatprep.subr.bf16.mxu0 0
      %6504 = vmatpush1.bf16.msra.mxu0 0
      %6505 = vmatprep.subr.bf16.mxu0 0
      %6506 = vmatpush1.bf16.msra.mxu0 0
      %6507 = vmatprep.subr.bf16.mxu0 0
      %6508 = vmatpush1.bf16.msra.mxu0 0
      %6509 = vmatprep.subr.bf16.mxu0 0
      %6510 = vmatpush1.bf16.msra.mxu0 0
      %6511 = vmatprep.subr.bf16.mxu0 0
      %6512 = vmatpush1.bf16.msra.mxu0 0
      %6513 = vmatprep.subr.bf16.mxu0 0
      %6514 = vmatpush1.bf16.msra.mxu0 0
      %6515 = vmatprep.mubr.bf16.mxu0 0
      %6516 = vmatmul.mubr.bf16.gmra.mrb[0].mxu0 %v4021
      %v6517 = vpop.f32.mrb[0].mxu0
      %v6518 = vadd.f32 %v817, %v6517
      %v6519 = vpop.f32.mrb[0].mxu0
      %v6520 = vadd.f32 %v817, %v6519
      %v6521 = vpop.f32.mrb[0].mxu0
      %v6522 = vpop.f32.mrb[0].mxu0
      %6523 = vdwg.mxu0
      %6524 = vmatprep.subr.bf16.mxu0 %v2862
      %6525 = vmatpush1.bf16.msra.mxu0 %v2861
      %6526 = vmatprep.subr.bf16.mxu0 %v2990
      %6527 = vmatpush1.bf16.msra.mxu0 %v2989
      %6528 = vmatprep.subr.bf16.mxu0 %v3118
      %6529 = vmatpush1.bf16.msra.mxu0 %v3117
      %6530 = vmatprep.subr.bf16.mxu0 %v3246
      %6531 = vmatpush1.bf16.msra.mxu0 %v3245
      %6532 = vmatprep.subr.bf16.mxu0 %v3374
      %6533 = vmatpush1.bf16.msra.mxu0 %v3373
      %6534 = vmatprep.subr.bf16.mxu0 0
      %6535 = vmatpush1.bf16.msra.mxu0 0
      %6536 = vmatprep.subr.bf16.mxu0 0
      %6537 = vmatpush1.bf16.msra.mxu0 0
      %6538 = vmatprep.subr.bf16.mxu0 0
      %6539 = vmatpush1.bf16.msra.mxu0 0
      %6540 = vmatprep.subr.bf16.mxu0 0
      %6541 = vmatpush1.bf16.msra.mxu0 0
      %6542 = vmatprep.subr.bf16.mxu0 0
      %6543 = vmatpush1.bf16.msra.mxu0 0
      %6544 = vmatprep.subr.bf16.mxu0 0
      %6545 = vmatpush1.bf16.msra.mxu0 0
      %6546 = vmatprep.subr.bf16.mxu0 0
      %6547 = vmatpush1.bf16.msra.mxu0 0
      %6548 = vmatprep.subr.bf16.mxu0 0
      %6549 = vmatpush1.bf16.msra.mxu0 0
      %6550 = vmatprep.subr.bf16.mxu0 0
      %6551 = vmatpush1.bf16.msra.mxu0 0
      %6552 = vmatprep.subr.bf16.mxu0 0
      %6553 = vmatpush1.bf16.msra.mxu0 0
      %6554 = vmatprep.subr.bf16.mxu0 0
      %6555 = vmatpush1.bf16.msra.mxu0 0
      %6556 = vmatprep.mubr.bf16.mxu0 0
      %6557 = vmatmul.mubr.bf16.gmra.mrb[0].mxu0 %v4021
      %v6558 = vpop.f32.mrb[0].mxu0
      %v6559 = vadd.f32 %v817, %v6558
      %v6560 = vpop.f32.mrb[0].mxu0
      %v6561 = vadd.f32 %v817, %v6560
      %v6562 = vpop.f32.mrb[0].mxu0
      %v6563 = vpop.f32.mrb[0].mxu0
      %6564 = vdwg.mxu0
      %6565 = vmatprep.subr.bf16.mxu0 %v2864
      %6566 = vmatpush1.bf16.msra.mxu0 %v2863
      %6567 = vmatprep.subr.bf16.mxu0 %v2992
      %6568 = vmatpush1.bf16.msra.mxu0 %v2991
      %6569 = vmatprep.subr.bf16.mxu0 %v3120
      %6570 = vmatpush1.bf16.msra.mxu0 %v3119
      %6571 = vmatprep.subr.bf16.mxu0 %v3248
      %6572 = vmatpush1.bf16.msra.mxu0 %v3247
      %6573 = vmatprep.subr.bf16.mxu0 %v3376
      %6574 = vmatpush1.bf16.msra.mxu0 %v3375
      %6575 = vmatprep.subr.bf16.mxu0 0
      %6576 = vmatpush1.bf16.msra.mxu0 0
      %6577 = vmatprep.subr.bf16.mxu0 0
      %6578 = vmatpush1.bf16.msra.mxu0 0
      %6579 = vmatprep.subr.bf16.mxu0 0
      %6580 = vmatpush1.bf16.msra.mxu0 0
      %6581 = vmatprep.subr.bf16.mxu0 0
      %6582 = vmatpush1.bf16.msra.mxu0 0
      %6583 = vmatprep.subr.bf16.mxu0 0
      %6584 = vmatpush1.bf16.msra.mxu0 0
      %6585 = vmatprep.subr.bf16.mxu0 0
      %6586 = vmatpush1.bf16.msra.mxu0 0
      %6587 = vmatprep.subr.bf16.mxu0 0
      %6588 = vmatpush1.bf16.msra.mxu0 0
      %6589 = vmatprep.subr.bf16.mxu0 0
      %6590 = vmatpush1.bf16.msra.mxu0 0
      %6591 = vmatprep.subr.bf16.mxu0 0
      %6592 = vmatpush1.bf16.msra.mxu0 0
      %6593 = vmatprep.subr.bf16.mxu0 0
      %6594 = vmatpush1.bf16.msra.mxu0 0
      %6595 = vmatprep.subr.bf16.mxu0 0
      %6596 = vmatpush1.bf16.msra.mxu0 0
      %6597 = vmatprep.mubr.bf16.mxu0 0
      %6598 = vmatmul.mubr.bf16.gmra.mrb[0].mxu0 %v4021
      %v6599 = vpop.f32.mrb[0].mxu0
      %v6600 = vadd.f32 %v817, %v6599
      %v6601 = vpop.f32.mrb[0].mxu0
      %v6602 = vadd.f32 %v817, %v6601
      %v6603 = vpop.f32.mrb[0].mxu0
      %v6604 = vpop.f32.mrb[0].mxu0
      %6605 = vdwg.mxu0
      %6606 = vmatprep.subr.bf16.mxu0 %v2866
      %6607 = vmatpush1.bf16.msra.mxu0 %v2865
      %6608 = vmatprep.subr.bf16.mxu0 %v2994
      %6609 = vmatpush1.bf16.msra.mxu0 %v2993
      %6610 = vmatprep.subr.bf16.mxu0 %v3122
      %6611 = vmatpush1.bf16.msra.mxu0 %v3121
      %6612 = vmatprep.subr.bf16.mxu0 %v3250
      %6613 = vmatpush1.bf16.msra.mxu0 %v3249
      %6614 = vmatprep.subr.bf16.mxu0 %v3378
      %6615 = vmatpush1.bf16.msra.mxu0 %v3377
      %6616 = vmatprep.subr.bf16.mxu0 0
      %6617 = vmatpush1.bf16.msra.mxu0 0
      %6618 = vmatprep.subr.bf16.mxu0 0
      %6619 = vmatpush1.bf16.msra.mxu0 0
      %6620 = vmatprep.subr.bf16.mxu0 0
      %6621 = vmatpush1.bf16.msra.mxu0 0
      %6622 = vmatprep.subr.bf16.mxu0 0
      %6623 = vmatpush1.bf16.msra.mxu0 0
      %6624 = vmatprep.subr.bf16.mxu0 0
      %6625 = vmatpush1.bf16.msra.mxu0 0
      %6626 = vmatprep.subr.bf16.mxu0 0
      %6627 = vmatpush1.bf16.msra.mxu0 0
      %6628 = vmatprep.subr.bf16.mxu0 0
      %6629 = vmatpush1.bf16.msra.mxu0 0
      %6630 = vmatprep.subr.bf16.mxu0 0
      %6631 = vmatpush1.bf16.msra.mxu0 0
      %6632 = vmatprep.subr.bf16.mxu0 0
      %6633 = vmatpush1.bf16.msra.mxu0 0
      %6634 = vmatprep.subr.bf16.mxu0 0
      %6635 = vmatpush1.bf16.msra.mxu0 0
      %6636 = vmatprep.subr.bf16.mxu0 0
      %6637 = vmatpush1.bf16.msra.mxu0 0
      %6638 = vmatprep.mubr.bf16.mxu0 0
      %6639 = vmatmul.mubr.bf16.gmra.mrb[0].mxu0 %v4021
      %v6640 = vpop.f32.mrb[0].mxu0
      %v6641 = vadd.f32 %v817, %v6640
      %v6642 = vpop.f32.mrb[0].mxu0
      %v6643 = vadd.f32 %v817, %v6642
      %v6644 = vpop.f32.mrb[0].mxu0
      %v6645 = vpop.f32.mrb[0].mxu0
      %6646 = vdwg.mxu0
      %v6647 = vmax.f32 %v4058, 0.0
      %v6648 = vmax.f32 %v4060, 0.0
      %v6649 = vmax.f32 %v4099, 0.0
      %v6650 = vmax.f32 %v4101, 0.0
      %v6651 = vmax.f32 %v4140, 0.0
      %v6652 = vmax.f32 %v4142, 0.0
      %v6653 = vmax.f32 %v4181, 0.0
      %v6654 = vmax.f32 %v4183, 0.0
      %v6655 = vmax.f32 %v4222, 0.0
      %v6656 = vmax.f32 %v4224, 0.0
      %v6657 = vmax.f32 %v4263, 0.0
      %v6658 = vmax.f32 %v4265, 0.0
      %v6659 = vmax.f32 %v4304, 0.0
      %v6660 = vmax.f32 %v4306, 0.0
      %v6661 = vmax.f32 %v4345, 0.0
      %v6662 = vmax.f32 %v4347, 0.0
      %v6663 = vmax.f32 %v4386, 0.0
      %v6664 = vmax.f32 %v4388, 0.0
      %v6665 = vmax.f32 %v4427, 0.0
      %v6666 = vmax.f32 %v4429, 0.0
      %v6667 = vmax.f32 %v4468, 0.0
      %v6668 = vmax.f32 %v4470, 0.0
      %v6669 = vmax.f32 %v4509, 0.0
      %v6670 = vmax.f32 %v4511, 0.0
      %v6671 = vmax.f32 %v4550, 0.0
      %v6672 = vmax.f32 %v4552, 0.0
      %v6673 = vmax.f32 %v4591, 0.0
      %v6674 = vmax.f32 %v4593, 0.0
      %v6675 = vmax.f32 %v4632, 0.0
      %v6676 = vmax.f32 %v4634, 0.0
      %v6677 = vmax.f32 %v4673, 0.0
      %v6678 = vmax.f32 %v4675, 0.0
      %v6679 = vmax.f32 %v4714, 0.0
      %v6680 = vmax.f32 %v4716, 0.0
      %v6681 = vmax.f32 %v4755, 0.0
      %v6682 = vmax.f32 %v4757, 0.0
      %v6683 = vmax.f32 %v4796, 0.0
      %v6684 = vmax.f32 %v4798, 0.0
      %v6685 = vmax.f32 %v4837, 0.0
      %v6686 = vmax.f32 %v4839, 0.0
      %v6687 = vmax.f32 %v4878, 0.0
      %v6688 = vmax.f32 %v4880, 0.0
      %v6689 = vmax.f32 %v4919, 0.0
      %v6690 = vmax.f32 %v4921, 0.0
      %v6691 = vmax.f32 %v4960, 0.0
      %v6692 = vmax.f32 %v4962, 0.0
      %v6693 = vmax.f32 %v5001, 0.0
      %v6694 = vmax.f32 %v5003, 0.0
      %v6695 = vmax.f32 %v5042, 0.0
      %v6696 = vmax.f32 %v5044, 0.0
      %v6697 = vmax.f32 %v5083, 0.0
      %v6698 = vmax.f32 %v5085, 0.0
      %v6699 = vmax.f32 %v5124, 0.0
      %v6700 = vmax.f32 %v5126, 0.0
      %v6701 = vmax.f32 %v5165, 0.0
      %v6702 = vmax.f32 %v5167, 0.0
      %v6703 = vmax.f32 %v5206, 0.0
      %v6704 = vmax.f32 %v5208, 0.0
      %v6705 = vmax.f32 %v5247, 0.0
      %v6706 = vmax.f32 %v5249, 0.0
      %v6707 = vmax.f32 %v5288, 0.0
      %v6708 = vmax.f32 %v5290, 0.0
      %v6709 = vmax.f32 %v5329, 0.0
      %v6710 = vmax.f32 %v5331, 0.0
      %v6711 = vmax.f32 %v5370, 0.0
      %v6712 = vmax.f32 %v5372, 0.0
      %v6713 = vmax.f32 %v5411, 0.0
      %v6714 = vmax.f32 %v5413, 0.0
      %v6715 = vmax.f32 %v5452, 0.0
      %v6716 = vmax.f32 %v5454, 0.0
      %v6717 = vmax.f32 %v5493, 0.0
      %v6718 = vmax.f32 %v5495, 0.0
      %v6719 = vmax.f32 %v5534, 0.0
      %v6720 = vmax.f32 %v5536, 0.0
      %v6721 = vmax.f32 %v5575, 0.0
      %v6722 = vmax.f32 %v5577, 0.0
      %v6723 = vmax.f32 %v5616, 0.0
      %v6724 = vmax.f32 %v5618, 0.0
      %v6725 = vmax.f32 %v5657, 0.0
      %v6726 = vmax.f32 %v5659, 0.0
      %v6727 = vmax.f32 %v5698, 0.0
      %v6728 = vmax.f32 %v5700, 0.0
      %v6729 = vmax.f32 %v5739, 0.0
      %v6730 = vmax.f32 %v5741, 0.0
      %v6731 = vmax.f32 %v5780, 0.0
      %v6732 = vmax.f32 %v5782, 0.0
      %v6733 = vmax.f32 %v5821, 0.0
      %v6734 = vmax.f32 %v5823, 0.0
      %v6735 = vmax.f32 %v5862, 0.0
      %v6736 = vmax.f32 %v5864, 0.0
      %v6737 = vmax.f32 %v5903, 0.0
      %v6738 = vmax.f32 %v5905, 0.0
      %v6739 = vmax.f32 %v5944, 0.0
      %v6740 = vmax.f32 %v5946, 0.0
      %v6741 = vmax.f32 %v5985, 0.0
      %v6742 = vmax.f32 %v5987, 0.0
      %v6743 = vmax.f32 %v6026, 0.0
      %v6744 = vmax.f32 %v6028, 0.0
      %v6745 = vmax.f32 %v6067, 0.0
      %v6746 = vmax.f32 %v6069, 0.0
      %v6747 = vmax.f32 %v6108, 0.0
      %v6748 = vmax.f32 %v6110, 0.0
      %v6749 = vmax.f32 %v6149, 0.0
      %v6750 = vmax.f32 %v6151, 0.0
      %v6751 = vmax.f32 %v6190, 0.0
      %v6752 = vmax.f32 %v6192, 0.0
      %v6753 = vmax.f32 %v6231, 0.0
      %v6754 = vmax.f32 %v6233, 0.0
      %v6755 = vmax.f32 %v6272, 0.0
      %v6756 = vmax.f32 %v6274, 0.0
      %v6757 = vmax.f32 %v6313, 0.0
      %v6758 = vmax.f32 %v6315, 0.0
      %v6759 = vmax.f32 %v6354, 0.0
      %v6760 = vmax.f32 %v6356, 0.0
      %v6761 = vmax.f32 %v6395, 0.0
      %v6762 = vmax.f32 %v6397, 0.0
      %v6763 = vmax.f32 %v6436, 0.0
      %v6764 = vmax.f32 %v6438, 0.0
      %v6765 = vmax.f32 %v6477, 0.0
      %v6766 = vmax.f32 %v6479, 0.0
      %v6767 = vmax.f32 %v6518, 0.0
      %v6768 = vmax.f32 %v6520, 0.0
      %v6769 = vmax.f32 %v6559, 0.0
      %v6770 = vmax.f32 %v6561, 0.0
      %v6771 = vmax.f32 %v6600, 0.0
      %v6772 = vmax.f32 %v6602, 0.0
      %v6773 = vmax.f32 %v6641, 0.0
      %v6774 = vmax.f32 %v6643, 0.0
      %v6775 = vmax.f32 %v6647, %v6679
      %v6776 = vmax.f32 %v6648, %v6680
      %v6777 = vmax.f32 %v6649, %v6681
      %v6778 = vmax.f32 %v6650, %v6682
      %v6779 = vmax.f32 %v6651, %v6683
      %v6780 = vmax.f32 %v6652, %v6684
      %v6781 = vmax.f32 %v6653, %v6685
      %v6782 = vmax.f32 %v6654, %v6686
      %v6783 = vmax.f32 %v6655, %v6687
      %v6784 = vmax.f32 %v6656, %v6688
      %v6785 = vmax.f32 %v6657, %v6689
      %v6786 = vmax.f32 %v6658, %v6690
      %v6787 = vmax.f32 %v6659, %v6691
      %v6788 = vmax.f32 %v6660, %v6692
      %v6789 = vmax.f32 %v6661, %v6693
      %v6790 = vmax.f32 %v6662, %v6694
      %v6791 = vmax.f32 %v6663, %v6695
      %v6792 = vmax.f32 %v6664, %v6696
      %v6793 = vmax.f32 %v6665, %v6697
      %v6794 = vmax.f32 %v6666, %v6698
      %v6795 = vmax.f32 %v6667, %v6699
      %v6796 = vmax.f32 %v6668, %v6700
      %v6797 = vmax.f32 %v6669, %v6701
      %v6798 = vmax.f32 %v6670, %v6702
      %v6799 = vmax.f32 %v6671, %v6703
      %v6800 = vmax.f32 %v6672, %v6704
      %v6801 = vmax.f32 %v6673, %v6705
      %v6802 = vmax.f32 %v6674, %v6706
      %v6803 = vmax.f32 %v6675, %v6707
      %v6804 = vmax.f32 %v6676, %v6708
      %v6805 = vmax.f32 %v6677, %v6709
      %v6806 = vmax.f32 %v6678, %v6710
      %v6807 = vmax.f32 %v6775, %v6711
      %v6808 = vmax.f32 %v6776, %v6712
      %v6809 = vmax.f32 %v6777, %v6713
      %v6810 = vmax.f32 %v6778, %v6714
      %v6811 = vmax.f32 %v6779, %v6715
      %v6812 = vmax.f32 %v6780, %v6716
      %v6813 = vmax.f32 %v6781, %v6717
      %v6814 = vmax.f32 %v6782, %v6718
      %v6815 = vmax.f32 %v6783, %v6719
      %v6816 = vmax.f32 %v6784, %v6720
      %v6817 = vmax.f32 %v6785, %v6721
      %v6818 = vmax.f32 %v6786, %v6722
      %v6819 = vmax.f32 %v6787, %v6723
      %v6820 = vmax.f32 %v6788, %v6724
      %v6821 = vmax.f32 %v6789, %v6725
      %v6822 = vmax.f32 %v6790, %v6726
      %v6823 = vmax.f32 %v6791, %v6727
      %v6824 = vmax.f32 %v6792, %v6728
      %v6825 = vmax.f32 %v6793, %v6729
      %v6826 = vmax.f32 %v6794, %v6730
      %v6827 = vmax.f32 %v6795, %v6731
      %v6828 = vmax.f32 %v6796, %v6732
      %v6829 = vmax.f32 %v6797, %v6733
      %v6830 = vmax.f32 %v6798, %v6734
      %v6831 = vmax.f32 %v6799, %v6735
      %v6832 = vmax.f32 %v6800, %v6736
      %v6833 = vmax.f32 %v6801, %v6737
      %v6834 = vmax.f32 %v6802, %v6738
      %v6835 = vmax.f32 %v6803, %v6739
      %v6836 = vmax.f32 %v6804, %v6740
      %v6837 = vmax.f32 %v6805, %v6741
      %v6838 = vmax.f32 %v6806, %v6742
      %v6839 = vmax.f32 %v6807, %v6743
      %v6840 = vmax.f32 %v6808, %v6744
      %v6841 = vmax.f32 %v6809, %v6745
      %v6842 = vmax.f32 %v6810, %v6746
      %v6843 = vmax.f32 %v6811, %v6747
      %v6844 = vmax.f32 %v6812, %v6748
      %v6845 = vmax.f32 %v6813, %v6749
      %v6846 = vmax.f32 %v6814, %v6750
      %v6847 = vmax.f32 %v6815, %v6751
      %v6848 = vmax.f32 %v6816, %v6752
      %v6849 = vmax.f32 %v6817, %v6753
      %v6850 = vmax.f32 %v6818, %v6754
      %v6851 = vmax.f32 %v6819, %v6755
      %v6852 = vmax.f32 %v6820, %v6756
      %v6853 = vmax.f32 %v6821, %v6757
      %v6854 = vmax.f32 %v6822, %v6758
      %v6855 = vmax.f32 %v6823, %v6759
      %v6856 = vmax.f32 %v6824, %v6760
      %v6857 = vmax.f32 %v6825, %v6761
      %v6858 = vmax.f32 %v6826, %v6762
      %v6859 = vmax.f32 %v6827, %v6763
      %v6860 = vmax.f32 %v6828, %v6764
      %v6861 = vmax.f32 %v6829, %v6765
      %v6862 = vmax.f32 %v6830, %v6766
      %v6863 = vmax.f32 %v6831, %v6767
      %v6864 = vmax.f32 %v6832, %v6768
      %v6865 = vmax.f32 %v6833, %v6769
      %v6866 = vmax.f32 %v6834, %v6770
      %v6867 = vmax.f32 %v6835, %v6771
      %v6868 = vmax.f32 %v6836, %v6772
      %v6869 = vmax.f32 %v6837, %v6773
      %v6870 = vmax.f32 %v6838, %v6774
      %6871 = vst [vmem:[%s170] sm:$0x3f] %v6839
      %6872 = vst [vmem:[%s170 + $0x8] sm:$0x3f] %v6840
      %6873 = vst [vmem:[%s170 + $0x10] sm:$0x3f] %v6841
      %6874 = vst [vmem:[%s170 + $0x18] sm:$0x3f] %v6842
      %6875 = vst [vmem:[%s170 + $0x20] sm:$0x3f] %v6843
      %6876 = vst [vmem:[%s170 + $0x28] sm:$0x3f] %v6844
      %6877 = vst [vmem:[%s170 + $0x30] sm:$0x3f] %v6845
      %6878 = vst [vmem:[%s170 + $0x38] sm:$0x3f] %v6846
      %6879 = vst [vmem:[%s170 + $0x40] sm:$0x3f] %v6847
      %6880 = vst [vmem:[%s170 + $0x48] sm:$0x3f] %v6848
      %6881 = vst [vmem:[%s170 + $0x50] sm:$0x3f] %v6849
      %6882 = vst [vmem:[%s170 + $0x58] sm:$0x3f] %v6850
      %6883 = vst [vmem:[%s170 + $0x60] sm:$0x3f] %v6851
      %6884 = vst [vmem:[%s170 + $0x68] sm:$0x3f] %v6852
      %6885 = vst [vmem:[%s170 + $0x70] sm:$0x3f] %v6853
      %6886 = vst [vmem:[%s170 + $0x78] sm:$0x3f] %v6854
      %6887 = vst [vmem:[%s170 + $0x80] sm:$0x3f] %v6855
      %6888 = vst [vmem:[%s170 + $0x88] sm:$0x3f] %v6856
      %6889 = vst [vmem:[%s170 + $0x90] sm:$0x3f] %v6857
      %6890 = vst [vmem:[%s170 + $0x98] sm:$0x3f] %v6858
      %6891 = vst [vmem:[%s170 + $0xa0] sm:$0x3f] %v6859
      %6892 = vst [vmem:[%s170 + $0xa8] sm:$0x3f] %v6860
      %6893 = vst [vmem:[%s170 + $0xb0] sm:$0x3f] %v6861
      %6894 = vst [vmem:[%s170 + $0xb8] sm:$0x3f] %v6862
      %6895 = vst [vmem:[%s170 + $0xc0] sm:$0x3f] %v6863
      %6896 = vst [vmem:[%s170 + $0xc8] sm:$0x3f] %v6864
      %6897 = vst [vmem:[%s170 + $0xd0] sm:$0x3f] %v6865
      %6898 = vst [vmem:[%s170 + $0xd8] sm:$0x3f] %v6866
      %6899 = vst [vmem:[%s170 + $0xe0] sm:$0x3f] %v6867
      %6900 = vst [vmem:[%s170 + $0xe8] sm:$0x3f] %v6868
      %6901 = vst [vmem:[%s170 + $0xf0] sm:$0x3f] %v6869
      %6902 = vst [vmem:[%s170 + $0xf8] sm:$0x3f] %v6870
      %p6903 = scmp.lt.s32.totalorder %s14, 1
      %s6904 = scalar_select %p6903, %s14, 1
      %s6905 = smul.addr %s6904, 32
      %s6906 = smul.addr %s6905, 8
      %s6907 = scalar_lea.vmem %s3, %s6906
      // Predicated region
      $region33: #{forward.4} parent=31 // pred_check
        %p6908 = pneg %p100
      $region34: #{forward.4} parent=31 // pred_check_branch
        %6910 = sbr.rel (%p6908) target = $region36
      $region35: #{forward.4} parent=31 // pred_region
        _
      $region36: #{forward.4} parent=31 // pred_fallthru
        _
    $region32: #{forward.4} parent=5 // pred_fallthru
      _
    %p6911 = scmp.le.s32.totalorder 2, %s9
    // Predicated region
    $region37: #{forward.4} parent=5 // pred_check
      %p6912 = pneg %p6911
    $region38: #{forward.4} parent=5 // pred_check_branch
      %6914 = sbr.rel (%p6912) target = $region40
    $region39: #{forward.4} parent=5 // pred_region
      %s6915 = ssub.s32 %s9, 2
      // Predicated region
      $region41: #{forward.4} parent=39 // pred_check
        %p6916 = pneg %p106
      $region42: #{forward.4} parent=39 // pred_check_branch
        %6918 = sbr.rel (%p6916) target = $region44
      $region43: #{forward.4} parent=39 // pred_region
        %p6919 = scmp.lt.s32.totalorder %s15, 1
        %s6920 = scalar_select %p6919, %s15, 1
        %s6921 = smul.addr %s6920, 32
        %s6922 = smul.addr %s6921, 8
        %s6923 = scalar_lea.vmem %s3, %s6922
      $region44: #{forward.4} parent=39 // pred_fallthru
        _
    $region40: #{forward.4} parent=5 // pred_fallthru
      _
  $region6: #{forward.4} parent=0 // loop_footer
    %s13 = sadd.s32 1, %s9
  $region7: #{forward.4} parent=0 // loop_footer_branch
    %8 = sbr.rel target = $region3
  $region8: #{forward.4} parent=0 // loop_exit
    _

// kernel: forward.5
$region0: #{forward.5}
  #allocation0 [shape = 'u32[]', space=smem, size = 0x4, offset = 0x4, fixed_abs, tag = 'smem constant byte address 0x4 - core index']
  #allocation1 [shape = 'u32[144,128]{1,0:T(1,128)}', space=vmem, size = 0x12000, scoped, tag = 'internal scratch']
  %s0 = inlined_call_operand.vmem [shape: bf16[2,64,4096], index: 0, kind: input, shape index: {}]
  %s1 = inlined_call_operand.vmem [shape: bf16[12,64], index: 1, kind: input, shape index: {}]
  %s2 = inlined_call_operand.vmem [shape: f32[12,1], index: 2, kind: input, shape index: {}]
  %s3 = inlined_call_operand.vmem [shape: f32[2,12,1024], index: 3, kind: output, shape index: {}]
  %s4 = sld [smem:[#allocation0]]
  $region45: #{forward.5} parent=0
    _
  %s6 = ssub.s32 1, %s4
  %s7 = scalar_select 0, %s6, %s4
  loop: start=0, step=1, limit=4
  $region2: #{forward.5} parent=0 // loop_pre_header
    _
  $region3: #{forward.5} parent=0 // loop_header
    %s9 = sphi 0, %s13
    %p10 = scmp.ge.s32.totalorder %s9, 4
    %s19 = sphi 0, %s21
    %s22 = sphi 0, %s19
    %s23 = sphi 0, %s22
    %s39 = sphi 0, %s23
    %s43 = sphi 0, %s43
    %s45 = sphi 0, %s43
    %s46 = sphi 0, %s45
    %s60 = sphi 0, %s46
    %s64 = sphi 0, %s64
    %s66 = sphi 0, %s64
    %s67 = sphi 0, %s66
    %s81 = sphi 0, %s67
    %s87 = sphi 0, %s89
    %s90 = sphi 0, %s87
    %s91 = sphi 0, %s90
    %s107 = sphi 0, %s91
  $region4: #{forward.5} parent=0 // loop_header_branch
    %12 = sbr.rel (%p10) target = $region8
  $region5: #{forward.5} parent=0 // loop_body
    %s14 = ssub.s32 %s9, 1
    %s15 = ssub.s32 %s9, 2
    %s16 = sadd.s32 %s9, 1
    %s17 = ssub.s32 %s9, %s16
    %p18 = scmp.eq.s32.totalorder %s17, 0
    %s20 = sadd.s32 %s19, 1
    %s21 = scalar_select %p18, %s19, %s20
    %p24 = pneg %p18
    %p25 = scmp.eq.s32.totalorder %s9, 1
    %p26 = por %p24, %p25
    %p27 = scmp.ne.s32.totalorder %s19, %s22
    %p28 = scmp.eq.s32.totalorder %s9, 0
    %p29 = por %p27, %p28
    %p30 = scmp.ne.s32.totalorder %s19, %s22
    %p31 = scmp.eq.s32.totalorder %s14, 1
    %p32 = por %p30, %p31
    %p33 = scmp.ne.s32.totalorder %s22, %s23
    %p34 = scmp.eq.s32.totalorder %s14, 0
    %p35 = por %p33, %p34
    %p36 = scmp.ne.s32.totalorder %s22, %s23
    %p37 = scmp.eq.s32.totalorder %s15, 1
    %p38 = por %p36, %p37
    %p40 = scmp.ne.s32.totalorder %s23, %s39
    %p41 = scmp.eq.s32.totalorder %s15, 0
    %p42 = por %p40, %p41
    %s44 = sadd.s32 %s43, 1
    %p47 = scmp.eq.s32.totalorder %s9, 1
    %p48 = scmp.ne.s32.totalorder %s43, %s45
    %p49 = scmp.eq.s32.totalorder %s9, 0
    %p50 = por %p48, %p49
    %p51 = scmp.ne.s32.totalorder %s43, %s45
    %p52 = scmp.eq.s32.totalorder %s14, 1
    %p53 = por %p51, %p52
    %p54 = scmp.ne.s32.totalorder %s45, %s46
    %p55 = scmp.eq.s32.totalorder %s14, 0
    %p56 = por %p54, %p55
    %p57 = scmp.ne.s32.totalorder %s45, %s46
    %p58 = scmp.eq.s32.totalorder %s15, 1
    %p59 = por %p57, %p58
    %p61 = scmp.ne.s32.totalorder %s46, %s60
    %p62 = scmp.eq.s32.totalorder %s15, 0
    %p63 = por %p61, %p62
    %s65 = sadd.s32 %s64, 1
    %p68 = scmp.eq.s32.totalorder %s9, 1
    %p69 = scmp.ne.s32.totalorder %s64, %s66
    %p70 = scmp.eq.s32.totalorder %s9, 0
    %p71 = por %p69, %p70
    %p72 = scmp.ne.s32.totalorder %s64, %s66
    %p73 = scmp.eq.s32.totalorder %s14, 1
    %p74 = por %p72, %p73
    %p75 = scmp.ne.s32.totalorder %s66, %s67
    %p76 = scmp.eq.s32.totalorder %s14, 0
    %p77 = por %p75, %p76
    %p78 = scmp.ne.s32.totalorder %s66, %s67
    %p79 = scmp.eq.s32.totalorder %s15, 1
    %p80 = por %p78, %p79
    %p82 = scmp.ne.s32.totalorder %s67, %s81
    %p83 = scmp.eq.s32.totalorder %s15, 0
    %p84 = por %p82, %p83
    %s85 = ssub.s32 %s9, %s16
    %p86 = scmp.eq.s32.totalorder %s85, 0
    %s88 = sadd.s32 %s87, 1
    %s89 = scalar_select %p86, %s87, %s88
    %p92 = pneg %p86
    %p93 = scmp.eq.s32.totalorder %s9, 1
    %p94 = por %p92, %p93
    %p95 = scmp.ne.s32.totalorder %s87, %s90
    %p96 = scmp.eq.s32.totalorder %s9, 0
    %p97 = por %p95, %p96
    %p98 = scmp.ne.s32.totalorder %s87, %s90
    %p99 = scmp.eq.s32.totalorder %s14, 1
    %p100 = por %p98, %p99
    %p101 = scmp.ne.s32.totalorder %s90, %s91
    %p102 = scmp.eq.s32.totalorder %s14, 0
    %p103 = por %p101, %p102
    %p104 = scmp.ne.s32.totalorder %s90, %s91
    %p105 = scmp.eq.s32.totalorder %s15, 1
    %p106 = por %p104, %p105
    %p108 = scmp.ne.s32.totalorder %s91, %s107
    %p109 = scmp.eq.s32.totalorder %s15, 0
    %p110 = por %p108, %p109
    %p111 = scmp.le.s32.totalorder 1, %s9
    %p112 = scmp.lt.s32.totalorder %s9, 3
    %p113 = pnand %p111, %p112
    %p114 = pneg %p113
    // Predicated region
    $region9: #{forward.5} parent=5 // pred_check
      _
    $region10: #{forward.5} parent=5 // pred_check_branch
      %116 = sbr.rel (%p113) target = $region12
    $region11: #{forward.5} parent=5 // pred_region
      %s117 = ssub.s32 %s9, 1
      // Predicated region
      $region13: #{forward.5} parent=11 // pred_check
        %p118 = pneg %p56
      $region14: #{forward.5} parent=11 // pred_check_branch
        %120 = sbr.rel (%p118) target = $region16
      $region15: #{forward.5} parent=11 // pred_region
        _
      $region16: #{forward.5} parent=11 // pred_fallthru
        _
      // Predicated region
      $region17: #{forward.5} parent=11 // pred_check
        %p121 = pneg %p77
      $region18: #{forward.5} parent=11 // pred_check_branch
        %123 = sbr.rel (%p121) target = $region20
      $region19: #{forward.5} parent=11 // pred_region
        _
      $region20: #{forward.5} parent=11 // pred_fallthru
        _
    $region12: #{forward.5} parent=5 // pred_fallthru
      _
    %p124 = scmp.lt.s32.totalorder %s9, 2
    // Predicated region
    $region21: #{forward.5} parent=5 // pred_check
      %p125 = pneg %p124
    $region22: #{forward.5} parent=5 // pred_check_branch
      %127 = sbr.rel (%p125) target = $region24
    $region23: #{forward.5} parent=5 // pred_region
      // Predicated region
      $region25: #{forward.5} parent=23 // pred_check
        %p128 = pneg %p29
      $region26: #{forward.5} parent=23 // pred_check_branch
        %130 = sbr.rel (%p128) target = $region28
      $region27: #{forward.5} parent=23 // pred_region
        %p131 = scmp.lt.s32.totalorder %s9, 1
        %s132 = scalar_select %p131, %s9, 1
        %s133 = smul.addr %s132, 256
        %s134 = smul.addr %s133, 4
        %s135 = scalar_lea.vmem %s0, %s134
      $region28: #{forward.5} parent=23 // pred_fallthru
        _
    $region24: #{forward.5} parent=5 // pred_fallthru
      _
    %p136 = scmp.le.s32.totalorder 1, %s9
    %p137 = scmp.lt.s32.totalorder %s9, 3
    %p138 = pnand %p136, %p137
    %p139 = pneg %p138
    // Predicated region
    $region29: #{forward.5} parent=5 // pred_check
      _
    $region30: #{forward.5} parent=5 // pred_check_branch
      %141 = sbr.rel (%p138) target = $region32
    $region31: #{forward.5} parent=5 // pred_region
      %s142 = ssub.s32 %s9, 1
      %p143 = scmp.lt.s32.totalorder %s14, 1
      %s144 = scalar_select %p143, %s14, 1
      %s145 = smul.addr %s144, 256
      %s146 = smul.addr %s145, 4
      %s147 = scalar_lea.vmem %s0, %s146
      %p148 = pneg %p35
      %p149 = pneg %p32
      %p150 = pneg %p56
      %p151 = pneg %p53
      %p152 = pneg %p77
      %p153 = pneg %p74
      %p154 = pneg %p103
      %p155 = pneg %p100
      %p156 = scmp.lt.s32.totalorder %s14, 1
      %s157 = scalar_select %p156, %s14, 1
      %s158 = smul.addr %s157, 16
      %s159 = smul.addr %s158, 8
      %s160 = scalar_lea.vmem %s3, %s159
      %p161 = scmp.lt.s32.totalorder %s14, 1
      %s162 = scalar_select %p161, %s14, 1
      %s163 = smul.addr %s162, 256
      %s164 = smul.addr %s163, 4
      %s165 = scalar_lea.vmem %s0, %s164
      %p166 = scmp.lt.s32.totalorder %s14, 1
      %s167 = scalar_select %p166, %s14, 1
      %s168 = smul.addr %s167, 16
      %s169 = smul.addr %s168, 8
      %s170 = scalar_lea.vmem %s3, %s169
      %v172 = vld [vmem:[%s1] sm:$0xf]
      %v173 = vld [vmem:[%s1 + $0x4] sm:$0x3]
      %v174 = vld [vmem:[%s165] sm:$0xff]
      %v175 = vld [vmem:[%s165 + $0x8] sm:$0xff]
      %v176 = vld [vmem:[%s165 + $0x10] sm:$0xff]
      %v177 = vld [vmem:[%s165 + $0x18] sm:$0xff]
      %v178 = vld [vmem:[%s165 + $0x20] sm:$0xff]
      %v179 = vld [vmem:[%s165 + $0x28] sm:$0xff]
      %v180 = vld [vmem:[%s165 + $0x30] sm:$0xff]
      %v181 = vld [vmem:[%s165 + $0x38] sm:$0xff]
      %v182 = vld [vmem:[%s165 + $0x40] sm:$0xff]
      %v183 = vld [vmem:[%s165 + $0x48] sm:$0xff]
      %v184 = vld [vmem:[%s165 + $0x50] sm:$0xff]
      %v185 = vld [vmem:[%s165 + $0x58] sm:$0xff]
      %v186 = vld [vmem:[%s165 + $0x60] sm:$0xff]
      %v187 = vld [vmem:[%s165 + $0x68] sm:$0xff]
      %v188 = vld [vmem:[%s165 + $0x70] sm:$0xff]
      %v189 = vld [vmem:[%s165 + $0x78] sm:$0xff]
      %v190 = vld [vmem:[%s165 + $0x80] sm:$0xff]
      %v191 = vld [vmem:[%s165 + $0x88] sm:$0xff]
      %v192 = vld [vmem:[%s165 + $0x90] sm:$0xff]
      %v193 = vld [vmem:[%s165 + $0x98] sm:$0xff]
      %v194 = vld [vmem:[%s165 + $0xa0] sm:$0xff]
      %v195 = vld [vmem:[%s165 + $0xa8] sm:$0xff]
      %v196 = vld [vmem:[%s165 + $0xb0] sm:$0xff]
      %v197 = vld [vmem:[%s165 + $0xb8] sm:$0xff]
      %v198 = vld [vmem:[%s165 + $0xc0] sm:$0xff]
      %v199 = vld [vmem:[%s165 + $0xc8] sm:$0xff]
      %v200 = vld [vmem:[%s165 + $0xd0] sm:$0xff]
      %v201 = vld [vmem:[%s165 + $0xd8] sm:$0xff]
      %v202 = vld [vmem:[%s165 + $0xe0] sm:$0xff]
      %v203 = vld [vmem:[%s165 + $0xe8] sm:$0xff]
      %v204 = vld [vmem:[%s165 + $0xf0] sm:$0xff]
      %v205 = vld [vmem:[%s165 + $0xf8] sm:$0xff]
      %v206 = vld [vmem:[%s165 + $0x100] sm:$0xff]
      %v207 = vld [vmem:[%s165 + $0x108] sm:$0xff]
      %v208 = vld [vmem:[%s165 + $0x110] sm:$0xff]
      %v209 = vld [vmem:[%s165 + $0x118] sm:$0xff]
      %v210 = vld [vmem:[%s165 + $0x120] sm:$0xff]
      %v211 = vld [vmem:[%s165 + $0x128] sm:$0xff]
      %v212 = vld [vmem:[%s165 + $0x130] sm:$0xff]
      %v213 = vld [vmem:[%s165 + $0x138] sm:$0xff]
      %v214 = vld [vmem:[%s165 + $0x140] sm:$0xff]
      %v215 = vld [vmem:[%s165 + $0x148] sm:$0xff]
      %v216 = vld [vmem:[%s165 + $0x150] sm:$0xff]
      %v217 = vld [vmem:[%s165 + $0x158] sm:$0xff]
      %v218 = vld [vmem:[%s165 + $0x160] sm:$0xff]
      %v219 = vld [vmem:[%s165 + $0x168] sm:$0xff]
      %v220 = vld [vmem:[%s165 + $0x170] sm:$0xff]
      %v221 = vld [vmem:[%s165 + $0x178] sm:$0xff]
      %v222 = vld [vmem:[%s165 + $0x180] sm:$0xff]
      %v223 = vld [vmem:[%s165 + $0x188] sm:$0xff]
      %v224 = vld [vmem:[%s165 + $0x190] sm:$0xff]
      %v225 = vld [vmem:[%s165 + $0x198] sm:$0xff]
      %v226 = vld [vmem:[%s165 + $0x1a0] sm:$0xff]
      %v227 = vld [vmem:[%s165 + $0x1a8] sm:$0xff]
      %v228 = vld [vmem:[%s165 + $0x1b0] sm:$0xff]
      %v229 = vld [vmem:[%s165 + $0x1b8] sm:$0xff]
      %v230 = vld [vmem:[%s165 + $0x1c0] sm:$0xff]
      %v231 = vld [vmem:[%s165 + $0x1c8] sm:$0xff]
      %v232 = vld [vmem:[%s165 + $0x1d0] sm:$0xff]
      %v233 = vld [vmem:[%s165 + $0x1d8] sm:$0xff]
      %v234 = vld [vmem:[%s165 + $0x1e0] sm:$0xff]
      %v235 = vld [vmem:[%s165 + $0x1e8] sm:$0xff]
      %v236 = vld [vmem:[%s165 + $0x1f0] sm:$0xff]
      %v237 = vld [vmem:[%s165 + $0x1f8] sm:$0xff]
      %v238 = vld [vmem:[%s165 + $0x200] sm:$0xff]
      %v239 = vld [vmem:[%s165 + $0x208] sm:$0xff]
      %v240 = vld [vmem:[%s165 + $0x210] sm:$0xff]
      %v241 = vld [vmem:[%s165 + $0x218] sm:$0xff]
      %v242 = vld [vmem:[%s165 + $0x220] sm:$0xff]
      %v243 = vld [vmem:[%s165 + $0x228] sm:$0xff]
      %v244 = vld [vmem:[%s165 + $0x230] sm:$0xff]
      %v245 = vld [vmem:[%s165 + $0x238] sm:$0xff]
      %v246 = vld [vmem:[%s165 + $0x240] sm:$0xff]
      %v247 = vld [vmem:[%s165 + $0x248] sm:$0xff]
      %v248 = vld [vmem:[%s165 + $0x250] sm:$0xff]
      %v249 = vld [vmem:[%s165 + $0x258] sm:$0xff]
      %v250 = vld [vmem:[%s165 + $0x260] sm:$0xff]
      %v251 = vld [vmem:[%s165 + $0x268] sm:$0xff]
      %v252 = vld [vmem:[%s165 + $0x270] sm:$0xff]
      %v253 = vld [vmem:[%s165 + $0x278] sm:$0xff]
      %v254 = vld [vmem:[%s165 + $0x280] sm:$0xff]
      %v255 = vld [vmem:[%s165 + $0x288] sm:$0xff]
      %v256 = vld [vmem:[%s165 + $0x290] sm:$0xff]
      %v257 = vld [vmem:[%s165 + $0x298] sm:$0xff]
      %v258 = vld [vmem:[%s165 + $0x2a0] sm:$0xff]
      %v259 = vld [vmem:[%s165 + $0x2a8] sm:$0xff]
      %v260 = vld [vmem:[%s165 + $0x2b0] sm:$0xff]
      %v261 = vld [vmem:[%s165 + $0x2b8] sm:$0xff]
      %v262 = vld [vmem:[%s165 + $0x2c0] sm:$0xff]
      %v263 = vld [vmem:[%s165 + $0x2c8] sm:$0xff]
      %v264 = vld [vmem:[%s165 + $0x2d0] sm:$0xff]
      %v265 = vld [vmem:[%s165 + $0x2d8] sm:$0xff]
      %v266 = vld [vmem:[%s165 + $0x2e0] sm:$0xff]
      %v267 = vld [vmem:[%s165 + $0x2e8] sm:$0xff]
      %v268 = vld [vmem:[%s165 + $0x2f0] sm:$0xff]
      %v269 = vld [vmem:[%s165 + $0x2f8] sm:$0xff]
      %v270 = vld [vmem:[%s165 + $0x300] sm:$0xff]
      %v271 = vld [vmem:[%s165 + $0x308] sm:$0xff]
      %v272 = vld [vmem:[%s165 + $0x310] sm:$0xff]
      %v273 = vld [vmem:[%s165 + $0x318] sm:$0xff]
      %v274 = vld [vmem:[%s165 + $0x320] sm:$0xff]
      %v275 = vld [vmem:[%s165 + $0x328] sm:$0xff]
      %v276 = vld [vmem:[%s165 + $0x330] sm:$0xff]
      %v277 = vld [vmem:[%s165 + $0x338] sm:$0xff]
      %v278 = vld [vmem:[%s165 + $0x340] sm:$0xff]
      %v279 = vld [vmem:[%s165 + $0x348] sm:$0xff]
      %v280 = vld [vmem:[%s165 + $0x350] sm:$0xff]
      %v281 = vld [vmem:[%s165 + $0x358] sm:$0xff]
      %v282 = vld [vmem:[%s165 + $0x360] sm:$0xff]
      %v283 = vld [vmem:[%s165 + $0x368] sm:$0xff]
      %v284 = vld [vmem:[%s165 + $0x370] sm:$0xff]
      %v285 = vld [vmem:[%s165 + $0x378] sm:$0xff]
      %v286 = vld [vmem:[%s165 + $0x380] sm:$0xff]
      %v287 = vld [vmem:[%s165 + $0x388] sm:$0xff]
      %v288 = vld [vmem:[%s165 + $0x390] sm:$0xff]
      %v289 = vld [vmem:[%s165 + $0x398] sm:$0xff]
      %v290 = vld [vmem:[%s165 + $0x3a0] sm:$0xff]
      %v291 = vld [vmem:[%s165 + $0x3a8] sm:$0xff]
      %v292 = vld [vmem:[%s165 + $0x3b0] sm:$0xff]
      %v293 = vld [vmem:[%s165 + $0x3b8] sm:$0xff]
      %v294 = vld [vmem:[%s165 + $0x3c0] sm:$0xff]
      %v295 = vld [vmem:[%s165 + $0x3c8] sm:$0xff]
      %v296 = vld [vmem:[%s165 + $0x3d0] sm:$0xff]
      %v297 = vld [vmem:[%s165 + $0x3d8] sm:$0xff]
      %v298 = vld [vmem:[%s165 + $0x3e0] sm:$0xff]
      %v299 = vld [vmem:[%s165 + $0x3e8] sm:$0xff]
      %v300 = vld [vmem:[%s165 + $0x3f0] sm:$0xff]
      %v301 = vld [vmem:[%s165 + $0x3f8] sm:$0xff]
      %v302 = vld [vmem:[%s2] sm:$0xff]
      %v303 = vld [vmem:[%s2 + $0x8] sm:$0xf]
      %305 = vset.pattern.permute.xlu0 0
      %306 = vperm.xlu0 %305, %v302
      %v307 = vpop.permute.xlu0 %306
      %310 = vset.pattern.permute.xlu0 0
      %311 = vperm.xlu0 %310, %v303
      %v312 = vpop.permute.xlu0 %311
      %v316 = vunpack.c.l.b16 %v172
      %v317 = vunpack.c.l.b16 %v173
      %v318 = vpack.c.b16 %v317, %v316
      %v447 = vunpack.c.l.b16 %v174
      %v448 = vunpack.c.h.b16 %v174
      %v449 = vunpack.c.l.b16 %v175
      %v450 = vunpack.c.h.b16 %v175
      %v451 = vunpack.c.l.b16 %v176
      %v452 = vunpack.c.h.b16 %v176
      %v453 = vunpack.c.l.b16 %v177
      %v454 = vunpack.c.h.b16 %v177
      %v455 = vunpack.c.l.b16 %v178
      %v456 = vunpack.c.h.b16 %v178
      %v457 = vunpack.c.l.b16 %v179
      %v458 = vunpack.c.h.b16 %v179
      %v459 = vunpack.c.l.b16 %v180
      %v460 = vunpack.c.h.b16 %v180
      %v461 = vunpack.c.l.b16 %v181
      %v462 = vunpack.c.h.b16 %v181
      %v463 = vunpack.c.l.b16 %v182
      %v464 = vunpack.c.h.b16 %v182
      %v465 = vunpack.c.l.b16 %v183
      %v466 = vunpack.c.h.b16 %v183
      %v467 = vunpack.c.l.b16 %v184
      %v468 = vunpack.c.h.b16 %v184
      %v469 = vunpack.c.l.b16 %v185
      %v470 = vunpack.c.h.b16 %v185
      %v471 = vunpack.c.l.b16 %v186
      %v472 = vunpack.c.h.b16 %v186
      %v473 = vunpack.c.l.b16 %v187
      %v474 = vunpack.c.h.b16 %v187
      %v475 = vunpack.c.l.b16 %v188
      %v476 = vunpack.c.h.b16 %v188
      %v477 = vunpack.c.l.b16 %v189
      %v478 = vunpack.c.h.b16 %v189
      %v479 = vunpack.c.l.b16 %v190
      %v480 = vunpack.c.h.b16 %v190
      %v481 = vunpack.c.l.b16 %v191
      %v482 = vunpack.c.h.b16 %v191
      %v483 = vunpack.c.l.b16 %v192
      %v484 = vunpack.c.h.b16 %v192
      %v485 = vunpack.c.l.b16 %v193
      %v486 = vunpack.c.h.b16 %v193
      %v487 = vunpack.c.l.b16 %v194
      %v488 = vunpack.c.h.b16 %v194
      %v489 = vunpack.c.l.b16 %v195
      %v490 = vunpack.c.h.b16 %v195
      %v491 = vunpack.c.l.b16 %v196
      %v492 = vunpack.c.h.b16 %v196
      %v493 = vunpack.c.l.b16 %v197
      %v494 = vunpack.c.h.b16 %v197
      %v495 = vunpack.c.l.b16 %v198
      %v496 = vunpack.c.h.b16 %v198
      %v497 = vunpack.c.l.b16 %v199
      %v498 = vunpack.c.h.b16 %v199
      %v499 = vunpack.c.l.b16 %v200
      %v500 = vunpack.c.h.b16 %v200
      %v501 = vunpack.c.l.b16 %v201
      %v502 = vunpack.c.h.b16 %v201
      %v503 = vunpack.c.l.b16 %v202
      %v504 = vunpack.c.h.b16 %v202
      %v505 = vunpack.c.l.b16 %v203
      %v506 = vunpack.c.h.b16 %v203
      %v507 = vunpack.c.l.b16 %v204
      %v508 = vunpack.c.h.b16 %v204
      %v509 = vunpack.c.l.b16 %v205
      %v510 = vunpack.c.h.b16 %v205
      %v511 = vunpack.c.l.b16 %v206
      %v512 = vunpack.c.h.b16 %v206
      %v513 = vunpack.c.l.b16 %v207
      %v514 = vunpack.c.h.b16 %v207
      %v515 = vunpack.c.l.b16 %v208
      %v516 = vunpack.c.h.b16 %v208
      %v517 = vunpack.c.l.b16 %v209
      %v518 = vunpack.c.h.b16 %v209
      %v519 = vunpack.c.l.b16 %v210
      %v520 = vunpack.c.h.b16 %v210
      %v521 = vunpack.c.l.b16 %v211
      %v522 = vunpack.c.h.b16 %v211
      %v523 = vunpack.c.l.b16 %v212
      %v524 = vunpack.c.h.b16 %v212
      %v525 = vunpack.c.l.b16 %v213
      %v526 = vunpack.c.h.b16 %v213
      %v527 = vunpack.c.l.b16 %v214
      %v528 = vunpack.c.h.b16 %v214
      %v529 = vunpack.c.l.b16 %v215
      %v530 = vunpack.c.h.b16 %v215
      %v531 = vunpack.c.l.b16 %v216
      %v532 = vunpack.c.h.b16 %v216
      %v533 = vunpack.c.l.b16 %v217
      %v534 = vunpack.c.h.b16 %v217
      %v535 = vunpack.c.l.b16 %v218
      %v536 = vunpack.c.h.b16 %v218
      %v537 = vunpack.c.l.b16 %v219
      %v538 = vunpack.c.h.b16 %v219
      %v539 = vunpack.c.l.b16 %v220
      %v540 = vunpack.c.h.b16 %v220
      %v541 = vunpack.c.l.b16 %v221
      %v542 = vunpack.c.h.b16 %v221
      %v543 = vunpack.c.l.b16 %v222
      %v544 = vunpack.c.h.b16 %v222
      %v545 = vunpack.c.l.b16 %v223
      %v546 = vunpack.c.h.b16 %v223
      %v547 = vunpack.c.l.b16 %v224
      %v548 = vunpack.c.h.b16 %v224
      %v549 = vunpack.c.l.b16 %v225
      %v550 = vunpack.c.h.b16 %v225
      %v551 = vunpack.c.l.b16 %v226
      %v552 = vunpack.c.h.b16 %v226
      %v553 = vunpack.c.l.b16 %v227
      %v554 = vunpack.c.h.b16 %v227
      %v555 = vunpack.c.l.b16 %v228
      %v556 = vunpack.c.h.b16 %v228
      %v557 = vunpack.c.l.b16 %v229
      %v558 = vunpack.c.h.b16 %v229
      %v559 = vunpack.c.l.b16 %v230
      %v560 = vunpack.c.h.b16 %v230
      %v561 = vunpack.c.l.b16 %v231
      %v562 = vunpack.c.h.b16 %v231
      %v563 = vunpack.c.l.b16 %v232
      %v564 = vunpack.c.h.b16 %v232
      %v565 = vunpack.c.l.b16 %v233
      %v566 = vunpack.c.h.b16 %v233
      %v567 = vunpack.c.l.b16 %v234
      %v568 = vunpack.c.h.b16 %v234
      %v569 = vunpack.c.l.b16 %v235
      %v570 = vunpack.c.h.b16 %v235
      %v571 = vunpack.c.l.b16 %v236
      %v572 = vunpack.c.h.b16 %v236
      %v573 = vunpack.c.l.b16 %v237
      %v574 = vunpack.c.h.b16 %v237
      %v575 = vunpack.c.l.b16 %v238
      %v576 = vunpack.c.h.b16 %v238
      %v577 = vunpack.c.l.b16 %v239
      %v578 = vunpack.c.h.b16 %v239
      %v579 = vunpack.c.l.b16 %v240
      %v580 = vunpack.c.h.b16 %v240
      %v581 = vunpack.c.l.b16 %v241
      %v582 = vunpack.c.h.b16 %v241
      %v583 = vunpack.c.l.b16 %v242
      %v584 = vunpack.c.h.b16 %v242
      %v585 = vunpack.c.l.b16 %v243
      %v586 = vunpack.c.h.b16 %v243
      %v587 = vunpack.c.l.b16 %v244
      %v588 = vunpack.c.h.b16 %v244
      %v589 = vunpack.c.l.b16 %v245
      %v590 = vunpack.c.h.b16 %v245
      %v591 = vunpack.c.l.b16 %v246
      %v592 = vunpack.c.h.b16 %v246
      %v593 = vunpack.c.l.b16 %v247
      %v594 = vunpack.c.h.b16 %v247
      %v595 = vunpack.c.l.b16 %v248
      %v596 = vunpack.c.h.b16 %v248
      %v597 = vunpack.c.l.b16 %v249
      %v598 = vunpack.c.h.b16 %v249
      %v599 = vunpack.c.l.b16 %v250
      %v600 = vunpack.c.h.b16 %v250
      %v601 = vunpack.c.l.b16 %v251
      %v602 = vunpack.c.h.b16 %v251
      %v603 = vunpack.c.l.b16 %v252
      %v604 = vunpack.c.h.b16 %v252
      %v605 = vunpack.c.l.b16 %v253
      %v606 = vunpack.c.h.b16 %v253
      %v607 = vunpack.c.l.b16 %v254
      %v608 = vunpack.c.h.b16 %v254
      %v609 = vunpack.c.l.b16 %v255
      %v610 = vunpack.c.h.b16 %v255
      %v611 = vunpack.c.l.b16 %v256
      %v612 = vunpack.c.h.b16 %v256
      %v613 = vunpack.c.l.b16 %v257
      %v614 = vunpack.c.h.b16 %v257
      %v615 = vunpack.c.l.b16 %v258
      %v616 = vunpack.c.h.b16 %v258
      %v617 = vunpack.c.l.b16 %v259
      %v618 = vunpack.c.h.b16 %v259
      %v619 = vunpack.c.l.b16 %v260
      %v620 = vunpack.c.h.b16 %v260
      %v621 = vunpack.c.l.b16 %v261
      %v622 = vunpack.c.h.b16 %v261
      %v623 = vunpack.c.l.b16 %v262
      %v624 = vunpack.c.h.b16 %v262
      %v625 = vunpack.c.l.b16 %v263
      %v626 = vunpack.c.h.b16 %v263
      %v627 = vunpack.c.l.b16 %v264
      %v628 = vunpack.c.h.b16 %v264
      %v629 = vunpack.c.l.b16 %v265
      %v630 = vunpack.c.h.b16 %v265
      %v631 = vunpack.c.l.b16 %v266
      %v632 = vunpack.c.h.b16 %v266
      %v633 = vunpack.c.l.b16 %v267
      %v634 = vunpack.c.h.b16 %v267
      %v635 = vunpack.c.l.b16 %v268
      %v636 = vunpack.c.h.b16 %v268
      %v637 = vunpack.c.l.b16 %v269
      %v638 = vunpack.c.h.b16 %v269
      %v639 = vunpack.c.l.b16 %v270
      %v640 = vunpack.c.h.b16 %v270
      %v641 = vunpack.c.l.b16 %v271
      %v642 = vunpack.c.h.b16 %v271
      %v643 = vunpack.c.l.b16 %v272
      %v644 = vunpack.c.h.b16 %v272
      %v645 = vunpack.c.l.b16 %v273
      %v646 = vunpack.c.h.b16 %v273
      %v647 = vunpack.c.l.b16 %v274
      %v648 = vunpack.c.h.b16 %v274
      %v649 = vunpack.c.l.b16 %v275
      %v650 = vunpack.c.h.b16 %v275
      %v651 = vunpack.c.l.b16 %v276
      %v652 = vunpack.c.h.b16 %v276
      %v653 = vunpack.c.l.b16 %v277
      %v654 = vunpack.c.h.b16 %v277
      %v655 = vunpack.c.l.b16 %v278
      %v656 = vunpack.c.h.b16 %v278
      %v657 = vunpack.c.l.b16 %v279
      %v658 = vunpack.c.h.b16 %v279
      %v659 = vunpack.c.l.b16 %v280
      %v660 = vunpack.c.h.b16 %v280
      %v661 = vunpack.c.l.b16 %v281
      %v662 = vunpack.c.h.b16 %v281
      %v663 = vunpack.c.l.b16 %v282
      %v664 = vunpack.c.h.b16 %v282
      %v665 = vunpack.c.l.b16 %v283
      %v666 = vunpack.c.h.b16 %v283
      %v667 = vunpack.c.l.b16 %v284
      %v668 = vunpack.c.h.b16 %v284
      %v669 = vunpack.c.l.b16 %v285
      %v670 = vunpack.c.h.b16 %v285
      %v671 = vunpack.c.l.b16 %v286
      %v672 = vunpack.c.h.b16 %v286
      %v673 = vunpack.c.l.b16 %v287
      %v674 = vunpack.c.h.b16 %v287
      %v675 = vunpack.c.l.b16 %v288
      %v676 = vunpack.c.h.b16 %v288
      %v677 = vunpack.c.l.b16 %v289
      %v678 = vunpack.c.h.b16 %v289
      %v679 = vunpack.c.l.b16 %v290
      %v680 = vunpack.c.h.b16 %v290
      %v681 = vunpack.c.l.b16 %v291
      %v682 = vunpack.c.h.b16 %v291
      %v683 = vunpack.c.l.b16 %v292
      %v684 = vunpack.c.h.b16 %v292
      %v685 = vunpack.c.l.b16 %v293
      %v686 = vunpack.c.h.b16 %v293
      %v687 = vunpack.c.l.b16 %v294
      %v688 = vunpack.c.h.b16 %v294
      %v689 = vunpack.c.l.b16 %v295
      %v690 = vunpack.c.h.b16 %v295
      %v691 = vunpack.c.l.b16 %v296
      %v692 = vunpack.c.h.b16 %v296
      %v693 = vunpack.c.l.b16 %v297
      %v694 = vunpack.c.h.b16 %v297
      %v695 = vunpack.c.l.b16 %v298
      %v696 = vunpack.c.h.b16 %v298
      %v697 = vunpack.c.l.b16 %v299
      %v698 = vunpack.c.h.b16 %v299
      %v699 = vunpack.c.l.b16 %v300
      %v700 = vunpack.c.h.b16 %v300
      %v701 = vunpack.c.l.b16 %v301
      %v702 = vunpack.c.h.b16 %v301
      %v703 = vpack.c.b16 %v479, %v447
      %v704 = vpack.c.b16 %v480, %v448
      %v705 = vpack.c.b16 %v481, %v449
      %v706 = vpack.c.b16 %v482, %v450
      %v707 = vpack.c.b16 %v483, %v451
      %v708 = vpack.c.b16 %v484, %v452
      %v709 = vpack.c.b16 %v485, %v453
      %v710 = vpack.c.b16 %v486, %v454
      %v711 = vpack.c.b16 %v487, %v455
      %v712 = vpack.c.b16 %v488, %v456
      %v713 = vpack.c.b16 %v489, %v457
      %v714 = vpack.c.b16 %v490, %v458
      %v715 = vpack.c.b16 %v491, %v459
      %v716 = vpack.c.b16 %v492, %v460
      %v717 = vpack.c.b16 %v493, %v461
      %v718 = vpack.c.b16 %v494, %v462
      %v719 = vpack.c.b16 %v495, %v463
      %v720 = vpack.c.b16 %v496, %v464
      %v721 = vpack.c.b16 %v497, %v465
      %v722 = vpack.c.b16 %v498, %v466
      %v723 = vpack.c.b16 %v499, %v467
      %v724 = vpack.c.b16 %v500, %v468
      %v725 = vpack.c.b16 %v501, %v469
      %v726 = vpack.c.b16 %v502, %v470
      %v727 = vpack.c.b16 %v503, %v471
      %v728 = vpack.c.b16 %v504, %v472
      %v729 = vpack.c.b16 %v505, %v473
      %v730 = vpack.c.b16 %v506, %v474
      %v731 = vpack.c.b16 %v507, %v475
      %v732 = vpack.c.b16 %v508, %v476
      %v733 = vpack.c.b16 %v509, %v477
      %v734 = vpack.c.b16 %v510, %v478
      %v735 = vpack.c.b16 %v543, %v511
      %v736 = vpack.c.b16 %v544, %v512
      %v737 = vpack.c.b16 %v545, %v513
      %v738 = vpack.c.b16 %v546, %v514
      %v739 = vpack.c.b16 %v547, %v515
      %v740 = vpack.c.b16 %v548, %v516
      %v741 = vpack.c.b16 %v549, %v517
      %v742 = vpack.c.b16 %v550, %v518
      %v743 = vpack.c.b16 %v551, %v519
      %v744 = vpack.c.b16 %v552, %v520
      %v745 = vpack.c.b16 %v553, %v521
      %v746 = vpack.c.b16 %v554, %v522
      %v747 = vpack.c.b16 %v555, %v523
      %v748 = vpack.c.b16 %v556, %v524
      %v749 = vpack.c.b16 %v557, %v525
      %v750 = vpack.c.b16 %v558, %v526
      %v751 = vpack.c.b16 %v559, %v527
      %v752 = vpack.c.b16 %v560, %v528
      %v753 = vpack.c.b16 %v561, %v529
      %v754 = vpack.c.b16 %v562, %v530
      %v755 = vpack.c.b16 %v563, %v531
      %v756 = vpack.c.b16 %v564, %v532
      %v757 = vpack.c.b16 %v565, %v533
      %v758 = vpack.c.b16 %v566, %v534
      %v759 = vpack.c.b16 %v567, %v535
      %v760 = vpack.c.b16 %v568, %v536
      %v761 = vpack.c.b16 %v569, %v537
      %v762 = vpack.c.b16 %v570, %v538
      %v763 = vpack.c.b16 %v571, %v539
      %v764 = vpack.c.b16 %v572, %v540
      %v765 = vpack.c.b16 %v573, %v541
      %v766 = vpack.c.b16 %v574, %v542
      %v767 = vpack.c.b16 %v607, %v575
      %v768 = vpack.c.b16 %v608, %v576
      %v769 = vpack.c.b16 %v609, %v577
      %v770 = vpack.c.b16 %v610, %v578
      %v771 = vpack.c.b16 %v611, %v579
      %v772 = vpack.c.b16 %v612, %v580
      %v773 = vpack.c.b16 %v613, %v581
      %v774 = vpack.c.b16 %v614, %v582
      %v775 = vpack.c.b16 %v615, %v583
      %v776 = vpack.c.b16 %v616, %v584
      %v777 = vpack.c.b16 %v617, %v585
      %v778 = vpack.c.b16 %v618, %v586
      %v779 = vpack.c.b16 %v619, %v587
      %v780 = vpack.c.b16 %v620, %v588
      %v781 = vpack.c.b16 %v621, %v589
      %v782 = vpack.c.b16 %v622, %v590
      %v783 = vpack.c.b16 %v623, %v591
      %v784 = vpack.c.b16 %v624, %v592
      %v785 = vpack.c.b16 %v625, %v593
      %v786 = vpack.c.b16 %v626, %v594
      %v787 = vpack.c.b16 %v627, %v595
      %v788 = vpack.c.b16 %v628, %v596
      %v789 = vpack.c.b16 %v629, %v597
      %v790 = vpack.c.b16 %v630, %v598
      %v791 = vpack.c.b16 %v631, %v599
      %v792 = vpack.c.b16 %v632, %v600
      %v793 = vpack.c.b16 %v633, %v601
      %v794 = vpack.c.b16 %v634, %v602
      %v795 = vpack.c.b16 %v635, %v603
      %v796 = vpack.c.b16 %v636, %v604
      %v797 = vpack.c.b16 %v637, %v605
      %v798 = vpack.c.b16 %v638, %v606
      %v799 = vpack.c.b16 %v671, %v639
      %v800 = vpack.c.b16 %v672, %v640
      %v801 = vpack.c.b16 %v673, %v641
      %v802 = vpack.c.b16 %v674, %v642
      %v803 = vpack.c.b16 %v675, %v643
      %v804 = vpack.c.b16 %v676, %v644
      %v805 = vpack.c.b16 %v677, %v645
      %v806 = vpack.c.b16 %v678, %v646
      %v807 = vpack.c.b16 %v679, %v647
      %v808 = vpack.c.b16 %v680, %v648
      %v809 = vpack.c.b16 %v681, %v649
      %v810 = vpack.c.b16 %v682, %v650
      %v811 = vpack.c.b16 %v683, %v651
      %v812 = vpack.c.b16 %v684, %v652
      %v813 = vpack.c.b16 %v685, %v653
      %v814 = vpack.c.b16 %v686, %v654
      %v815 = vpack.c.b16 %v687, %v655
      %v816 = vpack.c.b16 %v688, %v656
      %v817 = vpack.c.b16 %v689, %v657
      %v818 = vpack.c.b16 %v690, %v658
      %v819 = vpack.c.b16 %v691, %v659
      %v820 = vpack.c.b16 %v692, %v660
      %v821 = vpack.c.b16 %v693, %v661
      %v822 = vpack.c.b16 %v694, %v662
      %v823 = vpack.c.b16 %v695, %v663
      %v824 = vpack.c.b16 %v696, %v664
      %v825 = vpack.c.b16 %v697, %v665
      %v826 = vpack.c.b16 %v698, %v666
      %v827 = vpack.c.b16 %v699, %v667
      %v828 = vpack.c.b16 %v700, %v668
      %v829 = vpack.c.b16 %v701, %v669
      %v830 = vpack.c.b16 %v702, %v670
      %vm959 = vcmask 523264
      %v961 = vsel %vm959, %v318, 0
      %963 = vmatprep.subr.bf16.mxu0 %v704
      %964 = vmatpush1.bf16.msra.mxu0 %v703
      %965 = vmatprep.subr.bf16.mxu0 %v736
      %966 = vmatpush1.bf16.msra.mxu0 %v735
      %967 = vmatprep.subr.bf16.mxu0 %v768
      %968 = vmatpush1.bf16.msra.mxu0 %v767
      %969 = vmatprep.subr.bf16.mxu0 %v800
      %970 = vmatpush1.bf16.msra.mxu0 %v799
      %971 = vmatprep.subr.bf16.mxu0 0
      %972 = vmatpush1.bf16.msra.mxu0 0
      %973 = vmatprep.subr.bf16.mxu0 0
      %974 = vmatpush1.bf16.msra.mxu0 0
      %975 = vmatprep.subr.bf16.mxu0 0
      %976 = vmatpush1.bf16.msra.mxu0 0
      %977 = vmatprep.subr.bf16.mxu0 0
      %978 = vmatpush1.bf16.msra.mxu0 0
      %979 = vmatprep.subr.bf16.mxu0 0
      %980 = vmatpush1.bf16.msra.mxu0 0
      %981 = vmatprep.subr.bf16.mxu0 0
      %982 = vmatpush1.bf16.msra.mxu0 0
      %983 = vmatprep.subr.bf16.mxu0 0
      %984 = vmatpush1.bf16.msra.mxu0 0
      %985 = vmatprep.subr.bf16.mxu0 0
      %986 = vmatpush1.bf16.msra.mxu0 0
      %987 = vmatprep.subr.bf16.mxu0 0
      %988 = vmatpush1.bf16.msra.mxu0 0
      %989 = vmatprep.subr.bf16.mxu0 0
      %990 = vmatpush1.bf16.msra.mxu0 0
      %991 = vmatprep.subr.bf16.mxu0 0
      %992 = vmatpush1.bf16.msra.mxu0 0
      %993 = vmatprep.subr.bf16.mxu0 0
      %994 = vmatpush1.bf16.msra.mxu0 0
      %995 = vmatprep.mubr.bf16.mxu0 0
      %996 = vmatmul.mubr.bf16.gmra.mrb[0].mxu0 %v961
      %v997 = vpop.f32.mrb[0].mxu0
      %v998 = vadd.f32 %v307, %v997
      %v999 = vpop.f32.mrb[0].mxu0
      %v1000 = vadd.f32 %v307, %v999
      %v1001 = vpop.f32.mrb[0].mxu0
      %v1002 = vadd.f32 %v312, %v1001
      %v1003 = vpop.f32.mrb[0].mxu0
      %v1004 = vadd.f32 %v312, %v1003
      %1005 = vdwg.mxu0
      %1006 = vmatprep.subr.bf16.mxu0 %v706
      %1007 = vmatpush1.bf16.msra.mxu0 %v705
      %1008 = vmatprep.subr.bf16.mxu0 %v738
      %1009 = vmatpush1.bf16.msra.mxu0 %v737
      %1010 = vmatprep.subr.bf16.mxu0 %v770
      %1011 = vmatpush1.bf16.msra.mxu0 %v769
      %1012 = vmatprep.subr.bf16.mxu0 %v802
      %1013 = vmatpush1.bf16.msra.mxu0 %v801
      %1014 = vmatprep.subr.bf16.mxu0 0
      %1015 = vmatpush1.bf16.msra.mxu0 0
      %1016 = vmatprep.subr.bf16.mxu0 0
      %1017 = vmatpush1.bf16.msra.mxu0 0
      %1018 = vmatprep.subr.bf16.mxu0 0
      %1019 = vmatpush1.bf16.msra.mxu0 0
      %1020 = vmatprep.subr.bf16.mxu0 0
      %1021 = vmatpush1.bf16.msra.mxu0 0
      %1022 = vmatprep.subr.bf16.mxu0 0
      %1023 = vmatpush1.bf16.msra.mxu0 0
      %1024 = vmatprep.subr.bf16.mxu0 0
      %1025 = vmatpush1.bf16.msra.mxu0 0
      %1026 = vmatprep.subr.bf16.mxu0 0
      %1027 = vmatpush1.bf16.msra.mxu0 0
      %1028 = vmatprep.subr.bf16.mxu0 0
      %1029 = vmatpush1.bf16.msra.mxu0 0
      %1030 = vmatprep.subr.bf16.mxu0 0
      %1031 = vmatpush1.bf16.msra.mxu0 0
      %1032 = vmatprep.subr.bf16.mxu0 0
      %1033 = vmatpush1.bf16.msra.mxu0 0
      %1034 = vmatprep.subr.bf16.mxu0 0
      %1035 = vmatpush1.bf16.msra.mxu0 0
      %1036 = vmatprep.subr.bf16.mxu0 0
      %1037 = vmatpush1.bf16.msra.mxu0 0
      %1038 = vmatprep.mubr.bf16.mxu0 0
      %1039 = vmatmul.mubr.bf16.gmra.mrb[0].mxu0 %v961
      %v1040 = vpop.f32.mrb[0].mxu0
      %v1041 = vadd.f32 %v307, %v1040
      %v1042 = vpop.f32.mrb[0].mxu0
      %v1043 = vadd.f32 %v307, %v1042
      %v1044 = vpop.f32.mrb[0].mxu0
      %v1045 = vadd.f32 %v312, %v1044
      %v1046 = vpop.f32.mrb[0].mxu0
      %v1047 = vadd.f32 %v312, %v1046
      %1048 = vdwg.mxu0
      %1049 = vmatprep.subr.bf16.mxu0 %v708
      %1050 = vmatpush1.bf16.msra.mxu0 %v707
      %1051 = vmatprep.subr.bf16.mxu0 %v740
      %1052 = vmatpush1.bf16.msra.mxu0 %v739
      %1053 = vmatprep.subr.bf16.mxu0 %v772
      %1054 = vmatpush1.bf16.msra.mxu0 %v771
      %1055 = vmatprep.subr.bf16.mxu0 %v804
      %1056 = vmatpush1.bf16.msra.mxu0 %v803
      %1057 = vmatprep.subr.bf16.mxu0 0
      %1058 = vmatpush1.bf16.msra.mxu0 0
      %1059 = vmatprep.subr.bf16.mxu0 0
      %1060 = vmatpush1.bf16.msra.mxu0 0
      %1061 = vmatprep.subr.bf16.mxu0 0
      %1062 = vmatpush1.bf16.msra.mxu0 0
      %1063 = vmatprep.subr.bf16.mxu0 0
      %1064 = vmatpush1.bf16.msra.mxu0 0
      %1065 = vmatprep.subr.bf16.mxu0 0
      %1066 = vmatpush1.bf16.msra.mxu0 0
      %1067 = vmatprep.subr.bf16.mxu0 0
      %1068 = vmatpush1.bf16.msra.mxu0 0
      %1069 = vmatprep.subr.bf16.mxu0 0
      %1070 = vmatpush1.bf16.msra.mxu0 0
      %1071 = vmatprep.subr.bf16.mxu0 0
      %1072 = vmatpush1.bf16.msra.mxu0 0
      %1073 = vmatprep.subr.bf16.mxu0 0
      %1074 = vmatpush1.bf16.msra.mxu0 0
      %1075 = vmatprep.subr.bf16.mxu0 0
      %1076 = vmatpush1.bf16.msra.mxu0 0
      %1077 = vmatprep.subr.bf16.mxu0 0
      %1078 = vmatpush1.bf16.msra.mxu0 0
      %1079 = vmatprep.subr.bf16.mxu0 0
      %1080 = vmatpush1.bf16.msra.mxu0 0
      %1081 = vmatprep.mubr.bf16.mxu0 0
      %1082 = vmatmul.mubr.bf16.gmra.mrb[0].mxu0 %v961
      %v1083 = vpop.f32.mrb[0].mxu0
      %v1084 = vadd.f32 %v307, %v1083
      %v1085 = vpop.f32.mrb[0].mxu0
      %v1086 = vadd.f32 %v307, %v1085
      %v1087 = vpop.f32.mrb[0].mxu0
      %v1088 = vadd.f32 %v312, %v1087
      %v1089 = vpop.f32.mrb[0].mxu0
      %v1090 = vadd.f32 %v312, %v1089
      %1091 = vdwg.mxu0
      %1092 = vmatprep.subr.bf16.mxu0 %v710
      %1093 = vmatpush1.bf16.msra.mxu0 %v709
      %1094 = vmatprep.subr.bf16.mxu0 %v742
      %1095 = vmatpush1.bf16.msra.mxu0 %v741
      %1096 = vmatprep.subr.bf16.mxu0 %v774
      %1097 = vmatpush1.bf16.msra.mxu0 %v773
      %1098 = vmatprep.subr.bf16.mxu0 %v806
      %1099 = vmatpush1.bf16.msra.mxu0 %v805
      %1100 = vmatprep.subr.bf16.mxu0 0
      %1101 = vmatpush1.bf16.msra.mxu0 0
      %1102 = vmatprep.subr.bf16.mxu0 0
      %1103 = vmatpush1.bf16.msra.mxu0 0
      %1104 = vmatprep.subr.bf16.mxu0 0
      %1105 = vmatpush1.bf16.msra.mxu0 0
      %1106 = vmatprep.subr.bf16.mxu0 0
      %1107 = vmatpush1.bf16.msra.mxu0 0
      %1108 = vmatprep.subr.bf16.mxu0 0
      %1109 = vmatpush1.bf16.msra.mxu0 0
      %1110 = vmatprep.subr.bf16.mxu0 0
      %1111 = vmatpush1.bf16.msra.mxu0 0
      %1112 = vmatprep.subr.bf16.mxu0 0
      %1113 = vmatpush1.bf16.msra.mxu0 0
      %1114 = vmatprep.subr.bf16.mxu0 0
      %1115 = vmatpush1.bf16.msra.mxu0 0
      %1116 = vmatprep.subr.bf16.mxu0 0
      %1117 = vmatpush1.bf16.msra.mxu0 0
      %1118 = vmatprep.subr.bf16.mxu0 0
      %1119 = vmatpush1.bf16.msra.mxu0 0
      %1120 = vmatprep.subr.bf16.mxu0 0
      %1121 = vmatpush1.bf16.msra.mxu0 0
      %1122 = vmatprep.subr.bf16.mxu0 0
      %1123 = vmatpush1.bf16.msra.mxu0 0
      %1124 = vmatprep.mubr.bf16.mxu0 0
      %1125 = vmatmul.mubr.bf16.gmra.mrb[0].mxu0 %v961
      %v1126 = vpop.f32.mrb[0].mxu0
      %v1127 = vadd.f32 %v307, %v1126
      %v1128 = vpop.f32.mrb[0].mxu0
      %v1129 = vadd.f32 %v307, %v1128
      %v1130 = vpop.f32.mrb[0].mxu0
      %v1131 = vadd.f32 %v312, %v1130
      %v1132 = vpop.f32.mrb[0].mxu0
      %v1133 = vadd.f32 %v312, %v1132
      %1134 = vdwg.mxu0
      %1135 = vmatprep.subr.bf16.mxu0 %v712
      %1136 = vmatpush1.bf16.msra.mxu0 %v711
      %1137 = vmatprep.subr.bf16.mxu0 %v744
      %1138 = vmatpush1.bf16.msra.mxu0 %v743
      %1139 = vmatprep.subr.bf16.mxu0 %v776
      %1140 = vmatpush1.bf16.msra.mxu0 %v775
      %1141 = vmatprep.subr.bf16.mxu0 %v808
      %1142 = vmatpush1.bf16.msra.mxu0 %v807
      %1143 = vmatprep.subr.bf16.mxu0 0
      %1144 = vmatpush1.bf16.msra.mxu0 0
      %1145 = vmatprep.subr.bf16.mxu0 0
      %1146 = vmatpush1.bf16.msra.mxu0 0
      %1147 = vmatprep.subr.bf16.mxu0 0
      %1148 = vmatpush1.bf16.msra.mxu0 0
      %1149 = vmatprep.subr.bf16.mxu0 0
      %1150 = vmatpush1.bf16.msra.mxu0 0
      %1151 = vmatprep.subr.bf16.mxu0 0
      %1152 = vmatpush1.bf16.msra.mxu0 0
      %1153 = vmatprep.subr.bf16.mxu0 0
      %1154 = vmatpush1.bf16.msra.mxu0 0
      %1155 = vmatprep.subr.bf16.mxu0 0
      %1156 = vmatpush1.bf16.msra.mxu0 0
      %1157 = vmatprep.subr.bf16.mxu0 0
      %1158 = vmatpush1.bf16.msra.mxu0 0
      %1159 = vmatprep.subr.bf16.mxu0 0
      %1160 = vmatpush1.bf16.msra.mxu0 0
      %1161 = vmatprep.subr.bf16.mxu0 0
      %1162 = vmatpush1.bf16.msra.mxu0 0
      %1163 = vmatprep.subr.bf16.mxu0 0
      %1164 = vmatpush1.bf16.msra.mxu0 0
      %1165 = vmatprep.subr.bf16.mxu0 0
      %1166 = vmatpush1.bf16.msra.mxu0 0
      %1167 = vmatprep.mubr.bf16.mxu0 0
      %1168 = vmatmul.mubr.bf16.gmra.mrb[0].mxu0 %v961
      %v1169 = vpop.f32.mrb[0].mxu0
      %v1170 = vadd.f32 %v307, %v1169
      %v1171 = vpop.f32.mrb[0].mxu0
      %v1172 = vadd.f32 %v307, %v1171
      %v1173 = vpop.f32.mrb[0].mxu0
      %v1174 = vadd.f32 %v312, %v1173
      %v1175 = vpop.f32.mrb[0].mxu0
      %v1176 = vadd.f32 %v312, %v1175
      %1177 = vdwg.mxu0
      %1178 = vmatprep.subr.bf16.mxu0 %v714
      %1179 = vmatpush1.bf16.msra.mxu0 %v713
      %1180 = vmatprep.subr.bf16.mxu0 %v746
      %1181 = vmatpush1.bf16.msra.mxu0 %v745
      %1182 = vmatprep.subr.bf16.mxu0 %v778
      %1183 = vmatpush1.bf16.msra.mxu0 %v777
      %1184 = vmatprep.subr.bf16.mxu0 %v810
      %1185 = vmatpush1.bf16.msra.mxu0 %v809
      %1186 = vmatprep.subr.bf16.mxu0 0
      %1187 = vmatpush1.bf16.msra.mxu0 0
      %1188 = vmatprep.subr.bf16.mxu0 0
      %1189 = vmatpush1.bf16.msra.mxu0 0
      %1190 = vmatprep.subr.bf16.mxu0 0
      %1191 = vmatpush1.bf16.msra.mxu0 0
      %1192 = vmatprep.subr.bf16.mxu0 0
      %1193 = vmatpush1.bf16.msra.mxu0 0
      %1194 = vmatprep.subr.bf16.mxu0 0
      %1195 = vmatpush1.bf16.msra.mxu0 0
      %1196 = vmatprep.subr.bf16.mxu0 0
      %1197 = vmatpush1.bf16.msra.mxu0 0
      %1198 = vmatprep.subr.bf16.mxu0 0
      %1199 = vmatpush1.bf16.msra.mxu0 0
      %1200 = vmatprep.subr.bf16.mxu0 0
      %1201 = vmatpush1.bf16.msra.mxu0 0
      %1202 = vmatprep.subr.bf16.mxu0 0
      %1203 = vmatpush1.bf16.msra.mxu0 0
      %1204 = vmatprep.subr.bf16.mxu0 0
      %1205 = vmatpush1.bf16.msra.mxu0 0
      %1206 = vmatprep.subr.bf16.mxu0 0
      %1207 = vmatpush1.bf16.msra.mxu0 0
      %1208 = vmatprep.subr.bf16.mxu0 0
      %1209 = vmatpush1.bf16.msra.mxu0 0
      %1210 = vmatprep.mubr.bf16.mxu0 0
      %1211 = vmatmul.mubr.bf16.gmra.mrb[0].mxu0 %v961
      %v1212 = vpop.f32.mrb[0].mxu0
      %v1213 = vadd.f32 %v307, %v1212
      %v1214 = vpop.f32.mrb[0].mxu0
      %v1215 = vadd.f32 %v307, %v1214
      %v1216 = vpop.f32.mrb[0].mxu0
      %v1217 = vadd.f32 %v312, %v1216
      %v1218 = vpop.f32.mrb[0].mxu0
      %v1219 = vadd.f32 %v312, %v1218
      %1220 = vdwg.mxu0
      %1221 = vmatprep.subr.bf16.mxu0 %v716
      %1222 = vmatpush1.bf16.msra.mxu0 %v715
      %1223 = vmatprep.subr.bf16.mxu0 %v748
      %1224 = vmatpush1.bf16.msra.mxu0 %v747
      %1225 = vmatprep.subr.bf16.mxu0 %v780
      %1226 = vmatpush1.bf16.msra.mxu0 %v779
      %1227 = vmatprep.subr.bf16.mxu0 %v812
      %1228 = vmatpush1.bf16.msra.mxu0 %v811
      %1229 = vmatprep.subr.bf16.mxu0 0
      %1230 = vmatpush1.bf16.msra.mxu0 0
      %1231 = vmatprep.subr.bf16.mxu0 0
      %1232 = vmatpush1.bf16.msra.mxu0 0
      %1233 = vmatprep.subr.bf16.mxu0 0
      %1234 = vmatpush1.bf16.msra.mxu0 0
      %1235 = vmatprep.subr.bf16.mxu0 0
      %1236 = vmatpush1.bf16.msra.mxu0 0
      %1237 = vmatprep.subr.bf16.mxu0 0
      %1238 = vmatpush1.bf16.msra.mxu0 0
      %1239 = vmatprep.subr.bf16.mxu0 0
      %1240 = vmatpush1.bf16.msra.mxu0 0
      %1241 = vmatprep.subr.bf16.mxu0 0
      %1242 = vmatpush1.bf16.msra.mxu0 0
      %1243 = vmatprep.subr.bf16.mxu0 0
      %1244 = vmatpush1.bf16.msra.mxu0 0
      %1245 = vmatprep.subr.bf16.mxu0 0
      %1246 = vmatpush1.bf16.msra.mxu0 0
      %1247 = vmatprep.subr.bf16.mxu0 0
      %1248 = vmatpush1.bf16.msra.mxu0 0
      %1249 = vmatprep.subr.bf16.mxu0 0
      %1250 = vmatpush1.bf16.msra.mxu0 0
      %1251 = vmatprep.subr.bf16.mxu0 0
      %1252 = vmatpush1.bf16.msra.mxu0 0
      %1253 = vmatprep.mubr.bf16.mxu0 0
      %1254 = vmatmul.mubr.bf16.gmra.mrb[0].mxu0 %v961
      %v1255 = vpop.f32.mrb[0].mxu0
      %v1256 = vadd.f32 %v307, %v1255
      %v1257 = vpop.f32.mrb[0].mxu0
      %v1258 = vadd.f32 %v307, %v1257
      %v1259 = vpop.f32.mrb[0].mxu0
      %v1260 = vadd.f32 %v312, %v1259
      %v1261 = vpop.f32.mrb[0].mxu0
      %v1262 = vadd.f32 %v312, %v1261
      %1263 = vdwg.mxu0
      %1264 = vmatprep.subr.bf16.mxu0 %v718
      %1265 = vmatpush1.bf16.msra.mxu0 %v717
      %1266 = vmatprep.subr.bf16.mxu0 %v750
      %1267 = vmatpush1.bf16.msra.mxu0 %v749
      %1268 = vmatprep.subr.bf16.mxu0 %v782
      %1269 = vmatpush1.bf16.msra.mxu0 %v781
      %1270 = vmatprep.subr.bf16.mxu0 %v814
      %1271 = vmatpush1.bf16.msra.mxu0 %v813
      %1272 = vmatprep.subr.bf16.mxu0 0
      %1273 = vmatpush1.bf16.msra.mxu0 0
      %1274 = vmatprep.subr.bf16.mxu0 0
      %1275 = vmatpush1.bf16.msra.mxu0 0
      %1276 = vmatprep.subr.bf16.mxu0 0
      %1277 = vmatpush1.bf16.msra.mxu0 0
      %1278 = vmatprep.subr.bf16.mxu0 0
      %1279 = vmatpush1.bf16.msra.mxu0 0
      %1280 = vmatprep.subr.bf16.mxu0 0
      %1281 = vmatpush1.bf16.msra.mxu0 0
      %1282 = vmatprep.subr.bf16.mxu0 0
      %1283 = vmatpush1.bf16.msra.mxu0 0
      %1284 = vmatprep.subr.bf16.mxu0 0
      %1285 = vmatpush1.bf16.msra.mxu0 0
      %1286 = vmatprep.subr.bf16.mxu0 0
      %1287 = vmatpush1.bf16.msra.mxu0 0
      %1288 = vmatprep.subr.bf16.mxu0 0
      %1289 = vmatpush1.bf16.msra.mxu0 0
      %1290 = vmatprep.subr.bf16.mxu0 0
      %1291 = vmatpush1.bf16.msra.mxu0 0
      %1292 = vmatprep.subr.bf16.mxu0 0
      %1293 = vmatpush1.bf16.msra.mxu0 0
      %1294 = vmatprep.subr.bf16.mxu0 0
      %1295 = vmatpush1.bf16.msra.mxu0 0
      %1296 = vmatprep.mubr.bf16.mxu0 0
      %1297 = vmatmul.mubr.bf16.gmra.mrb[0].mxu0 %v961
      %v1298 = vpop.f32.mrb[0].mxu0
      %v1299 = vadd.f32 %v307, %v1298
      %v1300 = vpop.f32.mrb[0].mxu0
      %v1301 = vadd.f32 %v307, %v1300
      %v1302 = vpop.f32.mrb[0].mxu0
      %v1303 = vadd.f32 %v312, %v1302
      %v1304 = vpop.f32.mrb[0].mxu0
      %v1305 = vadd.f32 %v312, %v1304
      %1306 = vdwg.mxu0
      %1307 = vmatprep.subr.bf16.mxu0 %v720
      %1308 = vmatpush1.bf16.msra.mxu0 %v719
      %1309 = vmatprep.subr.bf16.mxu0 %v752
      %1310 = vmatpush1.bf16.msra.mxu0 %v751
      %1311 = vmatprep.subr.bf16.mxu0 %v784
      %1312 = vmatpush1.bf16.msra.mxu0 %v783
      %1313 = vmatprep.subr.bf16.mxu0 %v816
      %1314 = vmatpush1.bf16.msra.mxu0 %v815
      %1315 = vmatprep.subr.bf16.mxu0 0
      %1316 = vmatpush1.bf16.msra.mxu0 0
      %1317 = vmatprep.subr.bf16.mxu0 0
      %1318 = vmatpush1.bf16.msra.mxu0 0
      %1319 = vmatprep.subr.bf16.mxu0 0
      %1320 = vmatpush1.bf16.msra.mxu0 0
      %1321 = vmatprep.subr.bf16.mxu0 0
      %1322 = vmatpush1.bf16.msra.mxu0 0
      %1323 = vmatprep.subr.bf16.mxu0 0
      %1324 = vmatpush1.bf16.msra.mxu0 0
      %1325 = vmatprep.subr.bf16.mxu0 0
      %1326 = vmatpush1.bf16.msra.mxu0 0
      %1327 = vmatprep.subr.bf16.mxu0 0
      %1328 = vmatpush1.bf16.msra.mxu0 0
      %1329 = vmatprep.subr.bf16.mxu0 0
      %1330 = vmatpush1.bf16.msra.mxu0 0
      %1331 = vmatprep.subr.bf16.mxu0 0
      %1332 = vmatpush1.bf16.msra.mxu0 0
      %1333 = vmatprep.subr.bf16.mxu0 0
      %1334 = vmatpush1.bf16.msra.mxu0 0
      %1335 = vmatprep.subr.bf16.mxu0 0
      %1336 = vmatpush1.bf16.msra.mxu0 0
      %1337 = vmatprep.subr.bf16.mxu0 0
      %1338 = vmatpush1.bf16.msra.mxu0 0
      %1339 = vmatprep.mubr.bf16.mxu0 0
      %1340 = vmatmul.mubr.bf16.gmra.mrb[0].mxu0 %v961
      %v1341 = vpop.f32.mrb[0].mxu0
      %v1342 = vadd.f32 %v307, %v1341
      %v1343 = vpop.f32.mrb[0].mxu0
      %v1344 = vadd.f32 %v307, %v1343
      %v1345 = vpop.f32.mrb[0].mxu0
      %v1346 = vadd.f32 %v312, %v1345
      %v1347 = vpop.f32.mrb[0].mxu0
      %v1348 = vadd.f32 %v312, %v1347
      %1349 = vdwg.mxu0
      %1350 = vmatprep.subr.bf16.mxu0 %v722
      %1351 = vmatpush1.bf16.msra.mxu0 %v721
      %1352 = vmatprep.subr.bf16.mxu0 %v754
      %1353 = vmatpush1.bf16.msra.mxu0 %v753
      %1354 = vmatprep.subr.bf16.mxu0 %v786
      %1355 = vmatpush1.bf16.msra.mxu0 %v785
      %1356 = vmatprep.subr.bf16.mxu0 %v818
      %1357 = vmatpush1.bf16.msra.mxu0 %v817
      %1358 = vmatprep.subr.bf16.mxu0 0
      %1359 = vmatpush1.bf16.msra.mxu0 0
      %1360 = vmatprep.subr.bf16.mxu0 0
      %1361 = vmatpush1.bf16.msra.mxu0 0
      %1362 = vmatprep.subr.bf16.mxu0 0
      %1363 = vmatpush1.bf16.msra.mxu0 0
      %1364 = vmatprep.subr.bf16.mxu0 0
      %1365 = vmatpush1.bf16.msra.mxu0 0
      %1366 = vmatprep.subr.bf16.mxu0 0
      %1367 = vmatpush1.bf16.msra.mxu0 0
      %1368 = vmatprep.subr.bf16.mxu0 0
      %1369 = vmatpush1.bf16.msra.mxu0 0
      %1370 = vmatprep.subr.bf16.mxu0 0
      %1371 = vmatpush1.bf16.msra.mxu0 0
      %1372 = vmatprep.subr.bf16.mxu0 0
      %1373 = vmatpush1.bf16.msra.mxu0 0
      %1374 = vmatprep.subr.bf16.mxu0 0
      %1375 = vmatpush1.bf16.msra.mxu0 0
      %1376 = vmatprep.subr.bf16.mxu0 0
      %1377 = vmatpush1.bf16.msra.mxu0 0
      %1378 = vmatprep.subr.bf16.mxu0 0
      %1379 = vmatpush1.bf16.msra.mxu0 0
      %1380 = vmatprep.subr.bf16.mxu0 0
      %1381 = vmatpush1.bf16.msra.mxu0 0
      %1382 = vmatprep.mubr.bf16.mxu0 0
      %1383 = vmatmul.mubr.bf16.gmra.mrb[0].mxu0 %v961
      %v1384 = vpop.f32.mrb[0].mxu0
      %v1385 = vadd.f32 %v307, %v1384
      %v1386 = vpop.f32.mrb[0].mxu0
      %v1387 = vadd.f32 %v307, %v1386
      %v1388 = vpop.f32.mrb[0].mxu0
      %v1389 = vadd.f32 %v312, %v1388
      %v1390 = vpop.f32.mrb[0].mxu0
      %v1391 = vadd.f32 %v312, %v1390
      %1392 = vdwg.mxu0
      %1393 = vmatprep.subr.bf16.mxu0 %v724
      %1394 = vmatpush1.bf16.msra.mxu0 %v723
      %1395 = vmatprep.subr.bf16.mxu0 %v756
      %1396 = vmatpush1.bf16.msra.mxu0 %v755
      %1397 = vmatprep.subr.bf16.mxu0 %v788
      %1398 = vmatpush1.bf16.msra.mxu0 %v787
      %1399 = vmatprep.subr.bf16.mxu0 %v820
      %1400 = vmatpush1.bf16.msra.mxu0 %v819
      %1401 = vmatprep.subr.bf16.mxu0 0
      %1402 = vmatpush1.bf16.msra.mxu0 0
      %1403 = vmatprep.subr.bf16.mxu0 0
      %1404 = vmatpush1.bf16.msra.mxu0 0
      %1405 = vmatprep.subr.bf16.mxu0 0
      %1406 = vmatpush1.bf16.msra.mxu0 0
      %1407 = vmatprep.subr.bf16.mxu0 0
      %1408 = vmatpush1.bf16.msra.mxu0 0
      %1409 = vmatprep.subr.bf16.mxu0 0
      %1410 = vmatpush1.bf16.msra.mxu0 0
      %1411 = vmatprep.subr.bf16.mxu0 0
      %1412 = vmatpush1.bf16.msra.mxu0 0
      %1413 = vmatprep.subr.bf16.mxu0 0
      %1414 = vmatpush1.bf16.msra.mxu0 0
      %1415 = vmatprep.subr.bf16.mxu0 0
      %1416 = vmatpush1.bf16.msra.mxu0 0
      %1417 = vmatprep.subr.bf16.mxu0 0
      %1418 = vmatpush1.bf16.msra.mxu0 0
      %1419 = vmatprep.subr.bf16.mxu0 0
      %1420 = vmatpush1.bf16.msra.mxu0 0
      %1421 = vmatprep.subr.bf16.mxu0 0
      %1422 = vmatpush1.bf16.msra.mxu0 0
      %1423 = vmatprep.subr.bf16.mxu0 0
      %1424 = vmatpush1.bf16.msra.mxu0 0
      %1425 = vmatprep.mubr.bf16.mxu0 0
      %1426 = vmatmul.mubr.bf16.gmra.mrb[0].mxu0 %v961
      %v1427 = vpop.f32.mrb[0].mxu0
      %v1428 = vadd.f32 %v307, %v1427
      %v1429 = vpop.f32.mrb[0].mxu0
      %v1430 = vadd.f32 %v307, %v1429
      %v1431 = vpop.f32.mrb[0].mxu0
      %v1432 = vadd.f32 %v312, %v1431
      %v1433 = vpop.f32.mrb[0].mxu0
      %v1434 = vadd.f32 %v312, %v1433
      %1435 = vdwg.mxu0
      %1436 = vmatprep.subr.bf16.mxu0 %v726
      %1437 = vmatpush1.bf16.msra.mxu0 %v725
      %1438 = vmatprep.subr.bf16.mxu0 %v758
      %1439 = vmatpush1.bf16.msra.mxu0 %v757
      %1440 = vmatprep.subr.bf16.mxu0 %v790
      %1441 = vmatpush1.bf16.msra.mxu0 %v789
      %1442 = vmatprep.subr.bf16.mxu0 %v822
      %1443 = vmatpush1.bf16.msra.mxu0 %v821
      %1444 = vmatprep.subr.bf16.mxu0 0
      %1445 = vmatpush1.bf16.msra.mxu0 0
      %1446 = vmatprep.subr.bf16.mxu0 0
      %1447 = vmatpush1.bf16.msra.mxu0 0
      %1448 = vmatprep.subr.bf16.mxu0 0
      %1449 = vmatpush1.bf16.msra.mxu0 0
      %1450 = vmatprep.subr.bf16.mxu0 0
      %1451 = vmatpush1.bf16.msra.mxu0 0
      %1452 = vmatprep.subr.bf16.mxu0 0
      %1453 = vmatpush1.bf16.msra.mxu0 0
      %1454 = vmatprep.subr.bf16.mxu0 0
      %1455 = vmatpush1.bf16.msra.mxu0 0
      %1456 = vmatprep.subr.bf16.mxu0 0
      %1457 = vmatpush1.bf16.msra.mxu0 0
      %1458 = vmatprep.subr.bf16.mxu0 0
      %1459 = vmatpush1.bf16.msra.mxu0 0
      %1460 = vmatprep.subr.bf16.mxu0 0
      %1461 = vmatpush1.bf16.msra.mxu0 0
      %1462 = vmatprep.subr.bf16.mxu0 0
      %1463 = vmatpush1.bf16.msra.mxu0 0
      %1464 = vmatprep.subr.bf16.mxu0 0
      %1465 = vmatpush1.bf16.msra.mxu0 0
      %1466 = vmatprep.subr.bf16.mxu0 0
      %1467 = vmatpush1.bf16.msra.mxu0 0
      %1468 = vmatprep.mubr.bf16.mxu0 0
      %1469 = vmatmul.mubr.bf16.gmra.mrb[0].mxu0 %v961
      %v1470 = vpop.f32.mrb[0].mxu0
      %v1471 = vadd.f32 %v307, %v1470
      %v1472 = vpop.f32.mrb[0].mxu0
      %v1473 = vadd.f32 %v307, %v1472
      %v1474 = vpop.f32.mrb[0].mxu0
      %v1475 = vadd.f32 %v312, %v1474
      %v1476 = vpop.f32.mrb[0].mxu0
      %v1477 = vadd.f32 %v312, %v1476
      %1478 = vdwg.mxu0
      %1479 = vmatprep.subr.bf16.mxu0 %v728
      %1480 = vmatpush1.bf16.msra.mxu0 %v727
      %1481 = vmatprep.subr.bf16.mxu0 %v760
      %1482 = vmatpush1.bf16.msra.mxu0 %v759
      %1483 = vmatprep.subr.bf16.mxu0 %v792
      %1484 = vmatpush1.bf16.msra.mxu0 %v791
      %1485 = vmatprep.subr.bf16.mxu0 %v824
      %1486 = vmatpush1.bf16.msra.mxu0 %v823
      %1487 = vmatprep.subr.bf16.mxu0 0
      %1488 = vmatpush1.bf16.msra.mxu0 0
      %1489 = vmatprep.subr.bf16.mxu0 0
      %1490 = vmatpush1.bf16.msra.mxu0 0
      %1491 = vmatprep.subr.bf16.mxu0 0
      %1492 = vmatpush1.bf16.msra.mxu0 0
      %1493 = vmatprep.subr.bf16.mxu0 0
      %1494 = vmatpush1.bf16.msra.mxu0 0
      %1495 = vmatprep.subr.bf16.mxu0 0
      %1496 = vmatpush1.bf16.msra.mxu0 0
      %1497 = vmatprep.subr.bf16.mxu0 0
      %1498 = vmatpush1.bf16.msra.mxu0 0
      %1499 = vmatprep.subr.bf16.mxu0 0
      %1500 = vmatpush1.bf16.msra.mxu0 0
      %1501 = vmatprep.subr.bf16.mxu0 0
      %1502 = vmatpush1.bf16.msra.mxu0 0
      %1503 = vmatprep.subr.bf16.mxu0 0
      %1504 = vmatpush1.bf16.msra.mxu0 0
      %1505 = vmatprep.subr.bf16.mxu0 0
      %1506 = vmatpush1.bf16.msra.mxu0 0
      %1507 = vmatprep.subr.bf16.mxu0 0
      %1508 = vmatpush1.bf16.msra.mxu0 0
      %1509 = vmatprep.subr.bf16.mxu0 0
      %1510 = vmatpush1.bf16.msra.mxu0 0
      %1511 = vmatprep.mubr.bf16.mxu0 0
      %1512 = vmatmul.mubr.bf16.gmra.mrb[0].mxu0 %v961
      %v1513 = vpop.f32.mrb[0].mxu0
      %v1514 = vadd.f32 %v307, %v1513
      %v1515 = vpop.f32.mrb[0].mxu0
      %v1516 = vadd.f32 %v307, %v1515
      %v1517 = vpop.f32.mrb[0].mxu0
      %v1518 = vadd.f32 %v312, %v1517
      %v1519 = vpop.f32.mrb[0].mxu0
      %v1520 = vadd.f32 %v312, %v1519
      %1521 = vdwg.mxu0
      %1522 = vmatprep.subr.bf16.mxu0 %v730
      %1523 = vmatpush1.bf16.msra.mxu0 %v729
      %1524 = vmatprep.subr.bf16.mxu0 %v762
      %1525 = vmatpush1.bf16.msra.mxu0 %v761
      %1526 = vmatprep.subr.bf16.mxu0 %v794
      %1527 = vmatpush1.bf16.msra.mxu0 %v793
      %1528 = vmatprep.subr.bf16.mxu0 %v826
      %1529 = vmatpush1.bf16.msra.mxu0 %v825
      %1530 = vmatprep.subr.bf16.mxu0 0
      %1531 = vmatpush1.bf16.msra.mxu0 0
      %1532 = vmatprep.subr.bf16.mxu0 0
      %1533 = vmatpush1.bf16.msra.mxu0 0
      %1534 = vmatprep.subr.bf16.mxu0 0
      %1535 = vmatpush1.bf16.msra.mxu0 0
      %1536 = vmatprep.subr.bf16.mxu0 0
      %1537 = vmatpush1.bf16.msra.mxu0 0
      %1538 = vmatprep.subr.bf16.mxu0 0
      %1539 = vmatpush1.bf16.msra.mxu0 0
      %1540 = vmatprep.subr.bf16.mxu0 0
      %1541 = vmatpush1.bf16.msra.mxu0 0
      %1542 = vmatprep.subr.bf16.mxu0 0
      %1543 = vmatpush1.bf16.msra.mxu0 0
      %1544 = vmatprep.subr.bf16.mxu0 0
      %1545 = vmatpush1.bf16.msra.mxu0 0
      %1546 = vmatprep.subr.bf16.mxu0 0
      %1547 = vmatpush1.bf16.msra.mxu0 0
      %1548 = vmatprep.subr.bf16.mxu0 0
      %1549 = vmatpush1.bf16.msra.mxu0 0
      %1550 = vmatprep.subr.bf16.mxu0 0
      %1551 = vmatpush1.bf16.msra.mxu0 0
      %1552 = vmatprep.subr.bf16.mxu0 0
      %1553 = vmatpush1.bf16.msra.mxu0 0
      %1554 = vmatprep.mubr.bf16.mxu0 0
      %1555 = vmatmul.mubr.bf16.gmra.mrb[0].mxu0 %v961
      %v1556 = vpop.f32.mrb[0].mxu0
      %v1557 = vadd.f32 %v307, %v1556
      %v1558 = vpop.f32.mrb[0].mxu0
      %v1559 = vadd.f32 %v307, %v1558
      %v1560 = vpop.f32.mrb[0].mxu0
      %v1561 = vadd.f32 %v312, %v1560
      %v1562 = vpop.f32.mrb[0].mxu0
      %v1563 = vadd.f32 %v312, %v1562
      %1564 = vdwg.mxu0
      %1565 = vmatprep.subr.bf16.mxu0 %v732
      %1566 = vmatpush1.bf16.msra.mxu0 %v731
      %1567 = vmatprep.subr.bf16.mxu0 %v764
      %1568 = vmatpush1.bf16.msra.mxu0 %v763
      %1569 = vmatprep.subr.bf16.mxu0 %v796
      %1570 = vmatpush1.bf16.msra.mxu0 %v795
      %1571 = vmatprep.subr.bf16.mxu0 %v828
      %1572 = vmatpush1.bf16.msra.mxu0 %v827
      %1573 = vmatprep.subr.bf16.mxu0 0
      %1574 = vmatpush1.bf16.msra.mxu0 0
      %1575 = vmatprep.subr.bf16.mxu0 0
      %1576 = vmatpush1.bf16.msra.mxu0 0
      %1577 = vmatprep.subr.bf16.mxu0 0
      %1578 = vmatpush1.bf16.msra.mxu0 0
      %1579 = vmatprep.subr.bf16.mxu0 0
      %1580 = vmatpush1.bf16.msra.mxu0 0
      %1581 = vmatprep.subr.bf16.mxu0 0
      %1582 = vmatpush1.bf16.msra.mxu0 0
      %1583 = vmatprep.subr.bf16.mxu0 0
      %1584 = vmatpush1.bf16.msra.mxu0 0
      %1585 = vmatprep.subr.bf16.mxu0 0
      %1586 = vmatpush1.bf16.msra.mxu0 0
      %1587 = vmatprep.subr.bf16.mxu0 0
      %1588 = vmatpush1.bf16.msra.mxu0 0
      %1589 = vmatprep.subr.bf16.mxu0 0
      %1590 = vmatpush1.bf16.msra.mxu0 0
      %1591 = vmatprep.subr.bf16.mxu0 0
      %1592 = vmatpush1.bf16.msra.mxu0 0
      %1593 = vmatprep.subr.bf16.mxu0 0
      %1594 = vmatpush1.bf16.msra.mxu0 0
      %1595 = vmatprep.subr.bf16.mxu0 0
      %1596 = vmatpush1.bf16.msra.mxu0 0
      %1597 = vmatprep.mubr.bf16.mxu0 0
      %1598 = vmatmul.mubr.bf16.gmra.mrb[0].mxu0 %v961
      %v1599 = vpop.f32.mrb[0].mxu0
      %v1600 = vadd.f32 %v307, %v1599
      %v1601 = vpop.f32.mrb[0].mxu0
      %v1602 = vadd.f32 %v307, %v1601
      %v1603 = vpop.f32.mrb[0].mxu0
      %v1604 = vadd.f32 %v312, %v1603
      %v1605 = vpop.f32.mrb[0].mxu0
      %v1606 = vadd.f32 %v312, %v1605
      %1607 = vdwg.mxu0
      %1608 = vmatprep.subr.bf16.mxu0 %v734
      %1609 = vmatpush1.bf16.msra.mxu0 %v733
      %1610 = vmatprep.subr.bf16.mxu0 %v766
      %1611 = vmatpush1.bf16.msra.mxu0 %v765
      %1612 = vmatprep.subr.bf16.mxu0 %v798
      %1613 = vmatpush1.bf16.msra.mxu0 %v797
      %1614 = vmatprep.subr.bf16.mxu0 %v830
      %1615 = vmatpush1.bf16.msra.mxu0 %v829
      %1616 = vmatprep.subr.bf16.mxu0 0
      %1617 = vmatpush1.bf16.msra.mxu0 0
      %1618 = vmatprep.subr.bf16.mxu0 0
      %1619 = vmatpush1.bf16.msra.mxu0 0
      %1620 = vmatprep.subr.bf16.mxu0 0
      %1621 = vmatpush1.bf16.msra.mxu0 0
      %1622 = vmatprep.subr.bf16.mxu0 0
      %1623 = vmatpush1.bf16.msra.mxu0 0
      %1624 = vmatprep.subr.bf16.mxu0 0
      %1625 = vmatpush1.bf16.msra.mxu0 0
      %1626 = vmatprep.subr.bf16.mxu0 0
      %1627 = vmatpush1.bf16.msra.mxu0 0
      %1628 = vmatprep.subr.bf16.mxu0 0
      %1629 = vmatpush1.bf16.msra.mxu0 0
      %1630 = vmatprep.subr.bf16.mxu0 0
      %1631 = vmatpush1.bf16.msra.mxu0 0
      %1632 = vmatprep.subr.bf16.mxu0 0
      %1633 = vmatpush1.bf16.msra.mxu0 0
      %1634 = vmatprep.subr.bf16.mxu0 0
      %1635 = vmatpush1.bf16.msra.mxu0 0
      %1636 = vmatprep.subr.bf16.mxu0 0
      %1637 = vmatpush1.bf16.msra.mxu0 0
      %1638 = vmatprep.subr.bf16.mxu0 0
      %1639 = vmatpush1.bf16.msra.mxu0 0
      %1640 = vmatprep.mubr.bf16.mxu0 0
      %1641 = vmatmul.mubr.bf16.gmra.mrb[0].mxu0 %v961
      %v1642 = vpop.f32.mrb[0].mxu0
      %v1643 = vadd.f32 %v307, %v1642
      %v1644 = vpop.f32.mrb[0].mxu0
      %v1645 = vadd.f32 %v307, %v1644
      %v1646 = vpop.f32.mrb[0].mxu0
      %v1647 = vadd.f32 %v312, %v1646
      %v1648 = vpop.f32.mrb[0].mxu0
      %v1649 = vadd.f32 %v312, %v1648
      %1650 = vdwg.mxu0
      %v1651 = vmax.f32 %v998, 0.0
      %v1652 = vmax.f32 %v1000, 0.0
      %v1653 = vmax.f32 %v1041, 0.0
      %v1654 = vmax.f32 %v1043, 0.0
      %v1655 = vmax.f32 %v1084, 0.0
      %v1656 = vmax.f32 %v1086, 0.0
      %v1657 = vmax.f32 %v1127, 0.0
      %v1658 = vmax.f32 %v1129, 0.0
      %v1659 = vmax.f32 %v1170, 0.0
      %v1660 = vmax.f32 %v1172, 0.0
      %v1661 = vmax.f32 %v1213, 0.0
      %v1662 = vmax.f32 %v1215, 0.0
      %v1663 = vmax.f32 %v1256, 0.0
      %v1664 = vmax.f32 %v1258, 0.0
      %v1665 = vmax.f32 %v1299, 0.0
      %v1666 = vmax.f32 %v1301, 0.0
      %v1667 = vmax.f32 %v1342, 0.0
      %v1668 = vmax.f32 %v1344, 0.0
      %v1669 = vmax.f32 %v1385, 0.0
      %v1670 = vmax.f32 %v1387, 0.0
      %v1671 = vmax.f32 %v1428, 0.0
      %v1672 = vmax.f32 %v1430, 0.0
      %v1673 = vmax.f32 %v1471, 0.0
      %v1674 = vmax.f32 %v1473, 0.0
      %v1675 = vmax.f32 %v1514, 0.0
      %v1676 = vmax.f32 %v1516, 0.0
      %v1677 = vmax.f32 %v1557, 0.0
      %v1678 = vmax.f32 %v1559, 0.0
      %v1679 = vmax.f32 %v1600, 0.0
      %v1680 = vmax.f32 %v1602, 0.0
      %v1681 = vmax.f32 %v1643, 0.0
      %v1682 = vmax.f32 %v1645, 0.0
      %v1683 = vmax.f32 %v1002, 0.0
      %v1684 = vmax.f32 %v1004, 0.0
      %v1685 = vmax.f32 %v1045, 0.0
      %v1686 = vmax.f32 %v1047, 0.0
      %v1687 = vmax.f32 %v1088, 0.0
      %v1688 = vmax.f32 %v1090, 0.0
      %v1689 = vmax.f32 %v1131, 0.0
      %v1690 = vmax.f32 %v1133, 0.0
      %v1691 = vmax.f32 %v1174, 0.0
      %v1692 = vmax.f32 %v1176, 0.0
      %v1693 = vmax.f32 %v1217, 0.0
      %v1694 = vmax.f32 %v1219, 0.0
      %v1695 = vmax.f32 %v1260, 0.0
      %v1696 = vmax.f32 %v1262, 0.0
      %v1697 = vmax.f32 %v1303, 0.0
      %v1698 = vmax.f32 %v1305, 0.0
      %v1699 = vmax.f32 %v1346, 0.0
      %v1700 = vmax.f32 %v1348, 0.0
      %v1701 = vmax.f32 %v1389, 0.0
      %v1702 = vmax.f32 %v1391, 0.0
      %v1703 = vmax.f32 %v1432, 0.0
      %v1704 = vmax.f32 %v1434, 0.0
      %v1705 = vmax.f32 %v1475, 0.0
      %v1706 = vmax.f32 %v1477, 0.0
      %v1707 = vmax.f32 %v1518, 0.0
      %v1708 = vmax.f32 %v1520, 0.0
      %v1709 = vmax.f32 %v1561, 0.0
      %v1710 = vmax.f32 %v1563, 0.0
      %v1711 = vmax.f32 %v1604, 0.0
      %v1712 = vmax.f32 %v1606, 0.0
      %v1713 = vmax.f32 %v1647, 0.0
      %v1714 = vmax.f32 %v1649, 0.0
      %v1715 = vmax.f32 %v1651, %v1659
      %v1716 = vmax.f32 %v1652, %v1660
      %v1717 = vmax.f32 %v1653, %v1661
      %v1718 = vmax.f32 %v1654, %v1662
      %v1719 = vmax.f32 %v1655, %v1663
      %v1720 = vmax.f32 %v1656, %v1664
      %v1721 = vmax.f32 %v1657, %v1665
      %v1722 = vmax.f32 %v1658, %v1666
      %v1723 = vmax.f32 %v1683, %v1691
      %v1724 = vmax.f32 %v1684, %v1692
      %v1725 = vmax.f32 %v1685, %v1693
      %v1726 = vmax.f32 %v1686, %v1694
      %v1727 = vmax.f32 %v1687, %v1695
      %v1728 = vmax.f32 %v1688, %v1696
      %v1729 = vmax.f32 %v1689, %v1697
      %v1730 = vmax.f32 %v1690, %v1698
      %v1731 = vmax.f32 %v1715, %v1667
      %v1732 = vmax.f32 %v1716, %v1668
      %v1733 = vmax.f32 %v1717, %v1669
      %v1734 = vmax.f32 %v1718, %v1670
      %v1735 = vmax.f32 %v1719, %v1671
      %v1736 = vmax.f32 %v1720, %v1672
      %v1737 = vmax.f32 %v1721, %v1673
      %v1738 = vmax.f32 %v1722, %v1674
      %v1739 = vmax.f32 %v1723, %v1699
      %v1740 = vmax.f32 %v1724, %v1700
      %v1741 = vmax.f32 %v1725, %v1701
      %v1742 = vmax.f32 %v1726, %v1702
      %v1743 = vmax.f32 %v1727, %v1703
      %v1744 = vmax.f32 %v1728, %v1704
      %v1745 = vmax.f32 %v1729, %v1705
      %v1746 = vmax.f32 %v1730, %v1706
      %v1747 = vmax.f32 %v1731, %v1675
      %v1748 = vmax.f32 %v1732, %v1676
      %v1749 = vmax.f32 %v1733, %v1677
      %v1750 = vmax.f32 %v1734, %v1678
      %v1751 = vmax.f32 %v1735, %v1679
      %v1752 = vmax.f32 %v1736, %v1680
      %v1753 = vmax.f32 %v1737, %v1681
      %v1754 = vmax.f32 %v1738, %v1682
      %v1755 = vmax.f32 %v1739, %v1707
      %v1756 = vmax.f32 %v1740, %v1708
      %v1757 = vmax.f32 %v1741, %v1709
      %v1758 = vmax.f32 %v1742, %v1710
      %v1759 = vmax.f32 %v1743, %v1711
      %v1760 = vmax.f32 %v1744, %v1712
      %v1761 = vmax.f32 %v1745, %v1713
      %v1762 = vmax.f32 %v1746, %v1714
      %1763 = vst [vmem:[%s170] sm:$0xff] %v1747
      %1764 = vst [vmem:[%s170 + $0x8] sm:$0xff] %v1748
      %1765 = vst [vmem:[%s170 + $0x10] sm:$0xff] %v1749
      %1766 = vst [vmem:[%s170 + $0x18] sm:$0xff] %v1750
      %1767 = vst [vmem:[%s170 + $0x20] sm:$0xff] %v1751
      %1768 = vst [vmem:[%s170 + $0x28] sm:$0xff] %v1752
      %1769 = vst [vmem:[%s170 + $0x30] sm:$0xff] %v1753
      %1770 = vst [vmem:[%s170 + $0x38] sm:$0xff] %v1754
      %1771 = vst [vmem:[%s170 + $0x40] sm:$0xf] %v1755
      %1772 = vst [vmem:[%s170 + $0x48] sm:$0xf] %v1756
      %1773 = vst [vmem:[%s170 + $0x50] sm:$0xf] %v1757
      %1774 = vst [vmem:[%s170 + $0x58] sm:$0xf] %v1758
      %1775 = vst [vmem:[%s170 + $0x60] sm:$0xf] %v1759
      %1776 = vst [vmem:[%s170 + $0x68] sm:$0xf] %v1760
      %1777 = vst [vmem:[%s170 + $0x70] sm:$0xf] %v1761
      %1778 = vst [vmem:[%s170 + $0x78] sm:$0xf] %v1762
      %p1779 = scmp.lt.s32.totalorder %s14, 1
      %s1780 = scalar_select %p1779, %s14, 1
      %s1781 = smul.addr %s1780, 16
      %s1782 = smul.addr %s1781, 8
      %s1783 = scalar_lea.vmem %s3, %s1782
      // Predicated region
      $region33: #{forward.5} parent=31 // pred_check
        %p1784 = pneg %p100
      $region34: #{forward.5} parent=31 // pred_check_branch
        %1786 = sbr.rel (%p1784) target = $region36
      $region35: #{forward.5} parent=31 // pred_region
        _
      $region36: #{forward.5} parent=31 // pred_fallthru
        _
    $region32: #{forward.5} parent=5 // pred_fallthru
      _
    %p1787 = scmp.le.s32.totalorder 2, %s9
    // Predicated region
    $region37: #{forward.5} parent=5 // pred_check
      %p1788 = pneg %p1787
    $region38: #{forward.5} parent=5 // pred_check_branch
      %1790 = sbr.rel (%p1788) target = $region40
    $region39: #{forward.5} parent=5 // pred_region
      %s1791 = ssub.s32 %s9, 2
      // Predicated region
      $region41: #{forward.5} parent=39 // pred_check
        %p1792 = pneg %p106
      $region42: #{forward.5} parent=39 // pred_check_branch
        %1794 = sbr.rel (%p1792) target = $region44
      $region43: #{forward.5} parent=39 // pred_region
        %p1795 = scmp.lt.s32.totalorder %s15, 1
        %s1796 = scalar_select %p1795, %s15, 1
        %s1797 = smul.addr %s1796, 16
        %s1798 = smul.addr %s1797, 8
        %s1799 = scalar_lea.vmem %s3, %s1798
      $region44: #{forward.5} parent=39 // pred_fallthru
        _
    $region40: #{forward.5} parent=5 // pred_fallthru
      _
  $region6: #{forward.5} parent=0 // loop_footer
    %s13 = sadd.s32 1, %s9
  $region7: #{forward.5} parent=0 // loop_footer_branch
    %8 = sbr.rel target = $region3
  $region8: #{forward.5} parent=0 // loop_exit
    _

// kernel: forward.6
$region0: #{forward.6}
  #allocation0 [shape = 'u32[]', space=smem, size = 0x4, offset = 0x4, fixed_abs, tag = 'smem constant byte address 0x4 - core index']
  #allocation1 [shape = 'u32[144,128]{1,0:T(1,128)}', space=vmem, size = 0x12000, scoped, tag = 'internal scratch']
  %s0 = inlined_call_operand.vmem [shape: bf16[2,112,1024], index: 0, kind: input, shape index: {}]
  %s1 = inlined_call_operand.vmem [shape: bf16[16,112], index: 1, kind: input, shape index: {}]
  %s2 = inlined_call_operand.vmem [shape: f32[16,1], index: 2, kind: input, shape index: {}]
  %s3 = inlined_call_operand.vmem [shape: f32[2,16,256], index: 3, kind: output, shape index: {}]
  %s4 = sld [smem:[#allocation0]]
  $region45: #{forward.6} parent=0
    _
  %s6 = ssub.s32 1, %s4
  %s7 = scalar_select 0, %s6, %s4
  loop: start=0, step=1, limit=4
  $region2: #{forward.6} parent=0 // loop_pre_header
    _
  $region3: #{forward.6} parent=0 // loop_header
    %s9 = sphi 0, %s13
    %p10 = scmp.ge.s32.totalorder %s9, 4
    %s19 = sphi 0, %s21
    %s22 = sphi 0, %s19
    %s23 = sphi 0, %s22
    %s39 = sphi 0, %s23
    %s43 = sphi 0, %s43
    %s45 = sphi 0, %s43
    %s46 = sphi 0, %s45
    %s60 = sphi 0, %s46
    %s64 = sphi 0, %s64
    %s66 = sphi 0, %s64
    %s67 = sphi 0, %s66
    %s81 = sphi 0, %s67
    %s87 = sphi 0, %s89
    %s90 = sphi 0, %s87
    %s91 = sphi 0, %s90
    %s107 = sphi 0, %s91
  $region4: #{forward.6} parent=0 // loop_header_branch
    %12 = sbr.rel (%p10) target = $region8
  $region5: #{forward.6} parent=0 // loop_body
    %s14 = ssub.s32 %s9, 1
    %s15 = ssub.s32 %s9, 2
    %s16 = sadd.s32 %s9, 1
    %s17 = ssub.s32 %s9, %s16
    %p18 = scmp.eq.s32.totalorder %s17, 0
    %s20 = sadd.s32 %s19, 1
    %s21 = scalar_select %p18, %s19, %s20
    %p24 = pneg %p18
    %p25 = scmp.eq.s32.totalorder %s9, 1
    %p26 = por %p24, %p25
    %p27 = scmp.ne.s32.totalorder %s19, %s22
    %p28 = scmp.eq.s32.totalorder %s9, 0
    %p29 = por %p27, %p28
    %p30 = scmp.ne.s32.totalorder %s19, %s22
    %p31 = scmp.eq.s32.totalorder %s14, 1
    %p32 = por %p30, %p31
    %p33 = scmp.ne.s32.totalorder %s22, %s23
    %p34 = scmp.eq.s32.totalorder %s14, 0
    %p35 = por %p33, %p34
    %p36 = scmp.ne.s32.totalorder %s22, %s23
    %p37 = scmp.eq.s32.totalorder %s15, 1
    %p38 = por %p36, %p37
    %p40 = scmp.ne.s32.totalorder %s23, %s39
    %p41 = scmp.eq.s32.totalorder %s15, 0
    %p42 = por %p40, %p41
    %s44 = sadd.s32 %s43, 1
    %p47 = scmp.eq.s32.totalorder %s9, 1
    %p48 = scmp.ne.s32.totalorder %s43, %s45
    %p49 = scmp.eq.s32.totalorder %s9, 0
    %p50 = por %p48, %p49
    %p51 = scmp.ne.s32.totalorder %s43, %s45
    %p52 = scmp.eq.s32.totalorder %s14, 1
    %p53 = por %p51, %p52
    %p54 = scmp.ne.s32.totalorder %s45, %s46
    %p55 = scmp.eq.s32.totalorder %s14, 0
    %p56 = por %p54, %p55
    %p57 = scmp.ne.s32.totalorder %s45, %s46
    %p58 = scmp.eq.s32.totalorder %s15, 1
    %p59 = por %p57, %p58
    %p61 = scmp.ne.s32.totalorder %s46, %s60
    %p62 = scmp.eq.s32.totalorder %s15, 0
    %p63 = por %p61, %p62
    %s65 = sadd.s32 %s64, 1
    %p68 = scmp.eq.s32.totalorder %s9, 1
    %p69 = scmp.ne.s32.totalorder %s64, %s66
    %p70 = scmp.eq.s32.totalorder %s9, 0
    %p71 = por %p69, %p70
    %p72 = scmp.ne.s32.totalorder %s64, %s66
    %p73 = scmp.eq.s32.totalorder %s14, 1
    %p74 = por %p72, %p73
    %p75 = scmp.ne.s32.totalorder %s66, %s67
    %p76 = scmp.eq.s32.totalorder %s14, 0
    %p77 = por %p75, %p76
    %p78 = scmp.ne.s32.totalorder %s66, %s67
    %p79 = scmp.eq.s32.totalorder %s15, 1
    %p80 = por %p78, %p79
    %p82 = scmp.ne.s32.totalorder %s67, %s81
    %p83 = scmp.eq.s32.totalorder %s15, 0
    %p84 = por %p82, %p83
    %s85 = ssub.s32 %s9, %s16
    %p86 = scmp.eq.s32.totalorder %s85, 0
    %s88 = sadd.s32 %s87, 1
    %s89 = scalar_select %p86, %s87, %s88
    %p92 = pneg %p86
    %p93 = scmp.eq.s32.totalorder %s9, 1
    %p94 = por %p92, %p93
    %p95 = scmp.ne.s32.totalorder %s87, %s90
    %p96 = scmp.eq.s32.totalorder %s9, 0
    %p97 = por %p95, %p96
    %p98 = scmp.ne.s32.totalorder %s87, %s90
    %p99 = scmp.eq.s32.totalorder %s14, 1
    %p100 = por %p98, %p99
    %p101 = scmp.ne.s32.totalorder %s90, %s91
    %p102 = scmp.eq.s32.totalorder %s14, 0
    %p103 = por %p101, %p102
    %p104 = scmp.ne.s32.totalorder %s90, %s91
    %p105 = scmp.eq.s32.totalorder %s15, 1
    %p106 = por %p104, %p105
    %p108 = scmp.ne.s32.totalorder %s91, %s107
    %p109 = scmp.eq.s32.totalorder %s15, 0
    %p110 = por %p108, %p109
    %p111 = scmp.le.s32.totalorder 1, %s9
    %p112 = scmp.lt.s32.totalorder %s9, 3
    %p113 = pnand %p111, %p112
    %p114 = pneg %p113
    // Predicated region
    $region9: #{forward.6} parent=5 // pred_check
      _
    $region10: #{forward.6} parent=5 // pred_check_branch
      %116 = sbr.rel (%p113) target = $region12
    $region11: #{forward.6} parent=5 // pred_region
      %s117 = ssub.s32 %s9, 1
      // Predicated region
      $region13: #{forward.6} parent=11 // pred_check
        %p118 = pneg %p56
      $region14: #{forward.6} parent=11 // pred_check_branch
        %120 = sbr.rel (%p118) target = $region16
      $region15: #{forward.6} parent=11 // pred_region
        _
      $region16: #{forward.6} parent=11 // pred_fallthru
        _
      // Predicated region
      $region17: #{forward.6} parent=11 // pred_check
        %p121 = pneg %p77
      $region18: #{forward.6} parent=11 // pred_check_branch
        %123 = sbr.rel (%p121) target = $region20
      $region19: #{forward.6} parent=11 // pred_region
        _
      $region20: #{forward.6} parent=11 // pred_fallthru
        _
    $region12: #{forward.6} parent=5 // pred_fallthru
      _
    %p124 = scmp.lt.s32.totalorder %s9, 2
    // Predicated region
    $region21: #{forward.6} parent=5 // pred_check
      %p125 = pneg %p124
    $region22: #{forward.6} parent=5 // pred_check_branch
      %127 = sbr.rel (%p125) target = $region24
    $region23: #{forward.6} parent=5 // pred_region
      // Predicated region
      $region25: #{forward.6} parent=23 // pred_check
        %p128 = pneg %p29
      $region26: #{forward.6} parent=23 // pred_check_branch
        %130 = sbr.rel (%p128) target = $region28
      $region27: #{forward.6} parent=23 // pred_region
        %p131 = scmp.lt.s32.totalorder %s9, 1
        %s132 = scalar_select %p131, %s9, 1
        %s133 = smul.addr %s132, 112
        %s134 = smul.addr %s133, 4
        %s135 = scalar_lea.vmem %s0, %s134
      $region28: #{forward.6} parent=23 // pred_fallthru
        _
    $region24: #{forward.6} parent=5 // pred_fallthru
      _
    %p136 = scmp.le.s32.totalorder 1, %s9
    %p137 = scmp.lt.s32.totalorder %s9, 3
    %p138 = pnand %p136, %p137
    %p139 = pneg %p138
    // Predicated region
    $region29: #{forward.6} parent=5 // pred_check
      _
    $region30: #{forward.6} parent=5 // pred_check_branch
      %141 = sbr.rel (%p138) target = $region32
    $region31: #{forward.6} parent=5 // pred_region
      %s142 = ssub.s32 %s9, 1
      %p143 = scmp.lt.s32.totalorder %s14, 1
      %s144 = scalar_select %p143, %s14, 1
      %s145 = smul.addr %s144, 112
      %s146 = smul.addr %s145, 4
      %s147 = scalar_lea.vmem %s0, %s146
      %p148 = pneg %p35
      %p149 = pneg %p32
      %p150 = pneg %p56
      %p151 = pneg %p53
      %p152 = pneg %p77
      %p153 = pneg %p74
      %p154 = pneg %p103
      %p155 = pneg %p100
      %p156 = scmp.lt.s32.totalorder %s14, 1
      %s157 = scalar_select %p156, %s14, 1
      %s158 = smul.addr %s157, 4
      %s159 = smul.addr %s158, 8
      %s160 = scalar_lea.vmem %s3, %s159
      %p161 = scmp.lt.s32.totalorder %s14, 1
      %s162 = scalar_select %p161, %s14, 1
      %s163 = smul.addr %s162, 112
      %s164 = smul.addr %s163, 4
      %s165 = scalar_lea.vmem %s0, %s164
      %p166 = scmp.lt.s32.totalorder %s14, 1
      %s167 = scalar_select %p166, %s14, 1
      %s168 = smul.addr %s167, 4
      %s169 = smul.addr %s168, 8
      %s170 = scalar_lea.vmem %s3, %s169
      %v172 = vld [vmem:[%s1] sm:$0xf]
      %v173 = vld [vmem:[%s1 + $0x4] sm:$0xf]
      %v174 = vld [vmem:[%s165] sm:$0xff]
      %v175 = vld [vmem:[%s165 + $0x8] sm:$0xff]
      %v176 = vld [vmem:[%s165 + $0x10] sm:$0xff]
      %v177 = vld [vmem:[%s165 + $0x18] sm:$0xff]
      %v178 = vld [vmem:[%s165 + $0x20] sm:$0xff]
      %v179 = vld [vmem:[%s165 + $0x28] sm:$0xff]
      %v180 = vld [vmem:[%s165 + $0x30] sm:$0xff]
      %v181 = vld [vmem:[%s165 + $0x38] sm:$0xff]
      %v182 = vld [vmem:[%s165 + $0x40] sm:$0xff]
      %v183 = vld [vmem:[%s165 + $0x48] sm:$0xff]
      %v184 = vld [vmem:[%s165 + $0x50] sm:$0xff]
      %v185 = vld [vmem:[%s165 + $0x58] sm:$0xff]
      %v186 = vld [vmem:[%s165 + $0x60] sm:$0xff]
      %v187 = vld [vmem:[%s165 + $0x68] sm:$0xff]
      %v188 = vld [vmem:[%s165 + $0x70] sm:$0xff]
      %v189 = vld [vmem:[%s165 + $0x78] sm:$0xff]
      %v190 = vld [vmem:[%s165 + $0x80] sm:$0xff]
      %v191 = vld [vmem:[%s165 + $0x88] sm:$0xff]
      %v192 = vld [vmem:[%s165 + $0x90] sm:$0xff]
      %v193 = vld [vmem:[%s165 + $0x98] sm:$0xff]
      %v194 = vld [vmem:[%s165 + $0xa0] sm:$0xff]
      %v195 = vld [vmem:[%s165 + $0xa8] sm:$0xff]
      %v196 = vld [vmem:[%s165 + $0xb0] sm:$0xff]
      %v197 = vld [vmem:[%s165 + $0xb8] sm:$0xff]
      %v198 = vld [vmem:[%s165 + $0xc0] sm:$0xff]
      %v199 = vld [vmem:[%s165 + $0xc8] sm:$0xff]
      %v200 = vld [vmem:[%s165 + $0xd0] sm:$0xff]
      %v201 = vld [vmem:[%s165 + $0xd8] sm:$0xff]
      %v202 = vld [vmem:[%s165 + $0xe0] sm:$0xff]
      %v203 = vld [vmem:[%s165 + $0xe8] sm:$0xff]
      %v204 = vld [vmem:[%s165 + $0xf0] sm:$0xff]
      %v205 = vld [vmem:[%s165 + $0xf8] sm:$0xff]
      %v206 = vld [vmem:[%s165 + $0x100] sm:$0xff]
      %v207 = vld [vmem:[%s165 + $0x108] sm:$0xff]
      %v208 = vld [vmem:[%s165 + $0x110] sm:$0xff]
      %v209 = vld [vmem:[%s165 + $0x118] sm:$0xff]
      %v210 = vld [vmem:[%s165 + $0x120] sm:$0xff]
      %v211 = vld [vmem:[%s165 + $0x128] sm:$0xff]
      %v212 = vld [vmem:[%s165 + $0x130] sm:$0xff]
      %v213 = vld [vmem:[%s165 + $0x138] sm:$0xff]
      %v214 = vld [vmem:[%s165 + $0x140] sm:$0xff]
      %v215 = vld [vmem:[%s165 + $0x148] sm:$0xff]
      %v216 = vld [vmem:[%s165 + $0x150] sm:$0xff]
      %v217 = vld [vmem:[%s165 + $0x158] sm:$0xff]
      %v218 = vld [vmem:[%s165 + $0x160] sm:$0xff]
      %v219 = vld [vmem:[%s165 + $0x168] sm:$0xff]
      %v220 = vld [vmem:[%s165 + $0x170] sm:$0xff]
      %v221 = vld [vmem:[%s165 + $0x178] sm:$0xff]
      %v222 = vld [vmem:[%s165 + $0x180] sm:$0xff]
      %v223 = vld [vmem:[%s165 + $0x188] sm:$0xff]
      %v224 = vld [vmem:[%s165 + $0x190] sm:$0xff]
      %v225 = vld [vmem:[%s165 + $0x198] sm:$0xff]
      %v226 = vld [vmem:[%s165 + $0x1a0] sm:$0xff]
      %v227 = vld [vmem:[%s165 + $0x1a8] sm:$0xff]
      %v228 = vld [vmem:[%s165 + $0x1b0] sm:$0xff]
      %v229 = vld [vmem:[%s165 + $0x1b8] sm:$0xff]
      %v230 = vld [vmem:[%s2] sm:$0xff]
      %v231 = vld [vmem:[%s2 + $0x8] sm:$0xff]
      %233 = vset.pattern.permute.xlu0 0
      %234 = vperm.xlu0 %233, %v230
      %v235 = vpop.permute.xlu0 %234
      %238 = vset.pattern.permute.xlu0 0
      %239 = vperm.xlu0 %238, %v231
      %v240 = vpop.permute.xlu0 %239
      %v244 = vunpack.c.l.b16 %v172
      %v245 = vunpack.c.l.b16 %v173
      %v246 = vpack.c.b16 %v245, %v244
      %v303 = vunpack.c.l.b16 %v174
      %v304 = vunpack.c.h.b16 %v174
      %v305 = vunpack.c.l.b16 %v175
      %v306 = vunpack.c.h.b16 %v175
      %v307 = vunpack.c.l.b16 %v176
      %v308 = vunpack.c.h.b16 %v176
      %v309 = vunpack.c.l.b16 %v177
      %v310 = vunpack.c.h.b16 %v177
      %v311 = vunpack.c.l.b16 %v178
      %v312 = vunpack.c.h.b16 %v178
      %v313 = vunpack.c.l.b16 %v179
      %v314 = vunpack.c.h.b16 %v179
      %v315 = vunpack.c.l.b16 %v180
      %v316 = vunpack.c.h.b16 %v180
      %v317 = vunpack.c.l.b16 %v181
      %v318 = vunpack.c.h.b16 %v181
      %v319 = vunpack.c.l.b16 %v182
      %v320 = vunpack.c.h.b16 %v182
      %v321 = vunpack.c.l.b16 %v183
      %v322 = vunpack.c.h.b16 %v183
      %v323 = vunpack.c.l.b16 %v184
      %v324 = vunpack.c.h.b16 %v184
      %v325 = vunpack.c.l.b16 %v185
      %v326 = vunpack.c.h.b16 %v185
      %v327 = vunpack.c.l.b16 %v186
      %v328 = vunpack.c.h.b16 %v186
      %v329 = vunpack.c.l.b16 %v187
      %v330 = vunpack.c.h.b16 %v187
      %v331 = vunpack.c.l.b16 %v188
      %v332 = vunpack.c.h.b16 %v188
      %v333 = vunpack.c.l.b16 %v189
      %v334 = vunpack.c.h.b16 %v189
      %v335 = vunpack.c.l.b16 %v190
      %v336 = vunpack.c.h.b16 %v190
      %v337 = vunpack.c.l.b16 %v191
      %v338 = vunpack.c.h.b16 %v191
      %v339 = vunpack.c.l.b16 %v192
      %v340 = vunpack.c.h.b16 %v192
      %v341 = vunpack.c.l.b16 %v193
      %v342 = vunpack.c.h.b16 %v193
      %v343 = vunpack.c.l.b16 %v194
      %v344 = vunpack.c.h.b16 %v194
      %v345 = vunpack.c.l.b16 %v195
      %v346 = vunpack.c.h.b16 %v195
      %v347 = vunpack.c.l.b16 %v196
      %v348 = vunpack.c.h.b16 %v196
      %v349 = vunpack.c.l.b16 %v197
      %v350 = vunpack.c.h.b16 %v197
      %v351 = vunpack.c.l.b16 %v198
      %v352 = vunpack.c.h.b16 %v198
      %v353 = vunpack.c.l.b16 %v199
      %v354 = vunpack.c.h.b16 %v199
      %v355 = vunpack.c.l.b16 %v200
      %v356 = vunpack.c.h.b16 %v200
      %v357 = vunpack.c.l.b16 %v201
      %v358 = vunpack.c.h.b16 %v201
      %v359 = vunpack.c.l.b16 %v202
      %v360 = vunpack.c.h.b16 %v202
      %v361 = vunpack.c.l.b16 %v203
      %v362 = vunpack.c.h.b16 %v203
      %v363 = vunpack.c.l.b16 %v204
      %v364 = vunpack.c.h.b16 %v204
      %v365 = vunpack.c.l.b16 %v205
      %v366 = vunpack.c.h.b16 %v205
      %v367 = vunpack.c.l.b16 %v206
      %v368 = vunpack.c.h.b16 %v206
      %v369 = vunpack.c.l.b16 %v207
      %v370 = vunpack.c.h.b16 %v207
      %v371 = vunpack.c.l.b16 %v208
      %v372 = vunpack.c.h.b16 %v208
      %v373 = vunpack.c.l.b16 %v209
      %v374 = vunpack.c.h.b16 %v209
      %v375 = vunpack.c.l.b16 %v210
      %v376 = vunpack.c.h.b16 %v210
      %v377 = vunpack.c.l.b16 %v211
      %v378 = vunpack.c.h.b16 %v211
      %v379 = vunpack.c.l.b16 %v212
      %v380 = vunpack.c.h.b16 %v212
      %v381 = vunpack.c.l.b16 %v213
      %v382 = vunpack.c.h.b16 %v213
      %v383 = vunpack.c.l.b16 %v214
      %v384 = vunpack.c.h.b16 %v214
      %v385 = vunpack.c.l.b16 %v215
      %v386 = vunpack.c.h.b16 %v215
      %v387 = vunpack.c.l.b16 %v216
      %v388 = vunpack.c.h.b16 %v216
      %v389 = vunpack.c.l.b16 %v217
      %v390 = vunpack.c.h.b16 %v217
      %v391 = vunpack.c.l.b16 %v218
      %v392 = vunpack.c.h.b16 %v218
      %v393 = vunpack.c.l.b16 %v219
      %v394 = vunpack.c.h.b16 %v219
      %v395 = vunpack.c.l.b16 %v220
      %v396 = vunpack.c.h.b16 %v220
      %v397 = vunpack.c.l.b16 %v221
      %v398 = vunpack.c.h.b16 %v221
      %v399 = vunpack.c.l.b16 %v222
      %v400 = vunpack.c.h.b16 %v222
      %v401 = vunpack.c.l.b16 %v223
      %v402 = vunpack.c.h.b16 %v223
      %v403 = vunpack.c.l.b16 %v224
      %v404 = vunpack.c.h.b16 %v224
      %v405 = vunpack.c.l.b16 %v225
      %v406 = vunpack.c.h.b16 %v225
      %v407 = vunpack.c.l.b16 %v226
      %v408 = vunpack.c.h.b16 %v226
      %v409 = vunpack.c.l.b16 %v227
      %v410 = vunpack.c.h.b16 %v227
      %v411 = vunpack.c.l.b16 %v228
      %v412 = vunpack.c.h.b16 %v228
      %v413 = vunpack.c.l.b16 %v229
      %v414 = vunpack.c.h.b16 %v229
      %v415 = vpack.c.b16 %v311, %v303
      %v416 = vpack.c.b16 %v312, %v304
      %v417 = vpack.c.b16 %v313, %v305
      %v418 = vpack.c.b16 %v314, %v306
      %v419 = vpack.c.b16 %v315, %v307
      %v420 = vpack.c.b16 %v316, %v308
      %v421 = vpack.c.b16 %v317, %v309
      %v422 = vpack.c.b16 %v318, %v310
      %v423 = vpack.c.b16 %v327, %v319
      %v424 = vpack.c.b16 %v328, %v320
      %v425 = vpack.c.b16 %v329, %v321
      %v426 = vpack.c.b16 %v330, %v322
      %v427 = vpack.c.b16 %v331, %v323
      %v428 = vpack.c.b16 %v332, %v324
      %v429 = vpack.c.b16 %v333, %v325
      %v430 = vpack.c.b16 %v334, %v326
      %v431 = vpack.c.b16 %v343, %v335
      %v432 = vpack.c.b16 %v344, %v336
      %v433 = vpack.c.b16 %v345, %v337
      %v434 = vpack.c.b16 %v346, %v338
      %v435 = vpack.c.b16 %v347, %v339
      %v436 = vpack.c.b16 %v348, %v340
      %v437 = vpack.c.b16 %v349, %v341
      %v438 = vpack.c.b16 %v350, %v342
      %v439 = vpack.c.b16 %v359, %v351
      %v440 = vpack.c.b16 %v360, %v352
      %v441 = vpack.c.b16 %v361, %v353
      %v442 = vpack.c.b16 %v362, %v354
      %v443 = vpack.c.b16 %v363, %v355
      %v444 = vpack.c.b16 %v364, %v356
      %v445 = vpack.c.b16 %v365, %v357
      %v446 = vpack.c.b16 %v366, %v358
      %v447 = vpack.c.b16 %v375, %v367
      %v448 = vpack.c.b16 %v376, %v368
      %v449 = vpack.c.b16 %v377, %v369
      %v450 = vpack.c.b16 %v378, %v370
      %v451 = vpack.c.b16 %v379, %v371
      %v452 = vpack.c.b16 %v380, %v372
      %v453 = vpack.c.b16 %v381, %v373
      %v454 = vpack.c.b16 %v382, %v374
      %v455 = vpack.c.b16 %v391, %v383
      %v456 = vpack.c.b16 %v392, %v384
      %v457 = vpack.c.b16 %v393, %v385
      %v458 = vpack.c.b16 %v394, %v386
      %v459 = vpack.c.b16 %v395, %v387
      %v460 = vpack.c.b16 %v396, %v388
      %v461 = vpack.c.b16 %v397, %v389
      %v462 = vpack.c.b16 %v398, %v390
      %v463 = vpack.c.b16 %v407, %v399
      %v464 = vpack.c.b16 %v408, %v400
      %v465 = vpack.c.b16 %v409, %v401
      %v466 = vpack.c.b16 %v410, %v402
      %v467 = vpack.c.b16 %v411, %v403
      %v468 = vpack.c.b16 %v412, %v404
      %v469 = vpack.c.b16 %v413, %v405
      %v470 = vpack.c.b16 %v414, %v406
      %vm527 = vcmask 916480
      %v529 = vsel %vm527, %v246, 0
      %531 = vmatprep.subr.bf16.mxu0 %v416
      %532 = vmatpush1.bf16.msra.mxu0 %v415
      %533 = vmatprep.subr.bf16.mxu0 %v424
      %534 = vmatpush1.bf16.msra.mxu0 %v423
      %535 = vmatprep.subr.bf16.mxu0 %v432
      %536 = vmatpush1.bf16.msra.mxu0 %v431
      %537 = vmatprep.subr.bf16.mxu0 %v440
      %538 = vmatpush1.bf16.msra.mxu0 %v439
      %539 = vmatprep.subr.bf16.mxu0 %v448
      %540 = vmatpush1.bf16.msra.mxu0 %v447
      %541 = vmatprep.subr.bf16.mxu0 %v456
      %542 = vmatpush1.bf16.msra.mxu0 %v455
      %543 = vmatprep.subr.bf16.mxu0 %v464
      %544 = vmatpush1.bf16.msra.mxu0 %v463
      %545 = vmatprep.subr.bf16.mxu0 0
      %546 = vmatpush1.bf16.msra.mxu0 0
      %547 = vmatprep.subr.bf16.mxu0 0
      %548 = vmatpush1.bf16.msra.mxu0 0
      %549 = vmatprep.subr.bf16.mxu0 0
      %550 = vmatpush1.bf16.msra.mxu0 0
      %551 = vmatprep.subr.bf16.mxu0 0
      %552 = vmatpush1.bf16.msra.mxu0 0
      %553 = vmatprep.subr.bf16.mxu0 0
      %554 = vmatpush1.bf16.msra.mxu0 0
      %555 = vmatprep.subr.bf16.mxu0 0
      %556 = vmatpush1.bf16.msra.mxu0 0
      %557 = vmatprep.subr.bf16.mxu0 0
      %558 = vmatpush1.bf16.msra.mxu0 0
      %559 = vmatprep.subr.bf16.mxu0 0
      %560 = vmatpush1.bf16.msra.mxu0 0
      %561 = vmatprep.subr.bf16.mxu0 0
      %562 = vmatpush1.bf16.msra.mxu0 0
      %563 = vmatprep.mubr.bf16.mxu0 0
      %564 = vmatmul.mubr.bf16.gmra.mrb[0].mxu0 %v529
      %v565 = vpop.f32.mrb[0].mxu0
      %v566 = vadd.f32 %v235, %v565
      %v567 = vpop.f32.mrb[0].mxu0
      %v568 = vadd.f32 %v235, %v567
      %v569 = vpop.f32.mrb[0].mxu0
      %v570 = vadd.f32 %v240, %v569
      %v571 = vpop.f32.mrb[0].mxu0
      %v572 = vadd.f32 %v240, %v571
      %573 = vdwg.mxu0
      %574 = vmatprep.subr.bf16.mxu0 %v418
      %575 = vmatpush1.bf16.msra.mxu0 %v417
      %576 = vmatprep.subr.bf16.mxu0 %v426
      %577 = vmatpush1.bf16.msra.mxu0 %v425
      %578 = vmatprep.subr.bf16.mxu0 %v434
      %579 = vmatpush1.bf16.msra.mxu0 %v433
      %580 = vmatprep.subr.bf16.mxu0 %v442
      %581 = vmatpush1.bf16.msra.mxu0 %v441
      %582 = vmatprep.subr.bf16.mxu0 %v450
      %583 = vmatpush1.bf16.msra.mxu0 %v449
      %584 = vmatprep.subr.bf16.mxu0 %v458
      %585 = vmatpush1.bf16.msra.mxu0 %v457
      %586 = vmatprep.subr.bf16.mxu0 %v466
      %587 = vmatpush1.bf16.msra.mxu0 %v465
      %588 = vmatprep.subr.bf16.mxu0 0
      %589 = vmatpush1.bf16.msra.mxu0 0
      %590 = vmatprep.subr.bf16.mxu0 0
      %591 = vmatpush1.bf16.msra.mxu0 0
      %592 = vmatprep.subr.bf16.mxu0 0
      %593 = vmatpush1.bf16.msra.mxu0 0
      %594 = vmatprep.subr.bf16.mxu0 0
      %595 = vmatpush1.bf16.msra.mxu0 0
      %596 = vmatprep.subr.bf16.mxu0 0
      %597 = vmatpush1.bf16.msra.mxu0 0
      %598 = vmatprep.subr.bf16.mxu0 0
      %599 = vmatpush1.bf16.msra.mxu0 0
      %600 = vmatprep.subr.bf16.mxu0 0
      %601 = vmatpush1.bf16.msra.mxu0 0
      %602 = vmatprep.subr.bf16.mxu0 0
      %603 = vmatpush1.bf16.msra.mxu0 0
      %604 = vmatprep.subr.bf16.mxu0 0
      %605 = vmatpush1.bf16.msra.mxu0 0
      %606 = vmatprep.mubr.bf16.mxu0 0
      %607 = vmatmul.mubr.bf16.gmra.mrb[0].mxu0 %v529
      %v608 = vpop.f32.mrb[0].mxu0
      %v609 = vadd.f32 %v235, %v608
      %v610 = vpop.f32.mrb[0].mxu0
      %v611 = vadd.f32 %v235, %v610
      %v612 = vpop.f32.mrb[0].mxu0
      %v613 = vadd.f32 %v240, %v612
      %v614 = vpop.f32.mrb[0].mxu0
      %v615 = vadd.f32 %v240, %v614
      %616 = vdwg.mxu0
      %617 = vmatprep.subr.bf16.mxu0 %v420
      %618 = vmatpush1.bf16.msra.mxu0 %v419
      %619 = vmatprep.subr.bf16.mxu0 %v428
      %620 = vmatpush1.bf16.msra.mxu0 %v427
      %621 = vmatprep.subr.bf16.mxu0 %v436
      %622 = vmatpush1.bf16.msra.mxu0 %v435
      %623 = vmatprep.subr.bf16.mxu0 %v444
      %624 = vmatpush1.bf16.msra.mxu0 %v443
      %625 = vmatprep.subr.bf16.mxu0 %v452
      %626 = vmatpush1.bf16.msra.mxu0 %v451
      %627 = vmatprep.subr.bf16.mxu0 %v460
      %628 = vmatpush1.bf16.msra.mxu0 %v459
      %629 = vmatprep.subr.bf16.mxu0 %v468
      %630 = vmatpush1.bf16.msra.mxu0 %v467
      %631 = vmatprep.subr.bf16.mxu0 0
      %632 = vmatpush1.bf16.msra.mxu0 0
      %633 = vmatprep.subr.bf16.mxu0 0
      %634 = vmatpush1.bf16.msra.mxu0 0
      %635 = vmatprep.subr.bf16.mxu0 0
      %636 = vmatpush1.bf16.msra.mxu0 0
      %637 = vmatprep.subr.bf16.mxu0 0
      %638 = vmatpush1.bf16.msra.mxu0 0
      %639 = vmatprep.subr.bf16.mxu0 0
      %640 = vmatpush1.bf16.msra.mxu0 0
      %641 = vmatprep.subr.bf16.mxu0 0
      %642 = vmatpush1.bf16.msra.mxu0 0
      %643 = vmatprep.subr.bf16.mxu0 0
      %644 = vmatpush1.bf16.msra.mxu0 0
      %645 = vmatprep.subr.bf16.mxu0 0
      %646 = vmatpush1.bf16.msra.mxu0 0
      %647 = vmatprep.subr.bf16.mxu0 0
      %648 = vmatpush1.bf16.msra.mxu0 0
      %649 = vmatprep.mubr.bf16.mxu0 0
      %650 = vmatmul.mubr.bf16.gmra.mrb[0].mxu0 %v529
      %v651 = vpop.f32.mrb[0].mxu0
      %v652 = vadd.f32 %v235, %v651
      %v653 = vpop.f32.mrb[0].mxu0
      %v654 = vadd.f32 %v235, %v653
      %v655 = vpop.f32.mrb[0].mxu0
      %v656 = vadd.f32 %v240, %v655
      %v657 = vpop.f32.mrb[0].mxu0
      %v658 = vadd.f32 %v240, %v657
      %659 = vdwg.mxu0
      %660 = vmatprep.subr.bf16.mxu0 %v422
      %661 = vmatpush1.bf16.msra.mxu0 %v421
      %662 = vmatprep.subr.bf16.mxu0 %v430
      %663 = vmatpush1.bf16.msra.mxu0 %v429
      %664 = vmatprep.subr.bf16.mxu0 %v438
      %665 = vmatpush1.bf16.msra.mxu0 %v437
      %666 = vmatprep.subr.bf16.mxu0 %v446
      %667 = vmatpush1.bf16.msra.mxu0 %v445
      %668 = vmatprep.subr.bf16.mxu0 %v454
      %669 = vmatpush1.bf16.msra.mxu0 %v453
      %670 = vmatprep.subr.bf16.mxu0 %v462
      %671 = vmatpush1.bf16.msra.mxu0 %v461
      %672 = vmatprep.subr.bf16.mxu0 %v470
      %673 = vmatpush1.bf16.msra.mxu0 %v469
      %674 = vmatprep.subr.bf16.mxu0 0
      %675 = vmatpush1.bf16.msra.mxu0 0
      %676 = vmatprep.subr.bf16.mxu0 0
      %677 = vmatpush1.bf16.msra.mxu0 0
      %678 = vmatprep.subr.bf16.mxu0 0
      %679 = vmatpush1.bf16.msra.mxu0 0
      %680 = vmatprep.subr.bf16.mxu0 0
      %681 = vmatpush1.bf16.msra.mxu0 0
      %682 = vmatprep.subr.bf16.mxu0 0
      %683 = vmatpush1.bf16.msra.mxu0 0
      %684 = vmatprep.subr.bf16.mxu0 0
      %685 = vmatpush1.bf16.msra.mxu0 0
      %686 = vmatprep.subr.bf16.mxu0 0
      %687 = vmatpush1.bf16.msra.mxu0 0
      %688 = vmatprep.subr.bf16.mxu0 0
      %689 = vmatpush1.bf16.msra.mxu0 0
      %690 = vmatprep.subr.bf16.mxu0 0
      %691 = vmatpush1.bf16.msra.mxu0 0
      %692 = vmatprep.mubr.bf16.mxu0 0
      %693 = vmatmul.mubr.bf16.gmra.mrb[0].mxu0 %v529
      %v694 = vpop.f32.mrb[0].mxu0
      %v695 = vadd.f32 %v235, %v694
      %v696 = vpop.f32.mrb[0].mxu0
      %v697 = vadd.f32 %v235, %v696
      %v698 = vpop.f32.mrb[0].mxu0
      %v699 = vadd.f32 %v240, %v698
      %v700 = vpop.f32.mrb[0].mxu0
      %v701 = vadd.f32 %v240, %v700
      %702 = vdwg.mxu0
      %v703 = vmax.f32 %v566, 0.0
      %v704 = vmax.f32 %v568, 0.0
      %v705 = vmax.f32 %v609, 0.0
      %v706 = vmax.f32 %v611, 0.0
      %v707 = vmax.f32 %v652, 0.0
      %v708 = vmax.f32 %v654, 0.0
      %v709 = vmax.f32 %v695, 0.0
      %v710 = vmax.f32 %v697, 0.0
      %v711 = vmax.f32 %v570, 0.0
      %v712 = vmax.f32 %v572, 0.0
      %v713 = vmax.f32 %v613, 0.0
      %v714 = vmax.f32 %v615, 0.0
      %v715 = vmax.f32 %v656, 0.0
      %v716 = vmax.f32 %v658, 0.0
      %v717 = vmax.f32 %v699, 0.0
      %v718 = vmax.f32 %v701, 0.0
      %v719 = vmax.f32 %v703, %v705
      %v720 = vmax.f32 %v704, %v706
      %v721 = vmax.f32 %v711, %v713
      %v722 = vmax.f32 %v712, %v714
      %v723 = vmax.f32 %v719, %v707
      %v724 = vmax.f32 %v720, %v708
      %v725 = vmax.f32 %v721, %v715
      %v726 = vmax.f32 %v722, %v716
      %v727 = vmax.f32 %v723, %v709
      %v728 = vmax.f32 %v724, %v710
      %v729 = vmax.f32 %v725, %v717
      %v730 = vmax.f32 %v726, %v718
      %731 = vst [vmem:[%s170] sm:$0xff] %v727
      %732 = vst [vmem:[%s170 + $0x8] sm:$0xff] %v728
      %733 = vst [vmem:[%s170 + $0x10] sm:$0xff] %v729
      %734 = vst [vmem:[%s170 + $0x18] sm:$0xff] %v730
      %p735 = scmp.lt.s32.totalorder %s14, 1
      %s736 = scalar_select %p735, %s14, 1
      %s737 = smul.addr %s736, 4
      %s738 = smul.addr %s737, 8
      %s739 = scalar_lea.vmem %s3, %s738
      // Predicated region
      $region33: #{forward.6} parent=31 // pred_check
        %p740 = pneg %p100
      $region34: #{forward.6} parent=31 // pred_check_branch
        %742 = sbr.rel (%p740) target = $region36
      $region35: #{forward.6} parent=31 // pred_region
        _
      $region36: #{forward.6} parent=31 // pred_fallthru
        _
    $region32: #{forward.6} parent=5 // pred_fallthru
      _
    %p743 = scmp.le.s32.totalorder 2, %s9
    // Predicated region
    $region37: #{forward.6} parent=5 // pred_check
      %p744 = pneg %p743
    $region38: #{forward.6} parent=5 // pred_check_branch
      %746 = sbr.rel (%p744) target = $region40
    $region39: #{forward.6} parent=5 // pred_region
      %s747 = ssub.s32 %s9, 2
      // Predicated region
      $region41: #{forward.6} parent=39 // pred_check
        %p748 = pneg %p106
      $region42: #{forward.6} parent=39 // pred_check_branch
        %750 = sbr.rel (%p748) target = $region44
      $region43: #{forward.6} parent=39 // pred_region
        %p751 = scmp.lt.s32.totalorder %s15, 1
        %s752 = scalar_select %p751, %s15, 1
        %s753 = smul.addr %s752, 4
        %s754 = smul.addr %s753, 8
        %s755 = scalar_lea.vmem %s3, %s754
      $region44: #{forward.6} parent=39 // pred_fallthru
        _
    $region40: #{forward.6} parent=5 // pred_fallthru
      _
  $region6: #{forward.6} parent=0 // loop_footer
    %s13 = sadd.s32 1, %s9
  $region7: #{forward.6} parent=0 // loop_footer_branch
    %8 = sbr.rel target = $region3
  $region8: #{forward.6} parent=0 // loop_exit
    _

// kernel: forward.7
$region0: #{forward.7}
  #allocation0 [shape = 'u32[]', space=smem, size = 0x4, offset = 0x4, fixed_abs, tag = 'smem constant byte address 0x4 - core index']
  #allocation1 [shape = 'u32[144,128]{1,0:T(1,128)}', space=vmem, size = 0x12000, scoped, tag = 'internal scratch']
  %s0 = inlined_call_operand.vmem [shape: bf16[2,4096], index: 0, kind: input, shape index: {}]
  %s1 = inlined_call_operand.vmem [shape: bf16[4096,120], index: 1, kind: input, shape index: {}]
  %s2 = inlined_call_operand.vmem [shape: f32[1,120], index: 2, kind: input, shape index: {}]
  %s3 = inlined_call_operand.vmem [shape: f32[120,84], index: 3, kind: input, shape index: {}]
  %s4 = inlined_call_operand.vmem [shape: f32[1,84], index: 4, kind: input, shape index: {}]
  %s5 = inlined_call_operand.vmem [shape: f32[84,13], index: 5, kind: input, shape index: {}]
  %s6 = inlined_call_operand.vmem [shape: f32[1,13], index: 6, kind: input, shape index: {}]
  %s7 = inlined_call_operand.hbm [shape: f32[2,13], index: 7, kind: output, shape index: {}]
  %s8 = sld [smem:[#allocation0]]
  $region38: #{forward.7} parent=0
    _
  %s10 = ssub.s32 1, %s8
  %s11 = scalar_select 0, %s10, %s8
  $region1: #{forward.7} parent=0
    #allocation2 [shape = 'u8[1024]{0}', space=vmem, size = 0x400, scoped, tag = 'output window, operand 0, single buffered']
    #allocation3 [shape = 's32[1]{0}', space=sflag, size = 0x4, scoped, tag = 'scoped memory for forward.7']
    %12 = vsyncpa [#allocation3], 0
    // Predicated region
    $region2: #{forward.7} parent=1 // pred_check
      _
    $region3: #{forward.7} parent=1 // pred_check_branch
      %14 = sbr.rel (0) target = $region5
    $region4: #{forward.7} parent=1 // pred_region
      _
    $region5: #{forward.7} parent=1 // pred_fallthru
      _
    // Predicated region
    $region6: #{forward.7} parent=1 // pred_check
      _
    $region7: #{forward.7} parent=1 // pred_check_branch
      %16 = sbr.rel (0) target = $region9
    $region8: #{forward.7} parent=1 // pred_region
      _
    $region9: #{forward.7} parent=1 // pred_fallthru
      _
    // Predicated region
    $region10: #{forward.7} parent=1 // pred_check
      _
    $region11: #{forward.7} parent=1 // pred_check_branch
      %18 = sbr.rel (0) target = $region13
    $region12: #{forward.7} parent=1 // pred_region
      _
    $region13: #{forward.7} parent=1 // pred_fallthru
      _
    // Predicated region
    $region14: #{forward.7} parent=1 // pred_check
      _
    $region15: #{forward.7} parent=1 // pred_check_branch
      %20 = sbr.rel (0) target = $region17
    $region16: #{forward.7} parent=1 // pred_region
      _
    $region17: #{forward.7} parent=1 // pred_fallthru
      _
    // Predicated region
    $region18: #{forward.7} parent=1 // pred_check
      _
    $region19: #{forward.7} parent=1 // pred_check_branch
      %22 = sbr.rel (0) target = $region21
    $region20: #{forward.7} parent=1 // pred_region
      _
    $region21: #{forward.7} parent=1 // pred_fallthru
      _
    // Predicated region
    $region22: #{forward.7} parent=1 // pred_check
      _
    $region23: #{forward.7} parent=1 // pred_check_branch
      %24 = sbr.rel (0) target = $region25
    $region24: #{forward.7} parent=1 // pred_region
      _
    $region25: #{forward.7} parent=1 // pred_fallthru
      _
    // Predicated region
    $region26: #{forward.7} parent=1 // pred_check
      _
    $region27: #{forward.7} parent=1 // pred_check_branch
      %26 = sbr.rel (0) target = $region29
    $region28: #{forward.7} parent=1 // pred_region
      _
    $region29: #{forward.7} parent=1 // pred_fallthru
      _
    %v28 = vld [vmem:[%s0] sm:$0xff]
    %v29 = vld [vmem:[%s0 + $0x8] sm:$0xff]
    %v30 = vld [vmem:[%s0 + $0x10] sm:$0xff]
    %v31 = vld [vmem:[%s0 + $0x18] sm:$0xff]
    %v32 = vld [vmem:[%s1] sm:$0xf]
    %v33 = vld [vmem:[%s1 + $0x4] sm:$0xf]
    %v34 = vld [vmem:[%s1 + $0x8] sm:$0xf]
    %v35 = vld [vmem:[%s1 + $0xc] sm:$0xf]
    %v36 = vld [vmem:[%s1 + $0x10] sm:$0xf]
    %v37 = vld [vmem:[%s1 + $0x14] sm:$0xf]
    %v38 = vld [vmem:[%s1 + $0x18] sm:$0xf]
    %v39 = vld [vmem:[%s1 + $0x1c] sm:$0xf]
    %v40 = vld [vmem:[%s1 + $0x20] sm:$0xf]
    %v41 = vld [vmem:[%s1 + $0x24] sm:$0xf]
    %v42 = vld [vmem:[%s1 + $0x28] sm:$0xf]
    %v43 = vld [vmem:[%s1 + $0x2c] sm:$0xf]
    %v44 = vld [vmem:[%s1 + $0x30] sm:$0xf]
    %v45 = vld [vmem:[%s1 + $0x34] sm:$0xf]
    %v46 = vld [vmem:[%s1 + $0x38] sm:$0xf]
    %v47 = vld [vmem:[%s1 + $0x3c] sm:$0xf]
    %v48 = vld [vmem:[%s1 + $0x40] sm:$0xf]
    %v49 = vld [vmem:[%s1 + $0x44] sm:$0xf]
    %v50 = vld [vmem:[%s1 + $0x48] sm:$0xf]
    %v51 = vld [vmem:[%s1 + $0x4c] sm:$0xf]
    %v52 = vld [vmem:[%s1 + $0x50] sm:$0xf]
    %v53 = vld [vmem:[%s1 + $0x54] sm:$0xf]
    %v54 = vld [vmem:[%s1 + $0x58] sm:$0xf]
    %v55 = vld [vmem:[%s1 + $0x5c] sm:$0xf]
    %v56 = vld [vmem:[%s1 + $0x60] sm:$0xf]
    %v57 = vld [vmem:[%s1 + $0x64] sm:$0xf]
    %v58 = vld [vmem:[%s1 + $0x68] sm:$0xf]
    %v59 = vld [vmem:[%s1 + $0x6c] sm:$0xf]
    %v60 = vld [vmem:[%s1 + $0x70] sm:$0xf]
    %v61 = vld [vmem:[%s1 + $0x74] sm:$0xf]
    %v62 = vld [vmem:[%s1 + $0x78] sm:$0xf]
    %v63 = vld [vmem:[%s1 + $0x7c] sm:$0xf]
    %v64 = vld [vmem:[%s1 + $0x80] sm:$0xf]
    %v65 = vld [vmem:[%s1 + $0x84] sm:$0xf]
    %v66 = vld [vmem:[%s1 + $0x88] sm:$0xf]
    %v67 = vld [vmem:[%s1 + $0x8c] sm:$0xf]
    %v68 = vld [vmem:[%s1 + $0x90] sm:$0xf]
    %v69 = vld [vmem:[%s1 + $0x94] sm:$0xf]
    %v70 = vld [vmem:[%s1 + $0x98] sm:$0xf]
    %v71 = vld [vmem:[%s1 + $0x9c] sm:$0xf]
    %v72 = vld [vmem:[%s1 + $0xa0] sm:$0xf]
    %v73 = vld [vmem:[%s1 + $0xa4] sm:$0xf]
    %v74 = vld [vmem:[%s1 + $0xa8] sm:$0xf]
    %v75 = vld [vmem:[%s1 + $0xac] sm:$0xf]
    %v76 = vld [vmem:[%s1 + $0xb0] sm:$0xf]
    %v77 = vld [vmem:[%s1 + $0xb4] sm:$0xf]
    %v78 = vld [vmem:[%s1 + $0xb8] sm:$0xf]
    %v79 = vld [vmem:[%s1 + $0xbc] sm:$0xf]
    %v80 = vld [vmem:[%s1 + $0xc0] sm:$0xf]
    %v81 = vld [vmem:[%s1 + $0xc4] sm:$0xf]
    %v82 = vld [vmem:[%s1 + $0xc8] sm:$0xf]
    %v83 = vld [vmem:[%s1 + $0xcc] sm:$0xf]
    %v84 = vld [vmem:[%s1 + $0xd0] sm:$0xf]
    %v85 = vld [vmem:[%s1 + $0xd4] sm:$0xf]
    %v86 = vld [vmem:[%s1 + $0xd8] sm:$0xf]
    %v87 = vld [vmem:[%s1 + $0xdc] sm:$0xf]
    %v88 = vld [vmem:[%s1 + $0xe0] sm:$0xf]
    %v89 = vld [vmem:[%s1 + $0xe4] sm:$0xf]
    %v90 = vld [vmem:[%s1 + $0xe8] sm:$0xf]
    %v91 = vld [vmem:[%s1 + $0xec] sm:$0xf]
    %v92 = vld [vmem:[%s1 + $0xf0] sm:$0xf]
    %v93 = vld [vmem:[%s1 + $0xf4] sm:$0xf]
    %v94 = vld [vmem:[%s1 + $0xf8] sm:$0xf]
    %v95 = vld [vmem:[%s1 + $0xfc] sm:$0xf]
    %v96 = vld [vmem:[%s1 + $0x100] sm:$0xf]
    %v97 = vld [vmem:[%s1 + $0x104] sm:$0xf]
    %v98 = vld [vmem:[%s1 + $0x108] sm:$0xf]
    %v99 = vld [vmem:[%s1 + $0x10c] sm:$0xf]
    %v100 = vld [vmem:[%s1 + $0x110] sm:$0xf]
    %v101 = vld [vmem:[%s1 + $0x114] sm:$0xf]
    %v102 = vld [vmem:[%s1 + $0x118] sm:$0xf]
    %v103 = vld [vmem:[%s1 + $0x11c] sm:$0xf]
    %v104 = vld [vmem:[%s1 + $0x120] sm:$0xf]
    %v105 = vld [vmem:[%s1 + $0x124] sm:$0xf]
    %v106 = vld [vmem:[%s1 + $0x128] sm:$0xf]
    %v107 = vld [vmem:[%s1 + $0x12c] sm:$0xf]
    %v108 = vld [vmem:[%s1 + $0x130] sm:$0xf]
    %v109 = vld [vmem:[%s1 + $0x134] sm:$0xf]
    %v110 = vld [vmem:[%s1 + $0x138] sm:$0xf]
    %v111 = vld [vmem:[%s1 + $0x13c] sm:$0xf]
    %v112 = vld [vmem:[%s1 + $0x140] sm:$0xf]
    %v113 = vld [vmem:[%s1 + $0x144] sm:$0xf]
    %v114 = vld [vmem:[%s1 + $0x148] sm:$0xf]
    %v115 = vld [vmem:[%s1 + $0x14c] sm:$0xf]
    %v116 = vld [vmem:[%s1 + $0x150] sm:$0xf]
    %v117 = vld [vmem:[%s1 + $0x154] sm:$0xf]
    %v118 = vld [vmem:[%s1 + $0x158] sm:$0xf]
    %v119 = vld [vmem:[%s1 + $0x15c] sm:$0xf]
    %v120 = vld [vmem:[%s1 + $0x160] sm:$0xf]
    %v121 = vld [vmem:[%s1 + $0x164] sm:$0xf]
    %v122 = vld [vmem:[%s1 + $0x168] sm:$0xf]
    %v123 = vld [vmem:[%s1 + $0x16c] sm:$0xf]
    %v124 = vld [vmem:[%s1 + $0x170] sm:$0xf]
    %v125 = vld [vmem:[%s1 + $0x174] sm:$0xf]
    %v126 = vld [vmem:[%s1 + $0x178] sm:$0xf]
    %v127 = vld [vmem:[%s1 + $0x17c] sm:$0xf]
    %v128 = vld [vmem:[%s1 + $0x180] sm:$0xf]
    %v129 = vld [vmem:[%s1 + $0x184] sm:$0xf]
    %v130 = vld [vmem:[%s1 + $0x188] sm:$0xf]
    %v131 = vld [vmem:[%s1 + $0x18c] sm:$0xf]
    %v132 = vld [vmem:[%s1 + $0x190] sm:$0xf]
    %v133 = vld [vmem:[%s1 + $0x194] sm:$0xf]
    %v134 = vld [vmem:[%s1 + $0x198] sm:$0xf]
    %v135 = vld [vmem:[%s1 + $0x19c] sm:$0xf]
    %v136 = vld [vmem:[%s1 + $0x1a0] sm:$0xf]
    %v137 = vld [vmem:[%s1 + $0x1a4] sm:$0xf]
    %v138 = vld [vmem:[%s1 + $0x1a8] sm:$0xf]
    %v139 = vld [vmem:[%s1 + $0x1ac] sm:$0xf]
    %v140 = vld [vmem:[%s1 + $0x1b0] sm:$0xf]
    %v141 = vld [vmem:[%s1 + $0x1b4] sm:$0xf]
    %v142 = vld [vmem:[%s1 + $0x1b8] sm:$0xf]
    %v143 = vld [vmem:[%s1 + $0x1bc] sm:$0xf]
    %v144 = vld [vmem:[%s1 + $0x1c0] sm:$0xf]
    %v145 = vld [vmem:[%s1 + $0x1c4] sm:$0xf]
    %v146 = vld [vmem:[%s1 + $0x1c8] sm:$0xf]
    %v147 = vld [vmem:[%s1 + $0x1cc] sm:$0xf]
    %v148 = vld [vmem:[%s1 + $0x1d0] sm:$0xf]
    %v149 = vld [vmem:[%s1 + $0x1d4] sm:$0xf]
    %v150 = vld [vmem:[%s1 + $0x1d8] sm:$0xf]
    %v151 = vld [vmem:[%s1 + $0x1dc] sm:$0xf]
    %v152 = vld [vmem:[%s1 + $0x1e0] sm:$0xf]
    %v153 = vld [vmem:[%s1 + $0x1e4] sm:$0xf]
    %v154 = vld [vmem:[%s1 + $0x1e8] sm:$0xf]
    %v155 = vld [vmem:[%s1 + $0x1ec] sm:$0xf]
    %v156 = vld [vmem:[%s1 + $0x1f0] sm:$0xf]
    %v157 = vld [vmem:[%s1 + $0x1f4] sm:$0xf]
    %v158 = vld [vmem:[%s1 + $0x1f8] sm:$0xf]
    %v159 = vld [vmem:[%s1 + $0x1fc] sm:$0xf]
    %v160 = vld [vmem:[%s1 + $0x200] sm:$0xf]
    %v161 = vld [vmem:[%s1 + $0x204] sm:$0xf]
    %v162 = vld [vmem:[%s1 + $0x208] sm:$0xf]
    %v163 = vld [vmem:[%s1 + $0x20c] sm:$0xf]
    %v164 = vld [vmem:[%s1 + $0x210] sm:$0xf]
    %v165 = vld [vmem:[%s1 + $0x214] sm:$0xf]
    %v166 = vld [vmem:[%s1 + $0x218] sm:$0xf]
    %v167 = vld [vmem:[%s1 + $0x21c] sm:$0xf]
    %v168 = vld [vmem:[%s1 + $0x220] sm:$0xf]
    %v169 = vld [vmem:[%s1 + $0x224] sm:$0xf]
    %v170 = vld [vmem:[%s1 + $0x228] sm:$0xf]
    %v171 = vld [vmem:[%s1 + $0x22c] sm:$0xf]
    %v172 = vld [vmem:[%s1 + $0x230] sm:$0xf]
    %v173 = vld [vmem:[%s1 + $0x234] sm:$0xf]
    %v174 = vld [vmem:[%s1 + $0x238] sm:$0xf]
    %v175 = vld [vmem:[%s1 + $0x23c] sm:$0xf]
    %v176 = vld [vmem:[%s1 + $0x240] sm:$0xf]
    %v177 = vld [vmem:[%s1 + $0x244] sm:$0xf]
    %v178 = vld [vmem:[%s1 + $0x248] sm:$0xf]
    %v179 = vld [vmem:[%s1 + $0x24c] sm:$0xf]
    %v180 = vld [vmem:[%s1 + $0x250] sm:$0xf]
    %v181 = vld [vmem:[%s1 + $0x254] sm:$0xf]
    %v182 = vld [vmem:[%s1 + $0x258] sm:$0xf]
    %v183 = vld [vmem:[%s1 + $0x25c] sm:$0xf]
    %v184 = vld [vmem:[%s1 + $0x260] sm:$0xf]
    %v185 = vld [vmem:[%s1 + $0x264] sm:$0xf]
    %v186 = vld [vmem:[%s1 + $0x268] sm:$0xf]
    %v187 = vld [vmem:[%s1 + $0x26c] sm:$0xf]
    %v188 = vld [vmem:[%s1 + $0x270] sm:$0xf]
    %v189 = vld [vmem:[%s1 + $0x274] sm:$0xf]
    %v190 = vld [vmem:[%s1 + $0x278] sm:$0xf]
    %v191 = vld [vmem:[%s1 + $0x27c] sm:$0xf]
    %v192 = vld [vmem:[%s1 + $0x280] sm:$0xf]
    %v193 = vld [vmem:[%s1 + $0x284] sm:$0xf]
    %v194 = vld [vmem:[%s1 + $0x288] sm:$0xf]
    %v195 = vld [vmem:[%s1 + $0x28c] sm:$0xf]
    %v196 = vld [vmem:[%s1 + $0x290] sm:$0xf]
    %v197 = vld [vmem:[%s1 + $0x294] sm:$0xf]
    %v198 = vld [vmem:[%s1 + $0x298] sm:$0xf]
    %v199 = vld [vmem:[%s1 + $0x29c] sm:$0xf]
    %v200 = vld [vmem:[%s1 + $0x2a0] sm:$0xf]
    %v201 = vld [vmem:[%s1 + $0x2a4] sm:$0xf]
    %v202 = vld [vmem:[%s1 + $0x2a8] sm:$0xf]
    %v203 = vld [vmem:[%s1 + $0x2ac] sm:$0xf]
    %v204 = vld [vmem:[%s1 + $0x2b0] sm:$0xf]
    %v205 = vld [vmem:[%s1 + $0x2b4] sm:$0xf]
    %v206 = vld [vmem:[%s1 + $0x2b8] sm:$0xf]
    %v207 = vld [vmem:[%s1 + $0x2bc] sm:$0xf]
    %v208 = vld [vmem:[%s1 + $0x2c0] sm:$0xf]
    %v209 = vld [vmem:[%s1 + $0x2c4] sm:$0xf]
    %v210 = vld [vmem:[%s1 + $0x2c8] sm:$0xf]
    %v211 = vld [vmem:[%s1 + $0x2cc] sm:$0xf]
    %v212 = vld [vmem:[%s1 + $0x2d0] sm:$0xf]
    %v213 = vld [vmem:[%s1 + $0x2d4] sm:$0xf]
    %v214 = vld [vmem:[%s1 + $0x2d8] sm:$0xf]
    %v215 = vld [vmem:[%s1 + $0x2dc] sm:$0xf]
    %v216 = vld [vmem:[%s1 + $0x2e0] sm:$0xf]
    %v217 = vld [vmem:[%s1 + $0x2e4] sm:$0xf]
    %v218 = vld [vmem:[%s1 + $0x2e8] sm:$0xf]
    %v219 = vld [vmem:[%s1 + $0x2ec] sm:$0xf]
    %v220 = vld [vmem:[%s1 + $0x2f0] sm:$0xf]
    %v221 = vld [vmem:[%s1 + $0x2f4] sm:$0xf]
    %v222 = vld [vmem:[%s1 + $0x2f8] sm:$0xf]
    %v223 = vld [vmem:[%s1 + $0x2fc] sm:$0xf]
    %v224 = vld [vmem:[%s1 + $0x300] sm:$0xf]
    %v225 = vld [vmem:[%s1 + $0x304] sm:$0xf]
    %v226 = vld [vmem:[%s1 + $0x308] sm:$0xf]
    %v227 = vld [vmem:[%s1 + $0x30c] sm:$0xf]
    %v228 = vld [vmem:[%s1 + $0x310] sm:$0xf]
    %v229 = vld [vmem:[%s1 + $0x314] sm:$0xf]
    %v230 = vld [vmem:[%s1 + $0x318] sm:$0xf]
    %v231 = vld [vmem:[%s1 + $0x31c] sm:$0xf]
    %v232 = vld [vmem:[%s1 + $0x320] sm:$0xf]
    %v233 = vld [vmem:[%s1 + $0x324] sm:$0xf]
    %v234 = vld [vmem:[%s1 + $0x328] sm:$0xf]
    %v235 = vld [vmem:[%s1 + $0x32c] sm:$0xf]
    %v236 = vld [vmem:[%s1 + $0x330] sm:$0xf]
    %v237 = vld [vmem:[%s1 + $0x334] sm:$0xf]
    %v238 = vld [vmem:[%s1 + $0x338] sm:$0xf]
    %v239 = vld [vmem:[%s1 + $0x33c] sm:$0xf]
    %v240 = vld [vmem:[%s1 + $0x340] sm:$0xf]
    %v241 = vld [vmem:[%s1 + $0x344] sm:$0xf]
    %v242 = vld [vmem:[%s1 + $0x348] sm:$0xf]
    %v243 = vld [vmem:[%s1 + $0x34c] sm:$0xf]
    %v244 = vld [vmem:[%s1 + $0x350] sm:$0xf]
    %v245 = vld [vmem:[%s1 + $0x354] sm:$0xf]
    %v246 = vld [vmem:[%s1 + $0x358] sm:$0xf]
    %v247 = vld [vmem:[%s1 + $0x35c] sm:$0xf]
    %v248 = vld [vmem:[%s1 + $0x360] sm:$0xf]
    %v249 = vld [vmem:[%s1 + $0x364] sm:$0xf]
    %v250 = vld [vmem:[%s1 + $0x368] sm:$0xf]
    %v251 = vld [vmem:[%s1 + $0x36c] sm:$0xf]
    %v252 = vld [vmem:[%s1 + $0x370] sm:$0xf]
    %v253 = vld [vmem:[%s1 + $0x374] sm:$0xf]
    %v254 = vld [vmem:[%s1 + $0x378] sm:$0xf]
    %v255 = vld [vmem:[%s1 + $0x37c] sm:$0xf]
    %v256 = vld [vmem:[%s1 + $0x380] sm:$0xf]
    %v257 = vld [vmem:[%s1 + $0x384] sm:$0xf]
    %v258 = vld [vmem:[%s1 + $0x388] sm:$0xf]
    %v259 = vld [vmem:[%s1 + $0x38c] sm:$0xf]
    %v260 = vld [vmem:[%s1 + $0x390] sm:$0xf]
    %v261 = vld [vmem:[%s1 + $0x394] sm:$0xf]
    %v262 = vld [vmem:[%s1 + $0x398] sm:$0xf]
    %v263 = vld [vmem:[%s1 + $0x39c] sm:$0xf]
    %v264 = vld [vmem:[%s1 + $0x3a0] sm:$0xf]
    %v265 = vld [vmem:[%s1 + $0x3a4] sm:$0xf]
    %v266 = vld [vmem:[%s1 + $0x3a8] sm:$0xf]
    %v267 = vld [vmem:[%s1 + $0x3ac] sm:$0xf]
    %v268 = vld [vmem:[%s1 + $0x3b0] sm:$0xf]
    %v269 = vld [vmem:[%s1 + $0x3b4] sm:$0xf]
    %v270 = vld [vmem:[%s1 + $0x3b8] sm:$0xf]
    %v271 = vld [vmem:[%s1 + $0x3bc] sm:$0xf]
    %v272 = vld [vmem:[%s1 + $0x3c0] sm:$0xf]
    %v273 = vld [vmem:[%s1 + $0x3c4] sm:$0xf]
    %v274 = vld [vmem:[%s1 + $0x3c8] sm:$0xf]
    %v275 = vld [vmem:[%s1 + $0x3cc] sm:$0xf]
    %v276 = vld [vmem:[%s1 + $0x3d0] sm:$0xf]
    %v277 = vld [vmem:[%s1 + $0x3d4] sm:$0xf]
    %v278 = vld [vmem:[%s1 + $0x3d8] sm:$0xf]
    %v279 = vld [vmem:[%s1 + $0x3dc] sm:$0xf]
    %v280 = vld [vmem:[%s1 + $0x3e0] sm:$0xf]
    %v281 = vld [vmem:[%s1 + $0x3e4] sm:$0xf]
    %v282 = vld [vmem:[%s1 + $0x3e8] sm:$0xf]
    %v283 = vld [vmem:[%s1 + $0x3ec] sm:$0xf]
    %v284 = vld [vmem:[%s1 + $0x3f0] sm:$0xf]
    %v285 = vld [vmem:[%s1 + $0x3f4] sm:$0xf]
    %v286 = vld [vmem:[%s1 + $0x3f8] sm:$0xf]
    %v287 = vld [vmem:[%s1 + $0x3fc] sm:$0xf]
    %v288 = vld [vmem:[%s1 + $0x400] sm:$0xf]
    %v289 = vld [vmem:[%s1 + $0x404] sm:$0xf]
    %v290 = vld [vmem:[%s1 + $0x408] sm:$0xf]
    %v291 = vld [vmem:[%s1 + $0x40c] sm:$0xf]
    %v292 = vld [vmem:[%s1 + $0x410] sm:$0xf]
    %v293 = vld [vmem:[%s1 + $0x414] sm:$0xf]
    %v294 = vld [vmem:[%s1 + $0x418] sm:$0xf]
    %v295 = vld [vmem:[%s1 + $0x41c] sm:$0xf]
    %v296 = vld [vmem:[%s1 + $0x420] sm:$0xf]
    %v297 = vld [vmem:[%s1 + $0x424] sm:$0xf]
    %v298 = vld [vmem:[%s1 + $0x428] sm:$0xf]
    %v299 = vld [vmem:[%s1 + $0x42c] sm:$0xf]
    %v300 = vld [vmem:[%s1 + $0x430] sm:$0xf]
    %v301 = vld [vmem:[%s1 + $0x434] sm:$0xf]
    %v302 = vld [vmem:[%s1 + $0x438] sm:$0xf]
    %v303 = vld [vmem:[%s1 + $0x43c] sm:$0xf]
    %v304 = vld [vmem:[%s1 + $0x440] sm:$0xf]
    %v305 = vld [vmem:[%s1 + $0x444] sm:$0xf]
    %v306 = vld [vmem:[%s1 + $0x448] sm:$0xf]
    %v307 = vld [vmem:[%s1 + $0x44c] sm:$0xf]
    %v308 = vld [vmem:[%s1 + $0x450] sm:$0xf]
    %v309 = vld [vmem:[%s1 + $0x454] sm:$0xf]
    %v310 = vld [vmem:[%s1 + $0x458] sm:$0xf]
    %v311 = vld [vmem:[%s1 + $0x45c] sm:$0xf]
    %v312 = vld [vmem:[%s1 + $0x460] sm:$0xf]
    %v313 = vld [vmem:[%s1 + $0x464] sm:$0xf]
    %v314 = vld [vmem:[%s1 + $0x468] sm:$0xf]
    %v315 = vld [vmem:[%s1 + $0x46c] sm:$0xf]
    %v316 = vld [vmem:[%s1 + $0x470] sm:$0xf]
    %v317 = vld [vmem:[%s1 + $0x474] sm:$0xf]
    %v318 = vld [vmem:[%s1 + $0x478] sm:$0xf]
    %v319 = vld [vmem:[%s1 + $0x47c] sm:$0xf]
    %v320 = vld [vmem:[%s1 + $0x480] sm:$0xf]
    %v321 = vld [vmem:[%s1 + $0x484] sm:$0xf]
    %v322 = vld [vmem:[%s1 + $0x488] sm:$0xf]
    %v323 = vld [vmem:[%s1 + $0x48c] sm:$0xf]
    %v324 = vld [vmem:[%s1 + $0x490] sm:$0xf]
    %v325 = vld [vmem:[%s1 + $0x494] sm:$0xf]
    %v326 = vld [vmem:[%s1 + $0x498] sm:$0xf]
    %v327 = vld [vmem:[%s1 + $0x49c] sm:$0xf]
    %v328 = vld [vmem:[%s1 + $0x4a0] sm:$0xf]
    %v329 = vld [vmem:[%s1 + $0x4a4] sm:$0xf]
    %v330 = vld [vmem:[%s1 + $0x4a8] sm:$0xf]
    %v331 = vld [vmem:[%s1 + $0x4ac] sm:$0xf]
    %v332 = vld [vmem:[%s1 + $0x4b0] sm:$0xf]
    %v333 = vld [vmem:[%s1 + $0x4b4] sm:$0xf]
    %v334 = vld [vmem:[%s1 + $0x4b8] sm:$0xf]
    %v335 = vld [vmem:[%s1 + $0x4bc] sm:$0xf]
    %v336 = vld [vmem:[%s1 + $0x4c0] sm:$0xf]
    %v337 = vld [vmem:[%s1 + $0x4c4] sm:$0xf]
    %v338 = vld [vmem:[%s1 + $0x4c8] sm:$0xf]
    %v339 = vld [vmem:[%s1 + $0x4cc] sm:$0xf]
    %v340 = vld [vmem:[%s1 + $0x4d0] sm:$0xf]
    %v341 = vld [vmem:[%s1 + $0x4d4] sm:$0xf]
    %v342 = vld [vmem:[%s1 + $0x4d8] sm:$0xf]
    %v343 = vld [vmem:[%s1 + $0x4dc] sm:$0xf]
    %v344 = vld [vmem:[%s1 + $0x4e0] sm:$0xf]
    %v345 = vld [vmem:[%s1 + $0x4e4] sm:$0xf]
    %v346 = vld [vmem:[%s1 + $0x4e8] sm:$0xf]
    %v347 = vld [vmem:[%s1 + $0x4ec] sm:$0xf]
    %v348 = vld [vmem:[%s1 + $0x4f0] sm:$0xf]
    %v349 = vld [vmem:[%s1 + $0x4f4] sm:$0xf]
    %v350 = vld [vmem:[%s1 + $0x4f8] sm:$0xf]
    %v351 = vld [vmem:[%s1 + $0x4fc] sm:$0xf]
    %v352 = vld [vmem:[%s1 + $0x500] sm:$0xf]
    %v353 = vld [vmem:[%s1 + $0x504] sm:$0xf]
    %v354 = vld [vmem:[%s1 + $0x508] sm:$0xf]
    %v355 = vld [vmem:[%s1 + $0x50c] sm:$0xf]
    %v356 = vld [vmem:[%s1 + $0x510] sm:$0xf]
    %v357 = vld [vmem:[%s1 + $0x514] sm:$0xf]
    %v358 = vld [vmem:[%s1 + $0x518] sm:$0xf]
    %v359 = vld [vmem:[%s1 + $0x51c] sm:$0xf]
    %v360 = vld [vmem:[%s1 + $0x520] sm:$0xf]
    %v361 = vld [vmem:[%s1 + $0x524] sm:$0xf]
    %v362 = vld [vmem:[%s1 + $0x528] sm:$0xf]
    %v363 = vld [vmem:[%s1 + $0x52c] sm:$0xf]
    %v364 = vld [vmem:[%s1 + $0x530] sm:$0xf]
    %v365 = vld [vmem:[%s1 + $0x534] sm:$0xf]
    %v366 = vld [vmem:[%s1 + $0x538] sm:$0xf]
    %v367 = vld [vmem:[%s1 + $0x53c] sm:$0xf]
    %v368 = vld [vmem:[%s1 + $0x540] sm:$0xf]
    %v369 = vld [vmem:[%s1 + $0x544] sm:$0xf]
    %v370 = vld [vmem:[%s1 + $0x548] sm:$0xf]
    %v371 = vld [vmem:[%s1 + $0x54c] sm:$0xf]
    %v372 = vld [vmem:[%s1 + $0x550] sm:$0xf]
    %v373 = vld [vmem:[%s1 + $0x554] sm:$0xf]
    %v374 = vld [vmem:[%s1 + $0x558] sm:$0xf]
    %v375 = vld [vmem:[%s1 + $0x55c] sm:$0xf]
    %v376 = vld [vmem:[%s1 + $0x560] sm:$0xf]
    %v377 = vld [vmem:[%s1 + $0x564] sm:$0xf]
    %v378 = vld [vmem:[%s1 + $0x568] sm:$0xf]
    %v379 = vld [vmem:[%s1 + $0x56c] sm:$0xf]
    %v380 = vld [vmem:[%s1 + $0x570] sm:$0xf]
    %v381 = vld [vmem:[%s1 + $0x574] sm:$0xf]
    %v382 = vld [vmem:[%s1 + $0x578] sm:$0xf]
    %v383 = vld [vmem:[%s1 + $0x57c] sm:$0xf]
    %v384 = vld [vmem:[%s1 + $0x580] sm:$0xf]
    %v385 = vld [vmem:[%s1 + $0x584] sm:$0xf]
    %v386 = vld [vmem:[%s1 + $0x588] sm:$0xf]
    %v387 = vld [vmem:[%s1 + $0x58c] sm:$0xf]
    %v388 = vld [vmem:[%s1 + $0x590] sm:$0xf]
    %v389 = vld [vmem:[%s1 + $0x594] sm:$0xf]
    %v390 = vld [vmem:[%s1 + $0x598] sm:$0xf]
    %v391 = vld [vmem:[%s1 + $0x59c] sm:$0xf]
    %v392 = vld [vmem:[%s1 + $0x5a0] sm:$0xf]
    %v393 = vld [vmem:[%s1 + $0x5a4] sm:$0xf]
    %v394 = vld [vmem:[%s1 + $0x5a8] sm:$0xf]
    %v395 = vld [vmem:[%s1 + $0x5ac] sm:$0xf]
    %v396 = vld [vmem:[%s1 + $0x5b0] sm:$0xf]
    %v397 = vld [vmem:[%s1 + $0x5b4] sm:$0xf]
    %v398 = vld [vmem:[%s1 + $0x5b8] sm:$0xf]
    %v399 = vld [vmem:[%s1 + $0x5bc] sm:$0xf]
    %v400 = vld [vmem:[%s1 + $0x5c0] sm:$0xf]
    %v401 = vld [vmem:[%s1 + $0x5c4] sm:$0xf]
    %v402 = vld [vmem:[%s1 + $0x5c8] sm:$0xf]
    %v403 = vld [vmem:[%s1 + $0x5cc] sm:$0xf]
    %v404 = vld [vmem:[%s1 + $0x5d0] sm:$0xf]
    %v405 = vld [vmem:[%s1 + $0x5d4] sm:$0xf]
    %v406 = vld [vmem:[%s1 + $0x5d8] sm:$0xf]
    %v407 = vld [vmem:[%s1 + $0x5dc] sm:$0xf]
    %v408 = vld [vmem:[%s1 + $0x5e0] sm:$0xf]
    %v409 = vld [vmem:[%s1 + $0x5e4] sm:$0xf]
    %v410 = vld [vmem:[%s1 + $0x5e8] sm:$0xf]
    %v411 = vld [vmem:[%s1 + $0x5ec] sm:$0xf]
    %v412 = vld [vmem:[%s1 + $0x5f0] sm:$0xf]
    %v413 = vld [vmem:[%s1 + $0x5f4] sm:$0xf]
    %v414 = vld [vmem:[%s1 + $0x5f8] sm:$0xf]
    %v415 = vld [vmem:[%s1 + $0x5fc] sm:$0xf]
    %v416 = vld [vmem:[%s1 + $0x600] sm:$0xf]
    %v417 = vld [vmem:[%s1 + $0x604] sm:$0xf]
    %v418 = vld [vmem:[%s1 + $0x608] sm:$0xf]
    %v419 = vld [vmem:[%s1 + $0x60c] sm:$0xf]
    %v420 = vld [vmem:[%s1 + $0x610] sm:$0xf]
    %v421 = vld [vmem:[%s1 + $0x614] sm:$0xf]
    %v422 = vld [vmem:[%s1 + $0x618] sm:$0xf]
    %v423 = vld [vmem:[%s1 + $0x61c] sm:$0xf]
    %v424 = vld [vmem:[%s1 + $0x620] sm:$0xf]
    %v425 = vld [vmem:[%s1 + $0x624] sm:$0xf]
    %v426 = vld [vmem:[%s1 + $0x628] sm:$0xf]
    %v427 = vld [vmem:[%s1 + $0x62c] sm:$0xf]
    %v428 = vld [vmem:[%s1 + $0x630] sm:$0xf]
    %v429 = vld [vmem:[%s1 + $0x634] sm:$0xf]
    %v430 = vld [vmem:[%s1 + $0x638] sm:$0xf]
    %v431 = vld [vmem:[%s1 + $0x63c] sm:$0xf]
    %v432 = vld [vmem:[%s1 + $0x640] sm:$0xf]
    %v433 = vld [vmem:[%s1 + $0x644] sm:$0xf]
    %v434 = vld [vmem:[%s1 + $0x648] sm:$0xf]
    %v435 = vld [vmem:[%s1 + $0x64c] sm:$0xf]
    %v436 = vld [vmem:[%s1 + $0x650] sm:$0xf]
    %v437 = vld [vmem:[%s1 + $0x654] sm:$0xf]
    %v438 = vld [vmem:[%s1 + $0x658] sm:$0xf]
    %v439 = vld [vmem:[%s1 + $0x65c] sm:$0xf]
    %v440 = vld [vmem:[%s1 + $0x660] sm:$0xf]
    %v441 = vld [vmem:[%s1 + $0x664] sm:$0xf]
    %v442 = vld [vmem:[%s1 + $0x668] sm:$0xf]
    %v443 = vld [vmem:[%s1 + $0x66c] sm:$0xf]
    %v444 = vld [vmem:[%s1 + $0x670] sm:$0xf]
    %v445 = vld [vmem:[%s1 + $0x674] sm:$0xf]
    %v446 = vld [vmem:[%s1 + $0x678] sm:$0xf]
    %v447 = vld [vmem:[%s1 + $0x67c] sm:$0xf]
    %v448 = vld [vmem:[%s1 + $0x680] sm:$0xf]
    %v449 = vld [vmem:[%s1 + $0x684] sm:$0xf]
    %v450 = vld [vmem:[%s1 + $0x688] sm:$0xf]
    %v451 = vld [vmem:[%s1 + $0x68c] sm:$0xf]
    %v452 = vld [vmem:[%s1 + $0x690] sm:$0xf]
    %v453 = vld [vmem:[%s1 + $0x694] sm:$0xf]
    %v454 = vld [vmem:[%s1 + $0x698] sm:$0xf]
    %v455 = vld [vmem:[%s1 + $0x69c] sm:$0xf]
    %v456 = vld [vmem:[%s1 + $0x6a0] sm:$0xf]
    %v457 = vld [vmem:[%s1 + $0x6a4] sm:$0xf]
    %v458 = vld [vmem:[%s1 + $0x6a8] sm:$0xf]
    %v459 = vld [vmem:[%s1 + $0x6ac] sm:$0xf]
    %v460 = vld [vmem:[%s1 + $0x6b0] sm:$0xf]
    %v461 = vld [vmem:[%s1 + $0x6b4] sm:$0xf]
    %v462 = vld [vmem:[%s1 + $0x6b8] sm:$0xf]
    %v463 = vld [vmem:[%s1 + $0x6bc] sm:$0xf]
    %v464 = vld [vmem:[%s1 + $0x6c0] sm:$0xf]
    %v465 = vld [vmem:[%s1 + $0x6c4] sm:$0xf]
    %v466 = vld [vmem:[%s1 + $0x6c8] sm:$0xf]
    %v467 = vld [vmem:[%s1 + $0x6cc] sm:$0xf]
    %v468 = vld [vmem:[%s1 + $0x6d0] sm:$0xf]
    %v469 = vld [vmem:[%s1 + $0x6d4] sm:$0xf]
    %v470 = vld [vmem:[%s1 + $0x6d8] sm:$0xf]
    %v471 = vld [vmem:[%s1 + $0x6dc] sm:$0xf]
    %v472 = vld [vmem:[%s1 + $0x6e0] sm:$0xf]
    %v473 = vld [vmem:[%s1 + $0x6e4] sm:$0xf]
    %v474 = vld [vmem:[%s1 + $0x6e8] sm:$0xf]
    %v475 = vld [vmem:[%s1 + $0x6ec] sm:$0xf]
    %v476 = vld [vmem:[%s1 + $0x6f0] sm:$0xf]
    %v477 = vld [vmem:[%s1 + $0x6f4] sm:$0xf]
    %v478 = vld [vmem:[%s1 + $0x6f8] sm:$0xf]
    %v479 = vld [vmem:[%s1 + $0x6fc] sm:$0xf]
    %v480 = vld [vmem:[%s1 + $0x700] sm:$0xf]
    %v481 = vld [vmem:[%s1 + $0x704] sm:$0xf]
    %v482 = vld [vmem:[%s1 + $0x708] sm:$0xf]
    %v483 = vld [vmem:[%s1 + $0x70c] sm:$0xf]
    %v484 = vld [vmem:[%s1 + $0x710] sm:$0xf]
    %v485 = vld [vmem:[%s1 + $0x714] sm:$0xf]
    %v486 = vld [vmem:[%s1 + $0x718] sm:$0xf]
    %v487 = vld [vmem:[%s1 + $0x71c] sm:$0xf]
    %v488 = vld [vmem:[%s1 + $0x720] sm:$0xf]
    %v489 = vld [vmem:[%s1 + $0x724] sm:$0xf]
    %v490 = vld [vmem:[%s1 + $0x728] sm:$0xf]
    %v491 = vld [vmem:[%s1 + $0x72c] sm:$0xf]
    %v492 = vld [vmem:[%s1 + $0x730] sm:$0xf]
    %v493 = vld [vmem:[%s1 + $0x734] sm:$0xf]
    %v494 = vld [vmem:[%s1 + $0x738] sm:$0xf]
    %v495 = vld [vmem:[%s1 + $0x73c] sm:$0xf]
    %v496 = vld [vmem:[%s1 + $0x740] sm:$0xf]
    %v497 = vld [vmem:[%s1 + $0x744] sm:$0xf]
    %v498 = vld [vmem:[%s1 + $0x748] sm:$0xf]
    %v499 = vld [vmem:[%s1 + $0x74c] sm:$0xf]
    %v500 = vld [vmem:[%s1 + $0x750] sm:$0xf]
    %v501 = vld [vmem:[%s1 + $0x754] sm:$0xf]
    %v502 = vld [vmem:[%s1 + $0x758] sm:$0xf]
    %v503 = vld [vmem:[%s1 + $0x75c] sm:$0xf]
    %v504 = vld [vmem:[%s1 + $0x760] sm:$0xf]
    %v505 = vld [vmem:[%s1 + $0x764] sm:$0xf]
    %v506 = vld [vmem:[%s1 + $0x768] sm:$0xf]
    %v507 = vld [vmem:[%s1 + $0x76c] sm:$0xf]
    %v508 = vld [vmem:[%s1 + $0x770] sm:$0xf]
    %v509 = vld [vmem:[%s1 + $0x774] sm:$0xf]
    %v510 = vld [vmem:[%s1 + $0x778] sm:$0xf]
    %v511 = vld [vmem:[%s1 + $0x77c] sm:$0xf]
    %v512 = vld [vmem:[%s1 + $0x780] sm:$0xf]
    %v513 = vld [vmem:[%s1 + $0x784] sm:$0xf]
    %v514 = vld [vmem:[%s1 + $0x788] sm:$0xf]
    %v515 = vld [vmem:[%s1 + $0x78c] sm:$0xf]
    %v516 = vld [vmem:[%s1 + $0x790] sm:$0xf]
    %v517 = vld [vmem:[%s1 + $0x794] sm:$0xf]
    %v518 = vld [vmem:[%s1 + $0x798] sm:$0xf]
    %v519 = vld [vmem:[%s1 + $0x79c] sm:$0xf]
    %v520 = vld [vmem:[%s1 + $0x7a0] sm:$0xf]
    %v521 = vld [vmem:[%s1 + $0x7a4] sm:$0xf]
    %v522 = vld [vmem:[%s1 + $0x7a8] sm:$0xf]
    %v523 = vld [vmem:[%s1 + $0x7ac] sm:$0xf]
    %v524 = vld [vmem:[%s1 + $0x7b0] sm:$0xf]
    %v525 = vld [vmem:[%s1 + $0x7b4] sm:$0xf]
    %v526 = vld [vmem:[%s1 + $0x7b8] sm:$0xf]
    %v527 = vld [vmem:[%s1 + $0x7bc] sm:$0xf]
    %v528 = vld [vmem:[%s1 + $0x7c0] sm:$0xf]
    %v529 = vld [vmem:[%s1 + $0x7c4] sm:$0xf]
    %v530 = vld [vmem:[%s1 + $0x7c8] sm:$0xf]
    %v531 = vld [vmem:[%s1 + $0x7cc] sm:$0xf]
    %v532 = vld [vmem:[%s1 + $0x7d0] sm:$0xf]
    %v533 = vld [vmem:[%s1 + $0x7d4] sm:$0xf]
    %v534 = vld [vmem:[%s1 + $0x7d8] sm:$0xf]
    %v535 = vld [vmem:[%s1 + $0x7dc] sm:$0xf]
    %v536 = vld [vmem:[%s1 + $0x7e0] sm:$0xf]
    %v537 = vld [vmem:[%s1 + $0x7e4] sm:$0xf]
    %v538 = vld [vmem:[%s1 + $0x7e8] sm:$0xf]
    %v539 = vld [vmem:[%s1 + $0x7ec] sm:$0xf]
    %v540 = vld [vmem:[%s1 + $0x7f0] sm:$0xf]
    %v541 = vld [vmem:[%s1 + $0x7f4] sm:$0xf]
    %v542 = vld [vmem:[%s1 + $0x7f8] sm:$0xf]
    %v543 = vld [vmem:[%s1 + $0x7fc] sm:$0xf]
    %v544 = vld [vmem:[%s2] sm:$0x1]
    %v546 = vlaneseq
    %v547 = vshrl.u32 %v546, 7
    %v548 = vsub.s32 0, %v547
    %v549 = vrot.slane %v544, %v548
    %v555 = vcombine.high %v28, %v28
    %v557 = vunpack.c.l.s4 1966171168
    %v558 = vunpack.c.0.s8 %v557
    %v559 = vlaneseq
    %v560 = vshrl.u32 %v559, 7
    %v561 = vsub.s32 %v558, %v560
    %v562 = vrot.slane %v28, %v561
    %v564 = vunpack.c.l.s4 1966171168
    %v565 = vunpack.c.0.s8 %v564
    %v566 = vlaneseq
    %v567 = vshrl.u32 %v566, 7
    %v568 = vsub.s32 %v565, %v567
    %v569 = vrot.slane %v555, %v568
    %v570 = vcombine.high %v562, %v562
    %v571 = vcombine.high %v569, %v569
    %v573 = vunpack.c.l.s4 1966171168
    %v574 = vunpack.c.0.s8 %v573
    %v575 = vlaneseq
    %v576 = vshrl.u32 %v575, 7
    %v577 = vsub.s32 %v574, %v576
    %v578 = vrot.slane %v562, %v577
    %v580 = vunpack.c.l.s4 1966171168
    %v581 = vunpack.c.0.s8 %v580
    %v582 = vlaneseq
    %v583 = vshrl.u32 %v582, 7
    %v584 = vsub.s32 %v581, %v583
    %v585 = vrot.slane %v569, %v584
    %v587 = vunpack.c.l.s4 1966171168
    %v588 = vunpack.c.0.s8 %v587
    %v589 = vlaneseq
    %v590 = vshrl.u32 %v589, 7
    %v591 = vsub.s32 %v588, %v590
    %v592 = vrot.slane %v570, %v591
    %v594 = vunpack.c.l.s4 1966171168
    %v595 = vunpack.c.0.s8 %v594
    %v596 = vlaneseq
    %v597 = vshrl.u32 %v596, 7
    %v598 = vsub.s32 %v595, %v597
    %v599 = vrot.slane %v571, %v598
    %v600 = vcombine.high %v578, %v578
    %v601 = vcombine.high %v585, %v585
    %v602 = vcombine.high %v592, %v592
    %v603 = vcombine.high %v599, %v599
    %v604 = vcombine.high %v29, %v29
    %v606 = vunpack.c.l.s4 1966171168
    %v607 = vunpack.c.0.s8 %v606
    %v608 = vlaneseq
    %v609 = vshrl.u32 %v608, 7
    %v610 = vsub.s32 %v607, %v609
    %v611 = vrot.slane %v29, %v610
    %v613 = vunpack.c.l.s4 1966171168
    %v614 = vunpack.c.0.s8 %v613
    %v615 = vlaneseq
    %v616 = vshrl.u32 %v615, 7
    %v617 = vsub.s32 %v614, %v616
    %v618 = vrot.slane %v604, %v617
    %v619 = vcombine.high %v611, %v611
    %v620 = vcombine.high %v618, %v618
    %v622 = vunpack.c.l.s4 1966171168
    %v623 = vunpack.c.0.s8 %v622
    %v624 = vlaneseq
    %v625 = vshrl.u32 %v624, 7
    %v626 = vsub.s32 %v623, %v625
    %v627 = vrot.slane %v611, %v626
    %v629 = vunpack.c.l.s4 1966171168
    %v630 = vunpack.c.0.s8 %v629
    %v631 = vlaneseq
    %v632 = vshrl.u32 %v631, 7
    %v633 = vsub.s32 %v630, %v632
    %v634 = vrot.slane %v618, %v633
    %v636 = vunpack.c.l.s4 1966171168
    %v637 = vunpack.c.0.s8 %v636
    %v638 = vlaneseq
    %v639 = vshrl.u32 %v638, 7
    %v640 = vsub.s32 %v637, %v639
    %v641 = vrot.slane %v619, %v640
    %v643 = vunpack.c.l.s4 1966171168
    %v644 = vunpack.c.0.s8 %v643
    %v645 = vlaneseq
    %v646 = vshrl.u32 %v645, 7
    %v647 = vsub.s32 %v644, %v646
    %v648 = vrot.slane %v620, %v647
    %v649 = vcombine.high %v627, %v627
    %v650 = vcombine.high %v634, %v634
    %v651 = vcombine.high %v641, %v641
    %v652 = vcombine.high %v648, %v648
    %v653 = vcombine.high %v30, %v30
    %v655 = vunpack.c.l.s4 1966171168
    %v656 = vunpack.c.0.s8 %v655
    %v657 = vlaneseq
    %v658 = vshrl.u32 %v657, 7
    %v659 = vsub.s32 %v656, %v658
    %v660 = vrot.slane %v30, %v659
    %v662 = vunpack.c.l.s4 1966171168
    %v663 = vunpack.c.0.s8 %v662
    %v664 = vlaneseq
    %v665 = vshrl.u32 %v664, 7
    %v666 = vsub.s32 %v663, %v665
    %v667 = vrot.slane %v653, %v666
    %v668 = vcombine.high %v660, %v660
    %v669 = vcombine.high %v667, %v667
    %v671 = vunpack.c.l.s4 1966171168
    %v672 = vunpack.c.0.s8 %v671
    %v673 = vlaneseq
    %v674 = vshrl.u32 %v673, 7
    %v675 = vsub.s32 %v672, %v674
    %v676 = vrot.slane %v660, %v675
    %v678 = vunpack.c.l.s4 1966171168
    %v679 = vunpack.c.0.s8 %v678
    %v680 = vlaneseq
    %v681 = vshrl.u32 %v680, 7
    %v682 = vsub.s32 %v679, %v681
    %v683 = vrot.slane %v667, %v682
    %v685 = vunpack.c.l.s4 1966171168
    %v686 = vunpack.c.0.s8 %v685
    %v687 = vlaneseq
    %v688 = vshrl.u32 %v687, 7
    %v689 = vsub.s32 %v686, %v688
    %v690 = vrot.slane %v668, %v689
    %v692 = vunpack.c.l.s4 1966171168
    %v693 = vunpack.c.0.s8 %v692
    %v694 = vlaneseq
    %v695 = vshrl.u32 %v694, 7
    %v696 = vsub.s32 %v693, %v695
    %v697 = vrot.slane %v669, %v696
    %v698 = vcombine.high %v676, %v676
    %v699 = vcombine.high %v683, %v683
    %v700 = vcombine.high %v690, %v690
    %v701 = vcombine.high %v697, %v697
    %v702 = vcombine.high %v31, %v31
    %v704 = vunpack.c.l.s4 1966171168
    %v705 = vunpack.c.0.s8 %v704
    %v706 = vlaneseq
    %v707 = vshrl.u32 %v706, 7
    %v708 = vsub.s32 %v705, %v707
    %v709 = vrot.slane %v31, %v708
    %v711 = vunpack.c.l.s4 1966171168
    %v712 = vunpack.c.0.s8 %v711
    %v713 = vlaneseq
    %v714 = vshrl.u32 %v713, 7
    %v715 = vsub.s32 %v712, %v714
    %v716 = vrot.slane %v702, %v715
    %v717 = vcombine.high %v709, %v709
    %v718 = vcombine.high %v716, %v716
    %v720 = vunpack.c.l.s4 1966171168
    %v721 = vunpack.c.0.s8 %v720
    %v722 = vlaneseq
    %v723 = vshrl.u32 %v722, 7
    %v724 = vsub.s32 %v721, %v723
    %v725 = vrot.slane %v709, %v724
    %v727 = vunpack.c.l.s4 1966171168
    %v728 = vunpack.c.0.s8 %v727
    %v729 = vlaneseq
    %v730 = vshrl.u32 %v729, 7
    %v731 = vsub.s32 %v728, %v730
    %v732 = vrot.slane %v716, %v731
    %v734 = vunpack.c.l.s4 1966171168
    %v735 = vunpack.c.0.s8 %v734
    %v736 = vlaneseq
    %v737 = vshrl.u32 %v736, 7
    %v738 = vsub.s32 %v735, %v737
    %v739 = vrot.slane %v717, %v738
    %v741 = vunpack.c.l.s4 1966171168
    %v742 = vunpack.c.0.s8 %v741
    %v743 = vlaneseq
    %v744 = vshrl.u32 %v743, 7
    %v745 = vsub.s32 %v742, %v744
    %v746 = vrot.slane %v718, %v745
    %v747 = vcombine.high %v725, %v725
    %v748 = vcombine.high %v732, %v732
    %v749 = vcombine.high %v739, %v739
    %v750 = vcombine.high %v746, %v746
    %v1295 = vunpack.c.l.b16 %v32
    %v1296 = vunpack.c.l.b16 %v33
    %v1297 = vunpack.c.l.b16 %v34
    %v1298 = vunpack.c.l.b16 %v35
    %v1299 = vunpack.c.l.b16 %v36
    %v1300 = vunpack.c.l.b16 %v37
    %v1301 = vunpack.c.l.b16 %v38
    %v1302 = vunpack.c.l.b16 %v39
    %v1303 = vunpack.c.l.b16 %v40
    %v1304 = vunpack.c.l.b16 %v41
    %v1305 = vunpack.c.l.b16 %v42
    %v1306 = vunpack.c.l.b16 %v43
    %v1307 = vunpack.c.l.b16 %v44
    %v1308 = vunpack.c.l.b16 %v45
    %v1309 = vunpack.c.l.b16 %v46
    %v1310 = vunpack.c.l.b16 %v47
    %v1311 = vunpack.c.l.b16 %v48
    %v1312 = vunpack.c.l.b16 %v49
    %v1313 = vunpack.c.l.b16 %v50
    %v1314 = vunpack.c.l.b16 %v51
    %v1315 = vunpack.c.l.b16 %v52
    %v1316 = vunpack.c.l.b16 %v53
    %v1317 = vunpack.c.l.b16 %v54
    %v1318 = vunpack.c.l.b16 %v55
    %v1319 = vunpack.c.l.b16 %v56
    %v1320 = vunpack.c.l.b16 %v57
    %v1321 = vunpack.c.l.b16 %v58
    %v1322 = vunpack.c.l.b16 %v59
    %v1323 = vunpack.c.l.b16 %v60
    %v1324 = vunpack.c.l.b16 %v61
    %v1325 = vunpack.c.l.b16 %v62
    %v1326 = vunpack.c.l.b16 %v63
    %v1327 = vunpack.c.l.b16 %v64
    %v1328 = vunpack.c.l.b16 %v65
    %v1329 = vunpack.c.l.b16 %v66
    %v1330 = vunpack.c.l.b16 %v67
    %v1331 = vunpack.c.l.b16 %v68
    %v1332 = vunpack.c.l.b16 %v69
    %v1333 = vunpack.c.l.b16 %v70
    %v1334 = vunpack.c.l.b16 %v71
    %v1335 = vunpack.c.l.b16 %v72
    %v1336 = vunpack.c.l.b16 %v73
    %v1337 = vunpack.c.l.b16 %v74
    %v1338 = vunpack.c.l.b16 %v75
    %v1339 = vunpack.c.l.b16 %v76
    %v1340 = vunpack.c.l.b16 %v77
    %v1341 = vunpack.c.l.b16 %v78
    %v1342 = vunpack.c.l.b16 %v79
    %v1343 = vunpack.c.l.b16 %v80
    %v1344 = vunpack.c.l.b16 %v81
    %v1345 = vunpack.c.l.b16 %v82
    %v1346 = vunpack.c.l.b16 %v83
    %v1347 = vunpack.c.l.b16 %v84
    %v1348 = vunpack.c.l.b16 %v85
    %v1349 = vunpack.c.l.b16 %v86
    %v1350 = vunpack.c.l.b16 %v87
    %v1351 = vunpack.c.l.b16 %v88
    %v1352 = vunpack.c.l.b16 %v89
    %v1353 = vunpack.c.l.b16 %v90
    %v1354 = vunpack.c.l.b16 %v91
    %v1355 = vunpack.c.l.b16 %v92
    %v1356 = vunpack.c.l.b16 %v93
    %v1357 = vunpack.c.l.b16 %v94
    %v1358 = vunpack.c.l.b16 %v95
    %v1359 = vunpack.c.l.b16 %v96
    %v1360 = vunpack.c.l.b16 %v97
    %v1361 = vunpack.c.l.b16 %v98
    %v1362 = vunpack.c.l.b16 %v99
    %v1363 = vunpack.c.l.b16 %v100
    %v1364 = vunpack.c.l.b16 %v101
    %v1365 = vunpack.c.l.b16 %v102
    %v1366 = vunpack.c.l.b16 %v103
    %v1367 = vunpack.c.l.b16 %v104
    %v1368 = vunpack.c.l.b16 %v105
    %v1369 = vunpack.c.l.b16 %v106
    %v1370 = vunpack.c.l.b16 %v107
    %v1371 = vunpack.c.l.b16 %v108
    %v1372 = vunpack.c.l.b16 %v109
    %v1373 = vunpack.c.l.b16 %v110
    %v1374 = vunpack.c.l.b16 %v111
    %v1375 = vunpack.c.l.b16 %v112
    %v1376 = vunpack.c.l.b16 %v113
    %v1377 = vunpack.c.l.b16 %v114
    %v1378 = vunpack.c.l.b16 %v115
    %v1379 = vunpack.c.l.b16 %v116
    %v1380 = vunpack.c.l.b16 %v117
    %v1381 = vunpack.c.l.b16 %v118
    %v1382 = vunpack.c.l.b16 %v119
    %v1383 = vunpack.c.l.b16 %v120
    %v1384 = vunpack.c.l.b16 %v121
    %v1385 = vunpack.c.l.b16 %v122
    %v1386 = vunpack.c.l.b16 %v123
    %v1387 = vunpack.c.l.b16 %v124
    %v1388 = vunpack.c.l.b16 %v125
    %v1389 = vunpack.c.l.b16 %v126
    %v1390 = vunpack.c.l.b16 %v127
    %v1391 = vunpack.c.l.b16 %v128
    %v1392 = vunpack.c.l.b16 %v129
    %v1393 = vunpack.c.l.b16 %v130
    %v1394 = vunpack.c.l.b16 %v131
    %v1395 = vunpack.c.l.b16 %v132
    %v1396 = vunpack.c.l.b16 %v133
    %v1397 = vunpack.c.l.b16 %v134
    %v1398 = vunpack.c.l.b16 %v135
    %v1399 = vunpack.c.l.b16 %v136
    %v1400 = vunpack.c.l.b16 %v137
    %v1401 = vunpack.c.l.b16 %v138
    %v1402 = vunpack.c.l.b16 %v139
    %v1403 = vunpack.c.l.b16 %v140
    %v1404 = vunpack.c.l.b16 %v141
    %v1405 = vunpack.c.l.b16 %v142
    %v1406 = vunpack.c.l.b16 %v143
    %v1407 = vunpack.c.l.b16 %v144
    %v1408 = vunpack.c.l.b16 %v145
    %v1409 = vunpack.c.l.b16 %v146
    %v1410 = vunpack.c.l.b16 %v147
    %v1411 = vunpack.c.l.b16 %v148
    %v1412 = vunpack.c.l.b16 %v149
    %v1413 = vunpack.c.l.b16 %v150
    %v1414 = vunpack.c.l.b16 %v151
    %v1415 = vunpack.c.l.b16 %v152
    %v1416 = vunpack.c.l.b16 %v153
    %v1417 = vunpack.c.l.b16 %v154
    %v1418 = vunpack.c.l.b16 %v155
    %v1419 = vunpack.c.l.b16 %v156
    %v1420 = vunpack.c.l.b16 %v157
    %v1421 = vunpack.c.l.b16 %v158
    %v1422 = vunpack.c.l.b16 %v159
    %v1423 = vunpack.c.l.b16 %v160
    %v1424 = vunpack.c.l.b16 %v161
    %v1425 = vunpack.c.l.b16 %v162
    %v1426 = vunpack.c.l.b16 %v163
    %v1427 = vunpack.c.l.b16 %v164
    %v1428 = vunpack.c.l.b16 %v165
    %v1429 = vunpack.c.l.b16 %v166
    %v1430 = vunpack.c.l.b16 %v167
    %v1431 = vunpack.c.l.b16 %v168
    %v1432 = vunpack.c.l.b16 %v169
    %v1433 = vunpack.c.l.b16 %v170
    %v1434 = vunpack.c.l.b16 %v171
    %v1435 = vunpack.c.l.b16 %v172
    %v1436 = vunpack.c.l.b16 %v173
    %v1437 = vunpack.c.l.b16 %v174
    %v1438 = vunpack.c.l.b16 %v175
    %v1439 = vunpack.c.l.b16 %v176
    %v1440 = vunpack.c.l.b16 %v177
    %v1441 = vunpack.c.l.b16 %v178
    %v1442 = vunpack.c.l.b16 %v179
    %v1443 = vunpack.c.l.b16 %v180
    %v1444 = vunpack.c.l.b16 %v181
    %v1445 = vunpack.c.l.b16 %v182
    %v1446 = vunpack.c.l.b16 %v183
    %v1447 = vunpack.c.l.b16 %v184
    %v1448 = vunpack.c.l.b16 %v185
    %v1449 = vunpack.c.l.b16 %v186
    %v1450 = vunpack.c.l.b16 %v187
    %v1451 = vunpack.c.l.b16 %v188
    %v1452 = vunpack.c.l.b16 %v189
    %v1453 = vunpack.c.l.b16 %v190
    %v1454 = vunpack.c.l.b16 %v191
    %v1455 = vunpack.c.l.b16 %v192
    %v1456 = vunpack.c.l.b16 %v193
    %v1457 = vunpack.c.l.b16 %v194
    %v1458 = vunpack.c.l.b16 %v195
    %v1459 = vunpack.c.l.b16 %v196
    %v1460 = vunpack.c.l.b16 %v197
    %v1461 = vunpack.c.l.b16 %v198
    %v1462 = vunpack.c.l.b16 %v199
    %v1463 = vunpack.c.l.b16 %v200
    %v1464 = vunpack.c.l.b16 %v201
    %v1465 = vunpack.c.l.b16 %v202
    %v1466 = vunpack.c.l.b16 %v203
    %v1467 = vunpack.c.l.b16 %v204
    %v1468 = vunpack.c.l.b16 %v205
    %v1469 = vunpack.c.l.b16 %v206
    %v1470 = vunpack.c.l.b16 %v207
    %v1471 = vunpack.c.l.b16 %v208
    %v1472 = vunpack.c.l.b16 %v209
    %v1473 = vunpack.c.l.b16 %v210
    %v1474 = vunpack.c.l.b16 %v211
    %v1475 = vunpack.c.l.b16 %v212
    %v1476 = vunpack.c.l.b16 %v213
    %v1477 = vunpack.c.l.b16 %v214
    %v1478 = vunpack.c.l.b16 %v215
    %v1479 = vunpack.c.l.b16 %v216
    %v1480 = vunpack.c.l.b16 %v217
    %v1481 = vunpack.c.l.b16 %v218
    %v1482 = vunpack.c.l.b16 %v219
    %v1483 = vunpack.c.l.b16 %v220
    %v1484 = vunpack.c.l.b16 %v221
    %v1485 = vunpack.c.l.b16 %v222
    %v1486 = vunpack.c.l.b16 %v223
    %v1487 = vunpack.c.l.b16 %v224
    %v1488 = vunpack.c.l.b16 %v225
    %v1489 = vunpack.c.l.b16 %v226
    %v1490 = vunpack.c.l.b16 %v227
    %v1491 = vunpack.c.l.b16 %v228
    %v1492 = vunpack.c.l.b16 %v229
    %v1493 = vunpack.c.l.b16 %v230
    %v1494 = vunpack.c.l.b16 %v231
    %v1495 = vunpack.c.l.b16 %v232
    %v1496 = vunpack.c.l.b16 %v233
    %v1497 = vunpack.c.l.b16 %v234
    %v1498 = vunpack.c.l.b16 %v235
    %v1499 = vunpack.c.l.b16 %v236
    %v1500 = vunpack.c.l.b16 %v237
    %v1501 = vunpack.c.l.b16 %v238
    %v1502 = vunpack.c.l.b16 %v239
    %v1503 = vunpack.c.l.b16 %v240
    %v1504 = vunpack.c.l.b16 %v241
    %v1505 = vunpack.c.l.b16 %v242
    %v1506 = vunpack.c.l.b16 %v243
    %v1507 = vunpack.c.l.b16 %v244
    %v1508 = vunpack.c.l.b16 %v245
    %v1509 = vunpack.c.l.b16 %v246
    %v1510 = vunpack.c.l.b16 %v247
    %v1511 = vunpack.c.l.b16 %v248
    %v1512 = vunpack.c.l.b16 %v249
    %v1513 = vunpack.c.l.b16 %v250
    %v1514 = vunpack.c.l.b16 %v251
    %v1515 = vunpack.c.l.b16 %v252
    %v1516 = vunpack.c.l.b16 %v253
    %v1517 = vunpack.c.l.b16 %v254
    %v1518 = vunpack.c.l.b16 %v255
    %v1519 = vunpack.c.l.b16 %v256
    %v1520 = vunpack.c.l.b16 %v257
    %v1521 = vunpack.c.l.b16 %v258
    %v1522 = vunpack.c.l.b16 %v259
    %v1523 = vunpack.c.l.b16 %v260
    %v1524 = vunpack.c.l.b16 %v261
    %v1525 = vunpack.c.l.b16 %v262
    %v1526 = vunpack.c.l.b16 %v263
    %v1527 = vunpack.c.l.b16 %v264
    %v1528 = vunpack.c.l.b16 %v265
    %v1529 = vunpack.c.l.b16 %v266
    %v1530 = vunpack.c.l.b16 %v267
    %v1531 = vunpack.c.l.b16 %v268
    %v1532 = vunpack.c.l.b16 %v269
    %v1533 = vunpack.c.l.b16 %v270
    %v1534 = vunpack.c.l.b16 %v271
    %v1535 = vunpack.c.l.b16 %v272
    %v1536 = vunpack.c.l.b16 %v273
    %v1537 = vunpack.c.l.b16 %v274
    %v1538 = vunpack.c.l.b16 %v275
    %v1539 = vunpack.c.l.b16 %v276
    %v1540 = vunpack.c.l.b16 %v277
    %v1541 = vunpack.c.l.b16 %v278
    %v1542 = vunpack.c.l.b16 %v279
    %v1543 = vunpack.c.l.b16 %v280
    %v1544 = vunpack.c.l.b16 %v281
    %v1545 = vunpack.c.l.b16 %v282
    %v1546 = vunpack.c.l.b16 %v283
    %v1547 = vunpack.c.l.b16 %v284
    %v1548 = vunpack.c.l.b16 %v285
    %v1549 = vunpack.c.l.b16 %v286
    %v1550 = vunpack.c.l.b16 %v287
    %v1551 = vunpack.c.l.b16 %v288
    %v1552 = vunpack.c.l.b16 %v289
    %v1553 = vunpack.c.l.b16 %v290
    %v1554 = vunpack.c.l.b16 %v291
    %v1555 = vunpack.c.l.b16 %v292
    %v1556 = vunpack.c.l.b16 %v293
    %v1557 = vunpack.c.l.b16 %v294
    %v1558 = vunpack.c.l.b16 %v295
    %v1559 = vunpack.c.l.b16 %v296
    %v1560 = vunpack.c.l.b16 %v297
    %v1561 = vunpack.c.l.b16 %v298
    %v1562 = vunpack.c.l.b16 %v299
    %v1563 = vunpack.c.l.b16 %v300
    %v1564 = vunpack.c.l.b16 %v301
    %v1565 = vunpack.c.l.b16 %v302
    %v1566 = vunpack.c.l.b16 %v303
    %v1567 = vunpack.c.l.b16 %v304
    %v1568 = vunpack.c.l.b16 %v305
    %v1569 = vunpack.c.l.b16 %v306
    %v1570 = vunpack.c.l.b16 %v307
    %v1571 = vunpack.c.l.b16 %v308
    %v1572 = vunpack.c.l.b16 %v309
    %v1573 = vunpack.c.l.b16 %v310
    %v1574 = vunpack.c.l.b16 %v311
    %v1575 = vunpack.c.l.b16 %v312
    %v1576 = vunpack.c.l.b16 %v313
    %v1577 = vunpack.c.l.b16 %v314
    %v1578 = vunpack.c.l.b16 %v315
    %v1579 = vunpack.c.l.b16 %v316
    %v1580 = vunpack.c.l.b16 %v317
    %v1581 = vunpack.c.l.b16 %v318
    %v1582 = vunpack.c.l.b16 %v319
    %v1583 = vunpack.c.l.b16 %v320
    %v1584 = vunpack.c.l.b16 %v321
    %v1585 = vunpack.c.l.b16 %v322
    %v1586 = vunpack.c.l.b16 %v323
    %v1587 = vunpack.c.l.b16 %v324
    %v1588 = vunpack.c.l.b16 %v325
    %v1589 = vunpack.c.l.b16 %v326
    %v1590 = vunpack.c.l.b16 %v327
    %v1591 = vunpack.c.l.b16 %v328
    %v1592 = vunpack.c.l.b16 %v329
    %v1593 = vunpack.c.l.b16 %v330
    %v1594 = vunpack.c.l.b16 %v331
    %v1595 = vunpack.c.l.b16 %v332
    %v1596 = vunpack.c.l.b16 %v333
    %v1597 = vunpack.c.l.b16 %v334
    %v1598 = vunpack.c.l.b16 %v335
    %v1599 = vunpack.c.l.b16 %v336
    %v1600 = vunpack.c.l.b16 %v337
    %v1601 = vunpack.c.l.b16 %v338
    %v1602 = vunpack.c.l.b16 %v339
    %v1603 = vunpack.c.l.b16 %v340
    %v1604 = vunpack.c.l.b16 %v341
    %v1605 = vunpack.c.l.b16 %v342
    %v1606 = vunpack.c.l.b16 %v343
    %v1607 = vunpack.c.l.b16 %v344
    %v1608 = vunpack.c.l.b16 %v345
    %v1609 = vunpack.c.l.b16 %v346
    %v1610 = vunpack.c.l.b16 %v347
    %v1611 = vunpack.c.l.b16 %v348
    %v1612 = vunpack.c.l.b16 %v349
    %v1613 = vunpack.c.l.b16 %v350
    %v1614 = vunpack.c.l.b16 %v351
    %v1615 = vunpack.c.l.b16 %v352
    %v1616 = vunpack.c.l.b16 %v353
    %v1617 = vunpack.c.l.b16 %v354
    %v1618 = vunpack.c.l.b16 %v355
    %v1619 = vunpack.c.l.b16 %v356
    %v1620 = vunpack.c.l.b16 %v357
    %v1621 = vunpack.c.l.b16 %v358
    %v1622 = vunpack.c.l.b16 %v359
    %v1623 = vunpack.c.l.b16 %v360
    %v1624 = vunpack.c.l.b16 %v361
    %v1625 = vunpack.c.l.b16 %v362
    %v1626 = vunpack.c.l.b16 %v363
    %v1627 = vunpack.c.l.b16 %v364
    %v1628 = vunpack.c.l.b16 %v365
    %v1629 = vunpack.c.l.b16 %v366
    %v1630 = vunpack.c.l.b16 %v367
    %v1631 = vunpack.c.l.b16 %v368
    %v1632 = vunpack.c.l.b16 %v369
    %v1633 = vunpack.c.l.b16 %v370
    %v1634 = vunpack.c.l.b16 %v371
    %v1635 = vunpack.c.l.b16 %v372
    %v1636 = vunpack.c.l.b16 %v373
    %v1637 = vunpack.c.l.b16 %v374
    %v1638 = vunpack.c.l.b16 %v375
    %v1639 = vunpack.c.l.b16 %v376
    %v1640 = vunpack.c.l.b16 %v377
    %v1641 = vunpack.c.l.b16 %v378
    %v1642 = vunpack.c.l.b16 %v379
    %v1643 = vunpack.c.l.b16 %v380
    %v1644 = vunpack.c.l.b16 %v381
    %v1645 = vunpack.c.l.b16 %v382
    %v1646 = vunpack.c.l.b16 %v383
    %v1647 = vunpack.c.l.b16 %v384
    %v1648 = vunpack.c.l.b16 %v385
    %v1649 = vunpack.c.l.b16 %v386
    %v1650 = vunpack.c.l.b16 %v387
    %v1651 = vunpack.c.l.b16 %v388
    %v1652 = vunpack.c.l.b16 %v389
    %v1653 = vunpack.c.l.b16 %v390
    %v1654 = vunpack.c.l.b16 %v391
    %v1655 = vunpack.c.l.b16 %v392
    %v1656 = vunpack.c.l.b16 %v393
    %v1657 = vunpack.c.l.b16 %v394
    %v1658 = vunpack.c.l.b16 %v395
    %v1659 = vunpack.c.l.b16 %v396
    %v1660 = vunpack.c.l.b16 %v397
    %v1661 = vunpack.c.l.b16 %v398
    %v1662 = vunpack.c.l.b16 %v399
    %v1663 = vunpack.c.l.b16 %v400
    %v1664 = vunpack.c.l.b16 %v401
    %v1665 = vunpack.c.l.b16 %v402
    %v1666 = vunpack.c.l.b16 %v403
    %v1667 = vunpack.c.l.b16 %v404
    %v1668 = vunpack.c.l.b16 %v405
    %v1669 = vunpack.c.l.b16 %v406
    %v1670 = vunpack.c.l.b16 %v407
    %v1671 = vunpack.c.l.b16 %v408
    %v1672 = vunpack.c.l.b16 %v409
    %v1673 = vunpack.c.l.b16 %v410
    %v1674 = vunpack.c.l.b16 %v411
    %v1675 = vunpack.c.l.b16 %v412
    %v1676 = vunpack.c.l.b16 %v413
    %v1677 = vunpack.c.l.b16 %v414
    %v1678 = vunpack.c.l.b16 %v415
    %v1679 = vunpack.c.l.b16 %v416
    %v1680 = vunpack.c.l.b16 %v417
    %v1681 = vunpack.c.l.b16 %v418
    %v1682 = vunpack.c.l.b16 %v419
    %v1683 = vunpack.c.l.b16 %v420
    %v1684 = vunpack.c.l.b16 %v421
    %v1685 = vunpack.c.l.b16 %v422
    %v1686 = vunpack.c.l.b16 %v423
    %v1687 = vunpack.c.l.b16 %v424
    %v1688 = vunpack.c.l.b16 %v425
    %v1689 = vunpack.c.l.b16 %v426
    %v1690 = vunpack.c.l.b16 %v427
    %v1691 = vunpack.c.l.b16 %v428
    %v1692 = vunpack.c.l.b16 %v429
    %v1693 = vunpack.c.l.b16 %v430
    %v1694 = vunpack.c.l.b16 %v431
    %v1695 = vunpack.c.l.b16 %v432
    %v1696 = vunpack.c.l.b16 %v433
    %v1697 = vunpack.c.l.b16 %v434
    %v1698 = vunpack.c.l.b16 %v435
    %v1699 = vunpack.c.l.b16 %v436
    %v1700 = vunpack.c.l.b16 %v437
    %v1701 = vunpack.c.l.b16 %v438
    %v1702 = vunpack.c.l.b16 %v439
    %v1703 = vunpack.c.l.b16 %v440
    %v1704 = vunpack.c.l.b16 %v441
    %v1705 = vunpack.c.l.b16 %v442
    %v1706 = vunpack.c.l.b16 %v443
    %v1707 = vunpack.c.l.b16 %v444
    %v1708 = vunpack.c.l.b16 %v445
    %v1709 = vunpack.c.l.b16 %v446
    %v1710 = vunpack.c.l.b16 %v447
    %v1711 = vunpack.c.l.b16 %v448
    %v1712 = vunpack.c.l.b16 %v449
    %v1713 = vunpack.c.l.b16 %v450
    %v1714 = vunpack.c.l.b16 %v451
    %v1715 = vunpack.c.l.b16 %v452
    %v1716 = vunpack.c.l.b16 %v453
    %v1717 = vunpack.c.l.b16 %v454
    %v1718 = vunpack.c.l.b16 %v455
    %v1719 = vunpack.c.l.b16 %v456
    %v1720 = vunpack.c.l.b16 %v457
    %v1721 = vunpack.c.l.b16 %v458
    %v1722 = vunpack.c.l.b16 %v459
    %v1723 = vunpack.c.l.b16 %v460
    %v1724 = vunpack.c.l.b16 %v461
    %v1725 = vunpack.c.l.b16 %v462
    %v1726 = vunpack.c.l.b16 %v463
    %v1727 = vunpack.c.l.b16 %v464
    %v1728 = vunpack.c.l.b16 %v465
    %v1729 = vunpack.c.l.b16 %v466
    %v1730 = vunpack.c.l.b16 %v467
    %v1731 = vunpack.c.l.b16 %v468
    %v1732 = vunpack.c.l.b16 %v469
    %v1733 = vunpack.c.l.b16 %v470
    %v1734 = vunpack.c.l.b16 %v471
    %v1735 = vunpack.c.l.b16 %v472
    %v1736 = vunpack.c.l.b16 %v473
    %v1737 = vunpack.c.l.b16 %v474
    %v1738 = vunpack.c.l.b16 %v475
    %v1739 = vunpack.c.l.b16 %v476
    %v1740 = vunpack.c.l.b16 %v477
    %v1741 = vunpack.c.l.b16 %v478
    %v1742 = vunpack.c.l.b16 %v479
    %v1743 = vunpack.c.l.b16 %v480
    %v1744 = vunpack.c.l.b16 %v481
    %v1745 = vunpack.c.l.b16 %v482
    %v1746 = vunpack.c.l.b16 %v483
    %v1747 = vunpack.c.l.b16 %v484
    %v1748 = vunpack.c.l.b16 %v485
    %v1749 = vunpack.c.l.b16 %v486
    %v1750 = vunpack.c.l.b16 %v487
    %v1751 = vunpack.c.l.b16 %v488
    %v1752 = vunpack.c.l.b16 %v489
    %v1753 = vunpack.c.l.b16 %v490
    %v1754 = vunpack.c.l.b16 %v491
    %v1755 = vunpack.c.l.b16 %v492
    %v1756 = vunpack.c.l.b16 %v493
    %v1757 = vunpack.c.l.b16 %v494
    %v1758 = vunpack.c.l.b16 %v495
    %v1759 = vunpack.c.l.b16 %v496
    %v1760 = vunpack.c.l.b16 %v497
    %v1761 = vunpack.c.l.b16 %v498
    %v1762 = vunpack.c.l.b16 %v499
    %v1763 = vunpack.c.l.b16 %v500
    %v1764 = vunpack.c.l.b16 %v501
    %v1765 = vunpack.c.l.b16 %v502
    %v1766 = vunpack.c.l.b16 %v503
    %v1767 = vunpack.c.l.b16 %v504
    %v1768 = vunpack.c.l.b16 %v505
    %v1769 = vunpack.c.l.b16 %v506
    %v1770 = vunpack.c.l.b16 %v507
    %v1771 = vunpack.c.l.b16 %v508
    %v1772 = vunpack.c.l.b16 %v509
    %v1773 = vunpack.c.l.b16 %v510
    %v1774 = vunpack.c.l.b16 %v511
    %v1775 = vunpack.c.l.b16 %v512
    %v1776 = vunpack.c.l.b16 %v513
    %v1777 = vunpack.c.l.b16 %v514
    %v1778 = vunpack.c.l.b16 %v515
    %v1779 = vunpack.c.l.b16 %v516
    %v1780 = vunpack.c.l.b16 %v517
    %v1781 = vunpack.c.l.b16 %v518
    %v1782 = vunpack.c.l.b16 %v519
    %v1783 = vunpack.c.l.b16 %v520
    %v1784 = vunpack.c.l.b16 %v521
    %v1785 = vunpack.c.l.b16 %v522
    %v1786 = vunpack.c.l.b16 %v523
    %v1787 = vunpack.c.l.b16 %v524
    %v1788 = vunpack.c.l.b16 %v525
    %v1789 = vunpack.c.l.b16 %v526
    %v1790 = vunpack.c.l.b16 %v527
    %v1791 = vunpack.c.l.b16 %v528
    %v1792 = vunpack.c.l.b16 %v529
    %v1793 = vunpack.c.l.b16 %v530
    %v1794 = vunpack.c.l.b16 %v531
    %v1795 = vunpack.c.l.b16 %v532
    %v1796 = vunpack.c.l.b16 %v533
    %v1797 = vunpack.c.l.b16 %v534
    %v1798 = vunpack.c.l.b16 %v535
    %v1799 = vunpack.c.l.b16 %v536
    %v1800 = vunpack.c.l.b16 %v537
    %v1801 = vunpack.c.l.b16 %v538
    %v1802 = vunpack.c.l.b16 %v539
    %v1803 = vunpack.c.l.b16 %v540
    %v1804 = vunpack.c.l.b16 %v541
    %v1805 = vunpack.c.l.b16 %v542
    %v1806 = vunpack.c.l.b16 %v543
    %v1807 = vpack.c.b16 %v1296, %v1295
    %v1808 = vpack.c.b16 %v1298, %v1297
    %v1809 = vpack.c.b16 %v1300, %v1299
    %v1810 = vpack.c.b16 %v1302, %v1301
    %v1811 = vpack.c.b16 %v1304, %v1303
    %v1812 = vpack.c.b16 %v1306, %v1305
    %v1813 = vpack.c.b16 %v1308, %v1307
    %v1814 = vpack.c.b16 %v1310, %v1309
    %v1815 = vpack.c.b16 %v1312, %v1311
    %v1816 = vpack.c.b16 %v1314, %v1313
    %v1817 = vpack.c.b16 %v1316, %v1315
    %v1818 = vpack.c.b16 %v1318, %v1317
    %v1819 = vpack.c.b16 %v1320, %v1319
    %v1820 = vpack.c.b16 %v1322, %v1321
    %v1821 = vpack.c.b16 %v1324, %v1323
    %v1822 = vpack.c.b16 %v1326, %v1325
    %v1823 = vpack.c.b16 %v1328, %v1327
    %v1824 = vpack.c.b16 %v1330, %v1329
    %v1825 = vpack.c.b16 %v1332, %v1331
    %v1826 = vpack.c.b16 %v1334, %v1333
    %v1827 = vpack.c.b16 %v1336, %v1335
    %v1828 = vpack.c.b16 %v1338, %v1337
    %v1829 = vpack.c.b16 %v1340, %v1339
    %v1830 = vpack.c.b16 %v1342, %v1341
    %v1831 = vpack.c.b16 %v1344, %v1343
    %v1832 = vpack.c.b16 %v1346, %v1345
    %v1833 = vpack.c.b16 %v1348, %v1347
    %v1834 = vpack.c.b16 %v1350, %v1349
    %v1835 = vpack.c.b16 %v1352, %v1351
    %v1836 = vpack.c.b16 %v1354, %v1353
    %v1837 = vpack.c.b16 %v1356, %v1355
    %v1838 = vpack.c.b16 %v1358, %v1357
    %v1839 = vpack.c.b16 %v1360, %v1359
    %v1840 = vpack.c.b16 %v1362, %v1361
    %v1841 = vpack.c.b16 %v1364, %v1363
    %v1842 = vpack.c.b16 %v1366, %v1365
    %v1843 = vpack.c.b16 %v1368, %v1367
    %v1844 = vpack.c.b16 %v1370, %v1369
    %v1845 = vpack.c.b16 %v1372, %v1371
    %v1846 = vpack.c.b16 %v1374, %v1373
    %v1847 = vpack.c.b16 %v1376, %v1375
    %v1848 = vpack.c.b16 %v1378, %v1377
    %v1849 = vpack.c.b16 %v1380, %v1379
    %v1850 = vpack.c.b16 %v1382, %v1381
    %v1851 = vpack.c.b16 %v1384, %v1383
    %v1852 = vpack.c.b16 %v1386, %v1385
    %v1853 = vpack.c.b16 %v1388, %v1387
    %v1854 = vpack.c.b16 %v1390, %v1389
    %v1855 = vpack.c.b16 %v1392, %v1391
    %v1856 = vpack.c.b16 %v1394, %v1393
    %v1857 = vpack.c.b16 %v1396, %v1395
    %v1858 = vpack.c.b16 %v1398, %v1397
    %v1859 = vpack.c.b16 %v1400, %v1399
    %v1860 = vpack.c.b16 %v1402, %v1401
    %v1861 = vpack.c.b16 %v1404, %v1403
    %v1862 = vpack.c.b16 %v1406, %v1405
    %v1863 = vpack.c.b16 %v1408, %v1407
    %v1864 = vpack.c.b16 %v1410, %v1409
    %v1865 = vpack.c.b16 %v1412, %v1411
    %v1866 = vpack.c.b16 %v1414, %v1413
    %v1867 = vpack.c.b16 %v1416, %v1415
    %v1868 = vpack.c.b16 %v1418, %v1417
    %v1869 = vpack.c.b16 %v1420, %v1419
    %v1870 = vpack.c.b16 %v1422, %v1421
    %v1871 = vpack.c.b16 %v1424, %v1423
    %v1872 = vpack.c.b16 %v1426, %v1425
    %v1873 = vpack.c.b16 %v1428, %v1427
    %v1874 = vpack.c.b16 %v1430, %v1429
    %v1875 = vpack.c.b16 %v1432, %v1431
    %v1876 = vpack.c.b16 %v1434, %v1433
    %v1877 = vpack.c.b16 %v1436, %v1435
    %v1878 = vpack.c.b16 %v1438, %v1437
    %v1879 = vpack.c.b16 %v1440, %v1439
    %v1880 = vpack.c.b16 %v1442, %v1441
    %v1881 = vpack.c.b16 %v1444, %v1443
    %v1882 = vpack.c.b16 %v1446, %v1445
    %v1883 = vpack.c.b16 %v1448, %v1447
    %v1884 = vpack.c.b16 %v1450, %v1449
    %v1885 = vpack.c.b16 %v1452, %v1451
    %v1886 = vpack.c.b16 %v1454, %v1453
    %v1887 = vpack.c.b16 %v1456, %v1455
    %v1888 = vpack.c.b16 %v1458, %v1457
    %v1889 = vpack.c.b16 %v1460, %v1459
    %v1890 = vpack.c.b16 %v1462, %v1461
    %v1891 = vpack.c.b16 %v1464, %v1463
    %v1892 = vpack.c.b16 %v1466, %v1465
    %v1893 = vpack.c.b16 %v1468, %v1467
    %v1894 = vpack.c.b16 %v1470, %v1469
    %v1895 = vpack.c.b16 %v1472, %v1471
    %v1896 = vpack.c.b16 %v1474, %v1473
    %v1897 = vpack.c.b16 %v1476, %v1475
    %v1898 = vpack.c.b16 %v1478, %v1477
    %v1899 = vpack.c.b16 %v1480, %v1479
    %v1900 = vpack.c.b16 %v1482, %v1481
    %v1901 = vpack.c.b16 %v1484, %v1483
    %v1902 = vpack.c.b16 %v1486, %v1485
    %v1903 = vpack.c.b16 %v1488, %v1487
    %v1904 = vpack.c.b16 %v1490, %v1489
    %v1905 = vpack.c.b16 %v1492, %v1491
    %v1906 = vpack.c.b16 %v1494, %v1493
    %v1907 = vpack.c.b16 %v1496, %v1495
    %v1908 = vpack.c.b16 %v1498, %v1497
    %v1909 = vpack.c.b16 %v1500, %v1499
    %v1910 = vpack.c.b16 %v1502, %v1501
    %v1911 = vpack.c.b16 %v1504, %v1503
    %v1912 = vpack.c.b16 %v1506, %v1505
    %v1913 = vpack.c.b16 %v1508, %v1507
    %v1914 = vpack.c.b16 %v1510, %v1509
    %v1915 = vpack.c.b16 %v1512, %v1511
    %v1916 = vpack.c.b16 %v1514, %v1513
    %v1917 = vpack.c.b16 %v1516, %v1515
    %v1918 = vpack.c.b16 %v1518, %v1517
    %v1919 = vpack.c.b16 %v1520, %v1519
    %v1920 = vpack.c.b16 %v1522, %v1521
    %v1921 = vpack.c.b16 %v1524, %v1523
    %v1922 = vpack.c.b16 %v1526, %v1525
    %v1923 = vpack.c.b16 %v1528, %v1527
    %v1924 = vpack.c.b16 %v1530, %v1529
    %v1925 = vpack.c.b16 %v1532, %v1531
    %v1926 = vpack.c.b16 %v1534, %v1533
    %v1927 = vpack.c.b16 %v1536, %v1535
    %v1928 = vpack.c.b16 %v1538, %v1537
    %v1929 = vpack.c.b16 %v1540, %v1539
    %v1930 = vpack.c.b16 %v1542, %v1541
    %v1931 = vpack.c.b16 %v1544, %v1543
    %v1932 = vpack.c.b16 %v1546, %v1545
    %v1933 = vpack.c.b16 %v1548, %v1547
    %v1934 = vpack.c.b16 %v1550, %v1549
    %v1935 = vpack.c.b16 %v1552, %v1551
    %v1936 = vpack.c.b16 %v1554, %v1553
    %v1937 = vpack.c.b16 %v1556, %v1555
    %v1938 = vpack.c.b16 %v1558, %v1557
    %v1939 = vpack.c.b16 %v1560, %v1559
    %v1940 = vpack.c.b16 %v1562, %v1561
    %v1941 = vpack.c.b16 %v1564, %v1563
    %v1942 = vpack.c.b16 %v1566, %v1565
    %v1943 = vpack.c.b16 %v1568, %v1567
    %v1944 = vpack.c.b16 %v1570, %v1569
    %v1945 = vpack.c.b16 %v1572, %v1571
    %v1946 = vpack.c.b16 %v1574, %v1573
    %v1947 = vpack.c.b16 %v1576, %v1575
    %v1948 = vpack.c.b16 %v1578, %v1577
    %v1949 = vpack.c.b16 %v1580, %v1579
    %v1950 = vpack.c.b16 %v1582, %v1581
    %v1951 = vpack.c.b16 %v1584, %v1583
    %v1952 = vpack.c.b16 %v1586, %v1585
    %v1953 = vpack.c.b16 %v1588, %v1587
    %v1954 = vpack.c.b16 %v1590, %v1589
    %v1955 = vpack.c.b16 %v1592, %v1591
    %v1956 = vpack.c.b16 %v1594, %v1593
    %v1957 = vpack.c.b16 %v1596, %v1595
    %v1958 = vpack.c.b16 %v1598, %v1597
    %v1959 = vpack.c.b16 %v1600, %v1599
    %v1960 = vpack.c.b16 %v1602, %v1601
    %v1961 = vpack.c.b16 %v1604, %v1603
    %v1962 = vpack.c.b16 %v1606, %v1605
    %v1963 = vpack.c.b16 %v1608, %v1607
    %v1964 = vpack.c.b16 %v1610, %v1609
    %v1965 = vpack.c.b16 %v1612, %v1611
    %v1966 = vpack.c.b16 %v1614, %v1613
    %v1967 = vpack.c.b16 %v1616, %v1615
    %v1968 = vpack.c.b16 %v1618, %v1617
    %v1969 = vpack.c.b16 %v1620, %v1619
    %v1970 = vpack.c.b16 %v1622, %v1621
    %v1971 = vpack.c.b16 %v1624, %v1623
    %v1972 = vpack.c.b16 %v1626, %v1625
    %v1973 = vpack.c.b16 %v1628, %v1627
    %v1974 = vpack.c.b16 %v1630, %v1629
    %v1975 = vpack.c.b16 %v1632, %v1631
    %v1976 = vpack.c.b16 %v1634, %v1633
    %v1977 = vpack.c.b16 %v1636, %v1635
    %v1978 = vpack.c.b16 %v1638, %v1637
    %v1979 = vpack.c.b16 %v1640, %v1639
    %v1980 = vpack.c.b16 %v1642, %v1641
    %v1981 = vpack.c.b16 %v1644, %v1643
    %v1982 = vpack.c.b16 %v1646, %v1645
    %v1983 = vpack.c.b16 %v1648, %v1647
    %v1984 = vpack.c.b16 %v1650, %v1649
    %v1985 = vpack.c.b16 %v1652, %v1651
    %v1986 = vpack.c.b16 %v1654, %v1653
    %v1987 = vpack.c.b16 %v1656, %v1655
    %v1988 = vpack.c.b16 %v1658, %v1657
    %v1989 = vpack.c.b16 %v1660, %v1659
    %v1990 = vpack.c.b16 %v1662, %v1661
    %v1991 = vpack.c.b16 %v1664, %v1663
    %v1992 = vpack.c.b16 %v1666, %v1665
    %v1993 = vpack.c.b16 %v1668, %v1667
    %v1994 = vpack.c.b16 %v1670, %v1669
    %v1995 = vpack.c.b16 %v1672, %v1671
    %v1996 = vpack.c.b16 %v1674, %v1673
    %v1997 = vpack.c.b16 %v1676, %v1675
    %v1998 = vpack.c.b16 %v1678, %v1677
    %v1999 = vpack.c.b16 %v1680, %v1679
    %v2000 = vpack.c.b16 %v1682, %v1681
    %v2001 = vpack.c.b16 %v1684, %v1683
    %v2002 = vpack.c.b16 %v1686, %v1685
    %v2003 = vpack.c.b16 %v1688, %v1687
    %v2004 = vpack.c.b16 %v1690, %v1689
    %v2005 = vpack.c.b16 %v1692, %v1691
    %v2006 = vpack.c.b16 %v1694, %v1693
    %v2007 = vpack.c.b16 %v1696, %v1695
    %v2008 = vpack.c.b16 %v1698, %v1697
    %v2009 = vpack.c.b16 %v1700, %v1699
    %v2010 = vpack.c.b16 %v1702, %v1701
    %v2011 = vpack.c.b16 %v1704, %v1703
    %v2012 = vpack.c.b16 %v1706, %v1705
    %v2013 = vpack.c.b16 %v1708, %v1707
    %v2014 = vpack.c.b16 %v1710, %v1709
    %v2015 = vpack.c.b16 %v1712, %v1711
    %v2016 = vpack.c.b16 %v1714, %v1713
    %v2017 = vpack.c.b16 %v1716, %v1715
    %v2018 = vpack.c.b16 %v1718, %v1717
    %v2019 = vpack.c.b16 %v1720, %v1719
    %v2020 = vpack.c.b16 %v1722, %v1721
    %v2021 = vpack.c.b16 %v1724, %v1723
    %v2022 = vpack.c.b16 %v1726, %v1725
    %v2023 = vpack.c.b16 %v1728, %v1727
    %v2024 = vpack.c.b16 %v1730, %v1729
    %v2025 = vpack.c.b16 %v1732, %v1731
    %v2026 = vpack.c.b16 %v1734, %v1733
    %v2027 = vpack.c.b16 %v1736, %v1735
    %v2028 = vpack.c.b16 %v1738, %v1737
    %v2029 = vpack.c.b16 %v1740, %v1739
    %v2030 = vpack.c.b16 %v1742, %v1741
    %v2031 = vpack.c.b16 %v1744, %v1743
    %v2032 = vpack.c.b16 %v1746, %v1745
    %v2033 = vpack.c.b16 %v1748, %v1747
    %v2034 = vpack.c.b16 %v1750, %v1749
    %v2035 = vpack.c.b16 %v1752, %v1751
    %v2036 = vpack.c.b16 %v1754, %v1753
    %v2037 = vpack.c.b16 %v1756, %v1755
    %v2038 = vpack.c.b16 %v1758, %v1757
    %v2039 = vpack.c.b16 %v1760, %v1759
    %v2040 = vpack.c.b16 %v1762, %v1761
    %v2041 = vpack.c.b16 %v1764, %v1763
    %v2042 = vpack.c.b16 %v1766, %v1765
    %v2043 = vpack.c.b16 %v1768, %v1767
    %v2044 = vpack.c.b16 %v1770, %v1769
    %v2045 = vpack.c.b16 %v1772, %v1771
    %v2046 = vpack.c.b16 %v1774, %v1773
    %v2047 = vpack.c.b16 %v1776, %v1775
    %v2048 = vpack.c.b16 %v1778, %v1777
    %v2049 = vpack.c.b16 %v1780, %v1779
    %v2050 = vpack.c.b16 %v1782, %v1781
    %v2051 = vpack.c.b16 %v1784, %v1783
    %v2052 = vpack.c.b16 %v1786, %v1785
    %v2053 = vpack.c.b16 %v1788, %v1787
    %v2054 = vpack.c.b16 %v1790, %v1789
    %v2055 = vpack.c.b16 %v1792, %v1791
    %v2056 = vpack.c.b16 %v1794, %v1793
    %v2057 = vpack.c.b16 %v1796, %v1795
    %v2058 = vpack.c.b16 %v1798, %v1797
    %v2059 = vpack.c.b16 %v1800, %v1799
    %v2060 = vpack.c.b16 %v1802, %v1801
    %v2061 = vpack.c.b16 %v1804, %v1803
    %v2062 = vpack.c.b16 %v1806, %v1805
    %2319 = vmatprep.subr.bf16.mxu0 0
    %2320 = vmatpush1.bf16.msra.mxu0 %v1807
    %2321 = vmatprep.subr.bf16.mxu0 0
    %2322 = vmatpush1.bf16.msra.mxu0 %v1808
    %2323 = vmatprep.subr.bf16.mxu0 0
    %2324 = vmatpush1.bf16.msra.mxu0 %v1809
    %2325 = vmatprep.subr.bf16.mxu0 0
    %2326 = vmatpush1.bf16.msra.mxu0 %v1810
    %2327 = vmatprep.subr.bf16.mxu0 0
    %2328 = vmatpush1.bf16.msra.mxu0 %v1811
    %2329 = vmatprep.subr.bf16.mxu0 0
    %2330 = vmatpush1.bf16.msra.mxu0 %v1812
    %2331 = vmatprep.subr.bf16.mxu0 0
    %2332 = vmatpush1.bf16.msra.mxu0 %v1813
    %2333 = vmatprep.subr.bf16.mxu0 0
    %2334 = vmatpush1.bf16.msra.mxu0 %v1814
    %2335 = vmatprep.subr.bf16.mxu0 0
    %2336 = vmatpush1.bf16.msra.mxu0 %v1815
    %2337 = vmatprep.subr.bf16.mxu0 0
    %2338 = vmatpush1.bf16.msra.mxu0 %v1816
    %2339 = vmatprep.subr.bf16.mxu0 0
    %2340 = vmatpush1.bf16.msra.mxu0 %v1817
    %2341 = vmatprep.subr.bf16.mxu0 0
    %2342 = vmatpush1.bf16.msra.mxu0 %v1818
    %2343 = vmatprep.subr.bf16.mxu0 0
    %2344 = vmatpush1.bf16.msra.mxu0 %v1819
    %2345 = vmatprep.subr.bf16.mxu0 0
    %2346 = vmatpush1.bf16.msra.mxu0 %v1820
    %2347 = vmatprep.subr.bf16.mxu0 0
    %2348 = vmatpush1.bf16.msra.mxu0 %v1821
    %2349 = vmatprep.subr.bf16.mxu0 0
    %2350 = vmatpush1.bf16.msra.mxu0 %v1822
    %2351 = vmatprep.mubr.bf16.mxu0 %v592
    %2352 = vmatmul.mubr.bf16.gmra.mrb[0].mxu0 %v578
    %v2353 = vpop.f32.mrb[0].mxu0
    %v2354 = vadd.f32 %v549, %v2353
    %v2355 = vpop.f32.mrb[0].mxu0
    %v2356 = vpop.f32.mrb[0].mxu0
    %v2357 = vpop.f32.mrb[0].mxu0
    %2358 = vdwg.mxu0
    %2359 = vmatprep.subr.bf16.mxu0 0
    %2360 = vmatpush1.bf16.msra.mxu0 %v1823
    %2361 = vmatprep.subr.bf16.mxu0 0
    %2362 = vmatpush1.bf16.msra.mxu0 %v1824
    %2363 = vmatprep.subr.bf16.mxu0 0
    %2364 = vmatpush1.bf16.msra.mxu0 %v1825
    %2365 = vmatprep.subr.bf16.mxu0 0
    %2366 = vmatpush1.bf16.msra.mxu0 %v1826
    %2367 = vmatprep.subr.bf16.mxu0 0
    %2368 = vmatpush1.bf16.msra.mxu0 %v1827
    %2369 = vmatprep.subr.bf16.mxu0 0
    %2370 = vmatpush1.bf16.msra.mxu0 %v1828
    %2371 = vmatprep.subr.bf16.mxu0 0
    %2372 = vmatpush1.bf16.msra.mxu0 %v1829
    %2373 = vmatprep.subr.bf16.mxu0 0
    %2374 = vmatpush1.bf16.msra.mxu0 %v1830
    %2375 = vmatprep.subr.bf16.mxu0 0
    %2376 = vmatpush1.bf16.msra.mxu0 %v1831
    %2377 = vmatprep.subr.bf16.mxu0 0
    %2378 = vmatpush1.bf16.msra.mxu0 %v1832
    %2379 = vmatprep.subr.bf16.mxu0 0
    %2380 = vmatpush1.bf16.msra.mxu0 %v1833
    %2381 = vmatprep.subr.bf16.mxu0 0
    %2382 = vmatpush1.bf16.msra.mxu0 %v1834
    %2383 = vmatprep.subr.bf16.mxu0 0
    %2384 = vmatpush1.bf16.msra.mxu0 %v1835
    %2385 = vmatprep.subr.bf16.mxu0 0
    %2386 = vmatpush1.bf16.msra.mxu0 %v1836
    %2387 = vmatprep.subr.bf16.mxu0 0
    %2388 = vmatpush1.bf16.msra.mxu0 %v1837
    %2389 = vmatprep.subr.bf16.mxu0 0
    %2390 = vmatpush1.bf16.msra.mxu0 %v1838
    %2391 = vmatprep.mubr.bf16.mxu0 %v602
    %2392 = vmatmul.mubr.bf16.gmra.mrb[0].mxu0 %v600
    %v2393 = vpop.f32.mrb[0].mxu0
    %v2394 = vadd.f32 %v2354, %v2393
    %v2395 = vpop.f32.mrb[0].mxu0
    %v2396 = vpop.f32.mrb[0].mxu0
    %v2397 = vpop.f32.mrb[0].mxu0
    %2398 = vdwg.mxu0
    %2399 = vmatprep.subr.bf16.mxu0 0
    %2400 = vmatpush1.bf16.msra.mxu0 %v1839
    %2401 = vmatprep.subr.bf16.mxu0 0
    %2402 = vmatpush1.bf16.msra.mxu0 %v1840
    %2403 = vmatprep.subr.bf16.mxu0 0
    %2404 = vmatpush1.bf16.msra.mxu0 %v1841
    %2405 = vmatprep.subr.bf16.mxu0 0
    %2406 = vmatpush1.bf16.msra.mxu0 %v1842
    %2407 = vmatprep.subr.bf16.mxu0 0
    %2408 = vmatpush1.bf16.msra.mxu0 %v1843
    %2409 = vmatprep.subr.bf16.mxu0 0
    %2410 = vmatpush1.bf16.msra.mxu0 %v1844
    %2411 = vmatprep.subr.bf16.mxu0 0
    %2412 = vmatpush1.bf16.msra.mxu0 %v1845
    %2413 = vmatprep.subr.bf16.mxu0 0
    %2414 = vmatpush1.bf16.msra.mxu0 %v1846
    %2415 = vmatprep.subr.bf16.mxu0 0
    %2416 = vmatpush1.bf16.msra.mxu0 %v1847
    %2417 = vmatprep.subr.bf16.mxu0 0
    %2418 = vmatpush1.bf16.msra.mxu0 %v1848
    %2419 = vmatprep.subr.bf16.mxu0 0
    %2420 = vmatpush1.bf16.msra.mxu0 %v1849
    %2421 = vmatprep.subr.bf16.mxu0 0
    %2422 = vmatpush1.bf16.msra.mxu0 %v1850
    %2423 = vmatprep.subr.bf16.mxu0 0
    %2424 = vmatpush1.bf16.msra.mxu0 %v1851
    %2425 = vmatprep.subr.bf16.mxu0 0
    %2426 = vmatpush1.bf16.msra.mxu0 %v1852
    %2427 = vmatprep.subr.bf16.mxu0 0
    %2428 = vmatpush1.bf16.msra.mxu0 %v1853
    %2429 = vmatprep.subr.bf16.mxu0 0
    %2430 = vmatpush1.bf16.msra.mxu0 %v1854
    %2431 = vmatprep.mubr.bf16.mxu0 %v599
    %2432 = vmatmul.mubr.bf16.gmra.mrb[0].mxu0 %v585
    %v2433 = vpop.f32.mrb[0].mxu0
    %v2434 = vadd.f32 %v2394, %v2433
    %v2435 = vpop.f32.mrb[0].mxu0
    %v2436 = vpop.f32.mrb[0].mxu0
    %v2437 = vpop.f32.mrb[0].mxu0
    %2438 = vdwg.mxu0
    %2439 = vmatprep.subr.bf16.mxu0 0
    %2440 = vmatpush1.bf16.msra.mxu0 %v1855
    %2441 = vmatprep.subr.bf16.mxu0 0
    %2442 = vmatpush1.bf16.msra.mxu0 %v1856
    %2443 = vmatprep.subr.bf16.mxu0 0
    %2444 = vmatpush1.bf16.msra.mxu0 %v1857
    %2445 = vmatprep.subr.bf16.mxu0 0
    %2446 = vmatpush1.bf16.msra.mxu0 %v1858
    %2447 = vmatprep.subr.bf16.mxu0 0
    %2448 = vmatpush1.bf16.msra.mxu0 %v1859
    %2449 = vmatprep.subr.bf16.mxu0 0
    %2450 = vmatpush1.bf16.msra.mxu0 %v1860
    %2451 = vmatprep.subr.bf16.mxu0 0
    %2452 = vmatpush1.bf16.msra.mxu0 %v1861
    %2453 = vmatprep.subr.bf16.mxu0 0
    %2454 = vmatpush1.bf16.msra.mxu0 %v1862
    %2455 = vmatprep.subr.bf16.mxu0 0
    %2456 = vmatpush1.bf16.msra.mxu0 %v1863
    %2457 = vmatprep.subr.bf16.mxu0 0
    %2458 = vmatpush1.bf16.msra.mxu0 %v1864
    %2459 = vmatprep.subr.bf16.mxu0 0
    %2460 = vmatpush1.bf16.msra.mxu0 %v1865
    %2461 = vmatprep.subr.bf16.mxu0 0
    %2462 = vmatpush1.bf16.msra.mxu0 %v1866
    %2463 = vmatprep.subr.bf16.mxu0 0
    %2464 = vmatpush1.bf16.msra.mxu0 %v1867
    %2465 = vmatprep.subr.bf16.mxu0 0
    %2466 = vmatpush1.bf16.msra.mxu0 %v1868
    %2467 = vmatprep.subr.bf16.mxu0 0
    %2468 = vmatpush1.bf16.msra.mxu0 %v1869
    %2469 = vmatprep.subr.bf16.mxu0 0
    %2470 = vmatpush1.bf16.msra.mxu0 %v1870
    %2471 = vmatprep.mubr.bf16.mxu0 %v603
    %2472 = vmatmul.mubr.bf16.gmra.mrb[0].mxu0 %v601
    %v2473 = vpop.f32.mrb[0].mxu0
    %v2474 = vadd.f32 %v2434, %v2473
    %v2475 = vpop.f32.mrb[0].mxu0
    %v2476 = vpop.f32.mrb[0].mxu0
    %v2477 = vpop.f32.mrb[0].mxu0
    %2478 = vdwg.mxu0
    %2479 = vmatprep.subr.bf16.mxu0 0
    %2480 = vmatpush1.bf16.msra.mxu0 %v1871
    %2481 = vmatprep.subr.bf16.mxu0 0
    %2482 = vmatpush1.bf16.msra.mxu0 %v1872
    %2483 = vmatprep.subr.bf16.mxu0 0
    %2484 = vmatpush1.bf16.msra.mxu0 %v1873
    %2485 = vmatprep.subr.bf16.mxu0 0
    %2486 = vmatpush1.bf16.msra.mxu0 %v1874
    %2487 = vmatprep.subr.bf16.mxu0 0
    %2488 = vmatpush1.bf16.msra.mxu0 %v1875
    %2489 = vmatprep.subr.bf16.mxu0 0
    %2490 = vmatpush1.bf16.msra.mxu0 %v1876
    %2491 = vmatprep.subr.bf16.mxu0 0
    %2492 = vmatpush1.bf16.msra.mxu0 %v1877
    %2493 = vmatprep.subr.bf16.mxu0 0
    %2494 = vmatpush1.bf16.msra.mxu0 %v1878
    %2495 = vmatprep.subr.bf16.mxu0 0
    %2496 = vmatpush1.bf16.msra.mxu0 %v1879
    %2497 = vmatprep.subr.bf16.mxu0 0
    %2498 = vmatpush1.bf16.msra.mxu0 %v1880
    %2499 = vmatprep.subr.bf16.mxu0 0
    %2500 = vmatpush1.bf16.msra.mxu0 %v1881
    %2501 = vmatprep.subr.bf16.mxu0 0
    %2502 = vmatpush1.bf16.msra.mxu0 %v1882
    %2503 = vmatprep.subr.bf16.mxu0 0
    %2504 = vmatpush1.bf16.msra.mxu0 %v1883
    %2505 = vmatprep.subr.bf16.mxu0 0
    %2506 = vmatpush1.bf16.msra.mxu0 %v1884
    %2507 = vmatprep.subr.bf16.mxu0 0
    %2508 = vmatpush1.bf16.msra.mxu0 %v1885
    %2509 = vmatprep.subr.bf16.mxu0 0
    %2510 = vmatpush1.bf16.msra.mxu0 %v1886
    %2511 = vmatprep.mubr.bf16.mxu0 %v641
    %2512 = vmatmul.mubr.bf16.gmra.mrb[0].mxu0 %v627
    %v2513 = vpop.f32.mrb[0].mxu0
    %v2514 = vadd.f32 %v2474, %v2513
    %v2515 = vpop.f32.mrb[0].mxu0
    %v2516 = vpop.f32.mrb[0].mxu0
    %v2517 = vpop.f32.mrb[0].mxu0
    %2518 = vdwg.mxu0
    %2519 = vmatprep.subr.bf16.mxu0 0
    %2520 = vmatpush1.bf16.msra.mxu0 %v1887
    %2521 = vmatprep.subr.bf16.mxu0 0
    %2522 = vmatpush1.bf16.msra.mxu0 %v1888
    %2523 = vmatprep.subr.bf16.mxu0 0
    %2524 = vmatpush1.bf16.msra.mxu0 %v1889
    %2525 = vmatprep.subr.bf16.mxu0 0
    %2526 = vmatpush1.bf16.msra.mxu0 %v1890
    %2527 = vmatprep.subr.bf16.mxu0 0
    %2528 = vmatpush1.bf16.msra.mxu0 %v1891
    %2529 = vmatprep.subr.bf16.mxu0 0
    %2530 = vmatpush1.bf16.msra.mxu0 %v1892
    %2531 = vmatprep.subr.bf16.mxu0 0
    %2532 = vmatpush1.bf16.msra.mxu0 %v1893
    %2533 = vmatprep.subr.bf16.mxu0 0
    %2534 = vmatpush1.bf16.msra.mxu0 %v1894
    %2535 = vmatprep.subr.bf16.mxu0 0
    %2536 = vmatpush1.bf16.msra.mxu0 %v1895
    %2537 = vmatprep.subr.bf16.mxu0 0
    %2538 = vmatpush1.bf16.msra.mxu0 %v1896
    %2539 = vmatprep.subr.bf16.mxu0 0
    %2540 = vmatpush1.bf16.msra.mxu0 %v1897
    %2541 = vmatprep.subr.bf16.mxu0 0
    %2542 = vmatpush1.bf16.msra.mxu0 %v1898
    %2543 = vmatprep.subr.bf16.mxu0 0
    %2544 = vmatpush1.bf16.msra.mxu0 %v1899
    %2545 = vmatprep.subr.bf16.mxu0 0
    %2546 = vmatpush1.bf16.msra.mxu0 %v1900
    %2547 = vmatprep.subr.bf16.mxu0 0
    %2548 = vmatpush1.bf16.msra.mxu0 %v1901
    %2549 = vmatprep.subr.bf16.mxu0 0
    %2550 = vmatpush1.bf16.msra.mxu0 %v1902
    %2551 = vmatprep.mubr.bf16.mxu0 %v651
    %2552 = vmatmul.mubr.bf16.gmra.mrb[0].mxu0 %v649
    %v2553 = vpop.f32.mrb[0].mxu0
    %v2554 = vadd.f32 %v2514, %v2553
    %v2555 = vpop.f32.mrb[0].mxu0
    %v2556 = vpop.f32.mrb[0].mxu0
    %v2557 = vpop.f32.mrb[0].mxu0
    %2558 = vdwg.mxu0
    %2559 = vmatprep.subr.bf16.mxu0 0
    %2560 = vmatpush1.bf16.msra.mxu0 %v1903
    %2561 = vmatprep.subr.bf16.mxu0 0
    %2562 = vmatpush1.bf16.msra.mxu0 %v1904
    %2563 = vmatprep.subr.bf16.mxu0 0
    %2564 = vmatpush1.bf16.msra.mxu0 %v1905
    %2565 = vmatprep.subr.bf16.mxu0 0
    %2566 = vmatpush1.bf16.msra.mxu0 %v1906
    %2567 = vmatprep.subr.bf16.mxu0 0
    %2568 = vmatpush1.bf16.msra.mxu0 %v1907
    %2569 = vmatprep.subr.bf16.mxu0 0
    %2570 = vmatpush1.bf16.msra.mxu0 %v1908
    %2571 = vmatprep.subr.bf16.mxu0 0
    %2572 = vmatpush1.bf16.msra.mxu0 %v1909
    %2573 = vmatprep.subr.bf16.mxu0 0
    %2574 = vmatpush1.bf16.msra.mxu0 %v1910
    %2575 = vmatprep.subr.bf16.mxu0 0
    %2576 = vmatpush1.bf16.msra.mxu0 %v1911
    %2577 = vmatprep.subr.bf16.mxu0 0
    %2578 = vmatpush1.bf16.msra.mxu0 %v1912
    %2579 = vmatprep.subr.bf16.mxu0 0
    %2580 = vmatpush1.bf16.msra.mxu0 %v1913
    %2581 = vmatprep.subr.bf16.mxu0 0
    %2582 = vmatpush1.bf16.msra.mxu0 %v1914
    %2583 = vmatprep.subr.bf16.mxu0 0
    %2584 = vmatpush1.bf16.msra.mxu0 %v1915
    %2585 = vmatprep.subr.bf16.mxu0 0
    %2586 = vmatpush1.bf16.msra.mxu0 %v1916
    %2587 = vmatprep.subr.bf16.mxu0 0
    %2588 = vmatpush1.bf16.msra.mxu0 %v1917
    %2589 = vmatprep.subr.bf16.mxu0 0
    %2590 = vmatpush1.bf16.msra.mxu0 %v1918
    %2591 = vmatprep.mubr.bf16.mxu0 %v648
    %2592 = vmatmul.mubr.bf16.gmra.mrb[0].mxu0 %v634
    %v2593 = vpop.f32.mrb[0].mxu0
    %v2594 = vadd.f32 %v2554, %v2593
    %v2595 = vpop.f32.mrb[0].mxu0
    %v2596 = vpop.f32.mrb[0].mxu0
    %v2597 = vpop.f32.mrb[0].mxu0
    %2598 = vdwg.mxu0
    %2599 = vmatprep.subr.bf16.mxu0 0
    %2600 = vmatpush1.bf16.msra.mxu0 %v1919
    %2601 = vmatprep.subr.bf16.mxu0 0
    %2602 = vmatpush1.bf16.msra.mxu0 %v1920
    %2603 = vmatprep.subr.bf16.mxu0 0
    %2604 = vmatpush1.bf16.msra.mxu0 %v1921
    %2605 = vmatprep.subr.bf16.mxu0 0
    %2606 = vmatpush1.bf16.msra.mxu0 %v1922
    %2607 = vmatprep.subr.bf16.mxu0 0
    %2608 = vmatpush1.bf16.msra.mxu0 %v1923
    %2609 = vmatprep.subr.bf16.mxu0 0
    %2610 = vmatpush1.bf16.msra.mxu0 %v1924
    %2611 = vmatprep.subr.bf16.mxu0 0
    %2612 = vmatpush1.bf16.msra.mxu0 %v1925
    %2613 = vmatprep.subr.bf16.mxu0 0
    %2614 = vmatpush1.bf16.msra.mxu0 %v1926
    %2615 = vmatprep.subr.bf16.mxu0 0
    %2616 = vmatpush1.bf16.msra.mxu0 %v1927
    %2617 = vmatprep.subr.bf16.mxu0 0
    %2618 = vmatpush1.bf16.msra.mxu0 %v1928
    %2619 = vmatprep.subr.bf16.mxu0 0
    %2620 = vmatpush1.bf16.msra.mxu0 %v1929
    %2621 = vmatprep.subr.bf16.mxu0 0
    %2622 = vmatpush1.bf16.msra.mxu0 %v1930
    %2623 = vmatprep.subr.bf16.mxu0 0
    %2624 = vmatpush1.bf16.msra.mxu0 %v1931
    %2625 = vmatprep.subr.bf16.mxu0 0
    %2626 = vmatpush1.bf16.msra.mxu0 %v1932
    %2627 = vmatprep.subr.bf16.mxu0 0
    %2628 = vmatpush1.bf16.msra.mxu0 %v1933
    %2629 = vmatprep.subr.bf16.mxu0 0
    %2630 = vmatpush1.bf16.msra.mxu0 %v1934
    %2631 = vmatprep.mubr.bf16.mxu0 %v652
    %2632 = vmatmul.mubr.bf16.gmra.mrb[0].mxu0 %v650
    %v2633 = vpop.f32.mrb[0].mxu0
    %v2634 = vadd.f32 %v2594, %v2633
    %v2635 = vpop.f32.mrb[0].mxu0
    %v2636 = vpop.f32.mrb[0].mxu0
    %v2637 = vpop.f32.mrb[0].mxu0
    %2638 = vdwg.mxu0
    %2639 = vmatprep.subr.bf16.mxu0 0
    %2640 = vmatpush1.bf16.msra.mxu0 %v1935
    %2641 = vmatprep.subr.bf16.mxu0 0
    %2642 = vmatpush1.bf16.msra.mxu0 %v1936
    %2643 = vmatprep.subr.bf16.mxu0 0
    %2644 = vmatpush1.bf16.msra.mxu0 %v1937
    %2645 = vmatprep.subr.bf16.mxu0 0
    %2646 = vmatpush1.bf16.msra.mxu0 %v1938
    %2647 = vmatprep.subr.bf16.mxu0 0
    %2648 = vmatpush1.bf16.msra.mxu0 %v1939
    %2649 = vmatprep.subr.bf16.mxu0 0
    %2650 = vmatpush1.bf16.msra.mxu0 %v1940
    %2651 = vmatprep.subr.bf16.mxu0 0
    %2652 = vmatpush1.bf16.msra.mxu0 %v1941
    %2653 = vmatprep.subr.bf16.mxu0 0
    %2654 = vmatpush1.bf16.msra.mxu0 %v1942
    %2655 = vmatprep.subr.bf16.mxu0 0
    %2656 = vmatpush1.bf16.msra.mxu0 %v1943
    %2657 = vmatprep.subr.bf16.mxu0 0
    %2658 = vmatpush1.bf16.msra.mxu0 %v1944
    %2659 = vmatprep.subr.bf16.mxu0 0
    %2660 = vmatpush1.bf16.msra.mxu0 %v1945
    %2661 = vmatprep.subr.bf16.mxu0 0
    %2662 = vmatpush1.bf16.msra.mxu0 %v1946
    %2663 = vmatprep.subr.bf16.mxu0 0
    %2664 = vmatpush1.bf16.msra.mxu0 %v1947
    %2665 = vmatprep.subr.bf16.mxu0 0
    %2666 = vmatpush1.bf16.msra.mxu0 %v1948
    %2667 = vmatprep.subr.bf16.mxu0 0
    %2668 = vmatpush1.bf16.msra.mxu0 %v1949
    %2669 = vmatprep.subr.bf16.mxu0 0
    %2670 = vmatpush1.bf16.msra.mxu0 %v1950
    %2671 = vmatprep.mubr.bf16.mxu0 %v690
    %2672 = vmatmul.mubr.bf16.gmra.mrb[0].mxu0 %v676
    %v2673 = vpop.f32.mrb[0].mxu0
    %v2674 = vadd.f32 %v2634, %v2673
    %v2675 = vpop.f32.mrb[0].mxu0
    %v2676 = vpop.f32.mrb[0].mxu0
    %v2677 = vpop.f32.mrb[0].mxu0
    %2678 = vdwg.mxu0
    %2679 = vmatprep.subr.bf16.mxu0 0
    %2680 = vmatpush1.bf16.msra.mxu0 %v1951
    %2681 = vmatprep.subr.bf16.mxu0 0
    %2682 = vmatpush1.bf16.msra.mxu0 %v1952
    %2683 = vmatprep.subr.bf16.mxu0 0
    %2684 = vmatpush1.bf16.msra.mxu0 %v1953
    %2685 = vmatprep.subr.bf16.mxu0 0
    %2686 = vmatpush1.bf16.msra.mxu0 %v1954
    %2687 = vmatprep.subr.bf16.mxu0 0
    %2688 = vmatpush1.bf16.msra.mxu0 %v1955
    %2689 = vmatprep.subr.bf16.mxu0 0
    %2690 = vmatpush1.bf16.msra.mxu0 %v1956
    %2691 = vmatprep.subr.bf16.mxu0 0
    %2692 = vmatpush1.bf16.msra.mxu0 %v1957
    %2693 = vmatprep.subr.bf16.mxu0 0
    %2694 = vmatpush1.bf16.msra.mxu0 %v1958
    %2695 = vmatprep.subr.bf16.mxu0 0
    %2696 = vmatpush1.bf16.msra.mxu0 %v1959
    %2697 = vmatprep.subr.bf16.mxu0 0
    %2698 = vmatpush1.bf16.msra.mxu0 %v1960
    %2699 = vmatprep.subr.bf16.mxu0 0
    %2700 = vmatpush1.bf16.msra.mxu0 %v1961
    %2701 = vmatprep.subr.bf16.mxu0 0
    %2702 = vmatpush1.bf16.msra.mxu0 %v1962
    %2703 = vmatprep.subr.bf16.mxu0 0
    %2704 = vmatpush1.bf16.msra.mxu0 %v1963
    %2705 = vmatprep.subr.bf16.mxu0 0
    %2706 = vmatpush1.bf16.msra.mxu0 %v1964
    %2707 = vmatprep.subr.bf16.mxu0 0
    %2708 = vmatpush1.bf16.msra.mxu0 %v1965
    %2709 = vmatprep.subr.bf16.mxu0 0
    %2710 = vmatpush1.bf16.msra.mxu0 %v1966
    %2711 = vmatprep.mubr.bf16.mxu0 %v700
    %2712 = vmatmul.mubr.bf16.gmra.mrb[0].mxu0 %v698
    %v2713 = vpop.f32.mrb[0].mxu0
    %v2714 = vadd.f32 %v2674, %v2713
    %v2715 = vpop.f32.mrb[0].mxu0
    %v2716 = vpop.f32.mrb[0].mxu0
    %v2717 = vpop.f32.mrb[0].mxu0
    %2718 = vdwg.mxu0
    %2719 = vmatprep.subr.bf16.mxu0 0
    %2720 = vmatpush1.bf16.msra.mxu0 %v1967
    %2721 = vmatprep.subr.bf16.mxu0 0
    %2722 = vmatpush1.bf16.msra.mxu0 %v1968
    %2723 = vmatprep.subr.bf16.mxu0 0
    %2724 = vmatpush1.bf16.msra.mxu0 %v1969
    %2725 = vmatprep.subr.bf16.mxu0 0
    %2726 = vmatpush1.bf16.msra.mxu0 %v1970
    %2727 = vmatprep.subr.bf16.mxu0 0
    %2728 = vmatpush1.bf16.msra.mxu0 %v1971
    %2729 = vmatprep.subr.bf16.mxu0 0
    %2730 = vmatpush1.bf16.msra.mxu0 %v1972
    %2731 = vmatprep.subr.bf16.mxu0 0
    %2732 = vmatpush1.bf16.msra.mxu0 %v1973
    %2733 = vmatprep.subr.bf16.mxu0 0
    %2734 = vmatpush1.bf16.msra.mxu0 %v1974
    %2735 = vmatprep.subr.bf16.mxu0 0
    %2736 = vmatpush1.bf16.msra.mxu0 %v1975
    %2737 = vmatprep.subr.bf16.mxu0 0
    %2738 = vmatpush1.bf16.msra.mxu0 %v1976
    %2739 = vmatprep.subr.bf16.mxu0 0
    %2740 = vmatpush1.bf16.msra.mxu0 %v1977
    %2741 = vmatprep.subr.bf16.mxu0 0
    %2742 = vmatpush1.bf16.msra.mxu0 %v1978
    %2743 = vmatprep.subr.bf16.mxu0 0
    %2744 = vmatpush1.bf16.msra.mxu0 %v1979
    %2745 = vmatprep.subr.bf16.mxu0 0
    %2746 = vmatpush1.bf16.msra.mxu0 %v1980
    %2747 = vmatprep.subr.bf16.mxu0 0
    %2748 = vmatpush1.bf16.msra.mxu0 %v1981
    %2749 = vmatprep.subr.bf16.mxu0 0
    %2750 = vmatpush1.bf16.msra.mxu0 %v1982
    %2751 = vmatprep.mubr.bf16.mxu0 %v697
    %2752 = vmatmul.mubr.bf16.gmra.mrb[0].mxu0 %v683
    %v2753 = vpop.f32.mrb[0].mxu0
    %v2754 = vadd.f32 %v2714, %v2753
    %v2755 = vpop.f32.mrb[0].mxu0
    %v2756 = vpop.f32.mrb[0].mxu0
    %v2757 = vpop.f32.mrb[0].mxu0
    %2758 = vdwg.mxu0
    %2759 = vmatprep.subr.bf16.mxu0 0
    %2760 = vmatpush1.bf16.msra.mxu0 %v1983
    %2761 = vmatprep.subr.bf16.mxu0 0
    %2762 = vmatpush1.bf16.msra.mxu0 %v1984
    %2763 = vmatprep.subr.bf16.mxu0 0
    %2764 = vmatpush1.bf16.msra.mxu0 %v1985
    %2765 = vmatprep.subr.bf16.mxu0 0
    %2766 = vmatpush1.bf16.msra.mxu0 %v1986
    %2767 = vmatprep.subr.bf16.mxu0 0
    %2768 = vmatpush1.bf16.msra.mxu0 %v1987
    %2769 = vmatprep.subr.bf16.mxu0 0
    %2770 = vmatpush1.bf16.msra.mxu0 %v1988
    %2771 = vmatprep.subr.bf16.mxu0 0
    %2772 = vmatpush1.bf16.msra.mxu0 %v1989
    %2773 = vmatprep.subr.bf16.mxu0 0
    %2774 = vmatpush1.bf16.msra.mxu0 %v1990
    %2775 = vmatprep.subr.bf16.mxu0 0
    %2776 = vmatpush1.bf16.msra.mxu0 %v1991
    %2777 = vmatprep.subr.bf16.mxu0 0
    %2778 = vmatpush1.bf16.msra.mxu0 %v1992
    %2779 = vmatprep.subr.bf16.mxu0 0
    %2780 = vmatpush1.bf16.msra.mxu0 %v1993
    %2781 = vmatprep.subr.bf16.mxu0 0
    %2782 = vmatpush1.bf16.msra.mxu0 %v1994
    %2783 = vmatprep.subr.bf16.mxu0 0
    %2784 = vmatpush1.bf16.msra.mxu0 %v1995
    %2785 = vmatprep.subr.bf16.mxu0 0
    %2786 = vmatpush1.bf16.msra.mxu0 %v1996
    %2787 = vmatprep.subr.bf16.mxu0 0
    %2788 = vmatpush1.bf16.msra.mxu0 %v1997
    %2789 = vmatprep.subr.bf16.mxu0 0
    %2790 = vmatpush1.bf16.msra.mxu0 %v1998
    %2791 = vmatprep.mubr.bf16.mxu0 %v701
    %2792 = vmatmul.mubr.bf16.gmra.mrb[0].mxu0 %v699
    %v2793 = vpop.f32.mrb[0].mxu0
    %v2794 = vadd.f32 %v2754, %v2793
    %v2795 = vpop.f32.mrb[0].mxu0
    %v2796 = vpop.f32.mrb[0].mxu0
    %v2797 = vpop.f32.mrb[0].mxu0
    %2798 = vdwg.mxu0
    %2799 = vmatprep.subr.bf16.mxu0 0
    %2800 = vmatpush1.bf16.msra.mxu0 %v1999
    %2801 = vmatprep.subr.bf16.mxu0 0
    %2802 = vmatpush1.bf16.msra.mxu0 %v2000
    %2803 = vmatprep.subr.bf16.mxu0 0
    %2804 = vmatpush1.bf16.msra.mxu0 %v2001
    %2805 = vmatprep.subr.bf16.mxu0 0
    %2806 = vmatpush1.bf16.msra.mxu0 %v2002
    %2807 = vmatprep.subr.bf16.mxu0 0
    %2808 = vmatpush1.bf16.msra.mxu0 %v2003
    %2809 = vmatprep.subr.bf16.mxu0 0
    %2810 = vmatpush1.bf16.msra.mxu0 %v2004
    %2811 = vmatprep.subr.bf16.mxu0 0
    %2812 = vmatpush1.bf16.msra.mxu0 %v2005
    %2813 = vmatprep.subr.bf16.mxu0 0
    %2814 = vmatpush1.bf16.msra.mxu0 %v2006
    %2815 = vmatprep.subr.bf16.mxu0 0
    %2816 = vmatpush1.bf16.msra.mxu0 %v2007
    %2817 = vmatprep.subr.bf16.mxu0 0
    %2818 = vmatpush1.bf16.msra.mxu0 %v2008
    %2819 = vmatprep.subr.bf16.mxu0 0
    %2820 = vmatpush1.bf16.msra.mxu0 %v2009
    %2821 = vmatprep.subr.bf16.mxu0 0
    %2822 = vmatpush1.bf16.msra.mxu0 %v2010
    %2823 = vmatprep.subr.bf16.mxu0 0
    %2824 = vmatpush1.bf16.msra.mxu0 %v2011
    %2825 = vmatprep.subr.bf16.mxu0 0
    %2826 = vmatpush1.bf16.msra.mxu0 %v2012
    %2827 = vmatprep.subr.bf16.mxu0 0
    %2828 = vmatpush1.bf16.msra.mxu0 %v2013
    %2829 = vmatprep.subr.bf16.mxu0 0
    %2830 = vmatpush1.bf16.msra.mxu0 %v2014
    %2831 = vmatprep.mubr.bf16.mxu0 %v739
    %2832 = vmatmul.mubr.bf16.gmra.mrb[0].mxu0 %v725
    %v2833 = vpop.f32.mrb[0].mxu0
    %v2834 = vadd.f32 %v2794, %v2833
    %v2835 = vpop.f32.mrb[0].mxu0
    %v2836 = vpop.f32.mrb[0].mxu0
    %v2837 = vpop.f32.mrb[0].mxu0
    %2838 = vdwg.mxu0
    %2839 = vmatprep.subr.bf16.mxu0 0
    %2840 = vmatpush1.bf16.msra.mxu0 %v2015
    %2841 = vmatprep.subr.bf16.mxu0 0
    %2842 = vmatpush1.bf16.msra.mxu0 %v2016
    %2843 = vmatprep.subr.bf16.mxu0 0
    %2844 = vmatpush1.bf16.msra.mxu0 %v2017
    %2845 = vmatprep.subr.bf16.mxu0 0
    %2846 = vmatpush1.bf16.msra.mxu0 %v2018
    %2847 = vmatprep.subr.bf16.mxu0 0
    %2848 = vmatpush1.bf16.msra.mxu0 %v2019
    %2849 = vmatprep.subr.bf16.mxu0 0
    %2850 = vmatpush1.bf16.msra.mxu0 %v2020
    %2851 = vmatprep.subr.bf16.mxu0 0
    %2852 = vmatpush1.bf16.msra.mxu0 %v2021
    %2853 = vmatprep.subr.bf16.mxu0 0
    %2854 = vmatpush1.bf16.msra.mxu0 %v2022
    %2855 = vmatprep.subr.bf16.mxu0 0
    %2856 = vmatpush1.bf16.msra.mxu0 %v2023
    %2857 = vmatprep.subr.bf16.mxu0 0
    %2858 = vmatpush1.bf16.msra.mxu0 %v2024
    %2859 = vmatprep.subr.bf16.mxu0 0
    %2860 = vmatpush1.bf16.msra.mxu0 %v2025
    %2861 = vmatprep.subr.bf16.mxu0 0
    %2862 = vmatpush1.bf16.msra.mxu0 %v2026
    %2863 = vmatprep.subr.bf16.mxu0 0
    %2864 = vmatpush1.bf16.msra.mxu0 %v2027
    %2865 = vmatprep.subr.bf16.mxu0 0
    %2866 = vmatpush1.bf16.msra.mxu0 %v2028
    %2867 = vmatprep.subr.bf16.mxu0 0
    %2868 = vmatpush1.bf16.msra.mxu0 %v2029
    %2869 = vmatprep.subr.bf16.mxu0 0
    %2870 = vmatpush1.bf16.msra.mxu0 %v2030
    %2871 = vmatprep.mubr.bf16.mxu0 %v749
    %2872 = vmatmul.mubr.bf16.gmra.mrb[0].mxu0 %v747
    %v2873 = vpop.f32.mrb[0].mxu0
    %v2874 = vadd.f32 %v2834, %v2873
    %v2875 = vpop.f32.mrb[0].mxu0
    %v2876 = vpop.f32.mrb[0].mxu0
    %v2877 = vpop.f32.mrb[0].mxu0
    %2878 = vdwg.mxu0
    %2879 = vmatprep.subr.bf16.mxu0 0
    %2880 = vmatpush1.bf16.msra.mxu0 %v2031
    %2881 = vmatprep.subr.bf16.mxu0 0
    %2882 = vmatpush1.bf16.msra.mxu0 %v2032
    %2883 = vmatprep.subr.bf16.mxu0 0
    %2884 = vmatpush1.bf16.msra.mxu0 %v2033
    %2885 = vmatprep.subr.bf16.mxu0 0
    %2886 = vmatpush1.bf16.msra.mxu0 %v2034
    %2887 = vmatprep.subr.bf16.mxu0 0
    %2888 = vmatpush1.bf16.msra.mxu0 %v2035
    %2889 = vmatprep.subr.bf16.mxu0 0
    %2890 = vmatpush1.bf16.msra.mxu0 %v2036
    %2891 = vmatprep.subr.bf16.mxu0 0
    %2892 = vmatpush1.bf16.msra.mxu0 %v2037
    %2893 = vmatprep.subr.bf16.mxu0 0
    %2894 = vmatpush1.bf16.msra.mxu0 %v2038
    %2895 = vmatprep.subr.bf16.mxu0 0
    %2896 = vmatpush1.bf16.msra.mxu0 %v2039
    %2897 = vmatprep.subr.bf16.mxu0 0
    %2898 = vmatpush1.bf16.msra.mxu0 %v2040
    %2899 = vmatprep.subr.bf16.mxu0 0
    %2900 = vmatpush1.bf16.msra.mxu0 %v2041
    %2901 = vmatprep.subr.bf16.mxu0 0
    %2902 = vmatpush1.bf16.msra.mxu0 %v2042
    %2903 = vmatprep.subr.bf16.mxu0 0
    %2904 = vmatpush1.bf16.msra.mxu0 %v2043
    %2905 = vmatprep.subr.bf16.mxu0 0
    %2906 = vmatpush1.bf16.msra.mxu0 %v2044
    %2907 = vmatprep.subr.bf16.mxu0 0
    %2908 = vmatpush1.bf16.msra.mxu0 %v2045
    %2909 = vmatprep.subr.bf16.mxu0 0
    %2910 = vmatpush1.bf16.msra.mxu0 %v2046
    %2911 = vmatprep.mubr.bf16.mxu0 %v746
    %2912 = vmatmul.mubr.bf16.gmra.mrb[0].mxu0 %v732
    %v2913 = vpop.f32.mrb[0].mxu0
    %v2914 = vadd.f32 %v2874, %v2913
    %v2915 = vpop.f32.mrb[0].mxu0
    %v2916 = vpop.f32.mrb[0].mxu0
    %v2917 = vpop.f32.mrb[0].mxu0
    %2918 = vdwg.mxu0
    %2919 = vmatprep.subr.bf16.mxu0 0
    %2920 = vmatpush1.bf16.msra.mxu0 %v2047
    %2921 = vmatprep.subr.bf16.mxu0 0
    %2922 = vmatpush1.bf16.msra.mxu0 %v2048
    %2923 = vmatprep.subr.bf16.mxu0 0
    %2924 = vmatpush1.bf16.msra.mxu0 %v2049
    %2925 = vmatprep.subr.bf16.mxu0 0
    %2926 = vmatpush1.bf16.msra.mxu0 %v2050
    %2927 = vmatprep.subr.bf16.mxu0 0
    %2928 = vmatpush1.bf16.msra.mxu0 %v2051
    %2929 = vmatprep.subr.bf16.mxu0 0
    %2930 = vmatpush1.bf16.msra.mxu0 %v2052
    %2931 = vmatprep.subr.bf16.mxu0 0
    %2932 = vmatpush1.bf16.msra.mxu0 %v2053
    %2933 = vmatprep.subr.bf16.mxu0 0
    %2934 = vmatpush1.bf16.msra.mxu0 %v2054
    %2935 = vmatprep.subr.bf16.mxu0 0
    %2936 = vmatpush1.bf16.msra.mxu0 %v2055
    %2937 = vmatprep.subr.bf16.mxu0 0
    %2938 = vmatpush1.bf16.msra.mxu0 %v2056
    %2939 = vmatprep.subr.bf16.mxu0 0
    %2940 = vmatpush1.bf16.msra.mxu0 %v2057
    %2941 = vmatprep.subr.bf16.mxu0 0
    %2942 = vmatpush1.bf16.msra.mxu0 %v2058
    %2943 = vmatprep.subr.bf16.mxu0 0
    %2944 = vmatpush1.bf16.msra.mxu0 %v2059
    %2945 = vmatprep.subr.bf16.mxu0 0
    %2946 = vmatpush1.bf16.msra.mxu0 %v2060
    %2947 = vmatprep.subr.bf16.mxu0 0
    %2948 = vmatpush1.bf16.msra.mxu0 %v2061
    %2949 = vmatprep.subr.bf16.mxu0 0
    %2950 = vmatpush1.bf16.msra.mxu0 %v2062
    %2951 = vmatprep.mubr.bf16.mxu0 %v750
    %2952 = vmatmul.mubr.bf16.gmra.mrb[0].mxu0 %v748
    %v2953 = vpop.f32.mrb[0].mxu0
    %v2954 = vadd.f32 %v2914, %v2953
    %v2955 = vpop.f32.mrb[0].mxu0
    %v2956 = vpop.f32.mrb[0].mxu0
    %v2957 = vpop.f32.mrb[0].mxu0
    %2958 = vdwg.mxu0
    %v2959 = vmax.f32 %v2954, 0.0
    %v2960 = vld [vmem:[%s3] sm:$0xff]
    %v2961 = vld [vmem:[%s3 + $0x8] sm:$0xff]
    %v2962 = vld [vmem:[%s3 + $0x10] sm:$0xff]
    %v2963 = vld [vmem:[%s3 + $0x18] sm:$0xff]
    %v2964 = vld [vmem:[%s3 + $0x20] sm:$0xff]
    %v2965 = vld [vmem:[%s3 + $0x28] sm:$0xff]
    %v2966 = vld [vmem:[%s3 + $0x30] sm:$0xff]
    %v2967 = vld [vmem:[%s3 + $0x38] sm:$0xff]
    %v2968 = vld [vmem:[%s3 + $0x40] sm:$0xff]
    %v2969 = vld [vmem:[%s3 + $0x48] sm:$0xff]
    %v2970 = vld [vmem:[%s3 + $0x50] sm:$0xff]
    %v2971 = vld [vmem:[%s3 + $0x58] sm:$0xff]
    %v2972 = vld [vmem:[%s3 + $0x60] sm:$0xff]
    %v2973 = vld [vmem:[%s3 + $0x68] sm:$0xff]
    %v2974 = vld [vmem:[%s3 + $0x70] sm:$0xff]
    %v2975 = vld [vmem:[%s4] sm:$0x1]
    %v2977 = vlaneseq
    %v2978 = vshrl.u32 %v2977, 7
    %v2979 = vsub.s32 0, %v2978
    %v2980 = vrot.slane %v2975, %v2979
    %vm2982 = vcmask 982016
    %v2984 = vsel %vm2982, %v2959, 0
    %2986 = vmatprep.subr.mxu0 0.0
    %2987 = vmatpush1.msra.mxu0 %v2960
    %2988 = vmatprep.subr.mxu0 0.0
    %2989 = vmatpush1.msra.mxu0 %v2961
    %2990 = vmatprep.subr.mxu0 0.0
    %2991 = vmatpush1.msra.mxu0 %v2962
    %2992 = vmatprep.subr.mxu0 0.0
    %2993 = vmatpush1.msra.mxu0 %v2963
    %2994 = vmatprep.subr.mxu0 0.0
    %2995 = vmatpush1.msra.mxu0 %v2964
    %2996 = vmatprep.subr.mxu0 0.0
    %2997 = vmatpush1.msra.mxu0 %v2965
    %2998 = vmatprep.subr.mxu0 0.0
    %2999 = vmatpush1.msra.mxu0 %v2966
    %3000 = vmatprep.subr.mxu0 0.0
    %3001 = vmatpush1.msra.mxu0 %v2967
    %3002 = vmatprep.subr.mxu0 0.0
    %3003 = vmatpush1.msra.mxu0 %v2968
    %3004 = vmatprep.subr.mxu0 0.0
    %3005 = vmatpush1.msra.mxu0 %v2969
    %3006 = vmatprep.subr.mxu0 0.0
    %3007 = vmatpush1.msra.mxu0 %v2970
    %3008 = vmatprep.subr.mxu0 0.0
    %3009 = vmatpush1.msra.mxu0 %v2971
    %3010 = vmatprep.subr.mxu0 0.0
    %3011 = vmatpush1.msra.mxu0 %v2972
    %3012 = vmatprep.subr.mxu0 0.0
    %3013 = vmatpush1.msra.mxu0 %v2973
    %3014 = vmatprep.subr.mxu0 0.0
    %3015 = vmatpush1.msra.mxu0 %v2974
    %3016 = vmatprep.subr.mxu0 0.0
    %3017 = vmatpush1.msra.mxu0 0.0
    %3018 = vmatprep.subr.mxu0 0.0
    %3019 = vmatpush1.msra.mxu0 0.0
    %3020 = vmatprep.subr.mxu0 0.0
    %3021 = vmatpush1.msra.mxu0 0.0
    %3022 = vmatprep.subr.mxu0 0.0
    %3023 = vmatpush1.msra.mxu0 0.0
    %3024 = vmatprep.subr.mxu0 0.0
    %3025 = vmatpush1.msra.mxu0 0.0
    %3026 = vmatprep.subr.mxu0 0.0
    %3027 = vmatpush1.msra.mxu0 0.0
    %3028 = vmatprep.subr.mxu0 0.0
    %3029 = vmatpush1.msra.mxu0 0.0
    %3030 = vmatprep.subr.mxu0 0.0
    %3031 = vmatpush1.msra.mxu0 0.0
    %3032 = vmatprep.subr.mxu0 0.0
    %3033 = vmatpush1.msra.mxu0 0.0
    %3034 = vmatprep.subr.mxu0 0.0
    %3035 = vmatpush1.msra.mxu0 0.0
    %3036 = vmatprep.subr.mxu0 0.0
    %3037 = vmatpush1.msra.mxu0 0.0
    %3038 = vmatprep.subr.mxu0 0.0
    %3039 = vmatpush1.msra.mxu0 0.0
    %3040 = vmatprep.subr.mxu0 0.0
    %3041 = vmatpush1.msra.mxu0 0.0
    %3042 = vmatprep.subr.mxu0 0.0
    %3043 = vmatpush1.msra.mxu0 0.0
    %3044 = vmatprep.subr.mxu0 0.0
    %3045 = vmatpush1.msra.mxu0 0.0
    %3046 = vmatprep.subr.mxu0 0.0
    %3047 = vmatpush1.msra.mxu0 0.0
    %3048 = vmatprep.subr.mxu0 0.0
    %3049 = vmatpush1.msra.mxu0 0.0
    %3050 = vmatprep.mubr.f32.mxu0 0.0
    %3051 = vmatmul.mubr.f32.gmra.mrb[0].mxu0 %v2984
    %v3052 = vpop.f32.mrb[0].mxu0
    %v3053 = vadd.f32 %v2980, %v3052
    %v3054 = vpop.f32.mrb[0].mxu0
    %3055 = vdwg.mxu0
    %v3056 = vmax.f32 %v3053, 0.0
    %v3057 = vld [vmem:[%s5] sm:$0xff]
    %v3058 = vld [vmem:[%s5 + $0x8] sm:$0xff]
    %v3059 = vld [vmem:[%s5 + $0x10] sm:$0xff]
    %v3060 = vld [vmem:[%s5 + $0x18] sm:$0xff]
    %v3061 = vld [vmem:[%s5 + $0x20] sm:$0xff]
    %v3062 = vld [vmem:[%s5 + $0x28] sm:$0xff]
    %v3063 = vld [vmem:[%s5 + $0x30] sm:$0xff]
    %v3064 = vld [vmem:[%s5 + $0x38] sm:$0xff]
    %v3065 = vld [vmem:[%s5 + $0x40] sm:$0xff]
    %v3066 = vld [vmem:[%s5 + $0x48] sm:$0xff]
    %v3067 = vld [vmem:[%s5 + $0x50] sm:$0xf]
    %v3068 = vld [vmem:[%s6] sm:$0x1]
    %v3070 = vlaneseq
    %v3071 = vshrl.u32 %v3070, 7
    %v3072 = vsub.s32 0, %v3071
    %v3073 = vrot.slane %v3068, %v3072
    %vm3075 = vcmask 687104
    %v3077 = vsel %vm3075, %v3056, 0
    %vm3079 = vcmask 1043456
    %v3081 = vsel %vm3079, %v3067, 0
    %3083 = vmatprep.subr.mxu0 0.0
    %3084 = vmatpush1.msra.mxu0 %v3057
    %3085 = vmatprep.subr.mxu0 0.0
    %3086 = vmatpush1.msra.mxu0 %v3058
    %3087 = vmatprep.subr.mxu0 0.0
    %3088 = vmatpush1.msra.mxu0 %v3059
    %3089 = vmatprep.subr.mxu0 0.0
    %3090 = vmatpush1.msra.mxu0 %v3060
    %3091 = vmatprep.subr.mxu0 0.0
    %3092 = vmatpush1.msra.mxu0 %v3061
    %3093 = vmatprep.subr.mxu0 0.0
    %3094 = vmatpush1.msra.mxu0 %v3062
    %3095 = vmatprep.subr.mxu0 0.0
    %3096 = vmatpush1.msra.mxu0 %v3063
    %3097 = vmatprep.subr.mxu0 0.0
    %3098 = vmatpush1.msra.mxu0 %v3064
    %3099 = vmatprep.subr.mxu0 0.0
    %3100 = vmatpush1.msra.mxu0 %v3065
    %3101 = vmatprep.subr.mxu0 0.0
    %3102 = vmatpush1.msra.mxu0 %v3066
    %3103 = vmatprep.subr.mxu0 0.0
    %3104 = vmatpush1.msra.mxu0 %v3081
    %3105 = vmatprep.subr.mxu0 0.0
    %3106 = vmatpush1.msra.mxu0 0.0
    %3107 = vmatprep.subr.mxu0 0.0
    %3108 = vmatpush1.msra.mxu0 0.0
    %3109 = vmatprep.subr.mxu0 0.0
    %3110 = vmatpush1.msra.mxu0 0.0
    %3111 = vmatprep.subr.mxu0 0.0
    %3112 = vmatpush1.msra.mxu0 0.0
    %3113 = vmatprep.subr.mxu0 0.0
    %3114 = vmatpush1.msra.mxu0 0.0
    %3115 = vmatprep.subr.mxu0 0.0
    %3116 = vmatpush1.msra.mxu0 0.0
    %3117 = vmatprep.subr.mxu0 0.0
    %3118 = vmatpush1.msra.mxu0 0.0
    %3119 = vmatprep.subr.mxu0 0.0
    %3120 = vmatpush1.msra.mxu0 0.0
    %3121 = vmatprep.subr.mxu0 0.0
    %3122 = vmatpush1.msra.mxu0 0.0
    %3123 = vmatprep.subr.mxu0 0.0
    %3124 = vmatpush1.msra.mxu0 0.0
    %3125 = vmatprep.subr.mxu0 0.0
    %3126 = vmatpush1.msra.mxu0 0.0
    %3127 = vmatprep.subr.mxu0 0.0
    %3128 = vmatpush1.msra.mxu0 0.0
    %3129 = vmatprep.subr.mxu0 0.0
    %3130 = vmatpush1.msra.mxu0 0.0
    %3131 = vmatprep.subr.mxu0 0.0
    %3132 = vmatpush1.msra.mxu0 0.0
    %3133 = vmatprep.subr.mxu0 0.0
    %3134 = vmatpush1.msra.mxu0 0.0
    %3135 = vmatprep.subr.mxu0 0.0
    %3136 = vmatpush1.msra.mxu0 0.0
    %3137 = vmatprep.subr.mxu0 0.0
    %3138 = vmatpush1.msra.mxu0 0.0
    %3139 = vmatprep.subr.mxu0 0.0
    %3140 = vmatpush1.msra.mxu0 0.0
    %3141 = vmatprep.subr.mxu0 0.0
    %3142 = vmatpush1.msra.mxu0 0.0
    %3143 = vmatprep.subr.mxu0 0.0
    %3144 = vmatpush1.msra.mxu0 0.0
    %3145 = vmatprep.subr.mxu0 0.0
    %3146 = vmatpush1.msra.mxu0 0.0
    %3147 = vmatprep.mubr.f32.mxu0 0.0
    %3148 = vmatmul.mubr.f32.gmra.mrb[0].mxu0 %v3077
    %v3149 = vpop.f32.mrb[0].mxu0
    %v3150 = vadd.f32 %v3073, %v3149
    %v3151 = vpop.f32.mrb[0].mxu0
    %3152 = vdwg.mxu0
    %vm3153 = vcmask 99328
    %3154 = vst.msk [vmem:[#allocation2] sm:$0x3] %vm3153, %v3150
    // Predicated region
    $region30: #{forward.7} parent=1 // pred_check
      _
    $region31: #{forward.7} parent=1 // pred_check_branch
      %3156 = sbr.rel (0) target = $region33
    $region32: #{forward.7} parent=1 // pred_region
      %s3158 = ssub.s32 32, 32
      %3159 = vsyncadd [#allocation3], %s3158
      %s3161 = sshll.u32 [#allocation2], 4
      %s3162 = int_to_ptr.vmem [resolvable:$true] %s3161
      %3164 = dma.vmem_to_hbm [thread:$0]  %s3162, 32, %s7, [#allocation3]
    $region33: #{forward.7} parent=1 // pred_fallthru
      _
    // Predicated region
    $region34: #{forward.7} parent=1 // pred_check
      _
    $region35: #{forward.7} parent=1 // pred_check_branch
      %3166 = sbr.rel (0) target = $region37
    $region36: #{forward.7} parent=1 // pred_region
      %3167 = dma.done [#allocation3], 32
    $region37: #{forward.7} parent=1 // pred_fallthru
      _
    %3168 = vsyncpa [#allocation3], 1

</llo_original>
